<compile_context>
chip_gen: v6e
topology: v6e:2x2x1
jax: 0.10.0
libtpu: 0.0.40
codegen_flags: <defaults>
</compile_context>

<pallas_src>
import functools

import jax
import jax.numpy as jnp
from jax.experimental import pallas as pl
from jax.experimental.pallas import tpu as pltpu

KH = KW = 4
STRIDE = 2
PADDING = 1

# For output parity r, the contributing (input row shift di, kernel row ky)
# pairs of ConvTranspose2d(k=4, s=2, p=1); the same table applies to columns.
_PHASE_TAPS = {
    0: ((0, 1), (-1, 3)),   # even output rows / cols
    1: ((0, 2), (1, 0)),    # odd  output rows / cols
}
_DJS = (-1, 0, 1)


def _convt_kernel(x_ref, w_ref, b_ref, o_ref, *, W, HW, C_out, F, CHUNK):
    """One batch element of ConvTranspose2d(C_in -> C_out, 4, stride=2, pad=1).

    x_ref : (F + HW + F, C_in)   flattened NHWC image, F zero rows at each end
    w_ref : (12, C_in, 2*C_out)  packed taps, column phases side by side
    b_ref : (1, 2*C_out)
    o_ref : (2, HW, 2*C_out)     row-phase major, lane-dense last dim
    """
    # Column-boundary masks: in the flattened (HW, C) layout a dj=-1 shift
    # wraps the j==0 rows onto the previous image row and dj=+1 wraps j==W-1
    # onto the next; those rows must contribute zero.  CHUNK % W == 0, so the
    # same (CHUNK, 1) masks apply to every M-chunk -> computed once.
    row = jax.lax.broadcasted_iota(jnp.int32, (CHUNK, 1), 0)
    if W & (W - 1) == 0:                 # power-of-two width: cheap bitwise and
        j = jnp.bitwise_and(row, W - 1)
    else:
        j = jax.lax.rem(row, W)
    mask_l = j != 0
    mask_r = j != W - 1

    bias = jnp.broadcast_to(b_ref[...].astype(jnp.float32), (CHUNK, 2 * C_out))

    # M-tiled accumulation: each (CHUNK, 2*C_out) f32 accumulator stays in
    # vregs and is stored to the output exactly once.
    for c in range(HW // CHUNK):
        start = F + c * CHUNK
        for r in range(2):                                  # output row parity
            acc = bias
            for a, (di, _ky) in enumerate(_PHASE_TAPS[r]):
                base = start + di * W
                for dj_i, dj in enumerate(_DJS):
                    xs = x_ref[base + dj:base + dj + CHUNK, :]
                    if dj == -1:
                        xs = jnp.where(mask_l, xs, 0.0)
                    elif dj == 1:
                        xs = jnp.where(mask_r, xs, 0.0)
                    # DEFAULT precision: single-pass bf16 MXU, f32 accumulate.
                    acc = acc + jnp.dot(
                        xs, w_ref[(r * 2 + a) * 3 + dj_i],
                        preferred_element_type=jnp.float32)
            o_ref[r, c * CHUNK:(c + 1) * CHUNK, :] = acc.astype(o_ref.dtype)


def _pack_weights(w):
    """(C_in, C_out, 4, 4) ConvTranspose2d weight -> (12, C_in, 2*C_out) taps.

    Index = (row_parity*2 + row_tap)*3 + (dj + 1).  The two column phases are
    packed side by side along the last dim so each MXU matmul fills 128 lanes.
    """
    C_in, C_out = w.shape[0], w.shape[1]
    zero = jnp.zeros((C_in, C_out), w.dtype)
    taps = []
    for r in range(2):
        for (_di, ky) in _PHASE_TAPS[r]:
            taps.append(jnp.concatenate([w[:, :, ky, 3], zero], axis=1))            # dj = -1
            taps.append(jnp.concatenate([w[:, :, ky, 1], w[:, :, ky, 2]], axis=1))  # dj =  0
            taps.append(jnp.concatenate([zero, w[:, :, ky, 0]], axis=1))            # dj = +1
    return jnp.stack(taps, axis=0)


def conv_transpose_up2(x_nhwc, w, b):
    """ConvTranspose2d(C_in, C_out, 4, stride=2, padding=1) on an NHWC input."""
    N, H, W, C_in = x_nhwc.shape
    C_out = w.shape[1]
    HW = H * W

    # Zero padding of (W+1) rows, rounded up to a sublane multiple so the
    # static dj=0 slices inside the kernel are (8,128)-aligned.
    F = -(-(W + 1) // 8) * 8
    P = HW + 2 * F

    # M-chunk: multiple of W (mask reuse across chunks), divides HW, and at
    # most 128 rows so the f32 accumulator fits comfortably in vregs.
    if HW <= 128:
        chunk = HW
    else:
        chunk = max(W, (128 // W) * W)
        if HW % chunk:
            chunk = W
    assert HW % chunk == 0 and chunk % W == 0

    # Pad in the wrapper (fuses with the transpose/concat that produced x);
    # the kernel then needs no scratch and no VMEM->VMEM staging copy.
    x_pad = jnp.pad(x_nhwc.reshape(N, HW, C_in), ((0, 0), (F, F), (0, 0)))
    w_packed = _pack_weights(w)                              # (12, C_in, 2*C_out)
    bias2 = jnp.concatenate([b, b]).reshape(1, 2 * C_out)

    kernel = functools.partial(
        _convt_kernel, W=W, HW=HW, C_out=C_out, F=F, CHUNK=chunk)

    phases = pl.pallas_call(
        kernel,
        out_shape=jax.ShapeDtypeStruct((N, 2, HW, 2 * C_out), x_nhwc.dtype),
        grid_spec=pltpu.PrefetchScalarGridSpec(
            num_scalar_prefetch=0,
            grid=(N,),
            in_specs=[
                pl.BlockSpec((None, P, C_in), lambda n: (n, 0, 0)),
                pl.BlockSpec((12, C_in, 2 * C_out), lambda n: (0, 0, 0)),
                pl.BlockSpec((1, 2 * C_out), lambda n: (0, 0)),
            ],
            out_specs=pl.BlockSpec((None, 2, HW, 2 * C_out),
                                   lambda n: (n, 0, 0, 0)),
        ),
        compiler_params=pltpu.CompilerParams(
            dimension_semantics=("parallel",),   # batch axis -> megacore shards
        ),
    )(x_pad, w_packed, bias2)

    # phases[n, r, i*W + j, s*C_out + c] == out[n, 2i + r, 2j + s, c]
    out = phases.reshape(N, 2, H, W, 2, C_out)
    out = jnp.transpose(out, (0, 2, 1, 3, 4, 5))             # (N, H, 2, W, 2, C)
    return out.reshape(N, 2 * H, 2 * W, C_out)


def lfm_forward(x1, x2, x3, x4, params):
    """NCHW in / NCHW out, matching PyTorch LFM.forward."""
    nhwc = lambda t: jnp.transpose(t, (0, 2, 3, 1))

    x4_up = conv_transpose_up2(nhwc(x4), params["w_4_0"], params["b_4_0"])
    x43 = jnp.concatenate([x4_up, nhwc(x3)], axis=-1)
    x43_up = conv_transpose_up2(x43, params["w_2_2"], params["b_2_2"])
    x432 = jnp.concatenate([x43_up, nhwc(x2)], axis=-1)
    x432_up = conv_transpose_up2(x432, params["w_2_3"], params["b_2_3"])
    x4321 = jnp.concatenate([x432_up, nhwc(x1)], axis=-1)
    # TODO(synk): the concats / layout glue between layers are left to XLA
    # fusion; a fully fused multi-layer pallas_call would cut launch overhead
    # further at these tiny shapes.
    return jnp.transpose(x4321, (0, 3, 1, 2))


# ---------------------------------------------------------------------------
# Pure-JAX reference (no Pallas) mirroring the PyTorch module exactly.
# ---------------------------------------------------------------------------
def _conv_transpose_ref(x_nchw, w, b):
    rhs = jnp.transpose(w[:, :, ::-1, ::-1], (1, 0, 2, 3))   # (C_out, C_in, 4, 4)
    y = jax.lax.conv_general_dilated(
        x_nchw, rhs,
        window_strides=(1, 1),
        padding=((KH - 1 - PADDING,) * 2, (KW - 1 - PADDING,) * 2),
        lhs_dilation=(STRIDE, STRIDE),
        dimension_numbers=("NCHW", "OIHW", "NCHW"),
        precision=jax.lax.Precision.HIGHEST,
    )
    return y + b.reshape(1, -1, 1, 1)


def lfm_forward_ref(x1, x2, x3, x4, params):
    x4_up = _conv_transpose_ref(x4, params["w_4_0"], params["b_4_0"])
    x43 = jnp.concatenate([x4_up, x3], axis=1)
    x43_up = _conv_transpose_ref(x43, params["w_2_2"], params["b_2_2"])
    x432 = jnp.concatenate([x43_up, x2], axis=1)
    x432_up = _conv_transpose_ref(x432, params["w_2_3"], params["b_2_3"])
    return jnp.concatenate([x432_up, x1], axis=1)


if __name__ == "__main__":
    key = jax.random.PRNGKey(0)
    ks = jax.random.split(key, 10)

    N = 2
    x4 = jax.random.normal(ks[0], (N, 64, 4, 4), jnp.float32)
    x3 = jax.random.normal(ks[1], (N, 64, 8, 8), jnp.float32)
    x2 = jax.random.normal(ks[2], (N, 64, 16, 16), jnp.float32)
    x1 = jax.random.normal(ks[3], (N, 64, 32, 32), jnp.float32)

    params = {
        "w_4_0": jax.random.normal(ks[4], (64, 64, KH, KW), jnp.float32) * 0.05,
        "b_4_0": jax.random.normal(ks[5], (64,), jnp.float32) * 0.05,
        "w_2_2": jax.random.normal(ks[6], (128, 64, KH, KW), jnp.float32) * 0.05,
        "b_2_2": jax.random.normal(ks[7], (64,), jnp.float32) * 0.05,
        "w_2_3": jax.random.normal(ks[8], (128, 64, KH, KW), jnp.float32) * 0.05,
        "b_2_3": jax.random.normal(ks[9], (64,), jnp.float32) * 0.05,
    }

    out = jax.block_until_ready(jax.jit(lfm_forward)(x1, x2, x3, x4, params))
    ref = jax.block_until_ready(lfm_forward_ref(x1, x2, x3, x4, params))

    assert out.shape == (N, 128, 32, 32), out.shape
    # Kernel matmuls run at default (single-pass bf16 MXU, f32 accumulate)
    # precision; across three chained convs the expected max deviation from
    # the f32 reference is a few 1e-3, so use a bf16-appropriate tolerance.
    max_err = float(jnp.max(jnp.abs(out - ref)))
    mean_err = float(jnp.mean(jnp.abs(out - ref)))
    assert max_err < 2.5e-2, max_err
    assert mean_err < 3e-3, mean_err
    print("KERNEL_OK")
</pallas_src>

<mosaic_0001>
module attributes {stable_mosaic.version = 11 : i64} {
  func.func @_convt_kernel(%arg0: i32, %arg1: memref<1x32x64xf32, #tpu.memory_space<vmem>>, %arg2: memref<12x64x128xf32, #tpu.memory_space<vmem>>, %arg3: memref<1x128xf32, #tpu.memory_space<vmem>>, %arg4: memref<1x2x16x128xf32, #tpu.memory_space<vmem>>) attributes {dimension_semantics = [#tpu.dimension_semantics<parallel>], iteration_bounds = array<i64: 2>, scalar_prefetch = 0 : i64, scratch_operands = 0 : i64, tpu.core_type = #tpu.core_type<tc>, window_params = [{transform_indices = @transform_0, window_bounds = array<i64: 1, 32, 64>}, {pipeline_mode = #tpu.pipeline_mode<synchronous>, transform_indices = @transform_1, window_bounds = array<i64: 12, 64, 128>}, {pipeline_mode = #tpu.pipeline_mode<synchronous>, transform_indices = @transform_2, window_bounds = array<i64: 1, 128>}, {transform_indices = @transform_3, window_bounds = array<i64: 1, 2, 16, 128>}]} {
    %0 = tpu.iota {dimensions = array<i32: 0>} : vector<16x1xi32>
    %c3_i32 = arith.constant 3 : i32
    %1 = vector.broadcast %c3_i32 : i32 to vector<16x1xi32>
    %2 = arith.andi %0, %1 : vector<16x1xi32>
    %c0_i32 = arith.constant 0 : i32
    %3 = vector.broadcast %c0_i32 : i32 to vector<16x1xi32>
    %4 = arith.cmpi ne, %2, %3 : vector<16x1xi32>
    %c3_i32_0 = arith.constant 3 : i32
    %5 = vector.broadcast %c3_i32_0 : i32 to vector<16x1xi32>
    %6 = arith.cmpi ne, %2, %5 : vector<16x1xi32>
    %c0 = arith.constant 0 : index
    %c0_1 = arith.constant 0 : index
    %7 = vector.load %arg3[%c0, %c0_1] : memref<1x128xf32, #tpu.memory_space<vmem>>, vector<1x128xf32>
    %8 = vector.shape_cast %7 : vector<1x128xf32> to vector<1x128xf32>
    %9 = vector.broadcast %8 : vector<1x128xf32> to vector<16x128xf32>
    %c0_2 = arith.constant 0 : index
    %c7 = arith.constant 7 : index
    %c0_3 = arith.constant 0 : index
    %10 = vector.load %arg1[%c0_2, %c7, %c0_3] : memref<1x32x64xf32, #tpu.memory_space<vmem>>, vector<1x16x64xf32>
    %11 = vector.shape_cast %10 : vector<1x16x64xf32> to vector<16x64xf32>
    %cst = arith.constant 0.000000e+00 : f32
    %12 = vector.shape_cast %4 : vector<16x1xi1> to vector<16x1xi1>
    %13 = vector.broadcast %12 : vector<16x1xi1> to vector<16x64xi1>
    %14 = vector.broadcast %cst : f32 to vector<16x64xf32>
    %15 = arith.select %13, %11, %14 : vector<16x64xi1>, vector<16x64xf32>
    %c0_4 = arith.constant 0 : index
    %c0_5 = arith.constant 0 : index
    %c0_6 = arith.constant 0 : index
    %16 = vector.load %arg2[%c0_4, %c0_5, %c0_6] : memref<12x64x128xf32, #tpu.memory_space<vmem>>, vector<1x64x128xf32>
    %17 = vector.shape_cast %16 : vector<1x64x128xf32> to vector<64x128xf32>
    %cst_7 = arith.constant dense<0.000000e+00> : vector<16x128xf32>
    %18 = tpu.matmul %15, %17, %cst_7 {dimension_numbers = #tpu.dot_dimension_numbers<[1], [0], [0], [1], [0, 0, 1, 1], [], []>} : vector<16x64xf32>, vector<64x128xf32>, vector<16x128xf32> -> vector<16x128xf32>
    %19 = arith.addf %9, %18 : vector<16x128xf32>
    %c0_8 = arith.constant 0 : index
    %c8 = arith.constant 8 : index
    %c0_9 = arith.constant 0 : index
    %20 = vector.load %arg1[%c0_8, %c8, %c0_9] : memref<1x32x64xf32, #tpu.memory_space<vmem>>, vector<1x16x64xf32>
    %21 = vector.shape_cast %20 : vector<1x16x64xf32> to vector<16x64xf32>
    %c1 = arith.constant 1 : index
    %c0_10 = arith.constant 0 : index
    %c0_11 = arith.constant 0 : index
    %22 = vector.load %arg2[%c1, %c0_10, %c0_11] : memref<12x64x128xf32, #tpu.memory_space<vmem>>, vector<1x64x128xf32>
    %23 = vector.shape_cast %22 : vector<1x64x128xf32> to vector<64x128xf32>
    %cst_12 = arith.constant dense<0.000000e+00> : vector<16x128xf32>
    %24 = tpu.matmul %21, %23, %cst_12 {dimension_numbers = #tpu.dot_dimension_numbers<[1], [0], [0], [1], [0, 0, 1, 1], [], []>} : vector<16x64xf32>, vector<64x128xf32>, vector<16x128xf32> -> vector<16x128xf32>
    %25 = arith.addf %19, %24 : vector<16x128xf32>
    %c0_13 = arith.constant 0 : index
    %c9 = arith.constant 9 : index
    %c0_14 = arith.constant 0 : index
    %26 = vector.load %arg1[%c0_13, %c9, %c0_14] : memref<1x32x64xf32, #tpu.memory_space<vmem>>, vector<1x16x64xf32>
    %27 = vector.shape_cast %26 : vector<1x16x64xf32> to vector<16x64xf32>
    %cst_15 = arith.constant 0.000000e+00 : f32
    %28 = vector.shape_cast %6 : vector<16x1xi1> to vector<16x1xi1>
    %29 = vector.broadcast %28 : vector<16x1xi1> to vector<16x64xi1>
    %30 = vector.broadcast %cst_15 : f32 to vector<16x64xf32>
    %31 = arith.select %29, %27, %30 : vector<16x64xi1>, vector<16x64xf32>
    %c2 = arith.constant 2 : index
    %c0_16 = arith.constant 0 : index
    %c0_17 = arith.constant 0 : index
    %32 = vector.load %arg2[%c2, %c0_16, %c0_17] : memref<12x64x128xf32, #tpu.memory_space<vmem>>, vector<1x64x128xf32>
    %33 = vector.shape_cast %32 : vector<1x64x128xf32> to vector<64x128xf32>
    %cst_18 = arith.constant dense<0.000000e+00> : vector<16x128xf32>
    %34 = tpu.matmul %31, %33, %cst_18 {dimension_numbers = #tpu.dot_dimension_numbers<[1], [0], [0], [1], [0, 0, 1, 1], [], []>} : vector<16x64xf32>, vector<64x128xf32>, vector<16x128xf32> -> vector<16x128xf32>
    %35 = arith.addf %25, %34 : vector<16x128xf32>
    %c0_19 = arith.constant 0 : index
    %c3 = arith.constant 3 : index
    %c0_20 = arith.constant 0 : index
    %36 = vector.load %arg1[%c0_19, %c3, %c0_20] : memref<1x32x64xf32, #tpu.memory_space<vmem>>, vector<1x16x64xf32>
    %37 = vector.shape_cast %36 : vector<1x16x64xf32> to vector<16x64xf32>
    %cst_21 = arith.constant 0.000000e+00 : f32
    %38 = vector.shape_cast %4 : vector<16x1xi1> to vector<16x1xi1>
    %39 = vector.broadcast %38 : vector<16x1xi1> to vector<16x64xi1>
    %40 = vector.broadcast %cst_21 : f32 to vector<16x64xf32>
    %41 = arith.select %39, %37, %40 : vector<16x64xi1>, vector<16x64xf32>
    %c3_22 = arith.constant 3 : index
    %c0_23 = arith.constant 0 : index
    %c0_24 = arith.constant 0 : index
    %42 = vector.load %arg2[%c3_22, %c0_23, %c0_24] : memref<12x64x128xf32, #tpu.memory_space<vmem>>, vector<1x64x128xf32>
    %43 = vector.shape_cast %42 : vector<1x64x128xf32> to vector<64x128xf32>
    %cst_25 = arith.constant dense<0.000000e+00> : vector<16x128xf32>
    %44 = tpu.matmul %41, %43, %cst_25 {dimension_numbers = #tpu.dot_dimension_numbers<[1], [0], [0], [1], [0, 0, 1, 1], [], []>} : vector<16x64xf32>, vector<64x128xf32>, vector<16x128xf32> -> vector<16x128xf32>
    %45 = arith.addf %35, %44 : vector<16x128xf32>
    %c0_26 = arith.constant 0 : index
    %c4 = arith.constant 4 : index
    %c0_27 = arith.constant 0 : index
    %46 = vector.load %arg1[%c0_26, %c4, %c0_27] : memref<1x32x64xf32, #tpu.memory_space<vmem>>, vector<1x16x64xf32>
    %47 = vector.shape_cast %46 : vector<1x16x64xf32> to vector<16x64xf32>
    %c4_28 = arith.constant 4 : index
    %c0_29 = arith.constant 0 : index
    %c0_30 = arith.constant 0 : index
    %48 = vector.load %arg2[%c4_28, %c0_29, %c0_30] : memref<12x64x128xf32, #tpu.memory_space<vmem>>, vector<1x64x128xf32>
    %49 = vector.shape_cast %48 : vector<1x64x128xf32> to vector<64x128xf32>
    %cst_31 = arith.constant dense<0.000000e+00> : vector<16x128xf32>
    %50 = tpu.matmul %47, %49, %cst_31 {dimension_numbers = #tpu.dot_dimension_numbers<[1], [0], [0], [1], [0, 0, 1, 1], [], []>} : vector<16x64xf32>, vector<64x128xf32>, vector<16x128xf32> -> vector<16x128xf32>
    %51 = arith.addf %45, %50 : vector<16x128xf32>
    %c0_32 = arith.constant 0 : index
    %c5 = arith.constant 5 : index
    %c0_33 = arith.constant 0 : index
    %52 = vector.load %arg1[%c0_32, %c5, %c0_33] : memref<1x32x64xf32, #tpu.memory_space<vmem>>, vector<1x16x64xf32>
    %53 = vector.shape_cast %52 : vector<1x16x64xf32> to vector<16x64xf32>
    %cst_34 = arith.constant 0.000000e+00 : f32
    %54 = vector.shape_cast %6 : vector<16x1xi1> to vector<16x1xi1>
    %55 = vector.broadcast %54 : vector<16x1xi1> to vector<16x64xi1>
    %56 = vector.broadcast %cst_34 : f32 to vector<16x64xf32>
    %57 = arith.select %55, %53, %56 : vector<16x64xi1>, vector<16x64xf32>
    %c5_35 = arith.constant 5 : index
    %c0_36 = arith.constant 0 : index
    %c0_37 = arith.constant 0 : index
    %58 = vector.load %arg2[%c5_35, %c0_36, %c0_37] : memref<12x64x128xf32, #tpu.memory_space<vmem>>, vector<1x64x128xf32>
    %59 = vector.shape_cast %58 : vector<1x64x128xf32> to vector<64x128xf32>
    %cst_38 = arith.constant dense<0.000000e+00> : vector<16x128xf32>
    %60 = tpu.matmul %57, %59, %cst_38 {dimension_numbers = #tpu.dot_dimension_numbers<[1], [0], [0], [1], [0, 0, 1, 1], [], []>} : vector<16x64xf32>, vector<64x128xf32>, vector<16x128xf32> -> vector<16x128xf32>
    %61 = arith.addf %51, %60 : vector<16x128xf32>
    %c0_39 = arith.constant 0 : index
    %c0_40 = arith.constant 0 : index
    %c0_41 = arith.constant 0 : index
    %c0_42 = arith.constant 0 : index
    %62 = vector.load %arg4[%c0_39, %c0_40, %c0_41, %c0_42] : memref<1x2x16x128xf32, #tpu.memory_space<vmem>>, vector<1x1x16x128xf32>
    %63 = vector.shape_cast %62 : vector<1x1x16x128xf32> to vector<16x128xf32>
    %64 = vector.shape_cast %61 : vector<16x128xf32> to vector<1x1x16x128xf32>
    tpu.vector_store %arg4[%c0_39, %c0_40, %c0_41, %c0_42], %64 {strides = array<i32>} : memref<1x2x16x128xf32, #tpu.memory_space<vmem>>, vector<1x1x16x128xf32>,
    %c0_43 = arith.constant 0 : index
    %c7_44 = arith.constant 7 : index
    %c0_45 = arith.constant 0 : index
    %65 = vector.load %arg1[%c0_43, %c7_44, %c0_45] : memref<1x32x64xf32, #tpu.memory_space<vmem>>, vector<1x16x64xf32>
    %66 = vector.shape_cast %65 : vector<1x16x64xf32> to vector<16x64xf32>
    %cst_46 = arith.constant 0.000000e+00 : f32
    %67 = vector.shape_cast %4 : vector<16x1xi1> to vector<16x1xi1>
    %68 = vector.broadcast %67 : vector<16x1xi1> to vector<16x64xi1>
    %69 = vector.broadcast %cst_46 : f32 to vector<16x64xf32>
    %70 = arith.select %68, %66, %69 : vector<16x64xi1>, vector<16x64xf32>
    %c6 = arith.constant 6 : index
    %c0_47 = arith.constant 0 : index
    %c0_48 = arith.constant 0 : index
    %71 = vector.load %arg2[%c6, %c0_47, %c0_48] : memref<12x64x128xf32, #tpu.memory_space<vmem>>, vector<1x64x128xf32>
    %72 = vector.shape_cast %71 : vector<1x64x128xf32> to vector<64x128xf32>
    %cst_49 = arith.constant dense<0.000000e+00> : vector<16x128xf32>
    %73 = tpu.matmul %70, %72, %cst_49 {dimension_numbers = #tpu.dot_dimension_numbers<[1], [0], [0], [1], [0, 0, 1, 1], [], []>} : vector<16x64xf32>, vector<64x128xf32>, vector<16x128xf32> -> vector<16x128xf32>
    %74 = arith.addf %9, %73 : vector<16x128xf32>
    %c0_50 = arith.constant 0 : index
    %c8_51 = arith.constant 8 : index
    %c0_52 = arith.constant 0 : index
    %75 = vector.load %arg1[%c0_50, %c8_51, %c0_52] : memref<1x32x64xf32, #tpu.memory_space<vmem>>, vector<1x16x64xf32>
    %76 = vector.shape_cast %75 : vector<1x16x64xf32> to vector<16x64xf32>
    %c7_53 = arith.constant 7 : index
    %c0_54 = arith.constant 0 : index
    %c0_55 = arith.constant 0 : index
    %77 = vector.load %arg2[%c7_53, %c0_54, %c0_55] : memref<12x64x128xf32, #tpu.memory_space<vmem>>, vector<1x64x128xf32>
    %78 = vector.shape_cast %77 : vector<1x64x128xf32> to vector<64x128xf32>
    %cst_56 = arith.constant dense<0.000000e+00> : vector<16x128xf32>
    %79 = tpu.matmul %76, %78, %cst_56 {dimension_numbers = #tpu.dot_dimension_numbers<[1], [0], [0], [1], [0, 0, 1, 1], [], []>} : vector<16x64xf32>, vector<64x128xf32>, vector<16x128xf32> -> vector<16x128xf32>
    %80 = arith.addf %74, %79 : vector<16x128xf32>
    %c0_57 = arith.constant 0 : index
    %c9_58 = arith.constant 9 : index
    %c0_59 = arith.constant 0 : index
    %81 = vector.load %arg1[%c0_57, %c9_58, %c0_59] : memref<1x32x64xf32, #tpu.memory_space<vmem>>, vector<1x16x64xf32>
    %82 = vector.shape_cast %81 : vector<1x16x64xf32> to vector<16x64xf32>
    %cst_60 = arith.constant 0.000000e+00 : f32
    %83 = vector.shape_cast %6 : vector<16x1xi1> to vector<16x1xi1>
    %84 = vector.broadcast %83 : vector<16x1xi1> to vector<16x64xi1>
    %85 = vector.broadcast %cst_60 : f32 to vector<16x64xf32>
    %86 = arith.select %84, %82, %85 : vector<16x64xi1>, vector<16x64xf32>
    %c8_61 = arith.constant 8 : index
    %c0_62 = arith.constant 0 : index
    %c0_63 = arith.constant 0 : index
    %87 = vector.load %arg2[%c8_61, %c0_62, %c0_63] : memref<12x64x128xf32, #tpu.memory_space<vmem>>, vector<1x64x128xf32>
    %88 = vector.shape_cast %87 : vector<1x64x128xf32> to vector<64x128xf32>
    %cst_64 = arith.constant dense<0.000000e+00> : vector<16x128xf32>
    %89 = tpu.matmul %86, %88, %cst_64 {dimension_numbers = #tpu.dot_dimension_numbers<[1], [0], [0], [1], [0, 0, 1, 1], [], []>} : vector<16x64xf32>, vector<64x128xf32>, vector<16x128xf32> -> vector<16x128xf32>
    %90 = arith.addf %80, %89 : vector<16x128xf32>
    %c0_65 = arith.constant 0 : index
    %c11 = arith.constant 11 : index
    %c0_66 = arith.constant 0 : index
    %91 = vector.load %arg1[%c0_65, %c11, %c0_66] : memref<1x32x64xf32, #tpu.memory_space<vmem>>, vector<1x16x64xf32>
    %92 = vector.shape_cast %91 : vector<1x16x64xf32> to vector<16x64xf32>
    %cst_67 = arith.constant 0.000000e+00 : f32
    %93 = vector.shape_cast %4 : vector<16x1xi1> to vector<16x1xi1>
    %94 = vector.broadcast %93 : vector<16x1xi1> to vector<16x64xi1>
    %95 = vector.broadcast %cst_67 : f32 to vector<16x64xf32>
    %96 = arith.select %94, %92, %95 : vector<16x64xi1>, vector<16x64xf32>
    %c9_68 = arith.constant 9 : index
    %c0_69 = arith.constant 0 : index
    %c0_70 = arith.constant 0 : index
    %97 = vector.load %arg2[%c9_68, %c0_69, %c0_70] : memref<12x64x128xf32, #tpu.memory_space<vmem>>, vector<1x64x128xf32>
    %98 = vector.shape_cast %97 : vector<1x64x128xf32> to vector<64x128xf32>
    %cst_71 = arith.constant dense<0.000000e+00> : vector<16x128xf32>
    %99 = tpu.matmul %96, %98, %cst_71 {dimension_numbers = #tpu.dot_dimension_numbers<[1], [0], [0], [1], [0, 0, 1, 1], [], []>} : vector<16x64xf32>, vector<64x128xf32>, vector<16x128xf32> -> vector<16x128xf32>
    %100 = arith.addf %90, %99 : vector<16x128xf32>
    %c0_72 = arith.constant 0 : index
    %c12 = arith.constant 12 : index
    %c0_73 = arith.constant 0 : index
    %101 = vector.load %arg1[%c0_72, %c12, %c0_73] : memref<1x32x64xf32, #tpu.memory_space<vmem>>, vector<1x16x64xf32>
    %102 = vector.shape_cast %101 : vector<1x16x64xf32> to vector<16x64xf32>
    %c10 = arith.constant 10 : index
    %c0_74 = arith.constant 0 : index
    %c0_75 = arith.constant 0 : index
    %103 = vector.load %arg2[%c10, %c0_74, %c0_75] : memref<12x64x128xf32, #tpu.memory_space<vmem>>, vector<1x64x128xf32>
    %104 = vector.shape_cast %103 : vector<1x64x128xf32> to vector<64x128xf32>
    %cst_76 = arith.constant dense<0.000000e+00> : vector<16x128xf32>
    %105 = tpu.matmul %102, %104, %cst_76 {dimension_numbers = #tpu.dot_dimension_numbers<[1], [0], [0], [1], [0, 0, 1, 1], [], []>} : vector<16x64xf32>, vector<64x128xf32>, vector<16x128xf32> -> vector<16x128xf32>
    %106 = arith.addf %100, %105 : vector<16x128xf32>
    %c0_77 = arith.constant 0 : index
    %c13 = arith.constant 13 : index
    %c0_78 = arith.constant 0 : index
    %107 = vector.load %arg1[%c0_77, %c13, %c0_78] : memref<1x32x64xf32, #tpu.memory_space<vmem>>, vector<1x16x64xf32>
    %108 = vector.shape_cast %107 : vector<1x16x64xf32> to vector<16x64xf32>
    %cst_79 = arith.constant 0.000000e+00 : f32
    %109 = vector.shape_cast %6 : vector<16x1xi1> to vector<16x1xi1>
    %110 = vector.broadcast %109 : vector<16x1xi1> to vector<16x64xi1>
    %111 = vector.broadcast %cst_79 : f32 to vector<16x64xf32>
    %112 = arith.select %110, %108, %111 : vector<16x64xi1>, vector<16x64xf32>
    %c11_80 = arith.constant 11 : index
    %c0_81 = arith.constant 0 : index
    %c0_82 = arith.constant 0 : index
    %113 = vector.load %arg2[%c11_80, %c0_81, %c0_82] : memref<12x64x128xf32, #tpu.memory_space<vmem>>, vector<1x64x128xf32>
    %114 = vector.shape_cast %113 : vector<1x64x128xf32> to vector<64x128xf32>
    %cst_83 = arith.constant dense<0.000000e+00> : vector<16x128xf32>
    %115 = tpu.matmul %112, %114, %cst_83 {dimension_numbers = #tpu.dot_dimension_numbers<[1], [0], [0], [1], [0, 0, 1, 1], [], []>} : vector<16x64xf32>, vector<64x128xf32>, vector<16x128xf32> -> vector<16x128xf32>
    %116 = arith.addf %106, %115 : vector<16x128xf32>
    %c0_84 = arith.constant 0 : index
    %c1_85 = arith.constant 1 : index
    %c0_86 = arith.constant 0 : index
    %c0_87 = arith.constant 0 : index
    %117 = vector.load %arg4[%c0_84, %c1_85, %c0_86, %c0_87] : memref<1x2x16x128xf32, #tpu.memory_space<vmem>>, vector<1x1x16x128xf32>
    %118 = vector.shape_cast %117 : vector<1x1x16x128xf32> to vector<16x128xf32>
    %119 = vector.shape_cast %116 : vector<16x128xf32> to vector<1x1x16x128xf32>
    tpu.vector_store %arg4[%c0_84, %c1_85, %c0_86, %c0_87], %119 {strides = array<i32>} : memref<1x2x16x128xf32, #tpu.memory_space<vmem>>, vector<1x1x16x128xf32>,
    return
  }
  func.func @transform_0(%arg0: i32) -> (i32, i32, i32) {
    %c0_i32 = arith.constant 0 : i32
    %c0_i32_0 = arith.constant 0 : i32
    %c0_i32_1 = arith.constant 0 : i32
    return %arg0, %c0_i32, %c0_i32_0 : i32, i32, i32
  }
  func.func @transform_1(%arg0: i32) -> (i32, i32, i32) {
    %c0_i32 = arith.constant 0 : i32
    %c0_i32_0 = arith.constant 0 : i32
    %c0_i32_1 = arith.constant 0 : i32
    %c0_i32_2 = arith.constant 0 : i32
    return %c0_i32, %c0_i32_0, %c0_i32_1 : i32, i32, i32
  }
  func.func @transform_2(%arg0: i32) -> (i32, i32) {
    %c0_i32 = arith.constant 0 : i32
    %c0_i32_0 = arith.constant 0 : i32
    %c0_i32_1 = arith.constant 0 : i32
    return %c0_i32, %c0_i32_0 : i32, i32
  }
  func.func @transform_3(%arg0: i32) -> (i32, i32, i32, i32) {
    %c0_i32 = arith.constant 0 : i32
    %c0_i32_0 = arith.constant 0 : i32
    %c0_i32_1 = arith.constant 0 : i32
    %c0_i32_2 = arith.constant 0 : i32
    return %arg0, %c0_i32, %c0_i32_0, %c0_i32_1 : i32, i32, i32, i32
  }
}

module attributes {stable_mosaic.version = 11 : i64} {
  func.func @_convt_kernel(%arg0: i32, %arg1: memref<1x96x128xf32, #tpu.memory_space<vmem>>, %arg2: memref<12x128x128xf32, #tpu.memory_space<vmem>>, %arg3: memref<1x128xf32, #tpu.memory_space<vmem>>, %arg4: memref<1x2x64x128xf32, #tpu.memory_space<vmem>>) attributes {dimension_semantics = [#tpu.dimension_semantics<parallel>], iteration_bounds = array<i64: 2>, scalar_prefetch = 0 : i64, scratch_operands = 0 : i64, tpu.core_type = #tpu.core_type<tc>, window_params = [{transform_indices = @transform_0, window_bounds = array<i64: 1, 96, 128>}, {pipeline_mode = #tpu.pipeline_mode<synchronous>, transform_indices = @transform_1, window_bounds = array<i64: 12, 128, 128>}, {pipeline_mode = #tpu.pipeline_mode<synchronous>, transform_indices = @transform_2, window_bounds = array<i64: 1, 128>}, {transform_indices = @transform_3, window_bounds = array<i64: 1, 2, 64, 128>}]} {
    %0 = tpu.iota {dimensions = array<i32: 0>} : vector<64x1xi32>
    %c7_i32 = arith.constant 7 : i32
    %1 = vector.broadcast %c7_i32 : i32 to vector<64x1xi32>
    %2 = arith.andi %0, %1 : vector<64x1xi32>
    %c0_i32 = arith.constant 0 : i32
    %3 = vector.broadcast %c0_i32 : i32 to vector<64x1xi32>
    %4 = arith.cmpi ne, %2, %3 : vector<64x1xi32>
    %c7_i32_0 = arith.constant 7 : i32
    %5 = vector.broadcast %c7_i32_0 : i32 to vector<64x1xi32>
    %6 = arith.cmpi ne, %2, %5 : vector<64x1xi32>
    %c0 = arith.constant 0 : index
    %c0_1 = arith.constant 0 : index
    %7 = vector.load %arg3[%c0, %c0_1] : memref<1x128xf32, #tpu.memory_space<vmem>>, vector<1x128xf32>
    %8 = vector.shape_cast %7 : vector<1x128xf32> to vector<1x128xf32>
    %9 = vector.broadcast %8 : vector<1x128xf32> to vector<64x128xf32>
    %c0_2 = arith.constant 0 : index
    %c15 = arith.constant 15 : index
    %c0_3 = arith.constant 0 : index
    %10 = vector.load %arg1[%c0_2, %c15, %c0_3] : memref<1x96x128xf32, #tpu.memory_space<vmem>>, vector<1x64x128xf32>
    %11 = vector.shape_cast %10 : vector<1x64x128xf32> to vector<64x128xf32>
    %cst = arith.constant 0.000000e+00 : f32
    %12 = vector.shape_cast %4 : vector<64x1xi1> to vector<64x1xi1>
    %13 = vector.broadcast %12 : vector<64x1xi1> to vector<64x128xi1>
    %14 = vector.broadcast %cst : f32 to vector<64x128xf32>
    %15 = arith.select %13, %11, %14 : vector<64x128xi1>, vector<64x128xf32>
    %c0_4 = arith.constant 0 : index
    %c0_5 = arith.constant 0 : index
    %c0_6 = arith.constant 0 : index
    %16 = vector.load %arg2[%c0_4, %c0_5, %c0_6] : memref<12x128x128xf32, #tpu.memory_space<vmem>>, vector<1x128x128xf32>
    %17 = vector.shape_cast %16 : vector<1x128x128xf32> to vector<128x128xf32>
    %cst_7 = arith.constant dense<0.000000e+00> : vector<64x128xf32>
    %18 = tpu.matmul %15, %17, %cst_7 {dimension_numbers = #tpu.dot_dimension_numbers<[1], [0], [0], [1], [0, 0, 1, 1], [], []>} : vector<64x128xf32>, vector<128x128xf32>, vector<64x128xf32> -> vector<64x128xf32>
    %19 = arith.addf %9, %18 : vector<64x128xf32>
    %c0_8 = arith.constant 0 : index
    %c16 = arith.constant 16 : index
    %c0_9 = arith.constant 0 : index
    %20 = vector.load %arg1[%c0_8, %c16, %c0_9] : memref<1x96x128xf32, #tpu.memory_space<vmem>>, vector<1x64x128xf32>
    %21 = vector.shape_cast %20 : vector<1x64x128xf32> to vector<64x128xf32>
    %c1 = arith.constant 1 : index
    %c0_10 = arith.constant 0 : index
    %c0_11 = arith.constant 0 : index
    %22 = vector.load %arg2[%c1, %c0_10, %c0_11] : memref<12x128x128xf32, #tpu.memory_space<vmem>>, vector<1x128x128xf32>
    %23 = vector.shape_cast %22 : vector<1x128x128xf32> to vector<128x128xf32>
    %cst_12 = arith.constant dense<0.000000e+00> : vector<64x128xf32>
    %24 = tpu.matmul %21, %23, %cst_12 {dimension_numbers = #tpu.dot_dimension_numbers<[1], [0], [0], [1], [0, 0, 1, 1], [], []>} : vector<64x128xf32>, vector<128x128xf32>, vector<64x128xf32> -> vector<64x128xf32>
    %25 = arith.addf %19, %24 : vector<64x128xf32>
    %c0_13 = arith.constant 0 : index
    %c17 = arith.constant 17 : index
    %c0_14 = arith.constant 0 : index
    %26 = vector.load %arg1[%c0_13, %c17, %c0_14] : memref<1x96x128xf32, #tpu.memory_space<vmem>>, vector<1x64x128xf32>
    %27 = vector.shape_cast %26 : vector<1x64x128xf32> to vector<64x128xf32>
    %cst_15 = arith.constant 0.000000e+00 : f32
    %28 = vector.shape_cast %6 : vector<64x1xi1> to vector<64x1xi1>
    %29 = vector.broadcast %28 : vector<64x1xi1> to vector<64x128xi1>
    %30 = vector.broadcast %cst_15 : f32 to vector<64x128xf32>
    %31 = arith.select %29, %27, %30 : vector<64x128xi1>, vector<64x128xf32>
    %c2 = arith.constant 2 : index
    %c0_16 = arith.constant 0 : index
    %c0_17 = arith.constant 0 : index
    %32 = vector.load %arg2[%c2, %c0_16, %c0_17] : memref<12x128x128xf32, #tpu.memory_space<vmem>>, vector<1x128x128xf32>
    %33 = vector.shape_cast %32 : vector<1x128x128xf32> to vector<128x128xf32>
    %cst_18 = arith.constant dense<0.000000e+00> : vector<64x128xf32>
    %34 = tpu.matmul %31, %33, %cst_18 {dimension_numbers = #tpu.dot_dimension_numbers<[1], [0], [0], [1], [0, 0, 1, 1], [], []>} : vector<64x128xf32>, vector<128x128xf32>, vector<64x128xf32> -> vector<64x128xf32>
    %35 = arith.addf %25, %34 : vector<64x128xf32>
    %c0_19 = arith.constant 0 : index
    %c7 = arith.constant 7 : index
    %c0_20 = arith.constant 0 : index
    %36 = vector.load %arg1[%c0_19, %c7, %c0_20] : memref<1x96x128xf32, #tpu.memory_space<vmem>>, vector<1x64x128xf32>
    %37 = vector.shape_cast %36 : vector<1x64x128xf32> to vector<64x128xf32>
    %cst_21 = arith.constant 0.000000e+00 : f32
    %38 = vector.shape_cast %4 : vector<64x1xi1> to vector<64x1xi1>
    %39 = vector.broadcast %38 : vector<64x1xi1> to vector<64x128xi1>
    %40 = vector.broadcast %cst_21 : f32 to vector<64x128xf32>
    %41 = arith.select %39, %37, %40 : vector<64x128xi1>, vector<64x128xf32>
    %c3 = arith.constant 3 : index
    %c0_22 = arith.constant 0 : index
    %c0_23 = arith.constant 0 : index
    %42 = vector.load %arg2[%c3, %c0_22, %c0_23] : memref<12x128x128xf32, #tpu.memory_space<vmem>>, vector<1x128x128xf32>
    %43 = vector.shape_cast %42 : vector<1x128x128xf32> to vector<128x128xf32>
    %cst_24 = arith.constant dense<0.000000e+00> : vector<64x128xf32>
    %44 = tpu.matmul %41, %43, %cst_24 {dimension_numbers = #tpu.dot_dimension_numbers<[1], [0], [0], [1], [0, 0, 1, 1], [], []>} : vector<64x128xf32>, vector<128x128xf32>, vector<64x128xf32> -> vector<64x128xf32>
    %45 = arith.addf %35, %44 : vector<64x128xf32>
    %c0_25 = arith.constant 0 : index
    %c8 = arith.constant 8 : index
    %c0_26 = arith.constant 0 : index
    %46 = vector.load %arg1[%c0_25, %c8, %c0_26] : memref<1x96x128xf32, #tpu.memory_space<vmem>>, vector<1x64x128xf32>
    %47 = vector.shape_cast %46 : vector<1x64x128xf32> to vector<64x128xf32>
    %c4 = arith.constant 4 : index
    %c0_27 = arith.constant 0 : index
    %c0_28 = arith.constant 0 : index
    %48 = vector.load %arg2[%c4, %c0_27, %c0_28] : memref<12x128x128xf32, #tpu.memory_space<vmem>>, vector<1x128x128xf32>
    %49 = vector.shape_cast %48 : vector<1x128x128xf32> to vector<128x128xf32>
    %cst_29 = arith.constant dense<0.000000e+00> : vector<64x128xf32>
    %50 = tpu.matmul %47, %49, %cst_29 {dimension_numbers = #tpu.dot_dimension_numbers<[1], [0], [0], [1], [0, 0, 1, 1], [], []>} : vector<64x128xf32>, vector<128x128xf32>, vector<64x128xf32> -> vector<64x128xf32>
    %51 = arith.addf %45, %50 : vector<64x128xf32>
    %c0_30 = arith.constant 0 : index
    %c9 = arith.constant 9 : index
    %c0_31 = arith.constant 0 : index
    %52 = vector.load %arg1[%c0_30, %c9, %c0_31] : memref<1x96x128xf32, #tpu.memory_space<vmem>>, vector<1x64x128xf32>
    %53 = vector.shape_cast %52 : vector<1x64x128xf32> to vector<64x128xf32>
    %cst_32 = arith.constant 0.000000e+00 : f32
    %54 = vector.shape_cast %6 : vector<64x1xi1> to vector<64x1xi1>
    %55 = vector.broadcast %54 : vector<64x1xi1> to vector<64x128xi1>
    %56 = vector.broadcast %cst_32 : f32 to vector<64x128xf32>
    %57 = arith.select %55, %53, %56 : vector<64x128xi1>, vector<64x128xf32>
    %c5 = arith.constant 5 : index
    %c0_33 = arith.constant 0 : index
    %c0_34 = arith.constant 0 : index
    %58 = vector.load %arg2[%c5, %c0_33, %c0_34] : memref<12x128x128xf32, #tpu.memory_space<vmem>>, vector<1x128x128xf32>
    %59 = vector.shape_cast %58 : vector<1x128x128xf32> to vector<128x128xf32>
    %cst_35 = arith.constant dense<0.000000e+00> : vector<64x128xf32>
    %60 = tpu.matmul %57, %59, %cst_35 {dimension_numbers = #tpu.dot_dimension_numbers<[1], [0], [0], [1], [0, 0, 1, 1], [], []>} : vector<64x128xf32>, vector<128x128xf32>, vector<64x128xf32> -> vector<64x128xf32>
    %61 = arith.addf %51, %60 : vector<64x128xf32>
    %c0_36 = arith.constant 0 : index
    %c0_37 = arith.constant 0 : index
    %c0_38 = arith.constant 0 : index
    %c0_39 = arith.constant 0 : index
    %62 = vector.load %arg4[%c0_36, %c0_37, %c0_38, %c0_39] : memref<1x2x64x128xf32, #tpu.memory_space<vmem>>, vector<1x1x64x128xf32>
    %63 = vector.shape_cast %62 : vector<1x1x64x128xf32> to vector<64x128xf32>
    %64 = vector.shape_cast %61 : vector<64x128xf32> to vector<1x1x64x128xf32>
    tpu.vector_store %arg4[%c0_36, %c0_37, %c0_38, %c0_39], %64 {strides = array<i32>} : memref<1x2x64x128xf32, #tpu.memory_space<vmem>>, vector<1x1x64x128xf32>,
    %c0_40 = arith.constant 0 : index
    %c15_41 = arith.constant 15 : index
    %c0_42 = arith.constant 0 : index
    %65 = vector.load %arg1[%c0_40, %c15_41, %c0_42] : memref<1x96x128xf32, #tpu.memory_space<vmem>>, vector<1x64x128xf32>
    %66 = vector.shape_cast %65 : vector<1x64x128xf32> to vector<64x128xf32>
    %cst_43 = arith.constant 0.000000e+00 : f32
    %67 = vector.shape_cast %4 : vector<64x1xi1> to vector<64x1xi1>
    %68 = vector.broadcast %67 : vector<64x1xi1> to vector<64x128xi1>
    %69 = vector.broadcast %cst_43 : f32 to vector<64x128xf32>
    %70 = arith.select %68, %66, %69 : vector<64x128xi1>, vector<64x128xf32>
    %c6 = arith.constant 6 : index
    %c0_44 = arith.constant 0 : index
    %c0_45 = arith.constant 0 : index
    %71 = vector.load %arg2[%c6, %c0_44, %c0_45] : memref<12x128x128xf32, #tpu.memory_space<vmem>>, vector<1x128x128xf32>
    %72 = vector.shape_cast %71 : vector<1x128x128xf32> to vector<128x128xf32>
    %cst_46 = arith.constant dense<0.000000e+00> : vector<64x128xf32>
    %73 = tpu.matmul %70, %72, %cst_46 {dimension_numbers = #tpu.dot_dimension_numbers<[1], [0], [0], [1], [0, 0, 1, 1], [], []>} : vector<64x128xf32>, vector<128x128xf32>, vector<64x128xf32> -> vector<64x128xf32>
    %74 = arith.addf %9, %73 : vector<64x128xf32>
    %c0_47 = arith.constant 0 : index
    %c16_48 = arith.constant 16 : index
    %c0_49 = arith.constant 0 : index
    %75 = vector.load %arg1[%c0_47, %c16_48, %c0_49] : memref<1x96x128xf32, #tpu.memory_space<vmem>>, vector<1x64x128xf32>
    %76 = vector.shape_cast %75 : vector<1x64x128xf32> to vector<64x128xf32>
    %c7_50 = arith.constant 7 : index
    %c0_51 = arith.constant 0 : index
    %c0_52 = arith.constant 0 : index
    %77 = vector.load %arg2[%c7_50, %c0_51, %c0_52] : memref<12x128x128xf32, #tpu.memory_space<vmem>>, vector<1x128x128xf32>
    %78 = vector.shape_cast %77 : vector<1x128x128xf32> to vector<128x128xf32>
    %cst_53 = arith.constant dense<0.000000e+00> : vector<64x128xf32>
    %79 = tpu.matmul %76, %78, %cst_53 {dimension_numbers = #tpu.dot_dimension_numbers<[1], [0], [0], [1], [0, 0, 1, 1], [], []>} : vector<64x128xf32>, vector<128x128xf32>, vector<64x128xf32> -> vector<64x128xf32>
    %80 = arith.addf %74, %79 : vector<64x128xf32>
    %c0_54 = arith.constant 0 : index
    %c17_55 = arith.constant 17 : index
    %c0_56 = arith.constant 0 : index
    %81 = vector.load %arg1[%c0_54, %c17_55, %c0_56] : memref<1x96x128xf32, #tpu.memory_space<vmem>>, vector<1x64x128xf32>
    %82 = vector.shape_cast %81 : vector<1x64x128xf32> to vector<64x128xf32>
    %cst_57 = arith.constant 0.000000e+00 : f32
    %83 = vector.shape_cast %6 : vector<64x1xi1> to vector<64x1xi1>
    %84 = vector.broadcast %83 : vector<64x1xi1> to vector<64x128xi1>
    %85 = vector.broadcast %cst_57 : f32 to vector<64x128xf32>
    %86 = arith.select %84, %82, %85 : vector<64x128xi1>, vector<64x128xf32>
    %c8_58 = arith.constant 8 : index
    %c0_59 = arith.constant 0 : index
    %c0_60 = arith.constant 0 : index
    %87 = vector.load %arg2[%c8_58, %c0_59, %c0_60] : memref<12x128x128xf32, #tpu.memory_space<vmem>>, vector<1x128x128xf32>
    %88 = vector.shape_cast %87 : vector<1x128x128xf32> to vector<128x128xf32>
    %cst_61 = arith.constant dense<0.000000e+00> : vector<64x128xf32>
    %89 = tpu.matmul %86, %88, %cst_61 {dimension_numbers = #tpu.dot_dimension_numbers<[1], [0], [0], [1], [0, 0, 1, 1], [], []>} : vector<64x128xf32>, vector<128x128xf32>, vector<64x128xf32> -> vector<64x128xf32>
    %90 = arith.addf %80, %89 : vector<64x128xf32>
    %c0_62 = arith.constant 0 : index
    %c23 = arith.constant 23 : index
    %c0_63 = arith.constant 0 : index
    %91 = vector.load %arg1[%c0_62, %c23, %c0_63] : memref<1x96x128xf32, #tpu.memory_space<vmem>>, vector<1x64x128xf32>
    %92 = vector.shape_cast %91 : vector<1x64x128xf32> to vector<64x128xf32>
    %cst_64 = arith.constant 0.000000e+00 : f32
    %93 = vector.shape_cast %4 : vector<64x1xi1> to vector<64x1xi1>
    %94 = vector.broadcast %93 : vector<64x1xi1> to vector<64x128xi1>
    %95 = vector.broadcast %cst_64 : f32 to vector<64x128xf32>
    %96 = arith.select %94, %92, %95 : vector<64x128xi1>, vector<64x128xf32>
    %c9_65 = arith.constant 9 : index
    %c0_66 = arith.constant 0 : index
    %c0_67 = arith.constant 0 : index
    %97 = vector.load %arg2[%c9_65, %c0_66, %c0_67] : memref<12x128x128xf32, #tpu.memory_space<vmem>>, vector<1x128x128xf32>
    %98 = vector.shape_cast %97 : vector<1x128x128xf32> to vector<128x128xf32>
    %cst_68 = arith.constant dense<0.000000e+00> : vector<64x128xf32>
    %99 = tpu.matmul %96, %98, %cst_68 {dimension_numbers = #tpu.dot_dimension_numbers<[1], [0], [0], [1], [0, 0, 1, 1], [], []>} : vector<64x128xf32>, vector<128x128xf32>, vector<64x128xf32> -> vector<64x128xf32>
    %100 = arith.addf %90, %99 : vector<64x128xf32>
    %c0_69 = arith.constant 0 : index
    %c24 = arith.constant 24 : index
    %c0_70 = arith.constant 0 : index
    %101 = vector.load %arg1[%c0_69, %c24, %c0_70] : memref<1x96x128xf32, #tpu.memory_space<vmem>>, vector<1x64x128xf32>
    %102 = vector.shape_cast %101 : vector<1x64x128xf32> to vector<64x128xf32>
    %c10 = arith.constant 10 : index
    %c0_71 = arith.constant 0 : index
    %c0_72 = arith.constant 0 : index
    %103 = vector.load %arg2[%c10, %c0_71, %c0_72] : memref<12x128x128xf32, #tpu.memory_space<vmem>>, vector<1x128x128xf32>
    %104 = vector.shape_cast %103 : vector<1x128x128xf32> to vector<128x128xf32>
    %cst_73 = arith.constant dense<0.000000e+00> : vector<64x128xf32>
    %105 = tpu.matmul %102, %104, %cst_73 {dimension_numbers = #tpu.dot_dimension_numbers<[1], [0], [0], [1], [0, 0, 1, 1], [], []>} : vector<64x128xf32>, vector<128x128xf32>, vector<64x128xf32> -> vector<64x128xf32>
    %106 = arith.addf %100, %105 : vector<64x128xf32>
    %c0_74 = arith.constant 0 : index
    %c25 = arith.constant 25 : index
    %c0_75 = arith.constant 0 : index
    %107 = vector.load %arg1[%c0_74, %c25, %c0_75] : memref<1x96x128xf32, #tpu.memory_space<vmem>>, vector<1x64x128xf32>
    %108 = vector.shape_cast %107 : vector<1x64x128xf32> to vector<64x128xf32>
    %cst_76 = arith.constant 0.000000e+00 : f32
    %109 = vector.shape_cast %6 : vector<64x1xi1> to vector<64x1xi1>
    %110 = vector.broadcast %109 : vector<64x1xi1> to vector<64x128xi1>
    %111 = vector.broadcast %cst_76 : f32 to vector<64x128xf32>
    %112 = arith.select %110, %108, %111 : vector<64x128xi1>, vector<64x128xf32>
    %c11 = arith.constant 11 : index
    %c0_77 = arith.constant 0 : index
    %c0_78 = arith.constant 0 : index
    %113 = vector.load %arg2[%c11, %c0_77, %c0_78] : memref<12x128x128xf32, #tpu.memory_space<vmem>>, vector<1x128x128xf32>
    %114 = vector.shape_cast %113 : vector<1x128x128xf32> to vector<128x128xf32>
    %cst_79 = arith.constant dense<0.000000e+00> : vector<64x128xf32>
    %115 = tpu.matmul %112, %114, %cst_79 {dimension_numbers = #tpu.dot_dimension_numbers<[1], [0], [0], [1], [0, 0, 1, 1], [], []>} : vector<64x128xf32>, vector<128x128xf32>, vector<64x128xf32> -> vector<64x128xf32>
    %116 = arith.addf %106, %115 : vector<64x128xf32>
    %c0_80 = arith.constant 0 : index
    %c1_81 = arith.constant 1 : index
    %c0_82 = arith.constant 0 : index
    %c0_83 = arith.constant 0 : index
    %117 = vector.load %arg4[%c0_80, %c1_81, %c0_82, %c0_83] : memref<1x2x64x128xf32, #tpu.memory_space<vmem>>, vector<1x1x64x128xf32>
    %118 = vector.shape_cast %117 : vector<1x1x64x128xf32> to vector<64x128xf32>
    %119 = vector.shape_cast %116 : vector<64x128xf32> to vector<1x1x64x128xf32>
    tpu.vector_store %arg4[%c0_80, %c1_81, %c0_82, %c0_83], %119 {strides = array<i32>} : memref<1x2x64x128xf32, #tpu.memory_space<vmem>>, vector<1x1x64x128xf32>,
    return
  }
  func.func @transform_0(%arg0: i32) -> (i32, i32, i32) {
    %c0_i32 = arith.constant 0 : i32
    %c0_i32_0 = arith.constant 0 : i32
    %c0_i32_1 = arith.constant 0 : i32
    return %arg0, %c0_i32, %c0_i32_0 : i32, i32, i32
  }
  func.func @transform_1(%arg0: i32) -> (i32, i32, i32) {
    %c0_i32 = arith.constant 0 : i32
    %c0_i32_0 = arith.constant 0 : i32
    %c0_i32_1 = arith.constant 0 : i32
    %c0_i32_2 = arith.constant 0 : i32
    return %c0_i32, %c0_i32_0, %c0_i32_1 : i32, i32, i32
  }
  func.func @transform_2(%arg0: i32) -> (i32, i32) {
    %c0_i32 = arith.constant 0 : i32
    %c0_i32_0 = arith.constant 0 : i32
    %c0_i32_1 = arith.constant 0 : i32
    return %c0_i32, %c0_i32_0 : i32, i32
  }
  func.func @transform_3(%arg0: i32) -> (i32, i32, i32, i32) {
    %c0_i32 = arith.constant 0 : i32
    %c0_i32_0 = arith.constant 0 : i32
    %c0_i32_1 = arith.constant 0 : i32
    %c0_i32_2 = arith.constant 0 : i32
    return %arg0, %c0_i32, %c0_i32_0, %c0_i32_1 : i32, i32, i32, i32
  }
}

module attributes {stable_mosaic.version = 11 : i64} {
  func.func @_convt_kernel(%arg0: i32, %arg1: memref<1x304x128xf32, #tpu.memory_space<vmem>>, %arg2: memref<12x128x128xf32, #tpu.memory_space<vmem>>, %arg3: memref<1x128xf32, #tpu.memory_space<vmem>>, %arg4: memref<1x2x256x128xf32, #tpu.memory_space<vmem>>) attributes {dimension_semantics = [#tpu.dimension_semantics<parallel>], iteration_bounds = array<i64: 2>, scalar_prefetch = 0 : i64, scratch_operands = 0 : i64, tpu.core_type = #tpu.core_type<tc>, window_params = [{transform_indices = @transform_0, window_bounds = array<i64: 1, 304, 128>}, {pipeline_mode = #tpu.pipeline_mode<synchronous>, transform_indices = @transform_1, window_bounds = array<i64: 12, 128, 128>}, {pipeline_mode = #tpu.pipeline_mode<synchronous>, transform_indices = @transform_2, window_bounds = array<i64: 1, 128>}, {transform_indices = @transform_3, window_bounds = array<i64: 1, 2, 256, 128>}]} {
    %0 = tpu.iota {dimensions = array<i32: 0>} : vector<128x1xi32>
    %c15_i32 = arith.constant 15 : i32
    %1 = vector.broadcast %c15_i32 : i32 to vector<128x1xi32>
    %2 = arith.andi %0, %1 : vector<128x1xi32>
    %c0_i32 = arith.constant 0 : i32
    %3 = vector.broadcast %c0_i32 : i32 to vector<128x1xi32>
    %4 = arith.cmpi ne, %2, %3 : vector<128x1xi32>
    %c15_i32_0 = arith.constant 15 : i32
    %5 = vector.broadcast %c15_i32_0 : i32 to vector<128x1xi32>
    %6 = arith.cmpi ne, %2, %5 : vector<128x1xi32>
    %c0 = arith.constant 0 : index
    %c0_1 = arith.constant 0 : index
    %7 = vector.load %arg3[%c0, %c0_1] : memref<1x128xf32, #tpu.memory_space<vmem>>, vector<1x128xf32>
    %8 = vector.shape_cast %7 : vector<1x128xf32> to vector<1x128xf32>
    %9 = vector.broadcast %8 : vector<1x128xf32> to vector<128x128xf32>
    %c0_2 = arith.constant 0 : index
    %c23 = arith.constant 23 : index
    %c0_3 = arith.constant 0 : index
    %10 = vector.load %arg1[%c0_2, %c23, %c0_3] : memref<1x304x128xf32, #tpu.memory_space<vmem>>, vector<1x128x128xf32>
    %11 = vector.shape_cast %10 : vector<1x128x128xf32> to vector<128x128xf32>
    %cst = arith.constant 0.000000e+00 : f32
    %12 = vector.shape_cast %4 : vector<128x1xi1> to vector<128x1xi1>
    %13 = vector.broadcast %12 : vector<128x1xi1> to vector<128x128xi1>
    %14 = vector.broadcast %cst : f32 to vector<128x128xf32>
    %15 = arith.select %13, %11, %14 : vector<128x128xi1>, vector<128x128xf32>
    %c0_4 = arith.constant 0 : index
    %c0_5 = arith.constant 0 : index
    %c0_6 = arith.constant 0 : index
    %16 = vector.load %arg2[%c0_4, %c0_5, %c0_6] : memref<12x128x128xf32, #tpu.memory_space<vmem>>, vector<1x128x128xf32>
    %17 = vector.shape_cast %16 : vector<1x128x128xf32> to vector<128x128xf32>
    %cst_7 = arith.constant dense<0.000000e+00> : vector<128x128xf32>
    %18 = tpu.matmul %15, %17, %cst_7 {dimension_numbers = #tpu.dot_dimension_numbers<[1], [0], [0], [1], [0, 0, 1, 1], [], []>} : vector<128x128xf32>, vector<128x128xf32>, vector<128x128xf32> -> vector<128x128xf32>
    %19 = arith.addf %9, %18 : vector<128x128xf32>
    %c0_8 = arith.constant 0 : index
    %c24 = arith.constant 24 : index
    %c0_9 = arith.constant 0 : index
    %20 = vector.load %arg1[%c0_8, %c24, %c0_9] : memref<1x304x128xf32, #tpu.memory_space<vmem>>, vector<1x128x128xf32>
    %21 = vector.shape_cast %20 : vector<1x128x128xf32> to vector<128x128xf32>
    %c1 = arith.constant 1 : index
    %c0_10 = arith.constant 0 : index
    %c0_11 = arith.constant 0 : index
    %22 = vector.load %arg2[%c1, %c0_10, %c0_11] : memref<12x128x128xf32, #tpu.memory_space<vmem>>, vector<1x128x128xf32>
    %23 = vector.shape_cast %22 : vector<1x128x128xf32> to vector<128x128xf32>
    %cst_12 = arith.constant dense<0.000000e+00> : vector<128x128xf32>
    %24 = tpu.matmul %21, %23, %cst_12 {dimension_numbers = #tpu.dot_dimension_numbers<[1], [0], [0], [1], [0, 0, 1, 1], [], []>} : vector<128x128xf32>, vector<128x128xf32>, vector<128x128xf32> -> vector<128x128xf32>
    %25 = arith.addf %19, %24 : vector<128x128xf32>
    %c0_13 = arith.constant 0 : index
    %c25 = arith.constant 25 : index
    %c0_14 = arith.constant 0 : index
    %26 = vector.load %arg1[%c0_13, %c25, %c0_14] : memref<1x304x128xf32, #tpu.memory_space<vmem>>, vector<1x128x128xf32>
    %27 = vector.shape_cast %26 : vector<1x128x128xf32> to vector<128x128xf32>
    %cst_15 = arith.constant 0.000000e+00 : f32
    %28 = vector.shape_cast %6 : vector<128x1xi1> to vector<128x1xi1>
    %29 = vector.broadcast %28 : vector<128x1xi1> to vector<128x128xi1>
    %30 = vector.broadcast %cst_15 : f32 to vector<128x128xf32>
    %31 = arith.select %29, %27, %30 : vector<128x128xi1>, vector<128x128xf32>
    %c2 = arith.constant 2 : index
    %c0_16 = arith.constant 0 : index
    %c0_17 = arith.constant 0 : index
    %32 = vector.load %arg2[%c2, %c0_16, %c0_17] : memref<12x128x128xf32, #tpu.memory_space<vmem>>, vector<1x128x128xf32>
    %33 = vector.shape_cast %32 : vector<1x128x128xf32> to vector<128x128xf32>
    %cst_18 = arith.constant dense<0.000000e+00> : vector<128x128xf32>
    %34 = tpu.matmul %31, %33, %cst_18 {dimension_numbers = #tpu.dot_dimension_numbers<[1], [0], [0], [1], [0, 0, 1, 1], [], []>} : vector<128x128xf32>, vector<128x128xf32>, vector<128x128xf32> -> vector<128x128xf32>
    %35 = arith.addf %25, %34 : vector<128x128xf32>
    %c0_19 = arith.constant 0 : index
    %c7 = arith.constant 7 : index
    %c0_20 = arith.constant 0 : index
    %36 = vector.load %arg1[%c0_19, %c7, %c0_20] : memref<1x304x128xf32, #tpu.memory_space<vmem>>, vector<1x128x128xf32>
    %37 = vector.shape_cast %36 : vector<1x128x128xf32> to vector<128x128xf32>
    %cst_21 = arith.constant 0.000000e+00 : f32
    %38 = vector.shape_cast %4 : vector<128x1xi1> to vector<128x1xi1>
    %39 = vector.broadcast %38 : vector<128x1xi1> to vector<128x128xi1>
    %40 = vector.broadcast %cst_21 : f32 to vector<128x128xf32>
    %41 = arith.select %39, %37, %40 : vector<128x128xi1>, vector<128x128xf32>
    %c3 = arith.constant 3 : index
    %c0_22 = arith.constant 0 : index
    %c0_23 = arith.constant 0 : index
    %42 = vector.load %arg2[%c3, %c0_22, %c0_23] : memref<12x128x128xf32, #tpu.memory_space<vmem>>, vector<1x128x128xf32>
    %43 = vector.shape_cast %42 : vector<1x128x128xf32> to vector<128x128xf32>
    %cst_24 = arith.constant dense<0.000000e+00> : vector<128x128xf32>
    %44 = tpu.matmul %41, %43, %cst_24 {dimension_numbers = #tpu.dot_dimension_numbers<[1], [0], [0], [1], [0, 0, 1, 1], [], []>} : vector<128x128xf32>, vector<128x128xf32>, vector<128x128xf32> -> vector<128x128xf32>
    %45 = arith.addf %35, %44 : vector<128x128xf32>
    %c0_25 = arith.constant 0 : index
    %c8 = arith.constant 8 : index
    %c0_26 = arith.constant 0 : index
    %46 = vector.load %arg1[%c0_25, %c8, %c0_26] : memref<1x304x128xf32, #tpu.memory_space<vmem>>, vector<1x128x128xf32>
    %47 = vector.shape_cast %46 : vector<1x128x128xf32> to vector<128x128xf32>
    %c4 = arith.constant 4 : index
    %c0_27 = arith.constant 0 : index
    %c0_28 = arith.constant 0 : index
    %48 = vector.load %arg2[%c4, %c0_27, %c0_28] : memref<12x128x128xf32, #tpu.memory_space<vmem>>, vector<1x128x128xf32>
    %49 = vector.shape_cast %48 : vector<1x128x128xf32> to vector<128x128xf32>
    %cst_29 = arith.constant dense<0.000000e+00> : vector<128x128xf32>
    %50 = tpu.matmul %47, %49, %cst_29 {dimension_numbers = #tpu.dot_dimension_numbers<[1], [0], [0], [1], [0, 0, 1, 1], [], []>} : vector<128x128xf32>, vector<128x128xf32>, vector<128x128xf32> -> vector<128x128xf32>
    %51 = arith.addf %45, %50 : vector<128x128xf32>
    %c0_30 = arith.constant 0 : index
    %c9 = arith.constant 9 : index
    %c0_31 = arith.constant 0 : index
    %52 = vector.load %arg1[%c0_30, %c9, %c0_31] : memref<1x304x128xf32, #tpu.memory_space<vmem>>, vector<1x128x128xf32>
    %53 = vector.shape_cast %52 : vector<1x128x128xf32> to vector<128x128xf32>
    %cst_32 = arith.constant 0.000000e+00 : f32
    %54 = vector.shape_cast %6 : vector<128x1xi1> to vector<128x1xi1>
    %55 = vector.broadcast %54 : vector<128x1xi1> to vector<128x128xi1>
    %56 = vector.broadcast %cst_32 : f32 to vector<128x128xf32>
    %57 = arith.select %55, %53, %56 : vector<128x128xi1>, vector<128x128xf32>
    %c5 = arith.constant 5 : index
    %c0_33 = arith.constant 0 : index
    %c0_34 = arith.constant 0 : index
    %58 = vector.load %arg2[%c5, %c0_33, %c0_34] : memref<12x128x128xf32, #tpu.memory_space<vmem>>, vector<1x128x128xf32>
    %59 = vector.shape_cast %58 : vector<1x128x128xf32> to vector<128x128xf32>
    %cst_35 = arith.constant dense<0.000000e+00> : vector<128x128xf32>
    %60 = tpu.matmul %57, %59, %cst_35 {dimension_numbers = #tpu.dot_dimension_numbers<[1], [0], [0], [1], [0, 0, 1, 1], [], []>} : vector<128x128xf32>, vector<128x128xf32>, vector<128x128xf32> -> vector<128x128xf32>
    %61 = arith.addf %51, %60 : vector<128x128xf32>
    %c0_36 = arith.constant 0 : index
    %c0_37 = arith.constant 0 : index
    %c0_38 = arith.constant 0 : index
    %c0_39 = arith.constant 0 : index
    %62 = vector.load %arg4[%c0_36, %c0_37, %c0_38, %c0_39] : memref<1x2x256x128xf32, #tpu.memory_space<vmem>>, vector<1x1x128x128xf32>
    %63 = vector.shape_cast %62 : vector<1x1x128x128xf32> to vector<128x128xf32>
    %64 = vector.shape_cast %61 : vector<128x128xf32> to vector<1x1x128x128xf32>
    tpu.vector_store %arg4[%c0_36, %c0_37, %c0_38, %c0_39], %64 {strides = array<i32>} : memref<1x2x256x128xf32, #tpu.memory_space<vmem>>, vector<1x1x128x128xf32>,
    %c0_40 = arith.constant 0 : index
    %c23_41 = arith.constant 23 : index
    %c0_42 = arith.constant 0 : index
    %65 = vector.load %arg1[%c0_40, %c23_41, %c0_42] : memref<1x304x128xf32, #tpu.memory_space<vmem>>, vector<1x128x128xf32>
    %66 = vector.shape_cast %65 : vector<1x128x128xf32> to vector<128x128xf32>
    %cst_43 = arith.constant 0.000000e+00 : f32
    %67 = vector.shape_cast %4 : vector<128x1xi1> to vector<128x1xi1>
    %68 = vector.broadcast %67 : vector<128x1xi1> to vector<128x128xi1>
    %69 = vector.broadcast %cst_43 : f32 to vector<128x128xf32>
    %70 = arith.select %68, %66, %69 : vector<128x128xi1>, vector<128x128xf32>
    %c6 = arith.constant 6 : index
    %c0_44 = arith.constant 0 : index
    %c0_45 = arith.constant 0 : index
    %71 = vector.load %arg2[%c6, %c0_44, %c0_45] : memref<12x128x128xf32, #tpu.memory_space<vmem>>, vector<1x128x128xf32>
    %72 = vector.shape_cast %71 : vector<1x128x128xf32> to vector<128x128xf32>
    %cst_46 = arith.constant dense<0.000000e+00> : vector<128x128xf32>
    %73 = tpu.matmul %70, %72, %cst_46 {dimension_numbers = #tpu.dot_dimension_numbers<[1], [0], [0], [1], [0, 0, 1, 1], [], []>} : vector<128x128xf32>, vector<128x128xf32>, vector<128x128xf32> -> vector<128x128xf32>
    %74 = arith.addf %9, %73 : vector<128x128xf32>
    %c0_47 = arith.constant 0 : index
    %c24_48 = arith.constant 24 : index
    %c0_49 = arith.constant 0 : index
    %75 = vector.load %arg1[%c0_47, %c24_48, %c0_49] : memref<1x304x128xf32, #tpu.memory_space<vmem>>, vector<1x128x128xf32>
    %76 = vector.shape_cast %75 : vector<1x128x128xf32> to vector<128x128xf32>
    %c7_50 = arith.constant 7 : index
    %c0_51 = arith.constant 0 : index
    %c0_52 = arith.constant 0 : index
    %77 = vector.load %arg2[%c7_50, %c0_51, %c0_52] : memref<12x128x128xf32, #tpu.memory_space<vmem>>, vector<1x128x128xf32>
    %78 = vector.shape_cast %77 : vector<1x128x128xf32> to vector<128x128xf32>
    %cst_53 = arith.constant dense<0.000000e+00> : vector<128x128xf32>
    %79 = tpu.matmul %76, %78, %cst_53 {dimension_numbers = #tpu.dot_dimension_numbers<[1], [0], [0], [1], [0, 0, 1, 1], [], []>} : vector<128x128xf32>, vector<128x128xf32>, vector<128x128xf32> -> vector<128x128xf32>
    %80 = arith.addf %74, %79 : vector<128x128xf32>
    %c0_54 = arith.constant 0 : index
    %c25_55 = arith.constant 25 : index
    %c0_56 = arith.constant 0 : index
    %81 = vector.load %arg1[%c0_54, %c25_55, %c0_56] : memref<1x304x128xf32, #tpu.memory_space<vmem>>, vector<1x128x128xf32>
    %82 = vector.shape_cast %81 : vector<1x128x128xf32> to vector<128x128xf32>
    %cst_57 = arith.constant 0.000000e+00 : f32
    %83 = vector.shape_cast %6 : vector<128x1xi1> to vector<128x1xi1>
    %84 = vector.broadcast %83 : vector<128x1xi1> to vector<128x128xi1>
    %85 = vector.broadcast %cst_57 : f32 to vector<128x128xf32>
    %86 = arith.select %84, %82, %85 : vector<128x128xi1>, vector<128x128xf32>
    %c8_58 = arith.constant 8 : index
    %c0_59 = arith.constant 0 : index
    %c0_60 = arith.constant 0 : index
    %87 = vector.load %arg2[%c8_58, %c0_59, %c0_60] : memref<12x128x128xf32, #tpu.memory_space<vmem>>, vector<1x128x128xf32>
    %88 = vector.shape_cast %87 : vector<1x128x128xf32> to vector<128x128xf32>
    %cst_61 = arith.constant dense<0.000000e+00> : vector<128x128xf32>
    %89 = tpu.matmul %86, %88, %cst_61 {dimension_numbers = #tpu.dot_dimension_numbers<[1], [0], [0], [1], [0, 0, 1, 1], [], []>} : vector<128x128xf32>, vector<128x128xf32>, vector<128x128xf32> -> vector<128x128xf32>
    %90 = arith.addf %80, %89 : vector<128x128xf32>
    %c0_62 = arith.constant 0 : index
    %c39 = arith.constant 39 : index
    %c0_63 = arith.constant 0 : index
    %91 = vector.load %arg1[%c0_62, %c39, %c0_63] : memref<1x304x128xf32, #tpu.memory_space<vmem>>, vector<1x128x128xf32>
    %92 = vector.shape_cast %91 : vector<1x128x128xf32> to vector<128x128xf32>
    %cst_64 = arith.constant 0.000000e+00 : f32
    %93 = vector.shape_cast %4 : vector<128x1xi1> to vector<128x1xi1>
    %94 = vector.broadcast %93 : vector<128x1xi1> to vector<128x128xi1>
    %95 = vector.broadcast %cst_64 : f32 to vector<128x128xf32>
    %96 = arith.select %94, %92, %95 : vector<128x128xi1>, vector<128x128xf32>
    %c9_65 = arith.constant 9 : index
    %c0_66 = arith.constant 0 : index
    %c0_67 = arith.constant 0 : index
    %97 = vector.load %arg2[%c9_65, %c0_66, %c0_67] : memref<12x128x128xf32, #tpu.memory_space<vmem>>, vector<1x128x128xf32>
    %98 = vector.shape_cast %97 : vector<1x128x128xf32> to vector<128x128xf32>
    %cst_68 = arith.constant dense<0.000000e+00> : vector<128x128xf32>
    %99 = tpu.matmul %96, %98, %cst_68 {dimension_numbers = #tpu.dot_dimension_numbers<[1], [0], [0], [1], [0, 0, 1, 1], [], []>} : vector<128x128xf32>, vector<128x128xf32>, vector<128x128xf32> -> vector<128x128xf32>
    %100 = arith.addf %90, %99 : vector<128x128xf32>
    %c0_69 = arith.constant 0 : index
    %c40 = arith.constant 40 : index
    %c0_70 = arith.constant 0 : index
    %101 = vector.load %arg1[%c0_69, %c40, %c0_70] : memref<1x304x128xf32, #tpu.memory_space<vmem>>, vector<1x128x128xf32>
    %102 = vector.shape_cast %101 : vector<1x128x128xf32> to vector<128x128xf32>
    %c10 = arith.constant 10 : index
    %c0_71 = arith.constant 0 : index
    %c0_72 = arith.constant 0 : index
    %103 = vector.load %arg2[%c10, %c0_71, %c0_72] : memref<12x128x128xf32, #tpu.memory_space<vmem>>, vector<1x128x128xf32>
    %104 = vector.shape_cast %103 : vector<1x128x128xf32> to vector<128x128xf32>
    %cst_73 = arith.constant dense<0.000000e+00> : vector<128x128xf32>
    %105 = tpu.matmul %102, %104, %cst_73 {dimension_numbers = #tpu.dot_dimension_numbers<[1], [0], [0], [1], [0, 0, 1, 1], [], []>} : vector<128x128xf32>, vector<128x128xf32>, vector<128x128xf32> -> vector<128x128xf32>
    %106 = arith.addf %100, %105 : vector<128x128xf32>
    %c0_74 = arith.constant 0 : index
    %c41 = arith.constant 41 : index
    %c0_75 = arith.constant 0 : index
    %107 = vector.load %arg1[%c0_74, %c41, %c0_75] : memref<1x304x128xf32, #tpu.memory_space<vmem>>, vector<1x128x128xf32>
    %108 = vector.shape_cast %107 : vector<1x128x128xf32> to vector<128x128xf32>
    %cst_76 = arith.constant 0.000000e+00 : f32
    %109 = vector.shape_cast %6 : vector<128x1xi1> to vector<128x1xi1>
    %110 = vector.broadcast %109 : vector<128x1xi1> to vector<128x128xi1>
    %111 = vector.broadcast %cst_76 : f32 to vector<128x128xf32>
    %112 = arith.select %110, %108, %111 : vector<128x128xi1>, vector<128x128xf32>
    %c11 = arith.constant 11 : index
    %c0_77 = arith.constant 0 : index
    %c0_78 = arith.constant 0 : index
    %113 = vector.load %arg2[%c11, %c0_77, %c0_78] : memref<12x128x128xf32, #tpu.memory_space<vmem>>, vector<1x128x128xf32>
    %114 = vector.shape_cast %113 : vector<1x128x128xf32> to vector<128x128xf32>
    %cst_79 = arith.constant dense<0.000000e+00> : vector<128x128xf32>
    %115 = tpu.matmul %112, %114, %cst_79 {dimension_numbers = #tpu.dot_dimension_numbers<[1], [0], [0], [1], [0, 0, 1, 1], [], []>} : vector<128x128xf32>, vector<128x128xf32>, vector<128x128xf32> -> vector<128x128xf32>
    %116 = arith.addf %106, %115 : vector<128x128xf32>
    %c0_80 = arith.constant 0 : index
    %c1_81 = arith.constant 1 : index
    %c0_82 = arith.constant 0 : index
    %c0_83 = arith.constant 0 : index
    %117 = vector.load %arg4[%c0_80, %c1_81, %c0_82, %c0_83] : memref<1x2x256x128xf32, #tpu.memory_space<vmem>>, vector<1x1x128x128xf32>
    %118 = vector.shape_cast %117 : vector<1x1x128x128xf32> to vector<128x128xf32>
    %119 = vector.shape_cast %116 : vector<128x128xf32> to vector<1x1x128x128xf32>
    tpu.vector_store %arg4[%c0_80, %c1_81, %c0_82, %c0_83], %119 {strides = array<i32>} : memref<1x2x256x128xf32, #tpu.memory_space<vmem>>, vector<1x1x128x128xf32>,
    %c0_84 = arith.constant 0 : index
    %c151 = arith.constant 151 : index
    %c0_85 = arith.constant 0 : index
    %120 = vector.load %arg1[%c0_84, %c151, %c0_85] : memref<1x304x128xf32, #tpu.memory_space<vmem>>, vector<1x128x128xf32>
    %121 = vector.shape_cast %120 : vector<1x128x128xf32> to vector<128x128xf32>
    %cst_86 = arith.constant 0.000000e+00 : f32
    %122 = vector.shape_cast %4 : vector<128x1xi1> to vector<128x1xi1>
    %123 = vector.broadcast %122 : vector<128x1xi1> to vector<128x128xi1>
    %124 = vector.broadcast %cst_86 : f32 to vector<128x128xf32>
    %125 = arith.select %123, %121, %124 : vector<128x128xi1>, vector<128x128xf32>
    %c0_87 = arith.constant 0 : index
    %c0_88 = arith.constant 0 : index
    %c0_89 = arith.constant 0 : index
    %126 = vector.load %arg2[%c0_87, %c0_88, %c0_89] : memref<12x128x128xf32, #tpu.memory_space<vmem>>, vector<1x128x128xf32>
    %127 = vector.shape_cast %126 : vector<1x128x128xf32> to vector<128x128xf32>
    %cst_90 = arith.constant dense<0.000000e+00> : vector<128x128xf32>
    %128 = tpu.matmul %125, %127, %cst_90 {dimension_numbers = #tpu.dot_dimension_numbers<[1], [0], [0], [1], [0, 0, 1, 1], [], []>} : vector<128x128xf32>, vector<128x128xf32>, vector<128x128xf32> -> vector<128x128xf32>
    %129 = arith.addf %9, %128 : vector<128x128xf32>
    %c0_91 = arith.constant 0 : index
    %c152 = arith.constant 152 : index
    %c0_92 = arith.constant 0 : index
    %130 = vector.load %arg1[%c0_91, %c152, %c0_92] : memref<1x304x128xf32, #tpu.memory_space<vmem>>, vector<1x128x128xf32>
    %131 = vector.shape_cast %130 : vector<1x128x128xf32> to vector<128x128xf32>
    %c1_93 = arith.constant 1 : index
    %c0_94 = arith.constant 0 : index
    %c0_95 = arith.constant 0 : index
    %132 = vector.load %arg2[%c1_93, %c0_94, %c0_95] : memref<12x128x128xf32, #tpu.memory_space<vmem>>, vector<1x128x128xf32>
    %133 = vector.shape_cast %132 : vector<1x128x128xf32> to vector<128x128xf32>
    %cst_96 = arith.constant dense<0.000000e+00> : vector<128x128xf32>
    %134 = tpu.matmul %131, %133, %cst_96 {dimension_numbers = #tpu.dot_dimension_numbers<[1], [0], [0], [1], [0, 0, 1, 1], [], []>} : vector<128x128xf32>, vector<128x128xf32>, vector<128x128xf32> -> vector<128x128xf32>
    %135 = arith.addf %129, %134 : vector<128x128xf32>
    %c0_97 = arith.constant 0 : index
    %c153 = arith.constant 153 : index
    %c0_98 = arith.constant 0 : index
    %136 = vector.load %arg1[%c0_97, %c153, %c0_98] : memref<1x304x128xf32, #tpu.memory_space<vmem>>, vector<1x128x128xf32>
    %137 = vector.shape_cast %136 : vector<1x128x128xf32> to vector<128x128xf32>
    %cst_99 = arith.constant 0.000000e+00 : f32
    %138 = vector.shape_cast %6 : vector<128x1xi1> to vector<128x1xi1>
    %139 = vector.broadcast %138 : vector<128x1xi1> to vector<128x128xi1>
    %140 = vector.broadcast %cst_99 : f32 to vector<128x128xf32>
    %141 = arith.select %139, %137, %140 : vector<128x128xi1>, vector<128x128xf32>
    %c2_100 = arith.constant 2 : index
    %c0_101 = arith.constant 0 : index
    %c0_102 = arith.constant 0 : index
    %142 = vector.load %arg2[%c2_100, %c0_101, %c0_102] : memref<12x128x128xf32, #tpu.memory_space<vmem>>, vector<1x128x128xf32>
    %143 = vector.shape_cast %142 : vector<1x128x128xf32> to vector<128x128xf32>
    %cst_103 = arith.constant dense<0.000000e+00> : vector<128x128xf32>
    %144 = tpu.matmul %141, %143, %cst_103 {dimension_numbers = #tpu.dot_dimension_numbers<[1], [0], [0], [1], [0, 0, 1, 1], [], []>} : vector<128x128xf32>, vector<128x128xf32>, vector<128x128xf32> -> vector<128x128xf32>
    %145 = arith.addf %135, %144 : vector<128x128xf32>
    %c0_104 = arith.constant 0 : index
    %c135 = arith.constant 135 : index
    %c0_105 = arith.constant 0 : index
    %146 = vector.load %arg1[%c0_104, %c135, %c0_105] : memref<1x304x128xf32, #tpu.memory_space<vmem>>, vector<1x128x128xf32>
    %147 = vector.shape_cast %146 : vector<1x128x128xf32> to vector<128x128xf32>
    %cst_106 = arith.constant 0.000000e+00 : f32
    %148 = vector.shape_cast %4 : vector<128x1xi1> to vector<128x1xi1>
    %149 = vector.broadcast %148 : vector<128x1xi1> to vector<128x128xi1>
    %150 = vector.broadcast %cst_106 : f32 to vector<128x128xf32>
    %151 = arith.select %149, %147, %150 : vector<128x128xi1>, vector<128x128xf32>
    %c3_107 = arith.constant 3 : index
    %c0_108 = arith.constant 0 : index
    %c0_109 = arith.constant 0 : index
    %152 = vector.load %arg2[%c3_107, %c0_108, %c0_109] : memref<12x128x128xf32, #tpu.memory_space<vmem>>, vector<1x128x128xf32>
    %153 = vector.shape_cast %152 : vector<1x128x128xf32> to vector<128x128xf32>
    %cst_110 = arith.constant dense<0.000000e+00> : vector<128x128xf32>
    %154 = tpu.matmul %151, %153, %cst_110 {dimension_numbers = #tpu.dot_dimension_numbers<[1], [0], [0], [1], [0, 0, 1, 1], [], []>} : vector<128x128xf32>, vector<128x128xf32>, vector<128x128xf32> -> vector<128x128xf32>
    %155 = arith.addf %145, %154 : vector<128x128xf32>
    %c0_111 = arith.constant 0 : index
    %c136 = arith.constant 136 : index
    %c0_112 = arith.constant 0 : index
    %156 = vector.load %arg1[%c0_111, %c136, %c0_112] : memref<1x304x128xf32, #tpu.memory_space<vmem>>, vector<1x128x128xf32>
    %157 = vector.shape_cast %156 : vector<1x128x128xf32> to vector<128x128xf32>
    %c4_113 = arith.constant 4 : index
    %c0_114 = arith.constant 0 : index
    %c0_115 = arith.constant 0 : index
    %158 = vector.load %arg2[%c4_113, %c0_114, %c0_115] : memref<12x128x128xf32, #tpu.memory_space<vmem>>, vector<1x128x128xf32>
    %159 = vector.shape_cast %158 : vector<1x128x128xf32> to vector<128x128xf32>
    %cst_116 = arith.constant dense<0.000000e+00> : vector<128x128xf32>
    %160 = tpu.matmul %157, %159, %cst_116 {dimension_numbers = #tpu.dot_dimension_numbers<[1], [0], [0], [1], [0, 0, 1, 1], [], []>} : vector<128x128xf32>, vector<128x128xf32>, vector<128x128xf32> -> vector<128x128xf32>
    %161 = arith.addf %155, %160 : vector<128x128xf32>
    %c0_117 = arith.constant 0 : index
    %c137 = arith.constant 137 : index
    %c0_118 = arith.constant 0 : index
    %162 = vector.load %arg1[%c0_117, %c137, %c0_118] : memref<1x304x128xf32, #tpu.memory_space<vmem>>, vector<1x128x128xf32>
    %163 = vector.shape_cast %162 : vector<1x128x128xf32> to vector<128x128xf32>
    %cst_119 = arith.constant 0.000000e+00 : f32
    %164 = vector.shape_cast %6 : vector<128x1xi1> to vector<128x1xi1>
    %165 = vector.broadcast %164 : vector<128x1xi1> to vector<128x128xi1>
    %166 = vector.broadcast %cst_119 : f32 to vector<128x128xf32>
    %167 = arith.select %165, %163, %166 : vector<128x128xi1>, vector<128x128xf32>
    %c5_120 = arith.constant 5 : index
    %c0_121 = arith.constant 0 : index
    %c0_122 = arith.constant 0 : index
    %168 = vector.load %arg2[%c5_120, %c0_121, %c0_122] : memref<12x128x128xf32, #tpu.memory_space<vmem>>, vector<1x128x128xf32>
    %169 = vector.shape_cast %168 : vector<1x128x128xf32> to vector<128x128xf32>
    %cst_123 = arith.constant dense<0.000000e+00> : vector<128x128xf32>
    %170 = tpu.matmul %167, %169, %cst_123 {dimension_numbers = #tpu.dot_dimension_numbers<[1], [0], [0], [1], [0, 0, 1, 1], [], []>} : vector<128x128xf32>, vector<128x128xf32>, vector<128x128xf32> -> vector<128x128xf32>
    %171 = arith.addf %161, %170 : vector<128x128xf32>
    %c0_124 = arith.constant 0 : index
    %c0_125 = arith.constant 0 : index
    %c128 = arith.constant 128 : index
    %c0_126 = arith.constant 0 : index
    %172 = vector.load %arg4[%c0_124, %c0_125, %c128, %c0_126] : memref<1x2x256x128xf32, #tpu.memory_space<vmem>>, vector<1x1x128x128xf32>
    %173 = vector.shape_cast %172 : vector<1x1x128x128xf32> to vector<128x128xf32>
    %174 = vector.shape_cast %171 : vector<128x128xf32> to vector<1x1x128x128xf32>
    tpu.vector_store %arg4[%c0_124, %c0_125, %c128, %c0_126], %174 {strides = array<i32>} : memref<1x2x256x128xf32, #tpu.memory_space<vmem>>, vector<1x1x128x128xf32>,
    %c0_127 = arith.constant 0 : index
    %c151_128 = arith.constant 151 : index
    %c0_129 = arith.constant 0 : index
    %175 = vector.load %arg1[%c0_127, %c151_128, %c0_129] : memref<1x304x128xf32, #tpu.memory_space<vmem>>, vector<1x128x128xf32>
    %176 = vector.shape_cast %175 : vector<1x128x128xf32> to vector<128x128xf32>
    %cst_130 = arith.constant 0.000000e+00 : f32
    %177 = vector.shape_cast %4 : vector<128x1xi1> to vector<128x1xi1>
    %178 = vector.broadcast %177 : vector<128x1xi1> to vector<128x128xi1>
    %179 = vector.broadcast %cst_130 : f32 to vector<128x128xf32>
    %180 = arith.select %178, %176, %179 : vector<128x128xi1>, vector<128x128xf32>
    %c6_131 = arith.constant 6 : index
    %c0_132 = arith.constant 0 : index
    %c0_133 = arith.constant 0 : index
    %181 = vector.load %arg2[%c6_131, %c0_132, %c0_133] : memref<12x128x128xf32, #tpu.memory_space<vmem>>, vector<1x128x128xf32>
    %182 = vector.shape_cast %181 : vector<1x128x128xf32> to vector<128x128xf32>
    %cst_134 = arith.constant dense<0.000000e+00> : vector<128x128xf32>
    %183 = tpu.matmul %180, %182, %cst_134 {dimension_numbers = #tpu.dot_dimension_numbers<[1], [0], [0], [1], [0, 0, 1, 1], [], []>} : vector<128x128xf32>, vector<128x128xf32>, vector<128x128xf32> -> vector<128x128xf32>
    %184 = arith.addf %9, %183 : vector<128x128xf32>
    %c0_135 = arith.constant 0 : index
    %c152_136 = arith.constant 152 : index
    %c0_137 = arith.constant 0 : index
    %185 = vector.load %arg1[%c0_135, %c152_136, %c0_137] : memref<1x304x128xf32, #tpu.memory_space<vmem>>, vector<1x128x128xf32>
    %186 = vector.shape_cast %185 : vector<1x128x128xf32> to vector<128x128xf32>
    %c7_138 = arith.constant 7 : index
    %c0_139 = arith.constant 0 : index
    %c0_140 = arith.constant 0 : index
    %187 = vector.load %arg2[%c7_138, %c0_139, %c0_140] : memref<12x128x128xf32, #tpu.memory_space<vmem>>, vector<1x128x128xf32>
    %188 = vector.shape_cast %187 : vector<1x128x128xf32> to vector<128x128xf32>
    %cst_141 = arith.constant dense<0.000000e+00> : vector<128x128xf32>
    %189 = tpu.matmul %186, %188, %cst_141 {dimension_numbers = #tpu.dot_dimension_numbers<[1], [0], [0], [1], [0, 0, 1, 1], [], []>} : vector<128x128xf32>, vector<128x128xf32>, vector<128x128xf32> -> vector<128x128xf32>
    %190 = arith.addf %184, %189 : vector<128x128xf32>
    %c0_142 = arith.constant 0 : index
    %c153_143 = arith.constant 153 : index
    %c0_144 = arith.constant 0 : index
    %191 = vector.load %arg1[%c0_142, %c153_143, %c0_144] : memref<1x304x128xf32, #tpu.memory_space<vmem>>, vector<1x128x128xf32>
    %192 = vector.shape_cast %191 : vector<1x128x128xf32> to vector<128x128xf32>
    %cst_145 = arith.constant 0.000000e+00 : f32
    %193 = vector.shape_cast %6 : vector<128x1xi1> to vector<128x1xi1>
    %194 = vector.broadcast %193 : vector<128x1xi1> to vector<128x128xi1>
    %195 = vector.broadcast %cst_145 : f32 to vector<128x128xf32>
    %196 = arith.select %194, %192, %195 : vector<128x128xi1>, vector<128x128xf32>
    %c8_146 = arith.constant 8 : index
    %c0_147 = arith.constant 0 : index
    %c0_148 = arith.constant 0 : index
    %197 = vector.load %arg2[%c8_146, %c0_147, %c0_148] : memref<12x128x128xf32, #tpu.memory_space<vmem>>, vector<1x128x128xf32>
    %198 = vector.shape_cast %197 : vector<1x128x128xf32> to vector<128x128xf32>
    %cst_149 = arith.constant dense<0.000000e+00> : vector<128x128xf32>
    %199 = tpu.matmul %196, %198, %cst_149 {dimension_numbers = #tpu.dot_dimension_numbers<[1], [0], [0], [1], [0, 0, 1, 1], [], []>} : vector<128x128xf32>, vector<128x128xf32>, vector<128x128xf32> -> vector<128x128xf32>
    %200 = arith.addf %190, %199 : vector<128x128xf32>
    %c0_150 = arith.constant 0 : index
    %c167 = arith.constant 167 : index
    %c0_151 = arith.constant 0 : index
    %201 = vector.load %arg1[%c0_150, %c167, %c0_151] : memref<1x304x128xf32, #tpu.memory_space<vmem>>, vector<1x128x128xf32>
    %202 = vector.shape_cast %201 : vector<1x128x128xf32> to vector<128x128xf32>
    %cst_152 = arith.constant 0.000000e+00 : f32
    %203 = vector.shape_cast %4 : vector<128x1xi1> to vector<128x1xi1>
    %204 = vector.broadcast %203 : vector<128x1xi1> to vector<128x128xi1>
    %205 = vector.broadcast %cst_152 : f32 to vector<128x128xf32>
    %206 = arith.select %204, %202, %205 : vector<128x128xi1>, vector<128x128xf32>
    %c9_153 = arith.constant 9 : index
    %c0_154 = arith.constant 0 : index
    %c0_155 = arith.constant 0 : index
    %207 = vector.load %arg2[%c9_153, %c0_154, %c0_155] : memref<12x128x128xf32, #tpu.memory_space<vmem>>, vector<1x128x128xf32>
    %208 = vector.shape_cast %207 : vector<1x128x128xf32> to vector<128x128xf32>
    %cst_156 = arith.constant dense<0.000000e+00> : vector<128x128xf32>
    %209 = tpu.matmul %206, %208, %cst_156 {dimension_numbers = #tpu.dot_dimension_numbers<[1], [0], [0], [1], [0, 0, 1, 1], [], []>} : vector<128x128xf32>, vector<128x128xf32>, vector<128x128xf32> -> vector<128x128xf32>
    %210 = arith.addf %200, %209 : vector<128x128xf32>
    %c0_157 = arith.constant 0 : index
    %c168 = arith.constant 168 : index
    %c0_158 = arith.constant 0 : index
    %211 = vector.load %arg1[%c0_157, %c168, %c0_158] : memref<1x304x128xf32, #tpu.memory_space<vmem>>, vector<1x128x128xf32>
    %212 = vector.shape_cast %211 : vector<1x128x128xf32> to vector<128x128xf32>
    %c10_159 = arith.constant 10 : index
    %c0_160 = arith.constant 0 : index
    %c0_161 = arith.constant 0 : index
    %213 = vector.load %arg2[%c10_159, %c0_160, %c0_161] : memref<12x128x128xf32, #tpu.memory_space<vmem>>, vector<1x128x128xf32>
    %214 = vector.shape_cast %213 : vector<1x128x128xf32> to vector<128x128xf32>
    %cst_162 = arith.constant dense<0.000000e+00> : vector<128x128xf32>
    %215 = tpu.matmul %212, %214, %cst_162 {dimension_numbers = #tpu.dot_dimension_numbers<[1], [0], [0], [1], [0, 0, 1, 1], [], []>} : vector<128x128xf32>, vector<128x128xf32>, vector<128x128xf32> -> vector<128x128xf32>
    %216 = arith.addf %210, %215 : vector<128x128xf32>
    %c0_163 = arith.constant 0 : index
    %c169 = arith.constant 169 : index
    %c0_164 = arith.constant 0 : index
    %217 = vector.load %arg1[%c0_163, %c169, %c0_164] : memref<1x304x128xf32, #tpu.memory_space<vmem>>, vector<1x128x128xf32>
    %218 = vector.shape_cast %217 : vector<1x128x128xf32> to vector<128x128xf32>
    %cst_165 = arith.constant 0.000000e+00 : f32
    %219 = vector.shape_cast %6 : vector<128x1xi1> to vector<128x1xi1>
    %220 = vector.broadcast %219 : vector<128x1xi1> to vector<128x128xi1>
    %221 = vector.broadcast %cst_165 : f32 to vector<128x128xf32>
    %222 = arith.select %220, %218, %221 : vector<128x128xi1>, vector<128x128xf32>
    %c11_166 = arith.constant 11 : index
    %c0_167 = arith.constant 0 : index
    %c0_168 = arith.constant 0 : index
    %223 = vector.load %arg2[%c11_166, %c0_167, %c0_168] : memref<12x128x128xf32, #tpu.memory_space<vmem>>, vector<1x128x128xf32>
    %224 = vector.shape_cast %223 : vector<1x128x128xf32> to vector<128x128xf32>
    %cst_169 = arith.constant dense<0.000000e+00> : vector<128x128xf32>
    %225 = tpu.matmul %222, %224, %cst_169 {dimension_numbers = #tpu.dot_dimension_numbers<[1], [0], [0], [1], [0, 0, 1, 1], [], []>} : vector<128x128xf32>, vector<128x128xf32>, vector<128x128xf32> -> vector<128x128xf32>
    %226 = arith.addf %216, %225 : vector<128x128xf32>
    %c0_170 = arith.constant 0 : index
    %c1_171 = arith.constant 1 : index
    %c128_172 = arith.constant 128 : index
    %c0_173 = arith.constant 0 : index
    %227 = vector.load %arg4[%c0_170, %c1_171, %c128_172, %c0_173] : memref<1x2x256x128xf32, #tpu.memory_space<vmem>>, vector<1x1x128x128xf32>
    %228 = vector.shape_cast %227 : vector<1x1x128x128xf32> to vector<128x128xf32>
    %229 = vector.shape_cast %226 : vector<128x128xf32> to vector<1x1x128x128xf32>
    tpu.vector_store %arg4[%c0_170, %c1_171, %c128_172, %c0_173], %229 {strides = array<i32>} : memref<1x2x256x128xf32, #tpu.memory_space<vmem>>, vector<1x1x128x128xf32>,
    return
  }
  func.func @transform_0(%arg0: i32) -> (i32, i32, i32) {
    %c0_i32 = arith.constant 0 : i32
    %c0_i32_0 = arith.constant 0 : i32
    %c0_i32_1 = arith.constant 0 : i32
    return %arg0, %c0_i32, %c0_i32_0 : i32, i32, i32
  }
  func.func @transform_1(%arg0: i32) -> (i32, i32, i32) {
    %c0_i32 = arith.constant 0 : i32
    %c0_i32_0 = arith.constant 0 : i32
    %c0_i32_1 = arith.constant 0 : i32
    %c0_i32_2 = arith.constant 0 : i32
    return %c0_i32, %c0_i32_0, %c0_i32_1 : i32, i32, i32
  }
  func.func @transform_2(%arg0: i32) -> (i32, i32) {
    %c0_i32 = arith.constant 0 : i32
    %c0_i32_0 = arith.constant 0 : i32
    %c0_i32_1 = arith.constant 0 : i32
    return %c0_i32, %c0_i32_0 : i32, i32
  }
  func.func @transform_3(%arg0: i32) -> (i32, i32, i32, i32) {
    %c0_i32 = arith.constant 0 : i32
    %c0_i32_0 = arith.constant 0 : i32
    %c0_i32_1 = arith.constant 0 : i32
    %c0_i32_2 = arith.constant 0 : i32
    return %arg0, %c0_i32, %c0_i32_0, %c0_i32_1 : i32, i32, i32, i32
  }
}

</mosaic_0001>

<llo_original>
// kernel: lfm_forward.3
$region0: #{lfm_forward.3}
  #allocation0 [shape = 'u32[]', space=smem, size = 0x4, offset = 0x4, fixed_abs, tag = 'smem constant byte address 0x4 - core index']
  #allocation1 [shape = 'u32[144,128]{1,0:T(1,128)}', space=vmem, size = 0x12000, scoped, tag = 'internal scratch']
  %s0 = inlined_call_operand.vmem [shape: f32[2,32,64], index: 0, kind: input, shape index: {}]
  %s1 = inlined_call_operand.vmem [shape: f32[12,64,128], index: 1, kind: input, shape index: {}]
  %s2 = inlined_call_operand.vmem [shape: f32[1,128], index: 2, kind: input, shape index: {}]
  %s3 = inlined_call_operand.vmem [shape: f32[2,2,16,128], index: 3, kind: output, shape index: {}]
  %s4 = sld [smem:[#allocation0]]
  $region45: #{lfm_forward.3} parent=0
    _
  %s6 = ssub.s32 1, %s4
  %s7 = scalar_select 0, %s6, %s4
  loop: start=0, step=1, limit=4
  $region2: #{lfm_forward.3} parent=0 // loop_pre_header
    _
  $region3: #{lfm_forward.3} parent=0 // loop_header
    %s9 = sphi 0, %s13
    %p10 = scmp.ge.s32.totalorder %s9, 4
    %s19 = sphi 0, %s21
    %s22 = sphi 0, %s19
    %s23 = sphi 0, %s22
    %s39 = sphi 0, %s23
    %s43 = sphi 0, %s43
    %s45 = sphi 0, %s43
    %s46 = sphi 0, %s45
    %s60 = sphi 0, %s46
    %s64 = sphi 0, %s64
    %s66 = sphi 0, %s64
    %s67 = sphi 0, %s66
    %s81 = sphi 0, %s67
    %s87 = sphi 0, %s89
    %s90 = sphi 0, %s87
    %s91 = sphi 0, %s90
    %s107 = sphi 0, %s91
  $region4: #{lfm_forward.3} parent=0 // loop_header_branch
    %12 = sbr.rel (%p10) target = $region8
  $region5: #{lfm_forward.3} parent=0 // loop_body
    %s14 = ssub.s32 %s9, 1
    %s15 = ssub.s32 %s9, 2
    %s16 = sadd.s32 %s9, 1
    %s17 = ssub.s32 %s9, %s16
    %p18 = scmp.eq.s32.totalorder %s17, 0
    %s20 = sadd.s32 %s19, 1
    %s21 = scalar_select %p18, %s19, %s20
    %p24 = pneg %p18
    %p25 = scmp.eq.s32.totalorder %s9, 1
    %p26 = por %p24, %p25
    %p27 = scmp.ne.s32.totalorder %s19, %s22
    %p28 = scmp.eq.s32.totalorder %s9, 0
    %p29 = por %p27, %p28
    %p30 = scmp.ne.s32.totalorder %s19, %s22
    %p31 = scmp.eq.s32.totalorder %s14, 1
    %p32 = por %p30, %p31
    %p33 = scmp.ne.s32.totalorder %s22, %s23
    %p34 = scmp.eq.s32.totalorder %s14, 0
    %p35 = por %p33, %p34
    %p36 = scmp.ne.s32.totalorder %s22, %s23
    %p37 = scmp.eq.s32.totalorder %s15, 1
    %p38 = por %p36, %p37
    %p40 = scmp.ne.s32.totalorder %s23, %s39
    %p41 = scmp.eq.s32.totalorder %s15, 0
    %p42 = por %p40, %p41
    %s44 = sadd.s32 %s43, 1
    %p47 = scmp.eq.s32.totalorder %s9, 1
    %p48 = scmp.ne.s32.totalorder %s43, %s45
    %p49 = scmp.eq.s32.totalorder %s9, 0
    %p50 = por %p48, %p49
    %p51 = scmp.ne.s32.totalorder %s43, %s45
    %p52 = scmp.eq.s32.totalorder %s14, 1
    %p53 = por %p51, %p52
    %p54 = scmp.ne.s32.totalorder %s45, %s46
    %p55 = scmp.eq.s32.totalorder %s14, 0
    %p56 = por %p54, %p55
    %p57 = scmp.ne.s32.totalorder %s45, %s46
    %p58 = scmp.eq.s32.totalorder %s15, 1
    %p59 = por %p57, %p58
    %p61 = scmp.ne.s32.totalorder %s46, %s60
    %p62 = scmp.eq.s32.totalorder %s15, 0
    %p63 = por %p61, %p62
    %s65 = sadd.s32 %s64, 1
    %p68 = scmp.eq.s32.totalorder %s9, 1
    %p69 = scmp.ne.s32.totalorder %s64, %s66
    %p70 = scmp.eq.s32.totalorder %s9, 0
    %p71 = por %p69, %p70
    %p72 = scmp.ne.s32.totalorder %s64, %s66
    %p73 = scmp.eq.s32.totalorder %s14, 1
    %p74 = por %p72, %p73
    %p75 = scmp.ne.s32.totalorder %s66, %s67
    %p76 = scmp.eq.s32.totalorder %s14, 0
    %p77 = por %p75, %p76
    %p78 = scmp.ne.s32.totalorder %s66, %s67
    %p79 = scmp.eq.s32.totalorder %s15, 1
    %p80 = por %p78, %p79
    %p82 = scmp.ne.s32.totalorder %s67, %s81
    %p83 = scmp.eq.s32.totalorder %s15, 0
    %p84 = por %p82, %p83
    %s85 = ssub.s32 %s9, %s16
    %p86 = scmp.eq.s32.totalorder %s85, 0
    %s88 = sadd.s32 %s87, 1
    %s89 = scalar_select %p86, %s87, %s88
    %p92 = pneg %p86
    %p93 = scmp.eq.s32.totalorder %s9, 1
    %p94 = por %p92, %p93
    %p95 = scmp.ne.s32.totalorder %s87, %s90
    %p96 = scmp.eq.s32.totalorder %s9, 0
    %p97 = por %p95, %p96
    %p98 = scmp.ne.s32.totalorder %s87, %s90
    %p99 = scmp.eq.s32.totalorder %s14, 1
    %p100 = por %p98, %p99
    %p101 = scmp.ne.s32.totalorder %s90, %s91
    %p102 = scmp.eq.s32.totalorder %s14, 0
    %p103 = por %p101, %p102
    %p104 = scmp.ne.s32.totalorder %s90, %s91
    %p105 = scmp.eq.s32.totalorder %s15, 1
    %p106 = por %p104, %p105
    %p108 = scmp.ne.s32.totalorder %s91, %s107
    %p109 = scmp.eq.s32.totalorder %s15, 0
    %p110 = por %p108, %p109
    %p111 = scmp.le.s32.totalorder 1, %s9
    %p112 = scmp.lt.s32.totalorder %s9, 3
    %p113 = pnand %p111, %p112
    %p114 = pneg %p113
    // Predicated region
    $region9: #{lfm_forward.3} parent=5 // pred_check
      _
    $region10: #{lfm_forward.3} parent=5 // pred_check_branch
      %116 = sbr.rel (%p113) target = $region12
    $region11: #{lfm_forward.3} parent=5 // pred_region
      %s117 = ssub.s32 %s9, 1
      // Predicated region
      $region13: #{lfm_forward.3} parent=11 // pred_check
        %p118 = pneg %p56
      $region14: #{lfm_forward.3} parent=11 // pred_check_branch
        %120 = sbr.rel (%p118) target = $region16
      $region15: #{lfm_forward.3} parent=11 // pred_region
        _
      $region16: #{lfm_forward.3} parent=11 // pred_fallthru
        _
      // Predicated region
      $region17: #{lfm_forward.3} parent=11 // pred_check
        %p121 = pneg %p77
      $region18: #{lfm_forward.3} parent=11 // pred_check_branch
        %123 = sbr.rel (%p121) target = $region20
      $region19: #{lfm_forward.3} parent=11 // pred_region
        _
      $region20: #{lfm_forward.3} parent=11 // pred_fallthru
        _
    $region12: #{lfm_forward.3} parent=5 // pred_fallthru
      _
    %p124 = scmp.lt.s32.totalorder %s9, 2
    // Predicated region
    $region21: #{lfm_forward.3} parent=5 // pred_check
      %p125 = pneg %p124
    $region22: #{lfm_forward.3} parent=5 // pred_check_branch
      %127 = sbr.rel (%p125) target = $region24
    $region23: #{lfm_forward.3} parent=5 // pred_region
      // Predicated region
      $region25: #{lfm_forward.3} parent=23 // pred_check
        %p128 = pneg %p29
      $region26: #{lfm_forward.3} parent=23 // pred_check_branch
        %130 = sbr.rel (%p128) target = $region28
      $region27: #{lfm_forward.3} parent=23 // pred_region
        %p131 = scmp.lt.s32.totalorder %s9, 1
        %s132 = scalar_select %p131, %s9, 1
        %s133 = smul.addr %s132, 4
        %s134 = smul.addr %s133, 8
        %s135 = scalar_lea.vmem %s0, %s134
      $region28: #{lfm_forward.3} parent=23 // pred_fallthru
        _
    $region24: #{lfm_forward.3} parent=5 // pred_fallthru
      _
    %p136 = scmp.le.s32.totalorder 1, %s9
    %p137 = scmp.lt.s32.totalorder %s9, 3
    %p138 = pnand %p136, %p137
    %p139 = pneg %p138
    // Predicated region
    $region29: #{lfm_forward.3} parent=5 // pred_check
      _
    $region30: #{lfm_forward.3} parent=5 // pred_check_branch
      %141 = sbr.rel (%p138) target = $region32
    $region31: #{lfm_forward.3} parent=5 // pred_region
      %s142 = ssub.s32 %s9, 1
      %p143 = scmp.lt.s32.totalorder %s14, 1
      %s144 = scalar_select %p143, %s14, 1
      %s145 = smul.addr %s144, 4
      %s146 = smul.addr %s145, 8
      %s147 = scalar_lea.vmem %s0, %s146
      %p148 = pneg %p35
      %p149 = pneg %p32
      %p150 = pneg %p56
      %p151 = pneg %p53
      %p152 = pneg %p77
      %p153 = pneg %p74
      %p154 = pneg %p103
      %p155 = pneg %p100
      %p156 = scmp.lt.s32.totalorder %s14, 1
      %s157 = scalar_select %p156, %s14, 1
      %s158 = smul.addr %s157, 4
      %s159 = smul.addr %s158, 8
      %s160 = scalar_lea.vmem %s3, %s159
      %p161 = scmp.lt.s32.totalorder %s14, 1
      %s162 = scalar_select %p161, %s14, 1
      %s163 = smul.addr %s162, 4
      %s164 = smul.addr %s163, 8
      %s165 = scalar_lea.vmem %s0, %s164
      %p166 = scmp.lt.s32.totalorder %s14, 1
      %s167 = scalar_select %p166, %s14, 1
      %s168 = smul.addr %s167, 4
      %s169 = smul.addr %s168, 8
      %s170 = scalar_lea.vmem %s3, %s169
      %v171 = vlaneseq
      %v172 = vshrl.u32 %v171, 7
      %v173 = vadd.s32 %v172, 8
      %v174 = vand.u32 %v172, 3
      %v175 = vand.u32 %v173, 3
      %vm176 = vcmp.ne.s32.totalorder %v174, 0
      %vm177 = vcmp.ne.s32.totalorder %v175, 0
      %vm178 = vcmp.ne.s32.totalorder %v174, 3
      %vm179 = vcmp.ne.s32.totalorder %v175, 3
      %v180 = vld [vmem:[%s2] sm:$0x1]
      %v182 = vlaneseq
      %v183 = vshrl.u32 %v182, 7
      %v184 = vsub.s32 0, %v183
      %v185 = vrot.slane %v180, %v184
      %v187 = vld [vmem:[%s165 + $0x7] sm:$0xff]
      %v188 = vld [vmem:[%s165 + $0xf] sm:$0xff]
      %v189 = vsel %vm176, 1, 0
      %v190 = vsel %vm177, 1, 0
      %vm191 = vcmp.eq.s32.totalorder %v189, 1
      %vm192 = vcmp.eq.s32.totalorder %v190, 1
      %v193 = vsel %vm191, %v187, 0.0
      %v194 = vsel %vm192, %v188, 0.0
      %v195 = vld [vmem:[%s1] sm:$0xff]
      %v196 = vld [vmem:[%s1 + $0x8] sm:$0xff]
      %v197 = vld [vmem:[%s1 + $0x10] sm:$0xff]
      %v198 = vld [vmem:[%s1 + $0x18] sm:$0xff]
      %v199 = vld [vmem:[%s1 + $0x20] sm:$0xff]
      %v200 = vld [vmem:[%s1 + $0x28] sm:$0xff]
      %v201 = vld [vmem:[%s1 + $0x30] sm:$0xff]
      %v202 = vld [vmem:[%s1 + $0x38] sm:$0xff]
      %vm203 = vcmask 523264
      %v205 = vsel %vm203, %v193, 0
      %v208 = vsel %vm203, %v194, 0
      %210 = vmatprep.subr.mxu0 0.0
      %211 = vmatpush1.msra.mxu0 0.0
      %212 = vmatprep.subr.mxu0 0.0
      %213 = vmatpush1.msra.mxu0 0.0
      %214 = vmatprep.subr.mxu0 0.0
      %215 = vmatpush1.msra.mxu0 0.0
      %216 = vmatprep.subr.mxu0 0.0
      %217 = vmatpush1.msra.mxu0 0.0
      %218 = vmatprep.subr.mxu0 0.0
      %219 = vmatpush1.msra.mxu0 0.0
      %220 = vmatprep.subr.mxu0 0.0
      %221 = vmatpush1.msra.mxu0 0.0
      %222 = vmatprep.subr.mxu0 0.0
      %223 = vmatpush1.msra.mxu0 0.0
      %224 = vmatprep.subr.mxu0 0.0
      %225 = vmatpush1.msra.mxu0 0.0
      %226 = vmatprep.subr.mxu0 0.0
      %227 = vmatpush1.msra.mxu0 %v202
      %228 = vmatprep.subr.mxu0 0.0
      %229 = vmatpush1.msra.mxu0 %v201
      %230 = vmatprep.subr.mxu0 0.0
      %231 = vmatpush1.msra.mxu0 %v200
      %232 = vmatprep.subr.mxu0 0.0
      %233 = vmatpush1.msra.mxu0 %v199
      %234 = vmatprep.subr.mxu0 0.0
      %235 = vmatpush1.msra.mxu0 %v198
      %236 = vmatprep.subr.mxu0 0.0
      %237 = vmatpush1.msra.mxu0 %v197
      %238 = vmatprep.subr.mxu0 0.0
      %239 = vmatpush1.msra.mxu0 %v196
      %240 = vmatprep.subr.mxu0 0.0
      %241 = vmatpush1.msra.mxu0 %v195
      %242 = vmatprep.subr.mxu0 0.0
      %243 = vmatpush2.msra.mxu0 0.0
      %244 = vmatprep.subr.mxu0 0.0
      %245 = vmatpush2.msra.mxu0 0.0
      %246 = vmatprep.subr.mxu0 0.0
      %247 = vmatpush2.msra.mxu0 0.0
      %248 = vmatprep.subr.mxu0 0.0
      %249 = vmatpush2.msra.mxu0 0.0
      %250 = vmatprep.subr.mxu0 0.0
      %251 = vmatpush2.msra.mxu0 0.0
      %252 = vmatprep.subr.mxu0 0.0
      %253 = vmatpush2.msra.mxu0 0.0
      %254 = vmatprep.subr.mxu0 0.0
      %255 = vmatpush2.msra.mxu0 0.0
      %256 = vmatprep.subr.mxu0 0.0
      %257 = vmatpush2.msra.mxu0 0.0
      %258 = vmatprep.subr.mxu0 0.0
      %259 = vmatpush2.msra.mxu0 0.0
      %260 = vmatprep.subr.mxu0 0.0
      %261 = vmatpush2.msra.mxu0 0.0
      %262 = vmatprep.subr.mxu0 0.0
      %263 = vmatpush2.msra.mxu0 0.0
      %264 = vmatprep.subr.mxu0 0.0
      %265 = vmatpush2.msra.mxu0 0.0
      %266 = vmatprep.subr.mxu0 0.0
      %267 = vmatpush2.msra.mxu0 0.0
      %268 = vmatprep.subr.mxu0 0.0
      %269 = vmatpush2.msra.mxu0 0.0
      %270 = vmatprep.subr.mxu0 0.0
      %271 = vmatpush2.msra.mxu0 0.0
      %272 = vmatprep.subr.mxu0 0.0
      %273 = vmatpush2.msra.mxu0 0.0
      %274 = vmatprep.mubr.f32.mxu0 0.0
      %275 = vmatmul.mubr.f32.gmra.mxu0 %v205
      %v276 = vpop.f32.mrf.mxu0
      %v277 = vadd.f32 0.0, %v276
      %v278 = vpop.f32.mrf.mxu0
      %279 = vmatprep.mubr.f32.mxu0 0.0
      %280 = vmatmul.mubr.f32.gmra.mxu0 %v208
      %v281 = vpop.f32.mrf.mxu0
      %v282 = vadd.f32 0.0, %v281
      %v283 = vpop.f32.mrf.mxu0
      %284 = vdwg.mxu0
      %v285 = vadd.f32 %v185, %v277
      %v286 = vadd.f32 %v185, %v282
      %v287 = vld [vmem:[%s165 + $0x8] sm:$0xff]
      %v288 = vld [vmem:[%s165 + $0x10] sm:$0xff]
      %s289 = scalar_lea.vmem %s1, 64
      %v290 = vld [vmem:[%s289] sm:$0xff]
      %v291 = vld [vmem:[%s289 + $0x8] sm:$0xff]
      %v292 = vld [vmem:[%s289 + $0x10] sm:$0xff]
      %v293 = vld [vmem:[%s289 + $0x18] sm:$0xff]
      %v294 = vld [vmem:[%s289 + $0x20] sm:$0xff]
      %v295 = vld [vmem:[%s289 + $0x28] sm:$0xff]
      %v296 = vld [vmem:[%s289 + $0x30] sm:$0xff]
      %v297 = vld [vmem:[%s289 + $0x38] sm:$0xff]
      %v299 = vsel %vm203, %v287, 0
      %v302 = vsel %vm203, %v288, 0
      %304 = vmatprep.subr.mxu0 0.0
      %305 = vmatpush1.msra.mxu0 0.0
      %306 = vmatprep.subr.mxu0 0.0
      %307 = vmatpush1.msra.mxu0 0.0
      %308 = vmatprep.subr.mxu0 0.0
      %309 = vmatpush1.msra.mxu0 0.0
      %310 = vmatprep.subr.mxu0 0.0
      %311 = vmatpush1.msra.mxu0 0.0
      %312 = vmatprep.subr.mxu0 0.0
      %313 = vmatpush1.msra.mxu0 0.0
      %314 = vmatprep.subr.mxu0 0.0
      %315 = vmatpush1.msra.mxu0 0.0
      %316 = vmatprep.subr.mxu0 0.0
      %317 = vmatpush1.msra.mxu0 0.0
      %318 = vmatprep.subr.mxu0 0.0
      %319 = vmatpush1.msra.mxu0 0.0
      %320 = vmatprep.subr.mxu0 0.0
      %321 = vmatpush1.msra.mxu0 %v297
      %322 = vmatprep.subr.mxu0 0.0
      %323 = vmatpush1.msra.mxu0 %v296
      %324 = vmatprep.subr.mxu0 0.0
      %325 = vmatpush1.msra.mxu0 %v295
      %326 = vmatprep.subr.mxu0 0.0
      %327 = vmatpush1.msra.mxu0 %v294
      %328 = vmatprep.subr.mxu0 0.0
      %329 = vmatpush1.msra.mxu0 %v293
      %330 = vmatprep.subr.mxu0 0.0
      %331 = vmatpush1.msra.mxu0 %v292
      %332 = vmatprep.subr.mxu0 0.0
      %333 = vmatpush1.msra.mxu0 %v291
      %334 = vmatprep.subr.mxu0 0.0
      %335 = vmatpush1.msra.mxu0 %v290
      %336 = vmatprep.subr.mxu0 0.0
      %337 = vmatpush2.msra.mxu0 0.0
      %338 = vmatprep.subr.mxu0 0.0
      %339 = vmatpush2.msra.mxu0 0.0
      %340 = vmatprep.subr.mxu0 0.0
      %341 = vmatpush2.msra.mxu0 0.0
      %342 = vmatprep.subr.mxu0 0.0
      %343 = vmatpush2.msra.mxu0 0.0
      %344 = vmatprep.subr.mxu0 0.0
      %345 = vmatpush2.msra.mxu0 0.0
      %346 = vmatprep.subr.mxu0 0.0
      %347 = vmatpush2.msra.mxu0 0.0
      %348 = vmatprep.subr.mxu0 0.0
      %349 = vmatpush2.msra.mxu0 0.0
      %350 = vmatprep.subr.mxu0 0.0
      %351 = vmatpush2.msra.mxu0 0.0
      %352 = vmatprep.subr.mxu0 0.0
      %353 = vmatpush2.msra.mxu0 0.0
      %354 = vmatprep.subr.mxu0 0.0
      %355 = vmatpush2.msra.mxu0 0.0
      %356 = vmatprep.subr.mxu0 0.0
      %357 = vmatpush2.msra.mxu0 0.0
      %358 = vmatprep.subr.mxu0 0.0
      %359 = vmatpush2.msra.mxu0 0.0
      %360 = vmatprep.subr.mxu0 0.0
      %361 = vmatpush2.msra.mxu0 0.0
      %362 = vmatprep.subr.mxu0 0.0
      %363 = vmatpush2.msra.mxu0 0.0
      %364 = vmatprep.subr.mxu0 0.0
      %365 = vmatpush2.msra.mxu0 0.0
      %366 = vmatprep.subr.mxu0 0.0
      %367 = vmatpush2.msra.mxu0 0.0
      %368 = vmatprep.mubr.f32.mxu0 0.0
      %369 = vmatmul.mubr.f32.gmra.mxu0 %v299
      %v370 = vpop.f32.mrf.mxu0
      %v371 = vadd.f32 0.0, %v370
      %v372 = vpop.f32.mrf.mxu0
      %373 = vmatprep.mubr.f32.mxu0 0.0
      %374 = vmatmul.mubr.f32.gmra.mxu0 %v302
      %v375 = vpop.f32.mrf.mxu0
      %v376 = vadd.f32 0.0, %v375
      %v377 = vpop.f32.mrf.mxu0
      %378 = vdwg.mxu0
      %v379 = vadd.f32 %v285, %v371
      %v380 = vadd.f32 %v286, %v376
      %v381 = vld [vmem:[%s165 + $0x9] sm:$0xff]
      %v382 = vld [vmem:[%s165 + $0x11] sm:$0xff]
      %v383 = vsel %vm178, 1, 0
      %v384 = vsel %vm179, 1, 0
      %vm385 = vcmp.eq.s32.totalorder %v383, 1
      %vm386 = vcmp.eq.s32.totalorder %v384, 1
      %v387 = vsel %vm385, %v381, 0.0
      %v388 = vsel %vm386, %v382, 0.0
      %s389 = scalar_lea.vmem %s1, 128
      %v390 = vld [vmem:[%s389] sm:$0xff]
      %v391 = vld [vmem:[%s389 + $0x8] sm:$0xff]
      %v392 = vld [vmem:[%s389 + $0x10] sm:$0xff]
      %v393 = vld [vmem:[%s389 + $0x18] sm:$0xff]
      %v394 = vld [vmem:[%s389 + $0x20] sm:$0xff]
      %v395 = vld [vmem:[%s389 + $0x28] sm:$0xff]
      %v396 = vld [vmem:[%s389 + $0x30] sm:$0xff]
      %v397 = vld [vmem:[%s389 + $0x38] sm:$0xff]
      %v399 = vsel %vm203, %v387, 0
      %v402 = vsel %vm203, %v388, 0
      %404 = vmatprep.subr.mxu0 0.0
      %405 = vmatpush1.msra.mxu0 0.0
      %406 = vmatprep.subr.mxu0 0.0
      %407 = vmatpush1.msra.mxu0 0.0
      %408 = vmatprep.subr.mxu0 0.0
      %409 = vmatpush1.msra.mxu0 0.0
      %410 = vmatprep.subr.mxu0 0.0
      %411 = vmatpush1.msra.mxu0 0.0
      %412 = vmatprep.subr.mxu0 0.0
      %413 = vmatpush1.msra.mxu0 0.0
      %414 = vmatprep.subr.mxu0 0.0
      %415 = vmatpush1.msra.mxu0 0.0
      %416 = vmatprep.subr.mxu0 0.0
      %417 = vmatpush1.msra.mxu0 0.0
      %418 = vmatprep.subr.mxu0 0.0
      %419 = vmatpush1.msra.mxu0 0.0
      %420 = vmatprep.subr.mxu0 0.0
      %421 = vmatpush1.msra.mxu0 %v397
      %422 = vmatprep.subr.mxu0 0.0
      %423 = vmatpush1.msra.mxu0 %v396
      %424 = vmatprep.subr.mxu0 0.0
      %425 = vmatpush1.msra.mxu0 %v395
      %426 = vmatprep.subr.mxu0 0.0
      %427 = vmatpush1.msra.mxu0 %v394
      %428 = vmatprep.subr.mxu0 0.0
      %429 = vmatpush1.msra.mxu0 %v393
      %430 = vmatprep.subr.mxu0 0.0
      %431 = vmatpush1.msra.mxu0 %v392
      %432 = vmatprep.subr.mxu0 0.0
      %433 = vmatpush1.msra.mxu0 %v391
      %434 = vmatprep.subr.mxu0 0.0
      %435 = vmatpush1.msra.mxu0 %v390
      %436 = vmatprep.subr.mxu0 0.0
      %437 = vmatpush2.msra.mxu0 0.0
      %438 = vmatprep.subr.mxu0 0.0
      %439 = vmatpush2.msra.mxu0 0.0
      %440 = vmatprep.subr.mxu0 0.0
      %441 = vmatpush2.msra.mxu0 0.0
      %442 = vmatprep.subr.mxu0 0.0
      %443 = vmatpush2.msra.mxu0 0.0
      %444 = vmatprep.subr.mxu0 0.0
      %445 = vmatpush2.msra.mxu0 0.0
      %446 = vmatprep.subr.mxu0 0.0
      %447 = vmatpush2.msra.mxu0 0.0
      %448 = vmatprep.subr.mxu0 0.0
      %449 = vmatpush2.msra.mxu0 0.0
      %450 = vmatprep.subr.mxu0 0.0
      %451 = vmatpush2.msra.mxu0 0.0
      %452 = vmatprep.subr.mxu0 0.0
      %453 = vmatpush2.msra.mxu0 0.0
      %454 = vmatprep.subr.mxu0 0.0
      %455 = vmatpush2.msra.mxu0 0.0
      %456 = vmatprep.subr.mxu0 0.0
      %457 = vmatpush2.msra.mxu0 0.0
      %458 = vmatprep.subr.mxu0 0.0
      %459 = vmatpush2.msra.mxu0 0.0
      %460 = vmatprep.subr.mxu0 0.0
      %461 = vmatpush2.msra.mxu0 0.0
      %462 = vmatprep.subr.mxu0 0.0
      %463 = vmatpush2.msra.mxu0 0.0
      %464 = vmatprep.subr.mxu0 0.0
      %465 = vmatpush2.msra.mxu0 0.0
      %466 = vmatprep.subr.mxu0 0.0
      %467 = vmatpush2.msra.mxu0 0.0
      %468 = vmatprep.mubr.f32.mxu0 0.0
      %469 = vmatmul.mubr.f32.gmra.mxu0 %v399
      %v470 = vpop.f32.mrf.mxu0
      %v471 = vadd.f32 0.0, %v470
      %v472 = vpop.f32.mrf.mxu0
      %473 = vmatprep.mubr.f32.mxu0 0.0
      %474 = vmatmul.mubr.f32.gmra.mxu0 %v402
      %v475 = vpop.f32.mrf.mxu0
      %v476 = vadd.f32 0.0, %v475
      %v477 = vpop.f32.mrf.mxu0
      %478 = vdwg.mxu0
      %v479 = vadd.f32 %v379, %v471
      %v480 = vadd.f32 %v380, %v476
      %v481 = vld [vmem:[%s165 + $0x3] sm:$0xff]
      %v482 = vld [vmem:[%s165 + $0xb] sm:$0xff]
      %v483 = vsel %vm191, %v481, 0.0
      %v484 = vsel %vm192, %v482, 0.0
      %s485 = scalar_lea.vmem %s1, 192
      %v486 = vld [vmem:[%s485] sm:$0xff]
      %v487 = vld [vmem:[%s485 + $0x8] sm:$0xff]
      %v488 = vld [vmem:[%s485 + $0x10] sm:$0xff]
      %v489 = vld [vmem:[%s485 + $0x18] sm:$0xff]
      %v490 = vld [vmem:[%s485 + $0x20] sm:$0xff]
      %v491 = vld [vmem:[%s485 + $0x28] sm:$0xff]
      %v492 = vld [vmem:[%s485 + $0x30] sm:$0xff]
      %v493 = vld [vmem:[%s485 + $0x38] sm:$0xff]
      %v495 = vsel %vm203, %v483, 0
      %v498 = vsel %vm203, %v484, 0
      %500 = vmatprep.subr.mxu0 0.0
      %501 = vmatpush1.msra.mxu0 0.0
      %502 = vmatprep.subr.mxu0 0.0
      %503 = vmatpush1.msra.mxu0 0.0
      %504 = vmatprep.subr.mxu0 0.0
      %505 = vmatpush1.msra.mxu0 0.0
      %506 = vmatprep.subr.mxu0 0.0
      %507 = vmatpush1.msra.mxu0 0.0
      %508 = vmatprep.subr.mxu0 0.0
      %509 = vmatpush1.msra.mxu0 0.0
      %510 = vmatprep.subr.mxu0 0.0
      %511 = vmatpush1.msra.mxu0 0.0
      %512 = vmatprep.subr.mxu0 0.0
      %513 = vmatpush1.msra.mxu0 0.0
      %514 = vmatprep.subr.mxu0 0.0
      %515 = vmatpush1.msra.mxu0 0.0
      %516 = vmatprep.subr.mxu0 0.0
      %517 = vmatpush1.msra.mxu0 %v493
      %518 = vmatprep.subr.mxu0 0.0
      %519 = vmatpush1.msra.mxu0 %v492
      %520 = vmatprep.subr.mxu0 0.0
      %521 = vmatpush1.msra.mxu0 %v491
      %522 = vmatprep.subr.mxu0 0.0
      %523 = vmatpush1.msra.mxu0 %v490
      %524 = vmatprep.subr.mxu0 0.0
      %525 = vmatpush1.msra.mxu0 %v489
      %526 = vmatprep.subr.mxu0 0.0
      %527 = vmatpush1.msra.mxu0 %v488
      %528 = vmatprep.subr.mxu0 0.0
      %529 = vmatpush1.msra.mxu0 %v487
      %530 = vmatprep.subr.mxu0 0.0
      %531 = vmatpush1.msra.mxu0 %v486
      %532 = vmatprep.subr.mxu0 0.0
      %533 = vmatpush2.msra.mxu0 0.0
      %534 = vmatprep.subr.mxu0 0.0
      %535 = vmatpush2.msra.mxu0 0.0
      %536 = vmatprep.subr.mxu0 0.0
      %537 = vmatpush2.msra.mxu0 0.0
      %538 = vmatprep.subr.mxu0 0.0
      %539 = vmatpush2.msra.mxu0 0.0
      %540 = vmatprep.subr.mxu0 0.0
      %541 = vmatpush2.msra.mxu0 0.0
      %542 = vmatprep.subr.mxu0 0.0
      %543 = vmatpush2.msra.mxu0 0.0
      %544 = vmatprep.subr.mxu0 0.0
      %545 = vmatpush2.msra.mxu0 0.0
      %546 = vmatprep.subr.mxu0 0.0
      %547 = vmatpush2.msra.mxu0 0.0
      %548 = vmatprep.subr.mxu0 0.0
      %549 = vmatpush2.msra.mxu0 0.0
      %550 = vmatprep.subr.mxu0 0.0
      %551 = vmatpush2.msra.mxu0 0.0
      %552 = vmatprep.subr.mxu0 0.0
      %553 = vmatpush2.msra.mxu0 0.0
      %554 = vmatprep.subr.mxu0 0.0
      %555 = vmatpush2.msra.mxu0 0.0
      %556 = vmatprep.subr.mxu0 0.0
      %557 = vmatpush2.msra.mxu0 0.0
      %558 = vmatprep.subr.mxu0 0.0
      %559 = vmatpush2.msra.mxu0 0.0
      %560 = vmatprep.subr.mxu0 0.0
      %561 = vmatpush2.msra.mxu0 0.0
      %562 = vmatprep.subr.mxu0 0.0
      %563 = vmatpush2.msra.mxu0 0.0
      %564 = vmatprep.mubr.f32.mxu0 0.0
      %565 = vmatmul.mubr.f32.gmra.mxu0 %v495
      %v566 = vpop.f32.mrf.mxu0
      %v567 = vadd.f32 0.0, %v566
      %v568 = vpop.f32.mrf.mxu0
      %569 = vmatprep.mubr.f32.mxu0 0.0
      %570 = vmatmul.mubr.f32.gmra.mxu0 %v498
      %v571 = vpop.f32.mrf.mxu0
      %v572 = vadd.f32 0.0, %v571
      %v573 = vpop.f32.mrf.mxu0
      %574 = vdwg.mxu0
      %v575 = vadd.f32 %v479, %v567
      %v576 = vadd.f32 %v480, %v572
      %v577 = vld [vmem:[%s165 + $0x4] sm:$0xff]
      %v578 = vld [vmem:[%s165 + $0xc] sm:$0xff]
      %s579 = scalar_lea.vmem %s1, 256
      %v580 = vld [vmem:[%s579] sm:$0xff]
      %v581 = vld [vmem:[%s579 + $0x8] sm:$0xff]
      %v582 = vld [vmem:[%s579 + $0x10] sm:$0xff]
      %v583 = vld [vmem:[%s579 + $0x18] sm:$0xff]
      %v584 = vld [vmem:[%s579 + $0x20] sm:$0xff]
      %v585 = vld [vmem:[%s579 + $0x28] sm:$0xff]
      %v586 = vld [vmem:[%s579 + $0x30] sm:$0xff]
      %v587 = vld [vmem:[%s579 + $0x38] sm:$0xff]
      %v589 = vsel %vm203, %v577, 0
      %v592 = vsel %vm203, %v578, 0
      %594 = vmatprep.subr.mxu0 0.0
      %595 = vmatpush1.msra.mxu0 0.0
      %596 = vmatprep.subr.mxu0 0.0
      %597 = vmatpush1.msra.mxu0 0.0
      %598 = vmatprep.subr.mxu0 0.0
      %599 = vmatpush1.msra.mxu0 0.0
      %600 = vmatprep.subr.mxu0 0.0
      %601 = vmatpush1.msra.mxu0 0.0
      %602 = vmatprep.subr.mxu0 0.0
      %603 = vmatpush1.msra.mxu0 0.0
      %604 = vmatprep.subr.mxu0 0.0
      %605 = vmatpush1.msra.mxu0 0.0
      %606 = vmatprep.subr.mxu0 0.0
      %607 = vmatpush1.msra.mxu0 0.0
      %608 = vmatprep.subr.mxu0 0.0
      %609 = vmatpush1.msra.mxu0 0.0
      %610 = vmatprep.subr.mxu0 0.0
      %611 = vmatpush1.msra.mxu0 %v587
      %612 = vmatprep.subr.mxu0 0.0
      %613 = vmatpush1.msra.mxu0 %v586
      %614 = vmatprep.subr.mxu0 0.0
      %615 = vmatpush1.msra.mxu0 %v585
      %616 = vmatprep.subr.mxu0 0.0
      %617 = vmatpush1.msra.mxu0 %v584
      %618 = vmatprep.subr.mxu0 0.0
      %619 = vmatpush1.msra.mxu0 %v583
      %620 = vmatprep.subr.mxu0 0.0
      %621 = vmatpush1.msra.mxu0 %v582
      %622 = vmatprep.subr.mxu0 0.0
      %623 = vmatpush1.msra.mxu0 %v581
      %624 = vmatprep.subr.mxu0 0.0
      %625 = vmatpush1.msra.mxu0 %v580
      %626 = vmatprep.subr.mxu0 0.0
      %627 = vmatpush2.msra.mxu0 0.0
      %628 = vmatprep.subr.mxu0 0.0
      %629 = vmatpush2.msra.mxu0 0.0
      %630 = vmatprep.subr.mxu0 0.0
      %631 = vmatpush2.msra.mxu0 0.0
      %632 = vmatprep.subr.mxu0 0.0
      %633 = vmatpush2.msra.mxu0 0.0
      %634 = vmatprep.subr.mxu0 0.0
      %635 = vmatpush2.msra.mxu0 0.0
      %636 = vmatprep.subr.mxu0 0.0
      %637 = vmatpush2.msra.mxu0 0.0
      %638 = vmatprep.subr.mxu0 0.0
      %639 = vmatpush2.msra.mxu0 0.0
      %640 = vmatprep.subr.mxu0 0.0
      %641 = vmatpush2.msra.mxu0 0.0
      %642 = vmatprep.subr.mxu0 0.0
      %643 = vmatpush2.msra.mxu0 0.0
      %644 = vmatprep.subr.mxu0 0.0
      %645 = vmatpush2.msra.mxu0 0.0
      %646 = vmatprep.subr.mxu0 0.0
      %647 = vmatpush2.msra.mxu0 0.0
      %648 = vmatprep.subr.mxu0 0.0
      %649 = vmatpush2.msra.mxu0 0.0
      %650 = vmatprep.subr.mxu0 0.0
      %651 = vmatpush2.msra.mxu0 0.0
      %652 = vmatprep.subr.mxu0 0.0
      %653 = vmatpush2.msra.mxu0 0.0
      %654 = vmatprep.subr.mxu0 0.0
      %655 = vmatpush2.msra.mxu0 0.0
      %656 = vmatprep.subr.mxu0 0.0
      %657 = vmatpush2.msra.mxu0 0.0
      %658 = vmatprep.mubr.f32.mxu0 0.0
      %659 = vmatmul.mubr.f32.gmra.mxu0 %v589
      %v660 = vpop.f32.mrf.mxu0
      %v661 = vadd.f32 0.0, %v660
      %v662 = vpop.f32.mrf.mxu0
      %663 = vmatprep.mubr.f32.mxu0 0.0
      %664 = vmatmul.mubr.f32.gmra.mxu0 %v592
      %v665 = vpop.f32.mrf.mxu0
      %v666 = vadd.f32 0.0, %v665
      %v667 = vpop.f32.mrf.mxu0
      %668 = vdwg.mxu0
      %v669 = vadd.f32 %v575, %v661
      %v670 = vadd.f32 %v576, %v666
      %v671 = vld [vmem:[%s165 + $0x5] sm:$0xff]
      %v672 = vld [vmem:[%s165 + $0xd] sm:$0xff]
      %v673 = vsel %vm385, %v671, 0.0
      %v674 = vsel %vm386, %v672, 0.0
      %s675 = scalar_lea.vmem %s1, 320
      %v676 = vld [vmem:[%s675] sm:$0xff]
      %v677 = vld [vmem:[%s675 + $0x8] sm:$0xff]
      %v678 = vld [vmem:[%s675 + $0x10] sm:$0xff]
      %v679 = vld [vmem:[%s675 + $0x18] sm:$0xff]
      %v680 = vld [vmem:[%s675 + $0x20] sm:$0xff]
      %v681 = vld [vmem:[%s675 + $0x28] sm:$0xff]
      %v682 = vld [vmem:[%s675 + $0x30] sm:$0xff]
      %v683 = vld [vmem:[%s675 + $0x38] sm:$0xff]
      %v685 = vsel %vm203, %v673, 0
      %v688 = vsel %vm203, %v674, 0
      %690 = vmatprep.subr.mxu0 0.0
      %691 = vmatpush1.msra.mxu0 0.0
      %692 = vmatprep.subr.mxu0 0.0
      %693 = vmatpush1.msra.mxu0 0.0
      %694 = vmatprep.subr.mxu0 0.0
      %695 = vmatpush1.msra.mxu0 0.0
      %696 = vmatprep.subr.mxu0 0.0
      %697 = vmatpush1.msra.mxu0 0.0
      %698 = vmatprep.subr.mxu0 0.0
      %699 = vmatpush1.msra.mxu0 0.0
      %700 = vmatprep.subr.mxu0 0.0
      %701 = vmatpush1.msra.mxu0 0.0
      %702 = vmatprep.subr.mxu0 0.0
      %703 = vmatpush1.msra.mxu0 0.0
      %704 = vmatprep.subr.mxu0 0.0
      %705 = vmatpush1.msra.mxu0 0.0
      %706 = vmatprep.subr.mxu0 0.0
      %707 = vmatpush1.msra.mxu0 %v683
      %708 = vmatprep.subr.mxu0 0.0
      %709 = vmatpush1.msra.mxu0 %v682
      %710 = vmatprep.subr.mxu0 0.0
      %711 = vmatpush1.msra.mxu0 %v681
      %712 = vmatprep.subr.mxu0 0.0
      %713 = vmatpush1.msra.mxu0 %v680
      %714 = vmatprep.subr.mxu0 0.0
      %715 = vmatpush1.msra.mxu0 %v679
      %716 = vmatprep.subr.mxu0 0.0
      %717 = vmatpush1.msra.mxu0 %v678
      %718 = vmatprep.subr.mxu0 0.0
      %719 = vmatpush1.msra.mxu0 %v677
      %720 = vmatprep.subr.mxu0 0.0
      %721 = vmatpush1.msra.mxu0 %v676
      %722 = vmatprep.subr.mxu0 0.0
      %723 = vmatpush2.msra.mxu0 0.0
      %724 = vmatprep.subr.mxu0 0.0
      %725 = vmatpush2.msra.mxu0 0.0
      %726 = vmatprep.subr.mxu0 0.0
      %727 = vmatpush2.msra.mxu0 0.0
      %728 = vmatprep.subr.mxu0 0.0
      %729 = vmatpush2.msra.mxu0 0.0
      %730 = vmatprep.subr.mxu0 0.0
      %731 = vmatpush2.msra.mxu0 0.0
      %732 = vmatprep.subr.mxu0 0.0
      %733 = vmatpush2.msra.mxu0 0.0
      %734 = vmatprep.subr.mxu0 0.0
      %735 = vmatpush2.msra.mxu0 0.0
      %736 = vmatprep.subr.mxu0 0.0
      %737 = vmatpush2.msra.mxu0 0.0
      %738 = vmatprep.subr.mxu0 0.0
      %739 = vmatpush2.msra.mxu0 0.0
      %740 = vmatprep.subr.mxu0 0.0
      %741 = vmatpush2.msra.mxu0 0.0
      %742 = vmatprep.subr.mxu0 0.0
      %743 = vmatpush2.msra.mxu0 0.0
      %744 = vmatprep.subr.mxu0 0.0
      %745 = vmatpush2.msra.mxu0 0.0
      %746 = vmatprep.subr.mxu0 0.0
      %747 = vmatpush2.msra.mxu0 0.0
      %748 = vmatprep.subr.mxu0 0.0
      %749 = vmatpush2.msra.mxu0 0.0
      %750 = vmatprep.subr.mxu0 0.0
      %751 = vmatpush2.msra.mxu0 0.0
      %752 = vmatprep.subr.mxu0 0.0
      %753 = vmatpush2.msra.mxu0 0.0
      %754 = vmatprep.mubr.f32.mxu0 0.0
      %755 = vmatmul.mubr.f32.gmra.mxu0 %v685
      %v756 = vpop.f32.mrf.mxu0
      %v757 = vadd.f32 0.0, %v756
      %v758 = vpop.f32.mrf.mxu0
      %759 = vmatprep.mubr.f32.mxu0 0.0
      %760 = vmatmul.mubr.f32.gmra.mxu0 %v688
      %v761 = vpop.f32.mrf.mxu0
      %v762 = vadd.f32 0.0, %v761
      %v763 = vpop.f32.mrf.mxu0
      %764 = vdwg.mxu0
      %v765 = vadd.f32 %v669, %v757
      %v766 = vadd.f32 %v670, %v762
      %767 = vst [vmem:[%s170] sm:$0xff] %v765
      %768 = vst [vmem:[%s170 + $0x8] sm:$0xff] %v766
      %v769 = vld [vmem:[%s165 + $0x7] sm:$0xff]
      %v770 = vld [vmem:[%s165 + $0xf] sm:$0xff]
      %v771 = vsel %vm191, %v769, 0.0
      %v772 = vsel %vm192, %v770, 0.0
      %s773 = scalar_lea.vmem %s1, 384
      %v774 = vld [vmem:[%s773] sm:$0xff]
      %v775 = vld [vmem:[%s773 + $0x8] sm:$0xff]
      %v776 = vld [vmem:[%s773 + $0x10] sm:$0xff]
      %v777 = vld [vmem:[%s773 + $0x18] sm:$0xff]
      %v778 = vld [vmem:[%s773 + $0x20] sm:$0xff]
      %v779 = vld [vmem:[%s773 + $0x28] sm:$0xff]
      %v780 = vld [vmem:[%s773 + $0x30] sm:$0xff]
      %v781 = vld [vmem:[%s773 + $0x38] sm:$0xff]
      %v783 = vsel %vm203, %v771, 0
      %v786 = vsel %vm203, %v772, 0
      %788 = vmatprep.subr.mxu0 0.0
      %789 = vmatpush1.msra.mxu0 0.0
      %790 = vmatprep.subr.mxu0 0.0
      %791 = vmatpush1.msra.mxu0 0.0
      %792 = vmatprep.subr.mxu0 0.0
      %793 = vmatpush1.msra.mxu0 0.0
      %794 = vmatprep.subr.mxu0 0.0
      %795 = vmatpush1.msra.mxu0 0.0
      %796 = vmatprep.subr.mxu0 0.0
      %797 = vmatpush1.msra.mxu0 0.0
      %798 = vmatprep.subr.mxu0 0.0
      %799 = vmatpush1.msra.mxu0 0.0
      %800 = vmatprep.subr.mxu0 0.0
      %801 = vmatpush1.msra.mxu0 0.0
      %802 = vmatprep.subr.mxu0 0.0
      %803 = vmatpush1.msra.mxu0 0.0
      %804 = vmatprep.subr.mxu0 0.0
      %805 = vmatpush1.msra.mxu0 %v781
      %806 = vmatprep.subr.mxu0 0.0
      %807 = vmatpush1.msra.mxu0 %v780
      %808 = vmatprep.subr.mxu0 0.0
      %809 = vmatpush1.msra.mxu0 %v779
      %810 = vmatprep.subr.mxu0 0.0
      %811 = vmatpush1.msra.mxu0 %v778
      %812 = vmatprep.subr.mxu0 0.0
      %813 = vmatpush1.msra.mxu0 %v777
      %814 = vmatprep.subr.mxu0 0.0
      %815 = vmatpush1.msra.mxu0 %v776
      %816 = vmatprep.subr.mxu0 0.0
      %817 = vmatpush1.msra.mxu0 %v775
      %818 = vmatprep.subr.mxu0 0.0
      %819 = vmatpush1.msra.mxu0 %v774
      %820 = vmatprep.subr.mxu0 0.0
      %821 = vmatpush2.msra.mxu0 0.0
      %822 = vmatprep.subr.mxu0 0.0
      %823 = vmatpush2.msra.mxu0 0.0
      %824 = vmatprep.subr.mxu0 0.0
      %825 = vmatpush2.msra.mxu0 0.0
      %826 = vmatprep.subr.mxu0 0.0
      %827 = vmatpush2.msra.mxu0 0.0
      %828 = vmatprep.subr.mxu0 0.0
      %829 = vmatpush2.msra.mxu0 0.0
      %830 = vmatprep.subr.mxu0 0.0
      %831 = vmatpush2.msra.mxu0 0.0
      %832 = vmatprep.subr.mxu0 0.0
      %833 = vmatpush2.msra.mxu0 0.0
      %834 = vmatprep.subr.mxu0 0.0
      %835 = vmatpush2.msra.mxu0 0.0
      %836 = vmatprep.subr.mxu0 0.0
      %837 = vmatpush2.msra.mxu0 0.0
      %838 = vmatprep.subr.mxu0 0.0
      %839 = vmatpush2.msra.mxu0 0.0
      %840 = vmatprep.subr.mxu0 0.0
      %841 = vmatpush2.msra.mxu0 0.0
      %842 = vmatprep.subr.mxu0 0.0
      %843 = vmatpush2.msra.mxu0 0.0
      %844 = vmatprep.subr.mxu0 0.0
      %845 = vmatpush2.msra.mxu0 0.0
      %846 = vmatprep.subr.mxu0 0.0
      %847 = vmatpush2.msra.mxu0 0.0
      %848 = vmatprep.subr.mxu0 0.0
      %849 = vmatpush2.msra.mxu0 0.0
      %850 = vmatprep.subr.mxu0 0.0
      %851 = vmatpush2.msra.mxu0 0.0
      %852 = vmatprep.mubr.f32.mxu0 0.0
      %853 = vmatmul.mubr.f32.gmra.mxu0 %v783
      %v854 = vpop.f32.mrf.mxu0
      %v855 = vadd.f32 0.0, %v854
      %v856 = vpop.f32.mrf.mxu0
      %857 = vmatprep.mubr.f32.mxu0 0.0
      %858 = vmatmul.mubr.f32.gmra.mxu0 %v786
      %v859 = vpop.f32.mrf.mxu0
      %v860 = vadd.f32 0.0, %v859
      %v861 = vpop.f32.mrf.mxu0
      %862 = vdwg.mxu0
      %v863 = vadd.f32 %v185, %v855
      %v864 = vadd.f32 %v185, %v860
      %v865 = vld [vmem:[%s165 + $0x8] sm:$0xff]
      %v866 = vld [vmem:[%s165 + $0x10] sm:$0xff]
      %s867 = scalar_lea.vmem %s1, 448
      %v868 = vld [vmem:[%s867] sm:$0xff]
      %v869 = vld [vmem:[%s867 + $0x8] sm:$0xff]
      %v870 = vld [vmem:[%s867 + $0x10] sm:$0xff]
      %v871 = vld [vmem:[%s867 + $0x18] sm:$0xff]
      %v872 = vld [vmem:[%s867 + $0x20] sm:$0xff]
      %v873 = vld [vmem:[%s867 + $0x28] sm:$0xff]
      %v874 = vld [vmem:[%s867 + $0x30] sm:$0xff]
      %v875 = vld [vmem:[%s867 + $0x38] sm:$0xff]
      %v877 = vsel %vm203, %v865, 0
      %v880 = vsel %vm203, %v866, 0
      %882 = vmatprep.subr.mxu0 0.0
      %883 = vmatpush1.msra.mxu0 0.0
      %884 = vmatprep.subr.mxu0 0.0
      %885 = vmatpush1.msra.mxu0 0.0
      %886 = vmatprep.subr.mxu0 0.0
      %887 = vmatpush1.msra.mxu0 0.0
      %888 = vmatprep.subr.mxu0 0.0
      %889 = vmatpush1.msra.mxu0 0.0
      %890 = vmatprep.subr.mxu0 0.0
      %891 = vmatpush1.msra.mxu0 0.0
      %892 = vmatprep.subr.mxu0 0.0
      %893 = vmatpush1.msra.mxu0 0.0
      %894 = vmatprep.subr.mxu0 0.0
      %895 = vmatpush1.msra.mxu0 0.0
      %896 = vmatprep.subr.mxu0 0.0
      %897 = vmatpush1.msra.mxu0 0.0
      %898 = vmatprep.subr.mxu0 0.0
      %899 = vmatpush1.msra.mxu0 %v875
      %900 = vmatprep.subr.mxu0 0.0
      %901 = vmatpush1.msra.mxu0 %v874
      %902 = vmatprep.subr.mxu0 0.0
      %903 = vmatpush1.msra.mxu0 %v873
      %904 = vmatprep.subr.mxu0 0.0
      %905 = vmatpush1.msra.mxu0 %v872
      %906 = vmatprep.subr.mxu0 0.0
      %907 = vmatpush1.msra.mxu0 %v871
      %908 = vmatprep.subr.mxu0 0.0
      %909 = vmatpush1.msra.mxu0 %v870
      %910 = vmatprep.subr.mxu0 0.0
      %911 = vmatpush1.msra.mxu0 %v869
      %912 = vmatprep.subr.mxu0 0.0
      %913 = vmatpush1.msra.mxu0 %v868
      %914 = vmatprep.subr.mxu0 0.0
      %915 = vmatpush2.msra.mxu0 0.0
      %916 = vmatprep.subr.mxu0 0.0
      %917 = vmatpush2.msra.mxu0 0.0
      %918 = vmatprep.subr.mxu0 0.0
      %919 = vmatpush2.msra.mxu0 0.0
      %920 = vmatprep.subr.mxu0 0.0
      %921 = vmatpush2.msra.mxu0 0.0
      %922 = vmatprep.subr.mxu0 0.0
      %923 = vmatpush2.msra.mxu0 0.0
      %924 = vmatprep.subr.mxu0 0.0
      %925 = vmatpush2.msra.mxu0 0.0
      %926 = vmatprep.subr.mxu0 0.0
      %927 = vmatpush2.msra.mxu0 0.0
      %928 = vmatprep.subr.mxu0 0.0
      %929 = vmatpush2.msra.mxu0 0.0
      %930 = vmatprep.subr.mxu0 0.0
      %931 = vmatpush2.msra.mxu0 0.0
      %932 = vmatprep.subr.mxu0 0.0
      %933 = vmatpush2.msra.mxu0 0.0
      %934 = vmatprep.subr.mxu0 0.0
      %935 = vmatpush2.msra.mxu0 0.0
      %936 = vmatprep.subr.mxu0 0.0
      %937 = vmatpush2.msra.mxu0 0.0
      %938 = vmatprep.subr.mxu0 0.0
      %939 = vmatpush2.msra.mxu0 0.0
      %940 = vmatprep.subr.mxu0 0.0
      %941 = vmatpush2.msra.mxu0 0.0
      %942 = vmatprep.subr.mxu0 0.0
      %943 = vmatpush2.msra.mxu0 0.0
      %944 = vmatprep.subr.mxu0 0.0
      %945 = vmatpush2.msra.mxu0 0.0
      %946 = vmatprep.mubr.f32.mxu0 0.0
      %947 = vmatmul.mubr.f32.gmra.mxu0 %v877
      %v948 = vpop.f32.mrf.mxu0
      %v949 = vadd.f32 0.0, %v948
      %v950 = vpop.f32.mrf.mxu0
      %951 = vmatprep.mubr.f32.mxu0 0.0
      %952 = vmatmul.mubr.f32.gmra.mxu0 %v880
      %v953 = vpop.f32.mrf.mxu0
      %v954 = vadd.f32 0.0, %v953
      %v955 = vpop.f32.mrf.mxu0
      %956 = vdwg.mxu0
      %v957 = vadd.f32 %v863, %v949
      %v958 = vadd.f32 %v864, %v954
      %v959 = vld [vmem:[%s165 + $0x9] sm:$0xff]
      %v960 = vld [vmem:[%s165 + $0x11] sm:$0xff]
      %v961 = vsel %vm385, %v959, 0.0
      %v962 = vsel %vm386, %v960, 0.0
      %s963 = scalar_lea.vmem %s1, 512
      %v964 = vld [vmem:[%s963] sm:$0xff]
      %v965 = vld [vmem:[%s963 + $0x8] sm:$0xff]
      %v966 = vld [vmem:[%s963 + $0x10] sm:$0xff]
      %v967 = vld [vmem:[%s963 + $0x18] sm:$0xff]
      %v968 = vld [vmem:[%s963 + $0x20] sm:$0xff]
      %v969 = vld [vmem:[%s963 + $0x28] sm:$0xff]
      %v970 = vld [vmem:[%s963 + $0x30] sm:$0xff]
      %v971 = vld [vmem:[%s963 + $0x38] sm:$0xff]
      %v973 = vsel %vm203, %v961, 0
      %v976 = vsel %vm203, %v962, 0
      %978 = vmatprep.subr.mxu0 0.0
      %979 = vmatpush1.msra.mxu0 0.0
      %980 = vmatprep.subr.mxu0 0.0
      %981 = vmatpush1.msra.mxu0 0.0
      %982 = vmatprep.subr.mxu0 0.0
      %983 = vmatpush1.msra.mxu0 0.0
      %984 = vmatprep.subr.mxu0 0.0
      %985 = vmatpush1.msra.mxu0 0.0
      %986 = vmatprep.subr.mxu0 0.0
      %987 = vmatpush1.msra.mxu0 0.0
      %988 = vmatprep.subr.mxu0 0.0
      %989 = vmatpush1.msra.mxu0 0.0
      %990 = vmatprep.subr.mxu0 0.0
      %991 = vmatpush1.msra.mxu0 0.0
      %992 = vmatprep.subr.mxu0 0.0
      %993 = vmatpush1.msra.mxu0 0.0
      %994 = vmatprep.subr.mxu0 0.0
      %995 = vmatpush1.msra.mxu0 %v971
      %996 = vmatprep.subr.mxu0 0.0
      %997 = vmatpush1.msra.mxu0 %v970
      %998 = vmatprep.subr.mxu0 0.0
      %999 = vmatpush1.msra.mxu0 %v969
      %1000 = vmatprep.subr.mxu0 0.0
      %1001 = vmatpush1.msra.mxu0 %v968
      %1002 = vmatprep.subr.mxu0 0.0
      %1003 = vmatpush1.msra.mxu0 %v967
      %1004 = vmatprep.subr.mxu0 0.0
      %1005 = vmatpush1.msra.mxu0 %v966
      %1006 = vmatprep.subr.mxu0 0.0
      %1007 = vmatpush1.msra.mxu0 %v965
      %1008 = vmatprep.subr.mxu0 0.0
      %1009 = vmatpush1.msra.mxu0 %v964
      %1010 = vmatprep.subr.mxu0 0.0
      %1011 = vmatpush2.msra.mxu0 0.0
      %1012 = vmatprep.subr.mxu0 0.0
      %1013 = vmatpush2.msra.mxu0 0.0
      %1014 = vmatprep.subr.mxu0 0.0
      %1015 = vmatpush2.msra.mxu0 0.0
      %1016 = vmatprep.subr.mxu0 0.0
      %1017 = vmatpush2.msra.mxu0 0.0
      %1018 = vmatprep.subr.mxu0 0.0
      %1019 = vmatpush2.msra.mxu0 0.0
      %1020 = vmatprep.subr.mxu0 0.0
      %1021 = vmatpush2.msra.mxu0 0.0
      %1022 = vmatprep.subr.mxu0 0.0
      %1023 = vmatpush2.msra.mxu0 0.0
      %1024 = vmatprep.subr.mxu0 0.0
      %1025 = vmatpush2.msra.mxu0 0.0
      %1026 = vmatprep.subr.mxu0 0.0
      %1027 = vmatpush2.msra.mxu0 0.0
      %1028 = vmatprep.subr.mxu0 0.0
      %1029 = vmatpush2.msra.mxu0 0.0
      %1030 = vmatprep.subr.mxu0 0.0
      %1031 = vmatpush2.msra.mxu0 0.0
      %1032 = vmatprep.subr.mxu0 0.0
      %1033 = vmatpush2.msra.mxu0 0.0
      %1034 = vmatprep.subr.mxu0 0.0
      %1035 = vmatpush2.msra.mxu0 0.0
      %1036 = vmatprep.subr.mxu0 0.0
      %1037 = vmatpush2.msra.mxu0 0.0
      %1038 = vmatprep.subr.mxu0 0.0
      %1039 = vmatpush2.msra.mxu0 0.0
      %1040 = vmatprep.subr.mxu0 0.0
      %1041 = vmatpush2.msra.mxu0 0.0
      %1042 = vmatprep.mubr.f32.mxu0 0.0
      %1043 = vmatmul.mubr.f32.gmra.mxu0 %v973
      %v1044 = vpop.f32.mrf.mxu0
      %v1045 = vadd.f32 0.0, %v1044
      %v1046 = vpop.f32.mrf.mxu0
      %1047 = vmatprep.mubr.f32.mxu0 0.0
      %1048 = vmatmul.mubr.f32.gmra.mxu0 %v976
      %v1049 = vpop.f32.mrf.mxu0
      %v1050 = vadd.f32 0.0, %v1049
      %v1051 = vpop.f32.mrf.mxu0
      %1052 = vdwg.mxu0
      %v1053 = vadd.f32 %v957, %v1045
      %v1054 = vadd.f32 %v958, %v1050
      %v1055 = vld [vmem:[%s165 + $0xb] sm:$0xff]
      %v1056 = vld [vmem:[%s165 + $0x13] sm:$0xff]
      %v1057 = vsel %vm191, %v1055, 0.0
      %v1058 = vsel %vm192, %v1056, 0.0
      %s1059 = scalar_lea.vmem %s1, 576
      %v1060 = vld [vmem:[%s1059] sm:$0xff]
      %v1061 = vld [vmem:[%s1059 + $0x8] sm:$0xff]
      %v1062 = vld [vmem:[%s1059 + $0x10] sm:$0xff]
      %v1063 = vld [vmem:[%s1059 + $0x18] sm:$0xff]
      %v1064 = vld [vmem:[%s1059 + $0x20] sm:$0xff]
      %v1065 = vld [vmem:[%s1059 + $0x28] sm:$0xff]
      %v1066 = vld [vmem:[%s1059 + $0x30] sm:$0xff]
      %v1067 = vld [vmem:[%s1059 + $0x38] sm:$0xff]
      %v1069 = vsel %vm203, %v1057, 0
      %v1072 = vsel %vm203, %v1058, 0
      %1074 = vmatprep.subr.mxu0 0.0
      %1075 = vmatpush1.msra.mxu0 0.0
      %1076 = vmatprep.subr.mxu0 0.0
      %1077 = vmatpush1.msra.mxu0 0.0
      %1078 = vmatprep.subr.mxu0 0.0
      %1079 = vmatpush1.msra.mxu0 0.0
      %1080 = vmatprep.subr.mxu0 0.0
      %1081 = vmatpush1.msra.mxu0 0.0
      %1082 = vmatprep.subr.mxu0 0.0
      %1083 = vmatpush1.msra.mxu0 0.0
      %1084 = vmatprep.subr.mxu0 0.0
      %1085 = vmatpush1.msra.mxu0 0.0
      %1086 = vmatprep.subr.mxu0 0.0
      %1087 = vmatpush1.msra.mxu0 0.0
      %1088 = vmatprep.subr.mxu0 0.0
      %1089 = vmatpush1.msra.mxu0 0.0
      %1090 = vmatprep.subr.mxu0 0.0
      %1091 = vmatpush1.msra.mxu0 %v1067
      %1092 = vmatprep.subr.mxu0 0.0
      %1093 = vmatpush1.msra.mxu0 %v1066
      %1094 = vmatprep.subr.mxu0 0.0
      %1095 = vmatpush1.msra.mxu0 %v1065
      %1096 = vmatprep.subr.mxu0 0.0
      %1097 = vmatpush1.msra.mxu0 %v1064
      %1098 = vmatprep.subr.mxu0 0.0
      %1099 = vmatpush1.msra.mxu0 %v1063
      %1100 = vmatprep.subr.mxu0 0.0
      %1101 = vmatpush1.msra.mxu0 %v1062
      %1102 = vmatprep.subr.mxu0 0.0
      %1103 = vmatpush1.msra.mxu0 %v1061
      %1104 = vmatprep.subr.mxu0 0.0
      %1105 = vmatpush1.msra.mxu0 %v1060
      %1106 = vmatprep.subr.mxu0 0.0
      %1107 = vmatpush2.msra.mxu0 0.0
      %1108 = vmatprep.subr.mxu0 0.0
      %1109 = vmatpush2.msra.mxu0 0.0
      %1110 = vmatprep.subr.mxu0 0.0
      %1111 = vmatpush2.msra.mxu0 0.0
      %1112 = vmatprep.subr.mxu0 0.0
      %1113 = vmatpush2.msra.mxu0 0.0
      %1114 = vmatprep.subr.mxu0 0.0
      %1115 = vmatpush2.msra.mxu0 0.0
      %1116 = vmatprep.subr.mxu0 0.0
      %1117 = vmatpush2.msra.mxu0 0.0
      %1118 = vmatprep.subr.mxu0 0.0
      %1119 = vmatpush2.msra.mxu0 0.0
      %1120 = vmatprep.subr.mxu0 0.0
      %1121 = vmatpush2.msra.mxu0 0.0
      %1122 = vmatprep.subr.mxu0 0.0
      %1123 = vmatpush2.msra.mxu0 0.0
      %1124 = vmatprep.subr.mxu0 0.0
      %1125 = vmatpush2.msra.mxu0 0.0
      %1126 = vmatprep.subr.mxu0 0.0
      %1127 = vmatpush2.msra.mxu0 0.0
      %1128 = vmatprep.subr.mxu0 0.0
      %1129 = vmatpush2.msra.mxu0 0.0
      %1130 = vmatprep.subr.mxu0 0.0
      %1131 = vmatpush2.msra.mxu0 0.0
      %1132 = vmatprep.subr.mxu0 0.0
      %1133 = vmatpush2.msra.mxu0 0.0
      %1134 = vmatprep.subr.mxu0 0.0
      %1135 = vmatpush2.msra.mxu0 0.0
      %1136 = vmatprep.subr.mxu0 0.0
      %1137 = vmatpush2.msra.mxu0 0.0
      %1138 = vmatprep.mubr.f32.mxu0 0.0
      %1139 = vmatmul.mubr.f32.gmra.mxu0 %v1069
      %v1140 = vpop.f32.mrf.mxu0
      %v1141 = vadd.f32 0.0, %v1140
      %v1142 = vpop.f32.mrf.mxu0
      %1143 = vmatprep.mubr.f32.mxu0 0.0
      %1144 = vmatmul.mubr.f32.gmra.mxu0 %v1072
      %v1145 = vpop.f32.mrf.mxu0
      %v1146 = vadd.f32 0.0, %v1145
      %v1147 = vpop.f32.mrf.mxu0
      %1148 = vdwg.mxu0
      %v1149 = vadd.f32 %v1053, %v1141
      %v1150 = vadd.f32 %v1054, %v1146
      %v1151 = vld [vmem:[%s165 + $0xc] sm:$0xff]
      %v1152 = vld [vmem:[%s165 + $0x14] sm:$0xff]
      %s1153 = scalar_lea.vmem %s1, 640
      %v1154 = vld [vmem:[%s1153] sm:$0xff]
      %v1155 = vld [vmem:[%s1153 + $0x8] sm:$0xff]
      %v1156 = vld [vmem:[%s1153 + $0x10] sm:$0xff]
      %v1157 = vld [vmem:[%s1153 + $0x18] sm:$0xff]
      %v1158 = vld [vmem:[%s1153 + $0x20] sm:$0xff]
      %v1159 = vld [vmem:[%s1153 + $0x28] sm:$0xff]
      %v1160 = vld [vmem:[%s1153 + $0x30] sm:$0xff]
      %v1161 = vld [vmem:[%s1153 + $0x38] sm:$0xff]
      %v1163 = vsel %vm203, %v1151, 0
      %v1166 = vsel %vm203, %v1152, 0
      %1168 = vmatprep.subr.mxu0 0.0
      %1169 = vmatpush1.msra.mxu0 0.0
      %1170 = vmatprep.subr.mxu0 0.0
      %1171 = vmatpush1.msra.mxu0 0.0
      %1172 = vmatprep.subr.mxu0 0.0
      %1173 = vmatpush1.msra.mxu0 0.0
      %1174 = vmatprep.subr.mxu0 0.0
      %1175 = vmatpush1.msra.mxu0 0.0
      %1176 = vmatprep.subr.mxu0 0.0
      %1177 = vmatpush1.msra.mxu0 0.0
      %1178 = vmatprep.subr.mxu0 0.0
      %1179 = vmatpush1.msra.mxu0 0.0
      %1180 = vmatprep.subr.mxu0 0.0
      %1181 = vmatpush1.msra.mxu0 0.0
      %1182 = vmatprep.subr.mxu0 0.0
      %1183 = vmatpush1.msra.mxu0 0.0
      %1184 = vmatprep.subr.mxu0 0.0
      %1185 = vmatpush1.msra.mxu0 %v1161
      %1186 = vmatprep.subr.mxu0 0.0
      %1187 = vmatpush1.msra.mxu0 %v1160
      %1188 = vmatprep.subr.mxu0 0.0
      %1189 = vmatpush1.msra.mxu0 %v1159
      %1190 = vmatprep.subr.mxu0 0.0
      %1191 = vmatpush1.msra.mxu0 %v1158
      %1192 = vmatprep.subr.mxu0 0.0
      %1193 = vmatpush1.msra.mxu0 %v1157
      %1194 = vmatprep.subr.mxu0 0.0
      %1195 = vmatpush1.msra.mxu0 %v1156
      %1196 = vmatprep.subr.mxu0 0.0
      %1197 = vmatpush1.msra.mxu0 %v1155
      %1198 = vmatprep.subr.mxu0 0.0
      %1199 = vmatpush1.msra.mxu0 %v1154
      %1200 = vmatprep.subr.mxu0 0.0
      %1201 = vmatpush2.msra.mxu0 0.0
      %1202 = vmatprep.subr.mxu0 0.0
      %1203 = vmatpush2.msra.mxu0 0.0
      %1204 = vmatprep.subr.mxu0 0.0
      %1205 = vmatpush2.msra.mxu0 0.0
      %1206 = vmatprep.subr.mxu0 0.0
      %1207 = vmatpush2.msra.mxu0 0.0
      %1208 = vmatprep.subr.mxu0 0.0
      %1209 = vmatpush2.msra.mxu0 0.0
      %1210 = vmatprep.subr.mxu0 0.0
      %1211 = vmatpush2.msra.mxu0 0.0
      %1212 = vmatprep.subr.mxu0 0.0
      %1213 = vmatpush2.msra.mxu0 0.0
      %1214 = vmatprep.subr.mxu0 0.0
      %1215 = vmatpush2.msra.mxu0 0.0
      %1216 = vmatprep.subr.mxu0 0.0
      %1217 = vmatpush2.msra.mxu0 0.0
      %1218 = vmatprep.subr.mxu0 0.0
      %1219 = vmatpush2.msra.mxu0 0.0
      %1220 = vmatprep.subr.mxu0 0.0
      %1221 = vmatpush2.msra.mxu0 0.0
      %1222 = vmatprep.subr.mxu0 0.0
      %1223 = vmatpush2.msra.mxu0 0.0
      %1224 = vmatprep.subr.mxu0 0.0
      %1225 = vmatpush2.msra.mxu0 0.0
      %1226 = vmatprep.subr.mxu0 0.0
      %1227 = vmatpush2.msra.mxu0 0.0
      %1228 = vmatprep.subr.mxu0 0.0
      %1229 = vmatpush2.msra.mxu0 0.0
      %1230 = vmatprep.subr.mxu0 0.0
      %1231 = vmatpush2.msra.mxu0 0.0
      %1232 = vmatprep.mubr.f32.mxu0 0.0
      %1233 = vmatmul.mubr.f32.gmra.mxu0 %v1163
      %v1234 = vpop.f32.mrf.mxu0
      %v1235 = vadd.f32 0.0, %v1234
      %v1236 = vpop.f32.mrf.mxu0
      %1237 = vmatprep.mubr.f32.mxu0 0.0
      %1238 = vmatmul.mubr.f32.gmra.mxu0 %v1166
      %v1239 = vpop.f32.mrf.mxu0
      %v1240 = vadd.f32 0.0, %v1239
      %v1241 = vpop.f32.mrf.mxu0
      %1242 = vdwg.mxu0
      %v1243 = vadd.f32 %v1149, %v1235
      %v1244 = vadd.f32 %v1150, %v1240
      %v1245 = vld [vmem:[%s165 + $0xd] sm:$0xff]
      %v1246 = vld [vmem:[%s165 + $0x15] sm:$0xff]
      %v1247 = vsel %vm385, %v1245, 0.0
      %v1248 = vsel %vm386, %v1246, 0.0
      %s1249 = scalar_lea.vmem %s1, 704
      %v1250 = vld [vmem:[%s1249] sm:$0xff]
      %v1251 = vld [vmem:[%s1249 + $0x8] sm:$0xff]
      %v1252 = vld [vmem:[%s1249 + $0x10] sm:$0xff]
      %v1253 = vld [vmem:[%s1249 + $0x18] sm:$0xff]
      %v1254 = vld [vmem:[%s1249 + $0x20] sm:$0xff]
      %v1255 = vld [vmem:[%s1249 + $0x28] sm:$0xff]
      %v1256 = vld [vmem:[%s1249 + $0x30] sm:$0xff]
      %v1257 = vld [vmem:[%s1249 + $0x38] sm:$0xff]
      %v1259 = vsel %vm203, %v1247, 0
      %v1262 = vsel %vm203, %v1248, 0
      %1264 = vmatprep.subr.mxu0 0.0
      %1265 = vmatpush1.msra.mxu0 0.0
      %1266 = vmatprep.subr.mxu0 0.0
      %1267 = vmatpush1.msra.mxu0 0.0
      %1268 = vmatprep.subr.mxu0 0.0
      %1269 = vmatpush1.msra.mxu0 0.0
      %1270 = vmatprep.subr.mxu0 0.0
      %1271 = vmatpush1.msra.mxu0 0.0
      %1272 = vmatprep.subr.mxu0 0.0
      %1273 = vmatpush1.msra.mxu0 0.0
      %1274 = vmatprep.subr.mxu0 0.0
      %1275 = vmatpush1.msra.mxu0 0.0
      %1276 = vmatprep.subr.mxu0 0.0
      %1277 = vmatpush1.msra.mxu0 0.0
      %1278 = vmatprep.subr.mxu0 0.0
      %1279 = vmatpush1.msra.mxu0 0.0
      %1280 = vmatprep.subr.mxu0 0.0
      %1281 = vmatpush1.msra.mxu0 %v1257
      %1282 = vmatprep.subr.mxu0 0.0
      %1283 = vmatpush1.msra.mxu0 %v1256
      %1284 = vmatprep.subr.mxu0 0.0
      %1285 = vmatpush1.msra.mxu0 %v1255
      %1286 = vmatprep.subr.mxu0 0.0
      %1287 = vmatpush1.msra.mxu0 %v1254
      %1288 = vmatprep.subr.mxu0 0.0
      %1289 = vmatpush1.msra.mxu0 %v1253
      %1290 = vmatprep.subr.mxu0 0.0
      %1291 = vmatpush1.msra.mxu0 %v1252
      %1292 = vmatprep.subr.mxu0 0.0
      %1293 = vmatpush1.msra.mxu0 %v1251
      %1294 = vmatprep.subr.mxu0 0.0
      %1295 = vmatpush1.msra.mxu0 %v1250
      %1296 = vmatprep.subr.mxu0 0.0
      %1297 = vmatpush2.msra.mxu0 0.0
      %1298 = vmatprep.subr.mxu0 0.0
      %1299 = vmatpush2.msra.mxu0 0.0
      %1300 = vmatprep.subr.mxu0 0.0
      %1301 = vmatpush2.msra.mxu0 0.0
      %1302 = vmatprep.subr.mxu0 0.0
      %1303 = vmatpush2.msra.mxu0 0.0
      %1304 = vmatprep.subr.mxu0 0.0
      %1305 = vmatpush2.msra.mxu0 0.0
      %1306 = vmatprep.subr.mxu0 0.0
      %1307 = vmatpush2.msra.mxu0 0.0
      %1308 = vmatprep.subr.mxu0 0.0
      %1309 = vmatpush2.msra.mxu0 0.0
      %1310 = vmatprep.subr.mxu0 0.0
      %1311 = vmatpush2.msra.mxu0 0.0
      %1312 = vmatprep.subr.mxu0 0.0
      %1313 = vmatpush2.msra.mxu0 0.0
      %1314 = vmatprep.subr.mxu0 0.0
      %1315 = vmatpush2.msra.mxu0 0.0
      %1316 = vmatprep.subr.mxu0 0.0
      %1317 = vmatpush2.msra.mxu0 0.0
      %1318 = vmatprep.subr.mxu0 0.0
      %1319 = vmatpush2.msra.mxu0 0.0
      %1320 = vmatprep.subr.mxu0 0.0
      %1321 = vmatpush2.msra.mxu0 0.0
      %1322 = vmatprep.subr.mxu0 0.0
      %1323 = vmatpush2.msra.mxu0 0.0
      %1324 = vmatprep.subr.mxu0 0.0
      %1325 = vmatpush2.msra.mxu0 0.0
      %1326 = vmatprep.subr.mxu0 0.0
      %1327 = vmatpush2.msra.mxu0 0.0
      %1328 = vmatprep.mubr.f32.mxu0 0.0
      %1329 = vmatmul.mubr.f32.gmra.mxu0 %v1259
      %v1330 = vpop.f32.mrf.mxu0
      %v1331 = vadd.f32 0.0, %v1330
      %v1332 = vpop.f32.mrf.mxu0
      %1333 = vmatprep.mubr.f32.mxu0 0.0
      %1334 = vmatmul.mubr.f32.gmra.mxu0 %v1262
      %v1335 = vpop.f32.mrf.mxu0
      %v1336 = vadd.f32 0.0, %v1335
      %v1337 = vpop.f32.mrf.mxu0
      %1338 = vdwg.mxu0
      %v1339 = vadd.f32 %v1243, %v1331
      %v1340 = vadd.f32 %v1244, %v1336
      %s1341 = scalar_lea.vmem %s170, 16
      %1342 = vst [vmem:[%s1341] sm:$0xff] %v1339
      %1343 = vst [vmem:[%s1341 + $0x8] sm:$0xff] %v1340
      %p1344 = scmp.lt.s32.totalorder %s14, 1
      %s1345 = scalar_select %p1344, %s14, 1
      %s1346 = smul.addr %s1345, 4
      %s1347 = smul.addr %s1346, 8
      %s1348 = scalar_lea.vmem %s3, %s1347
      // Predicated region
      $region33: #{lfm_forward.3} parent=31 // pred_check
        %p1349 = pneg %p100
      $region34: #{lfm_forward.3} parent=31 // pred_check_branch
        %1351 = sbr.rel (%p1349) target = $region36
      $region35: #{lfm_forward.3} parent=31 // pred_region
        _
      $region36: #{lfm_forward.3} parent=31 // pred_fallthru
        _
    $region32: #{lfm_forward.3} parent=5 // pred_fallthru
      _
    %p1352 = scmp.le.s32.totalorder 2, %s9
    // Predicated region
    $region37: #{lfm_forward.3} parent=5 // pred_check
      %p1353 = pneg %p1352
    $region38: #{lfm_forward.3} parent=5 // pred_check_branch
      %1355 = sbr.rel (%p1353) target = $region40
    $region39: #{lfm_forward.3} parent=5 // pred_region
      %s1356 = ssub.s32 %s9, 2
      // Predicated region
      $region41: #{lfm_forward.3} parent=39 // pred_check
        %p1357 = pneg %p106
      $region42: #{lfm_forward.3} parent=39 // pred_check_branch
        %1359 = sbr.rel (%p1357) target = $region44
      $region43: #{lfm_forward.3} parent=39 // pred_region
        %p1360 = scmp.lt.s32.totalorder %s15, 1
        %s1361 = scalar_select %p1360, %s15, 1
        %s1362 = smul.addr %s1361, 4
        %s1363 = smul.addr %s1362, 8
        %s1364 = scalar_lea.vmem %s3, %s1363
      $region44: #{lfm_forward.3} parent=39 // pred_fallthru
        _
    $region40: #{lfm_forward.3} parent=5 // pred_fallthru
      _
  $region6: #{lfm_forward.3} parent=0 // loop_footer
    %s13 = sadd.s32 1, %s9
  $region7: #{lfm_forward.3} parent=0 // loop_footer_branch
    %8 = sbr.rel target = $region3
  $region8: #{lfm_forward.3} parent=0 // loop_exit
    _

// kernel: lfm_forward.4
$region0: #{lfm_forward.4}
  #allocation0 [shape = 'u32[]', space=smem, size = 0x4, offset = 0x4, fixed_abs, tag = 'smem constant byte address 0x4 - core index']
  #allocation1 [shape = 'u32[144,128]{1,0:T(1,128)}', space=vmem, size = 0x12000, scoped, tag = 'internal scratch']
  %s0 = inlined_call_operand.vmem [shape: f32[2,96,128], index: 0, kind: input, shape index: {}]
  %s1 = inlined_call_operand.vmem [shape: f32[12,128,128], index: 1, kind: input, shape index: {}]
  %s2 = inlined_call_operand.vmem [shape: f32[1,128], index: 2, kind: input, shape index: {}]
  %s3 = inlined_call_operand.vmem [shape: f32[2,2,64,128], index: 3, kind: output, shape index: {}]
  %s4 = sld [smem:[#allocation0]]
  $region45: #{lfm_forward.4} parent=0
    _
  %s6 = ssub.s32 1, %s4
  %s7 = scalar_select 0, %s6, %s4
  loop: start=0, step=1, limit=4
  $region2: #{lfm_forward.4} parent=0 // loop_pre_header
    _
  $region3: #{lfm_forward.4} parent=0 // loop_header
    %s9 = sphi 0, %s13
    %p10 = scmp.ge.s32.totalorder %s9, 4
    %s19 = sphi 0, %s21
    %s22 = sphi 0, %s19
    %s23 = sphi 0, %s22
    %s39 = sphi 0, %s23
    %s43 = sphi 0, %s43
    %s45 = sphi 0, %s43
    %s46 = sphi 0, %s45
    %s60 = sphi 0, %s46
    %s64 = sphi 0, %s64
    %s66 = sphi 0, %s64
    %s67 = sphi 0, %s66
    %s81 = sphi 0, %s67
    %s87 = sphi 0, %s89
    %s90 = sphi 0, %s87
    %s91 = sphi 0, %s90
    %s107 = sphi 0, %s91
  $region4: #{lfm_forward.4} parent=0 // loop_header_branch
    %12 = sbr.rel (%p10) target = $region8
  $region5: #{lfm_forward.4} parent=0 // loop_body
    %s14 = ssub.s32 %s9, 1
    %s15 = ssub.s32 %s9, 2
    %s16 = sadd.s32 %s9, 1
    %s17 = ssub.s32 %s9, %s16
    %p18 = scmp.eq.s32.totalorder %s17, 0
    %s20 = sadd.s32 %s19, 1
    %s21 = scalar_select %p18, %s19, %s20
    %p24 = pneg %p18
    %p25 = scmp.eq.s32.totalorder %s9, 1
    %p26 = por %p24, %p25
    %p27 = scmp.ne.s32.totalorder %s19, %s22
    %p28 = scmp.eq.s32.totalorder %s9, 0
    %p29 = por %p27, %p28
    %p30 = scmp.ne.s32.totalorder %s19, %s22
    %p31 = scmp.eq.s32.totalorder %s14, 1
    %p32 = por %p30, %p31
    %p33 = scmp.ne.s32.totalorder %s22, %s23
    %p34 = scmp.eq.s32.totalorder %s14, 0
    %p35 = por %p33, %p34
    %p36 = scmp.ne.s32.totalorder %s22, %s23
    %p37 = scmp.eq.s32.totalorder %s15, 1
    %p38 = por %p36, %p37
    %p40 = scmp.ne.s32.totalorder %s23, %s39
    %p41 = scmp.eq.s32.totalorder %s15, 0
    %p42 = por %p40, %p41
    %s44 = sadd.s32 %s43, 1
    %p47 = scmp.eq.s32.totalorder %s9, 1
    %p48 = scmp.ne.s32.totalorder %s43, %s45
    %p49 = scmp.eq.s32.totalorder %s9, 0
    %p50 = por %p48, %p49
    %p51 = scmp.ne.s32.totalorder %s43, %s45
    %p52 = scmp.eq.s32.totalorder %s14, 1
    %p53 = por %p51, %p52
    %p54 = scmp.ne.s32.totalorder %s45, %s46
    %p55 = scmp.eq.s32.totalorder %s14, 0
    %p56 = por %p54, %p55
    %p57 = scmp.ne.s32.totalorder %s45, %s46
    %p58 = scmp.eq.s32.totalorder %s15, 1
    %p59 = por %p57, %p58
    %p61 = scmp.ne.s32.totalorder %s46, %s60
    %p62 = scmp.eq.s32.totalorder %s15, 0
    %p63 = por %p61, %p62
    %s65 = sadd.s32 %s64, 1
    %p68 = scmp.eq.s32.totalorder %s9, 1
    %p69 = scmp.ne.s32.totalorder %s64, %s66
    %p70 = scmp.eq.s32.totalorder %s9, 0
    %p71 = por %p69, %p70
    %p72 = scmp.ne.s32.totalorder %s64, %s66
    %p73 = scmp.eq.s32.totalorder %s14, 1
    %p74 = por %p72, %p73
    %p75 = scmp.ne.s32.totalorder %s66, %s67
    %p76 = scmp.eq.s32.totalorder %s14, 0
    %p77 = por %p75, %p76
    %p78 = scmp.ne.s32.totalorder %s66, %s67
    %p79 = scmp.eq.s32.totalorder %s15, 1
    %p80 = por %p78, %p79
    %p82 = scmp.ne.s32.totalorder %s67, %s81
    %p83 = scmp.eq.s32.totalorder %s15, 0
    %p84 = por %p82, %p83
    %s85 = ssub.s32 %s9, %s16
    %p86 = scmp.eq.s32.totalorder %s85, 0
    %s88 = sadd.s32 %s87, 1
    %s89 = scalar_select %p86, %s87, %s88
    %p92 = pneg %p86
    %p93 = scmp.eq.s32.totalorder %s9, 1
    %p94 = por %p92, %p93
    %p95 = scmp.ne.s32.totalorder %s87, %s90
    %p96 = scmp.eq.s32.totalorder %s9, 0
    %p97 = por %p95, %p96
    %p98 = scmp.ne.s32.totalorder %s87, %s90
    %p99 = scmp.eq.s32.totalorder %s14, 1
    %p100 = por %p98, %p99
    %p101 = scmp.ne.s32.totalorder %s90, %s91
    %p102 = scmp.eq.s32.totalorder %s14, 0
    %p103 = por %p101, %p102
    %p104 = scmp.ne.s32.totalorder %s90, %s91
    %p105 = scmp.eq.s32.totalorder %s15, 1
    %p106 = por %p104, %p105
    %p108 = scmp.ne.s32.totalorder %s91, %s107
    %p109 = scmp.eq.s32.totalorder %s15, 0
    %p110 = por %p108, %p109
    %p111 = scmp.le.s32.totalorder 1, %s9
    %p112 = scmp.lt.s32.totalorder %s9, 3
    %p113 = pnand %p111, %p112
    %p114 = pneg %p113
    // Predicated region
    $region9: #{lfm_forward.4} parent=5 // pred_check
      _
    $region10: #{lfm_forward.4} parent=5 // pred_check_branch
      %116 = sbr.rel (%p113) target = $region12
    $region11: #{lfm_forward.4} parent=5 // pred_region
      %s117 = ssub.s32 %s9, 1
      // Predicated region
      $region13: #{lfm_forward.4} parent=11 // pred_check
        %p118 = pneg %p56
      $region14: #{lfm_forward.4} parent=11 // pred_check_branch
        %120 = sbr.rel (%p118) target = $region16
      $region15: #{lfm_forward.4} parent=11 // pred_region
        _
      $region16: #{lfm_forward.4} parent=11 // pred_fallthru
        _
      // Predicated region
      $region17: #{lfm_forward.4} parent=11 // pred_check
        %p121 = pneg %p77
      $region18: #{lfm_forward.4} parent=11 // pred_check_branch
        %123 = sbr.rel (%p121) target = $region20
      $region19: #{lfm_forward.4} parent=11 // pred_region
        _
      $region20: #{lfm_forward.4} parent=11 // pred_fallthru
        _
    $region12: #{lfm_forward.4} parent=5 // pred_fallthru
      _
    %p124 = scmp.lt.s32.totalorder %s9, 2
    // Predicated region
    $region21: #{lfm_forward.4} parent=5 // pred_check
      %p125 = pneg %p124
    $region22: #{lfm_forward.4} parent=5 // pred_check_branch
      %127 = sbr.rel (%p125) target = $region24
    $region23: #{lfm_forward.4} parent=5 // pred_region
      // Predicated region
      $region25: #{lfm_forward.4} parent=23 // pred_check
        %p128 = pneg %p29
      $region26: #{lfm_forward.4} parent=23 // pred_check_branch
        %130 = sbr.rel (%p128) target = $region28
      $region27: #{lfm_forward.4} parent=23 // pred_region
        %p131 = scmp.lt.s32.totalorder %s9, 1
        %s132 = scalar_select %p131, %s9, 1
        %s133 = smul.addr %s132, 12
        %s134 = smul.addr %s133, 8
        %s135 = scalar_lea.vmem %s0, %s134
      $region28: #{lfm_forward.4} parent=23 // pred_fallthru
        _
    $region24: #{lfm_forward.4} parent=5 // pred_fallthru
      _
    %p136 = scmp.le.s32.totalorder 1, %s9
    %p137 = scmp.lt.s32.totalorder %s9, 3
    %p138 = pnand %p136, %p137
    %p139 = pneg %p138
    // Predicated region
    $region29: #{lfm_forward.4} parent=5 // pred_check
      _
    $region30: #{lfm_forward.4} parent=5 // pred_check_branch
      %141 = sbr.rel (%p138) target = $region32
    $region31: #{lfm_forward.4} parent=5 // pred_region
      %s142 = ssub.s32 %s9, 1
      %p143 = scmp.lt.s32.totalorder %s14, 1
      %s144 = scalar_select %p143, %s14, 1
      %s145 = smul.addr %s144, 12
      %s146 = smul.addr %s145, 8
      %s147 = scalar_lea.vmem %s0, %s146
      %p148 = pneg %p35
      %p149 = pneg %p32
      %p150 = pneg %p56
      %p151 = pneg %p53
      %p152 = pneg %p77
      %p153 = pneg %p74
      %p154 = pneg %p103
      %p155 = pneg %p100
      %p156 = scmp.lt.s32.totalorder %s14, 1
      %s157 = scalar_select %p156, %s14, 1
      %s158 = smul.addr %s157, 16
      %s159 = smul.addr %s158, 8
      %s160 = scalar_lea.vmem %s3, %s159
      %p161 = scmp.lt.s32.totalorder %s14, 1
      %s162 = scalar_select %p161, %s14, 1
      %s163 = smul.addr %s162, 12
      %s164 = smul.addr %s163, 8
      %s165 = scalar_lea.vmem %s0, %s164
      %p166 = scmp.lt.s32.totalorder %s14, 1
      %s167 = scalar_select %p166, %s14, 1
      %s168 = smul.addr %s167, 16
      %s169 = smul.addr %s168, 8
      %s170 = scalar_lea.vmem %s3, %s169
      %v171 = vlaneseq
      %v172 = vshrl.u32 %v171, 7
      %v173 = vadd.s32 %v172, 8
      %v174 = vadd.s32 %v172, 16
      %v175 = vadd.s32 %v172, 24
      %v176 = vadd.s32 %v172, 32
      %v177 = vadd.s32 %v172, 40
      %v178 = vadd.s32 %v172, 48
      %v179 = vadd.s32 %v172, 56
      %v180 = vand.u32 %v172, 7
      %v181 = vand.u32 %v173, 7
      %v182 = vand.u32 %v174, 7
      %v183 = vand.u32 %v175, 7
      %v184 = vand.u32 %v176, 7
      %v185 = vand.u32 %v177, 7
      %v186 = vand.u32 %v178, 7
      %v187 = vand.u32 %v179, 7
      %vm188 = vcmp.ne.s32.totalorder %v180, 0
      %vm189 = vcmp.ne.s32.totalorder %v181, 0
      %vm190 = vcmp.ne.s32.totalorder %v182, 0
      %vm191 = vcmp.ne.s32.totalorder %v183, 0
      %vm192 = vcmp.ne.s32.totalorder %v184, 0
      %vm193 = vcmp.ne.s32.totalorder %v185, 0
      %vm194 = vcmp.ne.s32.totalorder %v186, 0
      %vm195 = vcmp.ne.s32.totalorder %v187, 0
      %vm196 = vcmp.ne.s32.totalorder %v180, 7
      %vm197 = vcmp.ne.s32.totalorder %v181, 7
      %vm198 = vcmp.ne.s32.totalorder %v182, 7
      %vm199 = vcmp.ne.s32.totalorder %v183, 7
      %vm200 = vcmp.ne.s32.totalorder %v184, 7
      %vm201 = vcmp.ne.s32.totalorder %v185, 7
      %vm202 = vcmp.ne.s32.totalorder %v186, 7
      %vm203 = vcmp.ne.s32.totalorder %v187, 7
      %v204 = vld [vmem:[%s2] sm:$0x1]
      %v206 = vlaneseq
      %v207 = vshrl.u32 %v206, 7
      %v208 = vsub.s32 0, %v207
      %v209 = vrot.slane %v204, %v208
      %v211 = vld [vmem:[%s165 + $0xf] sm:$0xff]
      %v212 = vld [vmem:[%s165 + $0x17] sm:$0xff]
      %v213 = vld [vmem:[%s165 + $0x1f] sm:$0xff]
      %v214 = vld [vmem:[%s165 + $0x27] sm:$0xff]
      %v215 = vld [vmem:[%s165 + $0x2f] sm:$0xff]
      %v216 = vld [vmem:[%s165 + $0x37] sm:$0xff]
      %v217 = vld [vmem:[%s165 + $0x3f] sm:$0xff]
      %v218 = vld [vmem:[%s165 + $0x47] sm:$0xff]
      %v219 = vsel %vm188, 1, 0
      %v220 = vsel %vm189, 1, 0
      %v221 = vsel %vm190, 1, 0
      %v222 = vsel %vm191, 1, 0
      %v223 = vsel %vm192, 1, 0
      %v224 = vsel %vm193, 1, 0
      %v225 = vsel %vm194, 1, 0
      %v226 = vsel %vm195, 1, 0
      %vm227 = vcmp.eq.s32.totalorder %v219, 1
      %vm228 = vcmp.eq.s32.totalorder %v220, 1
      %vm229 = vcmp.eq.s32.totalorder %v221, 1
      %vm230 = vcmp.eq.s32.totalorder %v222, 1
      %vm231 = vcmp.eq.s32.totalorder %v223, 1
      %vm232 = vcmp.eq.s32.totalorder %v224, 1
      %vm233 = vcmp.eq.s32.totalorder %v225, 1
      %vm234 = vcmp.eq.s32.totalorder %v226, 1
      %v235 = vsel %vm227, %v211, 0.0
      %v236 = vsel %vm228, %v212, 0.0
      %v237 = vsel %vm229, %v213, 0.0
      %v238 = vsel %vm230, %v214, 0.0
      %v239 = vsel %vm231, %v215, 0.0
      %v240 = vsel %vm232, %v216, 0.0
      %v241 = vsel %vm233, %v217, 0.0
      %v242 = vsel %vm234, %v218, 0.0
      %v243 = vld [vmem:[%s1] sm:$0xff]
      %v244 = vld [vmem:[%s1 + $0x8] sm:$0xff]
      %v245 = vld [vmem:[%s1 + $0x10] sm:$0xff]
      %v246 = vld [vmem:[%s1 + $0x18] sm:$0xff]
      %v247 = vld [vmem:[%s1 + $0x20] sm:$0xff]
      %v248 = vld [vmem:[%s1 + $0x28] sm:$0xff]
      %v249 = vld [vmem:[%s1 + $0x30] sm:$0xff]
      %v250 = vld [vmem:[%s1 + $0x38] sm:$0xff]
      %v251 = vld [vmem:[%s1 + $0x40] sm:$0xff]
      %v252 = vld [vmem:[%s1 + $0x48] sm:$0xff]
      %v253 = vld [vmem:[%s1 + $0x50] sm:$0xff]
      %v254 = vld [vmem:[%s1 + $0x58] sm:$0xff]
      %v255 = vld [vmem:[%s1 + $0x60] sm:$0xff]
      %v256 = vld [vmem:[%s1 + $0x68] sm:$0xff]
      %v257 = vld [vmem:[%s1 + $0x70] sm:$0xff]
      %v258 = vld [vmem:[%s1 + $0x78] sm:$0xff]
      %259 = vmatprep.subr.mxu0 0.0
      %260 = vmatpush1.msra.mxu0 %v258
      %261 = vmatprep.subr.mxu0 0.0
      %262 = vmatpush1.msra.mxu0 %v257
      %263 = vmatprep.subr.mxu0 0.0
      %264 = vmatpush1.msra.mxu0 %v256
      %265 = vmatprep.subr.mxu0 0.0
      %266 = vmatpush1.msra.mxu0 %v255
      %267 = vmatprep.subr.mxu0 0.0
      %268 = vmatpush1.msra.mxu0 %v254
      %269 = vmatprep.subr.mxu0 0.0
      %270 = vmatpush1.msra.mxu0 %v253
      %271 = vmatprep.subr.mxu0 0.0
      %272 = vmatpush1.msra.mxu0 %v252
      %273 = vmatprep.subr.mxu0 0.0
      %274 = vmatpush1.msra.mxu0 %v251
      %275 = vmatprep.subr.mxu0 0.0
      %276 = vmatpush1.msra.mxu0 %v250
      %277 = vmatprep.subr.mxu0 0.0
      %278 = vmatpush1.msra.mxu0 %v249
      %279 = vmatprep.subr.mxu0 0.0
      %280 = vmatpush1.msra.mxu0 %v248
      %281 = vmatprep.subr.mxu0 0.0
      %282 = vmatpush1.msra.mxu0 %v247
      %283 = vmatprep.subr.mxu0 0.0
      %284 = vmatpush1.msra.mxu0 %v246
      %285 = vmatprep.subr.mxu0 0.0
      %286 = vmatpush1.msra.mxu0 %v245
      %287 = vmatprep.subr.mxu0 0.0
      %288 = vmatpush1.msra.mxu0 %v244
      %289 = vmatprep.subr.mxu0 0.0
      %290 = vmatpush1.msra.mxu0 %v243
      %291 = vmatprep.subr.mxu0 0.0
      %292 = vmatpush2.msra.mxu0 0.0
      %293 = vmatprep.subr.mxu0 0.0
      %294 = vmatpush2.msra.mxu0 0.0
      %295 = vmatprep.subr.mxu0 0.0
      %296 = vmatpush2.msra.mxu0 0.0
      %297 = vmatprep.subr.mxu0 0.0
      %298 = vmatpush2.msra.mxu0 0.0
      %299 = vmatprep.subr.mxu0 0.0
      %300 = vmatpush2.msra.mxu0 0.0
      %301 = vmatprep.subr.mxu0 0.0
      %302 = vmatpush2.msra.mxu0 0.0
      %303 = vmatprep.subr.mxu0 0.0
      %304 = vmatpush2.msra.mxu0 0.0
      %305 = vmatprep.subr.mxu0 0.0
      %306 = vmatpush2.msra.mxu0 0.0
      %307 = vmatprep.subr.mxu0 0.0
      %308 = vmatpush2.msra.mxu0 0.0
      %309 = vmatprep.subr.mxu0 0.0
      %310 = vmatpush2.msra.mxu0 0.0
      %311 = vmatprep.subr.mxu0 0.0
      %312 = vmatpush2.msra.mxu0 0.0
      %313 = vmatprep.subr.mxu0 0.0
      %314 = vmatpush2.msra.mxu0 0.0
      %315 = vmatprep.subr.mxu0 0.0
      %316 = vmatpush2.msra.mxu0 0.0
      %317 = vmatprep.subr.mxu0 0.0
      %318 = vmatpush2.msra.mxu0 0.0
      %319 = vmatprep.subr.mxu0 0.0
      %320 = vmatpush2.msra.mxu0 0.0
      %321 = vmatprep.subr.mxu0 0.0
      %322 = vmatpush2.msra.mxu0 0.0
      %323 = vmatprep.mubr.f32.mxu0 0.0
      %324 = vmatmul.mubr.f32.gmra.mxu0 %v235
      %v325 = vpop.f32.mrf.mxu0
      %v326 = vadd.f32 0.0, %v325
      %v327 = vpop.f32.mrf.mxu0
      %328 = vmatprep.mubr.f32.mxu0 0.0
      %329 = vmatmul.mubr.f32.gmra.mxu0 %v236
      %v330 = vpop.f32.mrf.mxu0
      %v331 = vadd.f32 0.0, %v330
      %v332 = vpop.f32.mrf.mxu0
      %333 = vmatprep.mubr.f32.mxu0 0.0
      %334 = vmatmul.mubr.f32.gmra.mxu0 %v237
      %v335 = vpop.f32.mrf.mxu0
      %v336 = vadd.f32 0.0, %v335
      %v337 = vpop.f32.mrf.mxu0
      %338 = vmatprep.mubr.f32.mxu0 0.0
      %339 = vmatmul.mubr.f32.gmra.mxu0 %v238
      %v340 = vpop.f32.mrf.mxu0
      %v341 = vadd.f32 0.0, %v340
      %v342 = vpop.f32.mrf.mxu0
      %343 = vmatprep.mubr.f32.mxu0 0.0
      %344 = vmatmul.mubr.f32.gmra.mxu0 %v239
      %v345 = vpop.f32.mrf.mxu0
      %v346 = vadd.f32 0.0, %v345
      %v347 = vpop.f32.mrf.mxu0
      %348 = vmatprep.mubr.f32.mxu0 0.0
      %349 = vmatmul.mubr.f32.gmra.mxu0 %v240
      %v350 = vpop.f32.mrf.mxu0
      %v351 = vadd.f32 0.0, %v350
      %v352 = vpop.f32.mrf.mxu0
      %353 = vmatprep.mubr.f32.mxu0 0.0
      %354 = vmatmul.mubr.f32.gmra.mxu0 %v241
      %v355 = vpop.f32.mrf.mxu0
      %v356 = vadd.f32 0.0, %v355
      %v357 = vpop.f32.mrf.mxu0
      %358 = vmatprep.mubr.f32.mxu0 0.0
      %359 = vmatmul.mubr.f32.gmra.mxu0 %v242
      %v360 = vpop.f32.mrf.mxu0
      %v361 = vadd.f32 0.0, %v360
      %v362 = vpop.f32.mrf.mxu0
      %363 = vdwg.mxu0
      %v364 = vadd.f32 %v209, %v326
      %v365 = vadd.f32 %v209, %v331
      %v366 = vadd.f32 %v209, %v336
      %v367 = vadd.f32 %v209, %v341
      %v368 = vadd.f32 %v209, %v346
      %v369 = vadd.f32 %v209, %v351
      %v370 = vadd.f32 %v209, %v356
      %v371 = vadd.f32 %v209, %v361
      %v372 = vld [vmem:[%s165 + $0x10] sm:$0xff]
      %v373 = vld [vmem:[%s165 + $0x18] sm:$0xff]
      %v374 = vld [vmem:[%s165 + $0x20] sm:$0xff]
      %v375 = vld [vmem:[%s165 + $0x28] sm:$0xff]
      %v376 = vld [vmem:[%s165 + $0x30] sm:$0xff]
      %v377 = vld [vmem:[%s165 + $0x38] sm:$0xff]
      %v378 = vld [vmem:[%s165 + $0x40] sm:$0xff]
      %v379 = vld [vmem:[%s165 + $0x48] sm:$0xff]
      %s380 = scalar_lea.vmem %s1, 128
      %v381 = vld [vmem:[%s380] sm:$0xff]
      %v382 = vld [vmem:[%s380 + $0x8] sm:$0xff]
      %v383 = vld [vmem:[%s380 + $0x10] sm:$0xff]
      %v384 = vld [vmem:[%s380 + $0x18] sm:$0xff]
      %v385 = vld [vmem:[%s380 + $0x20] sm:$0xff]
      %v386 = vld [vmem:[%s380 + $0x28] sm:$0xff]
      %v387 = vld [vmem:[%s380 + $0x30] sm:$0xff]
      %v388 = vld [vmem:[%s380 + $0x38] sm:$0xff]
      %v389 = vld [vmem:[%s380 + $0x40] sm:$0xff]
      %v390 = vld [vmem:[%s380 + $0x48] sm:$0xff]
      %v391 = vld [vmem:[%s380 + $0x50] sm:$0xff]
      %v392 = vld [vmem:[%s380 + $0x58] sm:$0xff]
      %v393 = vld [vmem:[%s380 + $0x60] sm:$0xff]
      %v394 = vld [vmem:[%s380 + $0x68] sm:$0xff]
      %v395 = vld [vmem:[%s380 + $0x70] sm:$0xff]
      %v396 = vld [vmem:[%s380 + $0x78] sm:$0xff]
      %397 = vmatprep.subr.mxu0 0.0
      %398 = vmatpush1.msra.mxu0 %v396
      %399 = vmatprep.subr.mxu0 0.0
      %400 = vmatpush1.msra.mxu0 %v395
      %401 = vmatprep.subr.mxu0 0.0
      %402 = vmatpush1.msra.mxu0 %v394
      %403 = vmatprep.subr.mxu0 0.0
      %404 = vmatpush1.msra.mxu0 %v393
      %405 = vmatprep.subr.mxu0 0.0
      %406 = vmatpush1.msra.mxu0 %v392
      %407 = vmatprep.subr.mxu0 0.0
      %408 = vmatpush1.msra.mxu0 %v391
      %409 = vmatprep.subr.mxu0 0.0
      %410 = vmatpush1.msra.mxu0 %v390
      %411 = vmatprep.subr.mxu0 0.0
      %412 = vmatpush1.msra.mxu0 %v389
      %413 = vmatprep.subr.mxu0 0.0
      %414 = vmatpush1.msra.mxu0 %v388
      %415 = vmatprep.subr.mxu0 0.0
      %416 = vmatpush1.msra.mxu0 %v387
      %417 = vmatprep.subr.mxu0 0.0
      %418 = vmatpush1.msra.mxu0 %v386
      %419 = vmatprep.subr.mxu0 0.0
      %420 = vmatpush1.msra.mxu0 %v385
      %421 = vmatprep.subr.mxu0 0.0
      %422 = vmatpush1.msra.mxu0 %v384
      %423 = vmatprep.subr.mxu0 0.0
      %424 = vmatpush1.msra.mxu0 %v383
      %425 = vmatprep.subr.mxu0 0.0
      %426 = vmatpush1.msra.mxu0 %v382
      %427 = vmatprep.subr.mxu0 0.0
      %428 = vmatpush1.msra.mxu0 %v381
      %429 = vmatprep.subr.mxu0 0.0
      %430 = vmatpush2.msra.mxu0 0.0
      %431 = vmatprep.subr.mxu0 0.0
      %432 = vmatpush2.msra.mxu0 0.0
      %433 = vmatprep.subr.mxu0 0.0
      %434 = vmatpush2.msra.mxu0 0.0
      %435 = vmatprep.subr.mxu0 0.0
      %436 = vmatpush2.msra.mxu0 0.0
      %437 = vmatprep.subr.mxu0 0.0
      %438 = vmatpush2.msra.mxu0 0.0
      %439 = vmatprep.subr.mxu0 0.0
      %440 = vmatpush2.msra.mxu0 0.0
      %441 = vmatprep.subr.mxu0 0.0
      %442 = vmatpush2.msra.mxu0 0.0
      %443 = vmatprep.subr.mxu0 0.0
      %444 = vmatpush2.msra.mxu0 0.0
      %445 = vmatprep.subr.mxu0 0.0
      %446 = vmatpush2.msra.mxu0 0.0
      %447 = vmatprep.subr.mxu0 0.0
      %448 = vmatpush2.msra.mxu0 0.0
      %449 = vmatprep.subr.mxu0 0.0
      %450 = vmatpush2.msra.mxu0 0.0
      %451 = vmatprep.subr.mxu0 0.0
      %452 = vmatpush2.msra.mxu0 0.0
      %453 = vmatprep.subr.mxu0 0.0
      %454 = vmatpush2.msra.mxu0 0.0
      %455 = vmatprep.subr.mxu0 0.0
      %456 = vmatpush2.msra.mxu0 0.0
      %457 = vmatprep.subr.mxu0 0.0
      %458 = vmatpush2.msra.mxu0 0.0
      %459 = vmatprep.subr.mxu0 0.0
      %460 = vmatpush2.msra.mxu0 0.0
      %461 = vmatprep.mubr.f32.mxu0 0.0
      %462 = vmatmul.mubr.f32.gmra.mxu0 %v372
      %v463 = vpop.f32.mrf.mxu0
      %v464 = vadd.f32 0.0, %v463
      %v465 = vpop.f32.mrf.mxu0
      %466 = vmatprep.mubr.f32.mxu0 0.0
      %467 = vmatmul.mubr.f32.gmra.mxu0 %v373
      %v468 = vpop.f32.mrf.mxu0
      %v469 = vadd.f32 0.0, %v468
      %v470 = vpop.f32.mrf.mxu0
      %471 = vmatprep.mubr.f32.mxu0 0.0
      %472 = vmatmul.mubr.f32.gmra.mxu0 %v374
      %v473 = vpop.f32.mrf.mxu0
      %v474 = vadd.f32 0.0, %v473
      %v475 = vpop.f32.mrf.mxu0
      %476 = vmatprep.mubr.f32.mxu0 0.0
      %477 = vmatmul.mubr.f32.gmra.mxu0 %v375
      %v478 = vpop.f32.mrf.mxu0
      %v479 = vadd.f32 0.0, %v478
      %v480 = vpop.f32.mrf.mxu0
      %481 = vmatprep.mubr.f32.mxu0 0.0
      %482 = vmatmul.mubr.f32.gmra.mxu0 %v376
      %v483 = vpop.f32.mrf.mxu0
      %v484 = vadd.f32 0.0, %v483
      %v485 = vpop.f32.mrf.mxu0
      %486 = vmatprep.mubr.f32.mxu0 0.0
      %487 = vmatmul.mubr.f32.gmra.mxu0 %v377
      %v488 = vpop.f32.mrf.mxu0
      %v489 = vadd.f32 0.0, %v488
      %v490 = vpop.f32.mrf.mxu0
      %491 = vmatprep.mubr.f32.mxu0 0.0
      %492 = vmatmul.mubr.f32.gmra.mxu0 %v378
      %v493 = vpop.f32.mrf.mxu0
      %v494 = vadd.f32 0.0, %v493
      %v495 = vpop.f32.mrf.mxu0
      %496 = vmatprep.mubr.f32.mxu0 0.0
      %497 = vmatmul.mubr.f32.gmra.mxu0 %v379
      %v498 = vpop.f32.mrf.mxu0
      %v499 = vadd.f32 0.0, %v498
      %v500 = vpop.f32.mrf.mxu0
      %501 = vdwg.mxu0
      %v502 = vadd.f32 %v364, %v464
      %v503 = vadd.f32 %v365, %v469
      %v504 = vadd.f32 %v366, %v474
      %v505 = vadd.f32 %v367, %v479
      %v506 = vadd.f32 %v368, %v484
      %v507 = vadd.f32 %v369, %v489
      %v508 = vadd.f32 %v370, %v494
      %v509 = vadd.f32 %v371, %v499
      %v510 = vld [vmem:[%s165 + $0x11] sm:$0xff]
      %v511 = vld [vmem:[%s165 + $0x19] sm:$0xff]
      %v512 = vld [vmem:[%s165 + $0x21] sm:$0xff]
      %v513 = vld [vmem:[%s165 + $0x29] sm:$0xff]
      %v514 = vld [vmem:[%s165 + $0x31] sm:$0xff]
      %v515 = vld [vmem:[%s165 + $0x39] sm:$0xff]
      %v516 = vld [vmem:[%s165 + $0x41] sm:$0xff]
      %v517 = vld [vmem:[%s165 + $0x49] sm:$0xff]
      %v518 = vsel %vm196, 1, 0
      %v519 = vsel %vm197, 1, 0
      %v520 = vsel %vm198, 1, 0
      %v521 = vsel %vm199, 1, 0
      %v522 = vsel %vm200, 1, 0
      %v523 = vsel %vm201, 1, 0
      %v524 = vsel %vm202, 1, 0
      %v525 = vsel %vm203, 1, 0
      %vm526 = vcmp.eq.s32.totalorder %v518, 1
      %vm527 = vcmp.eq.s32.totalorder %v519, 1
      %vm528 = vcmp.eq.s32.totalorder %v520, 1
      %vm529 = vcmp.eq.s32.totalorder %v521, 1
      %vm530 = vcmp.eq.s32.totalorder %v522, 1
      %vm531 = vcmp.eq.s32.totalorder %v523, 1
      %vm532 = vcmp.eq.s32.totalorder %v524, 1
      %vm533 = vcmp.eq.s32.totalorder %v525, 1
      %v534 = vsel %vm526, %v510, 0.0
      %v535 = vsel %vm527, %v511, 0.0
      %v536 = vsel %vm528, %v512, 0.0
      %v537 = vsel %vm529, %v513, 0.0
      %v538 = vsel %vm530, %v514, 0.0
      %v539 = vsel %vm531, %v515, 0.0
      %v540 = vsel %vm532, %v516, 0.0
      %v541 = vsel %vm533, %v517, 0.0
      %s542 = scalar_lea.vmem %s1, 256
      %v543 = vld [vmem:[%s542] sm:$0xff]
      %v544 = vld [vmem:[%s542 + $0x8] sm:$0xff]
      %v545 = vld [vmem:[%s542 + $0x10] sm:$0xff]
      %v546 = vld [vmem:[%s542 + $0x18] sm:$0xff]
      %v547 = vld [vmem:[%s542 + $0x20] sm:$0xff]
      %v548 = vld [vmem:[%s542 + $0x28] sm:$0xff]
      %v549 = vld [vmem:[%s542 + $0x30] sm:$0xff]
      %v550 = vld [vmem:[%s542 + $0x38] sm:$0xff]
      %v551 = vld [vmem:[%s542 + $0x40] sm:$0xff]
      %v552 = vld [vmem:[%s542 + $0x48] sm:$0xff]
      %v553 = vld [vmem:[%s542 + $0x50] sm:$0xff]
      %v554 = vld [vmem:[%s542 + $0x58] sm:$0xff]
      %v555 = vld [vmem:[%s542 + $0x60] sm:$0xff]
      %v556 = vld [vmem:[%s542 + $0x68] sm:$0xff]
      %v557 = vld [vmem:[%s542 + $0x70] sm:$0xff]
      %v558 = vld [vmem:[%s542 + $0x78] sm:$0xff]
      %559 = vmatprep.subr.mxu0 0.0
      %560 = vmatpush1.msra.mxu0 %v558
      %561 = vmatprep.subr.mxu0 0.0
      %562 = vmatpush1.msra.mxu0 %v557
      %563 = vmatprep.subr.mxu0 0.0
      %564 = vmatpush1.msra.mxu0 %v556
      %565 = vmatprep.subr.mxu0 0.0
      %566 = vmatpush1.msra.mxu0 %v555
      %567 = vmatprep.subr.mxu0 0.0
      %568 = vmatpush1.msra.mxu0 %v554
      %569 = vmatprep.subr.mxu0 0.0
      %570 = vmatpush1.msra.mxu0 %v553
      %571 = vmatprep.subr.mxu0 0.0
      %572 = vmatpush1.msra.mxu0 %v552
      %573 = vmatprep.subr.mxu0 0.0
      %574 = vmatpush1.msra.mxu0 %v551
      %575 = vmatprep.subr.mxu0 0.0
      %576 = vmatpush1.msra.mxu0 %v550
      %577 = vmatprep.subr.mxu0 0.0
      %578 = vmatpush1.msra.mxu0 %v549
      %579 = vmatprep.subr.mxu0 0.0
      %580 = vmatpush1.msra.mxu0 %v548
      %581 = vmatprep.subr.mxu0 0.0
      %582 = vmatpush1.msra.mxu0 %v547
      %583 = vmatprep.subr.mxu0 0.0
      %584 = vmatpush1.msra.mxu0 %v546
      %585 = vmatprep.subr.mxu0 0.0
      %586 = vmatpush1.msra.mxu0 %v545
      %587 = vmatprep.subr.mxu0 0.0
      %588 = vmatpush1.msra.mxu0 %v544
      %589 = vmatprep.subr.mxu0 0.0
      %590 = vmatpush1.msra.mxu0 %v543
      %591 = vmatprep.subr.mxu0 0.0
      %592 = vmatpush2.msra.mxu0 0.0
      %593 = vmatprep.subr.mxu0 0.0
      %594 = vmatpush2.msra.mxu0 0.0
      %595 = vmatprep.subr.mxu0 0.0
      %596 = vmatpush2.msra.mxu0 0.0
      %597 = vmatprep.subr.mxu0 0.0
      %598 = vmatpush2.msra.mxu0 0.0
      %599 = vmatprep.subr.mxu0 0.0
      %600 = vmatpush2.msra.mxu0 0.0
      %601 = vmatprep.subr.mxu0 0.0
      %602 = vmatpush2.msra.mxu0 0.0
      %603 = vmatprep.subr.mxu0 0.0
      %604 = vmatpush2.msra.mxu0 0.0
      %605 = vmatprep.subr.mxu0 0.0
      %606 = vmatpush2.msra.mxu0 0.0
      %607 = vmatprep.subr.mxu0 0.0
      %608 = vmatpush2.msra.mxu0 0.0
      %609 = vmatprep.subr.mxu0 0.0
      %610 = vmatpush2.msra.mxu0 0.0
      %611 = vmatprep.subr.mxu0 0.0
      %612 = vmatpush2.msra.mxu0 0.0
      %613 = vmatprep.subr.mxu0 0.0
      %614 = vmatpush2.msra.mxu0 0.0
      %615 = vmatprep.subr.mxu0 0.0
      %616 = vmatpush2.msra.mxu0 0.0
      %617 = vmatprep.subr.mxu0 0.0
      %618 = vmatpush2.msra.mxu0 0.0
      %619 = vmatprep.subr.mxu0 0.0
      %620 = vmatpush2.msra.mxu0 0.0
      %621 = vmatprep.subr.mxu0 0.0
      %622 = vmatpush2.msra.mxu0 0.0
      %623 = vmatprep.mubr.f32.mxu0 0.0
      %624 = vmatmul.mubr.f32.gmra.mxu0 %v534
      %v625 = vpop.f32.mrf.mxu0
      %v626 = vadd.f32 0.0, %v625
      %v627 = vpop.f32.mrf.mxu0
      %628 = vmatprep.mubr.f32.mxu0 0.0
      %629 = vmatmul.mubr.f32.gmra.mxu0 %v535
      %v630 = vpop.f32.mrf.mxu0
      %v631 = vadd.f32 0.0, %v630
      %v632 = vpop.f32.mrf.mxu0
      %633 = vmatprep.mubr.f32.mxu0 0.0
      %634 = vmatmul.mubr.f32.gmra.mxu0 %v536
      %v635 = vpop.f32.mrf.mxu0
      %v636 = vadd.f32 0.0, %v635
      %v637 = vpop.f32.mrf.mxu0
      %638 = vmatprep.mubr.f32.mxu0 0.0
      %639 = vmatmul.mubr.f32.gmra.mxu0 %v537
      %v640 = vpop.f32.mrf.mxu0
      %v641 = vadd.f32 0.0, %v640
      %v642 = vpop.f32.mrf.mxu0
      %643 = vmatprep.mubr.f32.mxu0 0.0
      %644 = vmatmul.mubr.f32.gmra.mxu0 %v538
      %v645 = vpop.f32.mrf.mxu0
      %v646 = vadd.f32 0.0, %v645
      %v647 = vpop.f32.mrf.mxu0
      %648 = vmatprep.mubr.f32.mxu0 0.0
      %649 = vmatmul.mubr.f32.gmra.mxu0 %v539
      %v650 = vpop.f32.mrf.mxu0
      %v651 = vadd.f32 0.0, %v650
      %v652 = vpop.f32.mrf.mxu0
      %653 = vmatprep.mubr.f32.mxu0 0.0
      %654 = vmatmul.mubr.f32.gmra.mxu0 %v540
      %v655 = vpop.f32.mrf.mxu0
      %v656 = vadd.f32 0.0, %v655
      %v657 = vpop.f32.mrf.mxu0
      %658 = vmatprep.mubr.f32.mxu0 0.0
      %659 = vmatmul.mubr.f32.gmra.mxu0 %v541
      %v660 = vpop.f32.mrf.mxu0
      %v661 = vadd.f32 0.0, %v660
      %v662 = vpop.f32.mrf.mxu0
      %663 = vdwg.mxu0
      %v664 = vadd.f32 %v502, %v626
      %v665 = vadd.f32 %v503, %v631
      %v666 = vadd.f32 %v504, %v636
      %v667 = vadd.f32 %v505, %v641
      %v668 = vadd.f32 %v506, %v646
      %v669 = vadd.f32 %v507, %v651
      %v670 = vadd.f32 %v508, %v656
      %v671 = vadd.f32 %v509, %v661
      %v672 = vld [vmem:[%s165 + $0x7] sm:$0xff]
      %v673 = vld [vmem:[%s165 + $0xf] sm:$0xff]
      %v674 = vld [vmem:[%s165 + $0x17] sm:$0xff]
      %v675 = vld [vmem:[%s165 + $0x1f] sm:$0xff]
      %v676 = vld [vmem:[%s165 + $0x27] sm:$0xff]
      %v677 = vld [vmem:[%s165 + $0x2f] sm:$0xff]
      %v678 = vld [vmem:[%s165 + $0x37] sm:$0xff]
      %v679 = vld [vmem:[%s165 + $0x3f] sm:$0xff]
      %v680 = vsel %vm227, %v672, 0.0
      %v681 = vsel %vm228, %v673, 0.0
      %v682 = vsel %vm229, %v674, 0.0
      %v683 = vsel %vm230, %v675, 0.0
      %v684 = vsel %vm231, %v676, 0.0
      %v685 = vsel %vm232, %v677, 0.0
      %v686 = vsel %vm233, %v678, 0.0
      %v687 = vsel %vm234, %v679, 0.0
      %s688 = scalar_lea.vmem %s1, 384
      %v689 = vld [vmem:[%s688] sm:$0xff]
      %v690 = vld [vmem:[%s688 + $0x8] sm:$0xff]
      %v691 = vld [vmem:[%s688 + $0x10] sm:$0xff]
      %v692 = vld [vmem:[%s688 + $0x18] sm:$0xff]
      %v693 = vld [vmem:[%s688 + $0x20] sm:$0xff]
      %v694 = vld [vmem:[%s688 + $0x28] sm:$0xff]
      %v695 = vld [vmem:[%s688 + $0x30] sm:$0xff]
      %v696 = vld [vmem:[%s688 + $0x38] sm:$0xff]
      %v697 = vld [vmem:[%s688 + $0x40] sm:$0xff]
      %v698 = vld [vmem:[%s688 + $0x48] sm:$0xff]
      %v699 = vld [vmem:[%s688 + $0x50] sm:$0xff]
      %v700 = vld [vmem:[%s688 + $0x58] sm:$0xff]
      %v701 = vld [vmem:[%s688 + $0x60] sm:$0xff]
      %v702 = vld [vmem:[%s688 + $0x68] sm:$0xff]
      %v703 = vld [vmem:[%s688 + $0x70] sm:$0xff]
      %v704 = vld [vmem:[%s688 + $0x78] sm:$0xff]
      %705 = vmatprep.subr.mxu0 0.0
      %706 = vmatpush1.msra.mxu0 %v704
      %707 = vmatprep.subr.mxu0 0.0
      %708 = vmatpush1.msra.mxu0 %v703
      %709 = vmatprep.subr.mxu0 0.0
      %710 = vmatpush1.msra.mxu0 %v702
      %711 = vmatprep.subr.mxu0 0.0
      %712 = vmatpush1.msra.mxu0 %v701
      %713 = vmatprep.subr.mxu0 0.0
      %714 = vmatpush1.msra.mxu0 %v700
      %715 = vmatprep.subr.mxu0 0.0
      %716 = vmatpush1.msra.mxu0 %v699
      %717 = vmatprep.subr.mxu0 0.0
      %718 = vmatpush1.msra.mxu0 %v698
      %719 = vmatprep.subr.mxu0 0.0
      %720 = vmatpush1.msra.mxu0 %v697
      %721 = vmatprep.subr.mxu0 0.0
      %722 = vmatpush1.msra.mxu0 %v696
      %723 = vmatprep.subr.mxu0 0.0
      %724 = vmatpush1.msra.mxu0 %v695
      %725 = vmatprep.subr.mxu0 0.0
      %726 = vmatpush1.msra.mxu0 %v694
      %727 = vmatprep.subr.mxu0 0.0
      %728 = vmatpush1.msra.mxu0 %v693
      %729 = vmatprep.subr.mxu0 0.0
      %730 = vmatpush1.msra.mxu0 %v692
      %731 = vmatprep.subr.mxu0 0.0
      %732 = vmatpush1.msra.mxu0 %v691
      %733 = vmatprep.subr.mxu0 0.0
      %734 = vmatpush1.msra.mxu0 %v690
      %735 = vmatprep.subr.mxu0 0.0
      %736 = vmatpush1.msra.mxu0 %v689
      %737 = vmatprep.subr.mxu0 0.0
      %738 = vmatpush2.msra.mxu0 0.0
      %739 = vmatprep.subr.mxu0 0.0
      %740 = vmatpush2.msra.mxu0 0.0
      %741 = vmatprep.subr.mxu0 0.0
      %742 = vmatpush2.msra.mxu0 0.0
      %743 = vmatprep.subr.mxu0 0.0
      %744 = vmatpush2.msra.mxu0 0.0
      %745 = vmatprep.subr.mxu0 0.0
      %746 = vmatpush2.msra.mxu0 0.0
      %747 = vmatprep.subr.mxu0 0.0
      %748 = vmatpush2.msra.mxu0 0.0
      %749 = vmatprep.subr.mxu0 0.0
      %750 = vmatpush2.msra.mxu0 0.0
      %751 = vmatprep.subr.mxu0 0.0
      %752 = vmatpush2.msra.mxu0 0.0
      %753 = vmatprep.subr.mxu0 0.0
      %754 = vmatpush2.msra.mxu0 0.0
      %755 = vmatprep.subr.mxu0 0.0
      %756 = vmatpush2.msra.mxu0 0.0
      %757 = vmatprep.subr.mxu0 0.0
      %758 = vmatpush2.msra.mxu0 0.0
      %759 = vmatprep.subr.mxu0 0.0
      %760 = vmatpush2.msra.mxu0 0.0
      %761 = vmatprep.subr.mxu0 0.0
      %762 = vmatpush2.msra.mxu0 0.0
      %763 = vmatprep.subr.mxu0 0.0
      %764 = vmatpush2.msra.mxu0 0.0
      %765 = vmatprep.subr.mxu0 0.0
      %766 = vmatpush2.msra.mxu0 0.0
      %767 = vmatprep.subr.mxu0 0.0
      %768 = vmatpush2.msra.mxu0 0.0
      %769 = vmatprep.mubr.f32.mxu0 0.0
      %770 = vmatmul.mubr.f32.gmra.mxu0 %v680
      %v771 = vpop.f32.mrf.mxu0
      %v772 = vadd.f32 0.0, %v771
      %v773 = vpop.f32.mrf.mxu0
      %774 = vmatprep.mubr.f32.mxu0 0.0
      %775 = vmatmul.mubr.f32.gmra.mxu0 %v681
      %v776 = vpop.f32.mrf.mxu0
      %v777 = vadd.f32 0.0, %v776
      %v778 = vpop.f32.mrf.mxu0
      %779 = vmatprep.mubr.f32.mxu0 0.0
      %780 = vmatmul.mubr.f32.gmra.mxu0 %v682
      %v781 = vpop.f32.mrf.mxu0
      %v782 = vadd.f32 0.0, %v781
      %v783 = vpop.f32.mrf.mxu0
      %784 = vmatprep.mubr.f32.mxu0 0.0
      %785 = vmatmul.mubr.f32.gmra.mxu0 %v683
      %v786 = vpop.f32.mrf.mxu0
      %v787 = vadd.f32 0.0, %v786
      %v788 = vpop.f32.mrf.mxu0
      %789 = vmatprep.mubr.f32.mxu0 0.0
      %790 = vmatmul.mubr.f32.gmra.mxu0 %v684
      %v791 = vpop.f32.mrf.mxu0
      %v792 = vadd.f32 0.0, %v791
      %v793 = vpop.f32.mrf.mxu0
      %794 = vmatprep.mubr.f32.mxu0 0.0
      %795 = vmatmul.mubr.f32.gmra.mxu0 %v685
      %v796 = vpop.f32.mrf.mxu0
      %v797 = vadd.f32 0.0, %v796
      %v798 = vpop.f32.mrf.mxu0
      %799 = vmatprep.mubr.f32.mxu0 0.0
      %800 = vmatmul.mubr.f32.gmra.mxu0 %v686
      %v801 = vpop.f32.mrf.mxu0
      %v802 = vadd.f32 0.0, %v801
      %v803 = vpop.f32.mrf.mxu0
      %804 = vmatprep.mubr.f32.mxu0 0.0
      %805 = vmatmul.mubr.f32.gmra.mxu0 %v687
      %v806 = vpop.f32.mrf.mxu0
      %v807 = vadd.f32 0.0, %v806
      %v808 = vpop.f32.mrf.mxu0
      %809 = vdwg.mxu0
      %v810 = vadd.f32 %v664, %v772
      %v811 = vadd.f32 %v665, %v777
      %v812 = vadd.f32 %v666, %v782
      %v813 = vadd.f32 %v667, %v787
      %v814 = vadd.f32 %v668, %v792
      %v815 = vadd.f32 %v669, %v797
      %v816 = vadd.f32 %v670, %v802
      %v817 = vadd.f32 %v671, %v807
      %v818 = vld [vmem:[%s165 + $0x8] sm:$0xff]
      %v819 = vld [vmem:[%s165 + $0x10] sm:$0xff]
      %v820 = vld [vmem:[%s165 + $0x18] sm:$0xff]
      %v821 = vld [vmem:[%s165 + $0x20] sm:$0xff]
      %v822 = vld [vmem:[%s165 + $0x28] sm:$0xff]
      %v823 = vld [vmem:[%s165 + $0x30] sm:$0xff]
      %v824 = vld [vmem:[%s165 + $0x38] sm:$0xff]
      %v825 = vld [vmem:[%s165 + $0x40] sm:$0xff]
      %s826 = scalar_lea.vmem %s1, 512
      %v827 = vld [vmem:[%s826] sm:$0xff]
      %v828 = vld [vmem:[%s826 + $0x8] sm:$0xff]
      %v829 = vld [vmem:[%s826 + $0x10] sm:$0xff]
      %v830 = vld [vmem:[%s826 + $0x18] sm:$0xff]
      %v831 = vld [vmem:[%s826 + $0x20] sm:$0xff]
      %v832 = vld [vmem:[%s826 + $0x28] sm:$0xff]
      %v833 = vld [vmem:[%s826 + $0x30] sm:$0xff]
      %v834 = vld [vmem:[%s826 + $0x38] sm:$0xff]
      %v835 = vld [vmem:[%s826 + $0x40] sm:$0xff]
      %v836 = vld [vmem:[%s826 + $0x48] sm:$0xff]
      %v837 = vld [vmem:[%s826 + $0x50] sm:$0xff]
      %v838 = vld [vmem:[%s826 + $0x58] sm:$0xff]
      %v839 = vld [vmem:[%s826 + $0x60] sm:$0xff]
      %v840 = vld [vmem:[%s826 + $0x68] sm:$0xff]
      %v841 = vld [vmem:[%s826 + $0x70] sm:$0xff]
      %v842 = vld [vmem:[%s826 + $0x78] sm:$0xff]
      %843 = vmatprep.subr.mxu0 0.0
      %844 = vmatpush1.msra.mxu0 %v842
      %845 = vmatprep.subr.mxu0 0.0
      %846 = vmatpush1.msra.mxu0 %v841
      %847 = vmatprep.subr.mxu0 0.0
      %848 = vmatpush1.msra.mxu0 %v840
      %849 = vmatprep.subr.mxu0 0.0
      %850 = vmatpush1.msra.mxu0 %v839
      %851 = vmatprep.subr.mxu0 0.0
      %852 = vmatpush1.msra.mxu0 %v838
      %853 = vmatprep.subr.mxu0 0.0
      %854 = vmatpush1.msra.mxu0 %v837
      %855 = vmatprep.subr.mxu0 0.0
      %856 = vmatpush1.msra.mxu0 %v836
      %857 = vmatprep.subr.mxu0 0.0
      %858 = vmatpush1.msra.mxu0 %v835
      %859 = vmatprep.subr.mxu0 0.0
      %860 = vmatpush1.msra.mxu0 %v834
      %861 = vmatprep.subr.mxu0 0.0
      %862 = vmatpush1.msra.mxu0 %v833
      %863 = vmatprep.subr.mxu0 0.0
      %864 = vmatpush1.msra.mxu0 %v832
      %865 = vmatprep.subr.mxu0 0.0
      %866 = vmatpush1.msra.mxu0 %v831
      %867 = vmatprep.subr.mxu0 0.0
      %868 = vmatpush1.msra.mxu0 %v830
      %869 = vmatprep.subr.mxu0 0.0
      %870 = vmatpush1.msra.mxu0 %v829
      %871 = vmatprep.subr.mxu0 0.0
      %872 = vmatpush1.msra.mxu0 %v828
      %873 = vmatprep.subr.mxu0 0.0
      %874 = vmatpush1.msra.mxu0 %v827
      %875 = vmatprep.subr.mxu0 0.0
      %876 = vmatpush2.msra.mxu0 0.0
      %877 = vmatprep.subr.mxu0 0.0
      %878 = vmatpush2.msra.mxu0 0.0
      %879 = vmatprep.subr.mxu0 0.0
      %880 = vmatpush2.msra.mxu0 0.0
      %881 = vmatprep.subr.mxu0 0.0
      %882 = vmatpush2.msra.mxu0 0.0
      %883 = vmatprep.subr.mxu0 0.0
      %884 = vmatpush2.msra.mxu0 0.0
      %885 = vmatprep.subr.mxu0 0.0
      %886 = vmatpush2.msra.mxu0 0.0
      %887 = vmatprep.subr.mxu0 0.0
      %888 = vmatpush2.msra.mxu0 0.0
      %889 = vmatprep.subr.mxu0 0.0
      %890 = vmatpush2.msra.mxu0 0.0
      %891 = vmatprep.subr.mxu0 0.0
      %892 = vmatpush2.msra.mxu0 0.0
      %893 = vmatprep.subr.mxu0 0.0
      %894 = vmatpush2.msra.mxu0 0.0
      %895 = vmatprep.subr.mxu0 0.0
      %896 = vmatpush2.msra.mxu0 0.0
      %897 = vmatprep.subr.mxu0 0.0
      %898 = vmatpush2.msra.mxu0 0.0
      %899 = vmatprep.subr.mxu0 0.0
      %900 = vmatpush2.msra.mxu0 0.0
      %901 = vmatprep.subr.mxu0 0.0
      %902 = vmatpush2.msra.mxu0 0.0
      %903 = vmatprep.subr.mxu0 0.0
      %904 = vmatpush2.msra.mxu0 0.0
      %905 = vmatprep.subr.mxu0 0.0
      %906 = vmatpush2.msra.mxu0 0.0
      %907 = vmatprep.mubr.f32.mxu0 0.0
      %908 = vmatmul.mubr.f32.gmra.mxu0 %v818
      %v909 = vpop.f32.mrf.mxu0
      %v910 = vadd.f32 0.0, %v909
      %v911 = vpop.f32.mrf.mxu0
      %912 = vmatprep.mubr.f32.mxu0 0.0
      %913 = vmatmul.mubr.f32.gmra.mxu0 %v819
      %v914 = vpop.f32.mrf.mxu0
      %v915 = vadd.f32 0.0, %v914
      %v916 = vpop.f32.mrf.mxu0
      %917 = vmatprep.mubr.f32.mxu0 0.0
      %918 = vmatmul.mubr.f32.gmra.mxu0 %v820
      %v919 = vpop.f32.mrf.mxu0
      %v920 = vadd.f32 0.0, %v919
      %v921 = vpop.f32.mrf.mxu0
      %922 = vmatprep.mubr.f32.mxu0 0.0
      %923 = vmatmul.mubr.f32.gmra.mxu0 %v821
      %v924 = vpop.f32.mrf.mxu0
      %v925 = vadd.f32 0.0, %v924
      %v926 = vpop.f32.mrf.mxu0
      %927 = vmatprep.mubr.f32.mxu0 0.0
      %928 = vmatmul.mubr.f32.gmra.mxu0 %v822
      %v929 = vpop.f32.mrf.mxu0
      %v930 = vadd.f32 0.0, %v929
      %v931 = vpop.f32.mrf.mxu0
      %932 = vmatprep.mubr.f32.mxu0 0.0
      %933 = vmatmul.mubr.f32.gmra.mxu0 %v823
      %v934 = vpop.f32.mrf.mxu0
      %v935 = vadd.f32 0.0, %v934
      %v936 = vpop.f32.mrf.mxu0
      %937 = vmatprep.mubr.f32.mxu0 0.0
      %938 = vmatmul.mubr.f32.gmra.mxu0 %v824
      %v939 = vpop.f32.mrf.mxu0
      %v940 = vadd.f32 0.0, %v939
      %v941 = vpop.f32.mrf.mxu0
      %942 = vmatprep.mubr.f32.mxu0 0.0
      %943 = vmatmul.mubr.f32.gmra.mxu0 %v825
      %v944 = vpop.f32.mrf.mxu0
      %v945 = vadd.f32 0.0, %v944
      %v946 = vpop.f32.mrf.mxu0
      %947 = vdwg.mxu0
      %v948 = vadd.f32 %v810, %v910
      %v949 = vadd.f32 %v811, %v915
      %v950 = vadd.f32 %v812, %v920
      %v951 = vadd.f32 %v813, %v925
      %v952 = vadd.f32 %v814, %v930
      %v953 = vadd.f32 %v815, %v935
      %v954 = vadd.f32 %v816, %v940
      %v955 = vadd.f32 %v817, %v945
      %v956 = vld [vmem:[%s165 + $0x9] sm:$0xff]
      %v957 = vld [vmem:[%s165 + $0x11] sm:$0xff]
      %v958 = vld [vmem:[%s165 + $0x19] sm:$0xff]
      %v959 = vld [vmem:[%s165 + $0x21] sm:$0xff]
      %v960 = vld [vmem:[%s165 + $0x29] sm:$0xff]
      %v961 = vld [vmem:[%s165 + $0x31] sm:$0xff]
      %v962 = vld [vmem:[%s165 + $0x39] sm:$0xff]
      %v963 = vld [vmem:[%s165 + $0x41] sm:$0xff]
      %v964 = vsel %vm526, %v956, 0.0
      %v965 = vsel %vm527, %v957, 0.0
      %v966 = vsel %vm528, %v958, 0.0
      %v967 = vsel %vm529, %v959, 0.0
      %v968 = vsel %vm530, %v960, 0.0
      %v969 = vsel %vm531, %v961, 0.0
      %v970 = vsel %vm532, %v962, 0.0
      %v971 = vsel %vm533, %v963, 0.0
      %s972 = scalar_lea.vmem %s1, 640
      %v973 = vld [vmem:[%s972] sm:$0xff]
      %v974 = vld [vmem:[%s972 + $0x8] sm:$0xff]
      %v975 = vld [vmem:[%s972 + $0x10] sm:$0xff]
      %v976 = vld [vmem:[%s972 + $0x18] sm:$0xff]
      %v977 = vld [vmem:[%s972 + $0x20] sm:$0xff]
      %v978 = vld [vmem:[%s972 + $0x28] sm:$0xff]
      %v979 = vld [vmem:[%s972 + $0x30] sm:$0xff]
      %v980 = vld [vmem:[%s972 + $0x38] sm:$0xff]
      %v981 = vld [vmem:[%s972 + $0x40] sm:$0xff]
      %v982 = vld [vmem:[%s972 + $0x48] sm:$0xff]
      %v983 = vld [vmem:[%s972 + $0x50] sm:$0xff]
      %v984 = vld [vmem:[%s972 + $0x58] sm:$0xff]
      %v985 = vld [vmem:[%s972 + $0x60] sm:$0xff]
      %v986 = vld [vmem:[%s972 + $0x68] sm:$0xff]
      %v987 = vld [vmem:[%s972 + $0x70] sm:$0xff]
      %v988 = vld [vmem:[%s972 + $0x78] sm:$0xff]
      %989 = vmatprep.subr.mxu0 0.0
      %990 = vmatpush1.msra.mxu0 %v988
      %991 = vmatprep.subr.mxu0 0.0
      %992 = vmatpush1.msra.mxu0 %v987
      %993 = vmatprep.subr.mxu0 0.0
      %994 = vmatpush1.msra.mxu0 %v986
      %995 = vmatprep.subr.mxu0 0.0
      %996 = vmatpush1.msra.mxu0 %v985
      %997 = vmatprep.subr.mxu0 0.0
      %998 = vmatpush1.msra.mxu0 %v984
      %999 = vmatprep.subr.mxu0 0.0
      %1000 = vmatpush1.msra.mxu0 %v983
      %1001 = vmatprep.subr.mxu0 0.0
      %1002 = vmatpush1.msra.mxu0 %v982
      %1003 = vmatprep.subr.mxu0 0.0
      %1004 = vmatpush1.msra.mxu0 %v981
      %1005 = vmatprep.subr.mxu0 0.0
      %1006 = vmatpush1.msra.mxu0 %v980
      %1007 = vmatprep.subr.mxu0 0.0
      %1008 = vmatpush1.msra.mxu0 %v979
      %1009 = vmatprep.subr.mxu0 0.0
      %1010 = vmatpush1.msra.mxu0 %v978
      %1011 = vmatprep.subr.mxu0 0.0
      %1012 = vmatpush1.msra.mxu0 %v977
      %1013 = vmatprep.subr.mxu0 0.0
      %1014 = vmatpush1.msra.mxu0 %v976
      %1015 = vmatprep.subr.mxu0 0.0
      %1016 = vmatpush1.msra.mxu0 %v975
      %1017 = vmatprep.subr.mxu0 0.0
      %1018 = vmatpush1.msra.mxu0 %v974
      %1019 = vmatprep.subr.mxu0 0.0
      %1020 = vmatpush1.msra.mxu0 %v973
      %1021 = vmatprep.subr.mxu0 0.0
      %1022 = vmatpush2.msra.mxu0 0.0
      %1023 = vmatprep.subr.mxu0 0.0
      %1024 = vmatpush2.msra.mxu0 0.0
      %1025 = vmatprep.subr.mxu0 0.0
      %1026 = vmatpush2.msra.mxu0 0.0
      %1027 = vmatprep.subr.mxu0 0.0
      %1028 = vmatpush2.msra.mxu0 0.0
      %1029 = vmatprep.subr.mxu0 0.0
      %1030 = vmatpush2.msra.mxu0 0.0
      %1031 = vmatprep.subr.mxu0 0.0
      %1032 = vmatpush2.msra.mxu0 0.0
      %1033 = vmatprep.subr.mxu0 0.0
      %1034 = vmatpush2.msra.mxu0 0.0
      %1035 = vmatprep.subr.mxu0 0.0
      %1036 = vmatpush2.msra.mxu0 0.0
      %1037 = vmatprep.subr.mxu0 0.0
      %1038 = vmatpush2.msra.mxu0 0.0
      %1039 = vmatprep.subr.mxu0 0.0
      %1040 = vmatpush2.msra.mxu0 0.0
      %1041 = vmatprep.subr.mxu0 0.0
      %1042 = vmatpush2.msra.mxu0 0.0
      %1043 = vmatprep.subr.mxu0 0.0
      %1044 = vmatpush2.msra.mxu0 0.0
      %1045 = vmatprep.subr.mxu0 0.0
      %1046 = vmatpush2.msra.mxu0 0.0
      %1047 = vmatprep.subr.mxu0 0.0
      %1048 = vmatpush2.msra.mxu0 0.0
      %1049 = vmatprep.subr.mxu0 0.0
      %1050 = vmatpush2.msra.mxu0 0.0
      %1051 = vmatprep.subr.mxu0 0.0
      %1052 = vmatpush2.msra.mxu0 0.0
      %1053 = vmatprep.mubr.f32.mxu0 0.0
      %1054 = vmatmul.mubr.f32.gmra.mxu0 %v964
      %v1055 = vpop.f32.mrf.mxu0
      %v1056 = vadd.f32 0.0, %v1055
      %v1057 = vpop.f32.mrf.mxu0
      %1058 = vmatprep.mubr.f32.mxu0 0.0
      %1059 = vmatmul.mubr.f32.gmra.mxu0 %v965
      %v1060 = vpop.f32.mrf.mxu0
      %v1061 = vadd.f32 0.0, %v1060
      %v1062 = vpop.f32.mrf.mxu0
      %1063 = vmatprep.mubr.f32.mxu0 0.0
      %1064 = vmatmul.mubr.f32.gmra.mxu0 %v966
      %v1065 = vpop.f32.mrf.mxu0
      %v1066 = vadd.f32 0.0, %v1065
      %v1067 = vpop.f32.mrf.mxu0
      %1068 = vmatprep.mubr.f32.mxu0 0.0
      %1069 = vmatmul.mubr.f32.gmra.mxu0 %v967
      %v1070 = vpop.f32.mrf.mxu0
      %v1071 = vadd.f32 0.0, %v1070
      %v1072 = vpop.f32.mrf.mxu0
      %1073 = vmatprep.mubr.f32.mxu0 0.0
      %1074 = vmatmul.mubr.f32.gmra.mxu0 %v968
      %v1075 = vpop.f32.mrf.mxu0
      %v1076 = vadd.f32 0.0, %v1075
      %v1077 = vpop.f32.mrf.mxu0
      %1078 = vmatprep.mubr.f32.mxu0 0.0
      %1079 = vmatmul.mubr.f32.gmra.mxu0 %v969
      %v1080 = vpop.f32.mrf.mxu0
      %v1081 = vadd.f32 0.0, %v1080
      %v1082 = vpop.f32.mrf.mxu0
      %1083 = vmatprep.mubr.f32.mxu0 0.0
      %1084 = vmatmul.mubr.f32.gmra.mxu0 %v970
      %v1085 = vpop.f32.mrf.mxu0
      %v1086 = vadd.f32 0.0, %v1085
      %v1087 = vpop.f32.mrf.mxu0
      %1088 = vmatprep.mubr.f32.mxu0 0.0
      %1089 = vmatmul.mubr.f32.gmra.mxu0 %v971
      %v1090 = vpop.f32.mrf.mxu0
      %v1091 = vadd.f32 0.0, %v1090
      %v1092 = vpop.f32.mrf.mxu0
      %1093 = vdwg.mxu0
      %v1094 = vadd.f32 %v948, %v1056
      %v1095 = vadd.f32 %v949, %v1061
      %v1096 = vadd.f32 %v950, %v1066
      %v1097 = vadd.f32 %v951, %v1071
      %v1098 = vadd.f32 %v952, %v1076
      %v1099 = vadd.f32 %v953, %v1081
      %v1100 = vadd.f32 %v954, %v1086
      %v1101 = vadd.f32 %v955, %v1091
      %1102 = vst [vmem:[%s170] sm:$0xff] %v1094
      %1103 = vst [vmem:[%s170 + $0x8] sm:$0xff] %v1095
      %1104 = vst [vmem:[%s170 + $0x10] sm:$0xff] %v1096
      %1105 = vst [vmem:[%s170 + $0x18] sm:$0xff] %v1097
      %1106 = vst [vmem:[%s170 + $0x20] sm:$0xff] %v1098
      %1107 = vst [vmem:[%s170 + $0x28] sm:$0xff] %v1099
      %1108 = vst [vmem:[%s170 + $0x30] sm:$0xff] %v1100
      %1109 = vst [vmem:[%s170 + $0x38] sm:$0xff] %v1101
      %v1110 = vld [vmem:[%s165 + $0xf] sm:$0xff]
      %v1111 = vld [vmem:[%s165 + $0x17] sm:$0xff]
      %v1112 = vld [vmem:[%s165 + $0x1f] sm:$0xff]
      %v1113 = vld [vmem:[%s165 + $0x27] sm:$0xff]
      %v1114 = vld [vmem:[%s165 + $0x2f] sm:$0xff]
      %v1115 = vld [vmem:[%s165 + $0x37] sm:$0xff]
      %v1116 = vld [vmem:[%s165 + $0x3f] sm:$0xff]
      %v1117 = vld [vmem:[%s165 + $0x47] sm:$0xff]
      %v1118 = vsel %vm227, %v1110, 0.0
      %v1119 = vsel %vm228, %v1111, 0.0
      %v1120 = vsel %vm229, %v1112, 0.0
      %v1121 = vsel %vm230, %v1113, 0.0
      %v1122 = vsel %vm231, %v1114, 0.0
      %v1123 = vsel %vm232, %v1115, 0.0
      %v1124 = vsel %vm233, %v1116, 0.0
      %v1125 = vsel %vm234, %v1117, 0.0
      %s1126 = scalar_lea.vmem %s1, 768
      %v1127 = vld [vmem:[%s1126] sm:$0xff]
      %v1128 = vld [vmem:[%s1126 + $0x8] sm:$0xff]
      %v1129 = vld [vmem:[%s1126 + $0x10] sm:$0xff]
      %v1130 = vld [vmem:[%s1126 + $0x18] sm:$0xff]
      %v1131 = vld [vmem:[%s1126 + $0x20] sm:$0xff]
      %v1132 = vld [vmem:[%s1126 + $0x28] sm:$0xff]
      %v1133 = vld [vmem:[%s1126 + $0x30] sm:$0xff]
      %v1134 = vld [vmem:[%s1126 + $0x38] sm:$0xff]
      %v1135 = vld [vmem:[%s1126 + $0x40] sm:$0xff]
      %v1136 = vld [vmem:[%s1126 + $0x48] sm:$0xff]
      %v1137 = vld [vmem:[%s1126 + $0x50] sm:$0xff]
      %v1138 = vld [vmem:[%s1126 + $0x58] sm:$0xff]
      %v1139 = vld [vmem:[%s1126 + $0x60] sm:$0xff]
      %v1140 = vld [vmem:[%s1126 + $0x68] sm:$0xff]
      %v1141 = vld [vmem:[%s1126 + $0x70] sm:$0xff]
      %v1142 = vld [vmem:[%s1126 + $0x78] sm:$0xff]
      %1143 = vmatprep.subr.mxu0 0.0
      %1144 = vmatpush1.msra.mxu0 %v1142
      %1145 = vmatprep.subr.mxu0 0.0
      %1146 = vmatpush1.msra.mxu0 %v1141
      %1147 = vmatprep.subr.mxu0 0.0
      %1148 = vmatpush1.msra.mxu0 %v1140
      %1149 = vmatprep.subr.mxu0 0.0
      %1150 = vmatpush1.msra.mxu0 %v1139
      %1151 = vmatprep.subr.mxu0 0.0
      %1152 = vmatpush1.msra.mxu0 %v1138
      %1153 = vmatprep.subr.mxu0 0.0
      %1154 = vmatpush1.msra.mxu0 %v1137
      %1155 = vmatprep.subr.mxu0 0.0
      %1156 = vmatpush1.msra.mxu0 %v1136
      %1157 = vmatprep.subr.mxu0 0.0
      %1158 = vmatpush1.msra.mxu0 %v1135
      %1159 = vmatprep.subr.mxu0 0.0
      %1160 = vmatpush1.msra.mxu0 %v1134
      %1161 = vmatprep.subr.mxu0 0.0
      %1162 = vmatpush1.msra.mxu0 %v1133
      %1163 = vmatprep.subr.mxu0 0.0
      %1164 = vmatpush1.msra.mxu0 %v1132
      %1165 = vmatprep.subr.mxu0 0.0
      %1166 = vmatpush1.msra.mxu0 %v1131
      %1167 = vmatprep.subr.mxu0 0.0
      %1168 = vmatpush1.msra.mxu0 %v1130
      %1169 = vmatprep.subr.mxu0 0.0
      %1170 = vmatpush1.msra.mxu0 %v1129
      %1171 = vmatprep.subr.mxu0 0.0
      %1172 = vmatpush1.msra.mxu0 %v1128
      %1173 = vmatprep.subr.mxu0 0.0
      %1174 = vmatpush1.msra.mxu0 %v1127
      %1175 = vmatprep.subr.mxu0 0.0
      %1176 = vmatpush2.msra.mxu0 0.0
      %1177 = vmatprep.subr.mxu0 0.0
      %1178 = vmatpush2.msra.mxu0 0.0
      %1179 = vmatprep.subr.mxu0 0.0
      %1180 = vmatpush2.msra.mxu0 0.0
      %1181 = vmatprep.subr.mxu0 0.0
      %1182 = vmatpush2.msra.mxu0 0.0
      %1183 = vmatprep.subr.mxu0 0.0
      %1184 = vmatpush2.msra.mxu0 0.0
      %1185 = vmatprep.subr.mxu0 0.0
      %1186 = vmatpush2.msra.mxu0 0.0
      %1187 = vmatprep.subr.mxu0 0.0
      %1188 = vmatpush2.msra.mxu0 0.0
      %1189 = vmatprep.subr.mxu0 0.0
      %1190 = vmatpush2.msra.mxu0 0.0
      %1191 = vmatprep.subr.mxu0 0.0
      %1192 = vmatpush2.msra.mxu0 0.0
      %1193 = vmatprep.subr.mxu0 0.0
      %1194 = vmatpush2.msra.mxu0 0.0
      %1195 = vmatprep.subr.mxu0 0.0
      %1196 = vmatpush2.msra.mxu0 0.0
      %1197 = vmatprep.subr.mxu0 0.0
      %1198 = vmatpush2.msra.mxu0 0.0
      %1199 = vmatprep.subr.mxu0 0.0
      %1200 = vmatpush2.msra.mxu0 0.0
      %1201 = vmatprep.subr.mxu0 0.0
      %1202 = vmatpush2.msra.mxu0 0.0
      %1203 = vmatprep.subr.mxu0 0.0
      %1204 = vmatpush2.msra.mxu0 0.0
      %1205 = vmatprep.subr.mxu0 0.0
      %1206 = vmatpush2.msra.mxu0 0.0
      %1207 = vmatprep.mubr.f32.mxu0 0.0
      %1208 = vmatmul.mubr.f32.gmra.mxu0 %v1118
      %v1209 = vpop.f32.mrf.mxu0
      %v1210 = vadd.f32 0.0, %v1209
      %v1211 = vpop.f32.mrf.mxu0
      %1212 = vmatprep.mubr.f32.mxu0 0.0
      %1213 = vmatmul.mubr.f32.gmra.mxu0 %v1119
      %v1214 = vpop.f32.mrf.mxu0
      %v1215 = vadd.f32 0.0, %v1214
      %v1216 = vpop.f32.mrf.mxu0
      %1217 = vmatprep.mubr.f32.mxu0 0.0
      %1218 = vmatmul.mubr.f32.gmra.mxu0 %v1120
      %v1219 = vpop.f32.mrf.mxu0
      %v1220 = vadd.f32 0.0, %v1219
      %v1221 = vpop.f32.mrf.mxu0
      %1222 = vmatprep.mubr.f32.mxu0 0.0
      %1223 = vmatmul.mubr.f32.gmra.mxu0 %v1121
      %v1224 = vpop.f32.mrf.mxu0
      %v1225 = vadd.f32 0.0, %v1224
      %v1226 = vpop.f32.mrf.mxu0
      %1227 = vmatprep.mubr.f32.mxu0 0.0
      %1228 = vmatmul.mubr.f32.gmra.mxu0 %v1122
      %v1229 = vpop.f32.mrf.mxu0
      %v1230 = vadd.f32 0.0, %v1229
      %v1231 = vpop.f32.mrf.mxu0
      %1232 = vmatprep.mubr.f32.mxu0 0.0
      %1233 = vmatmul.mubr.f32.gmra.mxu0 %v1123
      %v1234 = vpop.f32.mrf.mxu0
      %v1235 = vadd.f32 0.0, %v1234
      %v1236 = vpop.f32.mrf.mxu0
      %1237 = vmatprep.mubr.f32.mxu0 0.0
      %1238 = vmatmul.mubr.f32.gmra.mxu0 %v1124
      %v1239 = vpop.f32.mrf.mxu0
      %v1240 = vadd.f32 0.0, %v1239
      %v1241 = vpop.f32.mrf.mxu0
      %1242 = vmatprep.mubr.f32.mxu0 0.0
      %1243 = vmatmul.mubr.f32.gmra.mxu0 %v1125
      %v1244 = vpop.f32.mrf.mxu0
      %v1245 = vadd.f32 0.0, %v1244
      %v1246 = vpop.f32.mrf.mxu0
      %1247 = vdwg.mxu0
      %v1248 = vadd.f32 %v209, %v1210
      %v1249 = vadd.f32 %v209, %v1215
      %v1250 = vadd.f32 %v209, %v1220
      %v1251 = vadd.f32 %v209, %v1225
      %v1252 = vadd.f32 %v209, %v1230
      %v1253 = vadd.f32 %v209, %v1235
      %v1254 = vadd.f32 %v209, %v1240
      %v1255 = vadd.f32 %v209, %v1245
      %v1256 = vld [vmem:[%s165 + $0x10] sm:$0xff]
      %v1257 = vld [vmem:[%s165 + $0x18] sm:$0xff]
      %v1258 = vld [vmem:[%s165 + $0x20] sm:$0xff]
      %v1259 = vld [vmem:[%s165 + $0x28] sm:$0xff]
      %v1260 = vld [vmem:[%s165 + $0x30] sm:$0xff]
      %v1261 = vld [vmem:[%s165 + $0x38] sm:$0xff]
      %v1262 = vld [vmem:[%s165 + $0x40] sm:$0xff]
      %v1263 = vld [vmem:[%s165 + $0x48] sm:$0xff]
      %s1264 = scalar_lea.vmem %s1, 896
      %v1265 = vld [vmem:[%s1264] sm:$0xff]
      %v1266 = vld [vmem:[%s1264 + $0x8] sm:$0xff]
      %v1267 = vld [vmem:[%s1264 + $0x10] sm:$0xff]
      %v1268 = vld [vmem:[%s1264 + $0x18] sm:$0xff]
      %v1269 = vld [vmem:[%s1264 + $0x20] sm:$0xff]
      %v1270 = vld [vmem:[%s1264 + $0x28] sm:$0xff]
      %v1271 = vld [vmem:[%s1264 + $0x30] sm:$0xff]
      %v1272 = vld [vmem:[%s1264 + $0x38] sm:$0xff]
      %v1273 = vld [vmem:[%s1264 + $0x40] sm:$0xff]
      %v1274 = vld [vmem:[%s1264 + $0x48] sm:$0xff]
      %v1275 = vld [vmem:[%s1264 + $0x50] sm:$0xff]
      %v1276 = vld [vmem:[%s1264 + $0x58] sm:$0xff]
      %v1277 = vld [vmem:[%s1264 + $0x60] sm:$0xff]
      %v1278 = vld [vmem:[%s1264 + $0x68] sm:$0xff]
      %v1279 = vld [vmem:[%s1264 + $0x70] sm:$0xff]
      %v1280 = vld [vmem:[%s1264 + $0x78] sm:$0xff]
      %1281 = vmatprep.subr.mxu0 0.0
      %1282 = vmatpush1.msra.mxu0 %v1280
      %1283 = vmatprep.subr.mxu0 0.0
      %1284 = vmatpush1.msra.mxu0 %v1279
      %1285 = vmatprep.subr.mxu0 0.0
      %1286 = vmatpush1.msra.mxu0 %v1278
      %1287 = vmatprep.subr.mxu0 0.0
      %1288 = vmatpush1.msra.mxu0 %v1277
      %1289 = vmatprep.subr.mxu0 0.0
      %1290 = vmatpush1.msra.mxu0 %v1276
      %1291 = vmatprep.subr.mxu0 0.0
      %1292 = vmatpush1.msra.mxu0 %v1275
      %1293 = vmatprep.subr.mxu0 0.0
      %1294 = vmatpush1.msra.mxu0 %v1274
      %1295 = vmatprep.subr.mxu0 0.0
      %1296 = vmatpush1.msra.mxu0 %v1273
      %1297 = vmatprep.subr.mxu0 0.0
      %1298 = vmatpush1.msra.mxu0 %v1272
      %1299 = vmatprep.subr.mxu0 0.0
      %1300 = vmatpush1.msra.mxu0 %v1271
      %1301 = vmatprep.subr.mxu0 0.0
      %1302 = vmatpush1.msra.mxu0 %v1270
      %1303 = vmatprep.subr.mxu0 0.0
      %1304 = vmatpush1.msra.mxu0 %v1269
      %1305 = vmatprep.subr.mxu0 0.0
      %1306 = vmatpush1.msra.mxu0 %v1268
      %1307 = vmatprep.subr.mxu0 0.0
      %1308 = vmatpush1.msra.mxu0 %v1267
      %1309 = vmatprep.subr.mxu0 0.0
      %1310 = vmatpush1.msra.mxu0 %v1266
      %1311 = vmatprep.subr.mxu0 0.0
      %1312 = vmatpush1.msra.mxu0 %v1265
      %1313 = vmatprep.subr.mxu0 0.0
      %1314 = vmatpush2.msra.mxu0 0.0
      %1315 = vmatprep.subr.mxu0 0.0
      %1316 = vmatpush2.msra.mxu0 0.0
      %1317 = vmatprep.subr.mxu0 0.0
      %1318 = vmatpush2.msra.mxu0 0.0
      %1319 = vmatprep.subr.mxu0 0.0
      %1320 = vmatpush2.msra.mxu0 0.0
      %1321 = vmatprep.subr.mxu0 0.0
      %1322 = vmatpush2.msra.mxu0 0.0
      %1323 = vmatprep.subr.mxu0 0.0
      %1324 = vmatpush2.msra.mxu0 0.0
      %1325 = vmatprep.subr.mxu0 0.0
      %1326 = vmatpush2.msra.mxu0 0.0
      %1327 = vmatprep.subr.mxu0 0.0
      %1328 = vmatpush2.msra.mxu0 0.0
      %1329 = vmatprep.subr.mxu0 0.0
      %1330 = vmatpush2.msra.mxu0 0.0
      %1331 = vmatprep.subr.mxu0 0.0
      %1332 = vmatpush2.msra.mxu0 0.0
      %1333 = vmatprep.subr.mxu0 0.0
      %1334 = vmatpush2.msra.mxu0 0.0
      %1335 = vmatprep.subr.mxu0 0.0
      %1336 = vmatpush2.msra.mxu0 0.0
      %1337 = vmatprep.subr.mxu0 0.0
      %1338 = vmatpush2.msra.mxu0 0.0
      %1339 = vmatprep.subr.mxu0 0.0
      %1340 = vmatpush2.msra.mxu0 0.0
      %1341 = vmatprep.subr.mxu0 0.0
      %1342 = vmatpush2.msra.mxu0 0.0
      %1343 = vmatprep.subr.mxu0 0.0
      %1344 = vmatpush2.msra.mxu0 0.0
      %1345 = vmatprep.mubr.f32.mxu0 0.0
      %1346 = vmatmul.mubr.f32.gmra.mxu0 %v1256
      %v1347 = vpop.f32.mrf.mxu0
      %v1348 = vadd.f32 0.0, %v1347
      %v1349 = vpop.f32.mrf.mxu0
      %1350 = vmatprep.mubr.f32.mxu0 0.0
      %1351 = vmatmul.mubr.f32.gmra.mxu0 %v1257
      %v1352 = vpop.f32.mrf.mxu0
      %v1353 = vadd.f32 0.0, %v1352
      %v1354 = vpop.f32.mrf.mxu0
      %1355 = vmatprep.mubr.f32.mxu0 0.0
      %1356 = vmatmul.mubr.f32.gmra.mxu0 %v1258
      %v1357 = vpop.f32.mrf.mxu0
      %v1358 = vadd.f32 0.0, %v1357
      %v1359 = vpop.f32.mrf.mxu0
      %1360 = vmatprep.mubr.f32.mxu0 0.0
      %1361 = vmatmul.mubr.f32.gmra.mxu0 %v1259
      %v1362 = vpop.f32.mrf.mxu0
      %v1363 = vadd.f32 0.0, %v1362
      %v1364 = vpop.f32.mrf.mxu0
      %1365 = vmatprep.mubr.f32.mxu0 0.0
      %1366 = vmatmul.mubr.f32.gmra.mxu0 %v1260
      %v1367 = vpop.f32.mrf.mxu0
      %v1368 = vadd.f32 0.0, %v1367
      %v1369 = vpop.f32.mrf.mxu0
      %1370 = vmatprep.mubr.f32.mxu0 0.0
      %1371 = vmatmul.mubr.f32.gmra.mxu0 %v1261
      %v1372 = vpop.f32.mrf.mxu0
      %v1373 = vadd.f32 0.0, %v1372
      %v1374 = vpop.f32.mrf.mxu0
      %1375 = vmatprep.mubr.f32.mxu0 0.0
      %1376 = vmatmul.mubr.f32.gmra.mxu0 %v1262
      %v1377 = vpop.f32.mrf.mxu0
      %v1378 = vadd.f32 0.0, %v1377
      %v1379 = vpop.f32.mrf.mxu0
      %1380 = vmatprep.mubr.f32.mxu0 0.0
      %1381 = vmatmul.mubr.f32.gmra.mxu0 %v1263
      %v1382 = vpop.f32.mrf.mxu0
      %v1383 = vadd.f32 0.0, %v1382
      %v1384 = vpop.f32.mrf.mxu0
      %1385 = vdwg.mxu0
      %v1386 = vadd.f32 %v1248, %v1348
      %v1387 = vadd.f32 %v1249, %v1353
      %v1388 = vadd.f32 %v1250, %v1358
      %v1389 = vadd.f32 %v1251, %v1363
      %v1390 = vadd.f32 %v1252, %v1368
      %v1391 = vadd.f32 %v1253, %v1373
      %v1392 = vadd.f32 %v1254, %v1378
      %v1393 = vadd.f32 %v1255, %v1383
      %v1394 = vld [vmem:[%s165 + $0x11] sm:$0xff]
      %v1395 = vld [vmem:[%s165 + $0x19] sm:$0xff]
      %v1396 = vld [vmem:[%s165 + $0x21] sm:$0xff]
      %v1397 = vld [vmem:[%s165 + $0x29] sm:$0xff]
      %v1398 = vld [vmem:[%s165 + $0x31] sm:$0xff]
      %v1399 = vld [vmem:[%s165 + $0x39] sm:$0xff]
      %v1400 = vld [vmem:[%s165 + $0x41] sm:$0xff]
      %v1401 = vld [vmem:[%s165 + $0x49] sm:$0xff]
      %v1402 = vsel %vm526, %v1394, 0.0
      %v1403 = vsel %vm527, %v1395, 0.0
      %v1404 = vsel %vm528, %v1396, 0.0
      %v1405 = vsel %vm529, %v1397, 0.0
      %v1406 = vsel %vm530, %v1398, 0.0
      %v1407 = vsel %vm531, %v1399, 0.0
      %v1408 = vsel %vm532, %v1400, 0.0
      %v1409 = vsel %vm533, %v1401, 0.0
      %s1410 = scalar_lea.vmem %s1, 1024
      %v1411 = vld [vmem:[%s1410] sm:$0xff]
      %v1412 = vld [vmem:[%s1410 + $0x8] sm:$0xff]
      %v1413 = vld [vmem:[%s1410 + $0x10] sm:$0xff]
      %v1414 = vld [vmem:[%s1410 + $0x18] sm:$0xff]
      %v1415 = vld [vmem:[%s1410 + $0x20] sm:$0xff]
      %v1416 = vld [vmem:[%s1410 + $0x28] sm:$0xff]
      %v1417 = vld [vmem:[%s1410 + $0x30] sm:$0xff]
      %v1418 = vld [vmem:[%s1410 + $0x38] sm:$0xff]
      %v1419 = vld [vmem:[%s1410 + $0x40] sm:$0xff]
      %v1420 = vld [vmem:[%s1410 + $0x48] sm:$0xff]
      %v1421 = vld [vmem:[%s1410 + $0x50] sm:$0xff]
      %v1422 = vld [vmem:[%s1410 + $0x58] sm:$0xff]
      %v1423 = vld [vmem:[%s1410 + $0x60] sm:$0xff]
      %v1424 = vld [vmem:[%s1410 + $0x68] sm:$0xff]
      %v1425 = vld [vmem:[%s1410 + $0x70] sm:$0xff]
      %v1426 = vld [vmem:[%s1410 + $0x78] sm:$0xff]
      %1427 = vmatprep.subr.mxu0 0.0
      %1428 = vmatpush1.msra.mxu0 %v1426
      %1429 = vmatprep.subr.mxu0 0.0
      %1430 = vmatpush1.msra.mxu0 %v1425
      %1431 = vmatprep.subr.mxu0 0.0
      %1432 = vmatpush1.msra.mxu0 %v1424
      %1433 = vmatprep.subr.mxu0 0.0
      %1434 = vmatpush1.msra.mxu0 %v1423
      %1435 = vmatprep.subr.mxu0 0.0
      %1436 = vmatpush1.msra.mxu0 %v1422
      %1437 = vmatprep.subr.mxu0 0.0
      %1438 = vmatpush1.msra.mxu0 %v1421
      %1439 = vmatprep.subr.mxu0 0.0
      %1440 = vmatpush1.msra.mxu0 %v1420
      %1441 = vmatprep.subr.mxu0 0.0
      %1442 = vmatpush1.msra.mxu0 %v1419
      %1443 = vmatprep.subr.mxu0 0.0
      %1444 = vmatpush1.msra.mxu0 %v1418
      %1445 = vmatprep.subr.mxu0 0.0
      %1446 = vmatpush1.msra.mxu0 %v1417
      %1447 = vmatprep.subr.mxu0 0.0
      %1448 = vmatpush1.msra.mxu0 %v1416
      %1449 = vmatprep.subr.mxu0 0.0
      %1450 = vmatpush1.msra.mxu0 %v1415
      %1451 = vmatprep.subr.mxu0 0.0
      %1452 = vmatpush1.msra.mxu0 %v1414
      %1453 = vmatprep.subr.mxu0 0.0
      %1454 = vmatpush1.msra.mxu0 %v1413
      %1455 = vmatprep.subr.mxu0 0.0
      %1456 = vmatpush1.msra.mxu0 %v1412
      %1457 = vmatprep.subr.mxu0 0.0
      %1458 = vmatpush1.msra.mxu0 %v1411
      %1459 = vmatprep.subr.mxu0 0.0
      %1460 = vmatpush2.msra.mxu0 0.0
      %1461 = vmatprep.subr.mxu0 0.0
      %1462 = vmatpush2.msra.mxu0 0.0
      %1463 = vmatprep.subr.mxu0 0.0
      %1464 = vmatpush2.msra.mxu0 0.0
      %1465 = vmatprep.subr.mxu0 0.0
      %1466 = vmatpush2.msra.mxu0 0.0
      %1467 = vmatprep.subr.mxu0 0.0
      %1468 = vmatpush2.msra.mxu0 0.0
      %1469 = vmatprep.subr.mxu0 0.0
      %1470 = vmatpush2.msra.mxu0 0.0
      %1471 = vmatprep.subr.mxu0 0.0
      %1472 = vmatpush2.msra.mxu0 0.0
      %1473 = vmatprep.subr.mxu0 0.0
      %1474 = vmatpush2.msra.mxu0 0.0
      %1475 = vmatprep.subr.mxu0 0.0
      %1476 = vmatpush2.msra.mxu0 0.0
      %1477 = vmatprep.subr.mxu0 0.0
      %1478 = vmatpush2.msra.mxu0 0.0
      %1479 = vmatprep.subr.mxu0 0.0
      %1480 = vmatpush2.msra.mxu0 0.0
      %1481 = vmatprep.subr.mxu0 0.0
      %1482 = vmatpush2.msra.mxu0 0.0
      %1483 = vmatprep.subr.mxu0 0.0
      %1484 = vmatpush2.msra.mxu0 0.0
      %1485 = vmatprep.subr.mxu0 0.0
      %1486 = vmatpush2.msra.mxu0 0.0
      %1487 = vmatprep.subr.mxu0 0.0
      %1488 = vmatpush2.msra.mxu0 0.0
      %1489 = vmatprep.subr.mxu0 0.0
      %1490 = vmatpush2.msra.mxu0 0.0
      %1491 = vmatprep.mubr.f32.mxu0 0.0
      %1492 = vmatmul.mubr.f32.gmra.mxu0 %v1402
      %v1493 = vpop.f32.mrf.mxu0
      %v1494 = vadd.f32 0.0, %v1493
      %v1495 = vpop.f32.mrf.mxu0
      %1496 = vmatprep.mubr.f32.mxu0 0.0
      %1497 = vmatmul.mubr.f32.gmra.mxu0 %v1403
      %v1498 = vpop.f32.mrf.mxu0
      %v1499 = vadd.f32 0.0, %v1498
      %v1500 = vpop.f32.mrf.mxu0
      %1501 = vmatprep.mubr.f32.mxu0 0.0
      %1502 = vmatmul.mubr.f32.gmra.mxu0 %v1404
      %v1503 = vpop.f32.mrf.mxu0
      %v1504 = vadd.f32 0.0, %v1503
      %v1505 = vpop.f32.mrf.mxu0
      %1506 = vmatprep.mubr.f32.mxu0 0.0
      %1507 = vmatmul.mubr.f32.gmra.mxu0 %v1405
      %v1508 = vpop.f32.mrf.mxu0
      %v1509 = vadd.f32 0.0, %v1508
      %v1510 = vpop.f32.mrf.mxu0
      %1511 = vmatprep.mubr.f32.mxu0 0.0
      %1512 = vmatmul.mubr.f32.gmra.mxu0 %v1406
      %v1513 = vpop.f32.mrf.mxu0
      %v1514 = vadd.f32 0.0, %v1513
      %v1515 = vpop.f32.mrf.mxu0
      %1516 = vmatprep.mubr.f32.mxu0 0.0
      %1517 = vmatmul.mubr.f32.gmra.mxu0 %v1407
      %v1518 = vpop.f32.mrf.mxu0
      %v1519 = vadd.f32 0.0, %v1518
      %v1520 = vpop.f32.mrf.mxu0
      %1521 = vmatprep.mubr.f32.mxu0 0.0
      %1522 = vmatmul.mubr.f32.gmra.mxu0 %v1408
      %v1523 = vpop.f32.mrf.mxu0
      %v1524 = vadd.f32 0.0, %v1523
      %v1525 = vpop.f32.mrf.mxu0
      %1526 = vmatprep.mubr.f32.mxu0 0.0
      %1527 = vmatmul.mubr.f32.gmra.mxu0 %v1409
      %v1528 = vpop.f32.mrf.mxu0
      %v1529 = vadd.f32 0.0, %v1528
      %v1530 = vpop.f32.mrf.mxu0
      %1531 = vdwg.mxu0
      %v1532 = vadd.f32 %v1386, %v1494
      %v1533 = vadd.f32 %v1387, %v1499
      %v1534 = vadd.f32 %v1388, %v1504
      %v1535 = vadd.f32 %v1389, %v1509
      %v1536 = vadd.f32 %v1390, %v1514
      %v1537 = vadd.f32 %v1391, %v1519
      %v1538 = vadd.f32 %v1392, %v1524
      %v1539 = vadd.f32 %v1393, %v1529
      %v1540 = vld [vmem:[%s165 + $0x17] sm:$0xff]
      %v1541 = vld [vmem:[%s165 + $0x1f] sm:$0xff]
      %v1542 = vld [vmem:[%s165 + $0x27] sm:$0xff]
      %v1543 = vld [vmem:[%s165 + $0x2f] sm:$0xff]
      %v1544 = vld [vmem:[%s165 + $0x37] sm:$0xff]
      %v1545 = vld [vmem:[%s165 + $0x3f] sm:$0xff]
      %v1546 = vld [vmem:[%s165 + $0x47] sm:$0xff]
      %v1547 = vld [vmem:[%s165 + $0x4f] sm:$0xff]
      %v1548 = vsel %vm227, %v1540, 0.0
      %v1549 = vsel %vm228, %v1541, 0.0
      %v1550 = vsel %vm229, %v1542, 0.0
      %v1551 = vsel %vm230, %v1543, 0.0
      %v1552 = vsel %vm231, %v1544, 0.0
      %v1553 = vsel %vm232, %v1545, 0.0
      %v1554 = vsel %vm233, %v1546, 0.0
      %v1555 = vsel %vm234, %v1547, 0.0
      %s1556 = scalar_lea.vmem %s1, 1152
      %v1557 = vld [vmem:[%s1556] sm:$0xff]
      %v1558 = vld [vmem:[%s1556 + $0x8] sm:$0xff]
      %v1559 = vld [vmem:[%s1556 + $0x10] sm:$0xff]
      %v1560 = vld [vmem:[%s1556 + $0x18] sm:$0xff]
      %v1561 = vld [vmem:[%s1556 + $0x20] sm:$0xff]
      %v1562 = vld [vmem:[%s1556 + $0x28] sm:$0xff]
      %v1563 = vld [vmem:[%s1556 + $0x30] sm:$0xff]
      %v1564 = vld [vmem:[%s1556 + $0x38] sm:$0xff]
      %v1565 = vld [vmem:[%s1556 + $0x40] sm:$0xff]
      %v1566 = vld [vmem:[%s1556 + $0x48] sm:$0xff]
      %v1567 = vld [vmem:[%s1556 + $0x50] sm:$0xff]
      %v1568 = vld [vmem:[%s1556 + $0x58] sm:$0xff]
      %v1569 = vld [vmem:[%s1556 + $0x60] sm:$0xff]
      %v1570 = vld [vmem:[%s1556 + $0x68] sm:$0xff]
      %v1571 = vld [vmem:[%s1556 + $0x70] sm:$0xff]
      %v1572 = vld [vmem:[%s1556 + $0x78] sm:$0xff]
      %1573 = vmatprep.subr.mxu0 0.0
      %1574 = vmatpush1.msra.mxu0 %v1572
      %1575 = vmatprep.subr.mxu0 0.0
      %1576 = vmatpush1.msra.mxu0 %v1571
      %1577 = vmatprep.subr.mxu0 0.0
      %1578 = vmatpush1.msra.mxu0 %v1570
      %1579 = vmatprep.subr.mxu0 0.0
      %1580 = vmatpush1.msra.mxu0 %v1569
      %1581 = vmatprep.subr.mxu0 0.0
      %1582 = vmatpush1.msra.mxu0 %v1568
      %1583 = vmatprep.subr.mxu0 0.0
      %1584 = vmatpush1.msra.mxu0 %v1567
      %1585 = vmatprep.subr.mxu0 0.0
      %1586 = vmatpush1.msra.mxu0 %v1566
      %1587 = vmatprep.subr.mxu0 0.0
      %1588 = vmatpush1.msra.mxu0 %v1565
      %1589 = vmatprep.subr.mxu0 0.0
      %1590 = vmatpush1.msra.mxu0 %v1564
      %1591 = vmatprep.subr.mxu0 0.0
      %1592 = vmatpush1.msra.mxu0 %v1563
      %1593 = vmatprep.subr.mxu0 0.0
      %1594 = vmatpush1.msra.mxu0 %v1562
      %1595 = vmatprep.subr.mxu0 0.0
      %1596 = vmatpush1.msra.mxu0 %v1561
      %1597 = vmatprep.subr.mxu0 0.0
      %1598 = vmatpush1.msra.mxu0 %v1560
      %1599 = vmatprep.subr.mxu0 0.0
      %1600 = vmatpush1.msra.mxu0 %v1559
      %1601 = vmatprep.subr.mxu0 0.0
      %1602 = vmatpush1.msra.mxu0 %v1558
      %1603 = vmatprep.subr.mxu0 0.0
      %1604 = vmatpush1.msra.mxu0 %v1557
      %1605 = vmatprep.subr.mxu0 0.0
      %1606 = vmatpush2.msra.mxu0 0.0
      %1607 = vmatprep.subr.mxu0 0.0
      %1608 = vmatpush2.msra.mxu0 0.0
      %1609 = vmatprep.subr.mxu0 0.0
      %1610 = vmatpush2.msra.mxu0 0.0
      %1611 = vmatprep.subr.mxu0 0.0
      %1612 = vmatpush2.msra.mxu0 0.0
      %1613 = vmatprep.subr.mxu0 0.0
      %1614 = vmatpush2.msra.mxu0 0.0
      %1615 = vmatprep.subr.mxu0 0.0
      %1616 = vmatpush2.msra.mxu0 0.0
      %1617 = vmatprep.subr.mxu0 0.0
      %1618 = vmatpush2.msra.mxu0 0.0
      %1619 = vmatprep.subr.mxu0 0.0
      %1620 = vmatpush2.msra.mxu0 0.0
      %1621 = vmatprep.subr.mxu0 0.0
      %1622 = vmatpush2.msra.mxu0 0.0
      %1623 = vmatprep.subr.mxu0 0.0
      %1624 = vmatpush2.msra.mxu0 0.0
      %1625 = vmatprep.subr.mxu0 0.0
      %1626 = vmatpush2.msra.mxu0 0.0
      %1627 = vmatprep.subr.mxu0 0.0
      %1628 = vmatpush2.msra.mxu0 0.0
      %1629 = vmatprep.subr.mxu0 0.0
      %1630 = vmatpush2.msra.mxu0 0.0
      %1631 = vmatprep.subr.mxu0 0.0
      %1632 = vmatpush2.msra.mxu0 0.0
      %1633 = vmatprep.subr.mxu0 0.0
      %1634 = vmatpush2.msra.mxu0 0.0
      %1635 = vmatprep.subr.mxu0 0.0
      %1636 = vmatpush2.msra.mxu0 0.0
      %1637 = vmatprep.mubr.f32.mxu0 0.0
      %1638 = vmatmul.mubr.f32.gmra.mxu0 %v1548
      %v1639 = vpop.f32.mrf.mxu0
      %v1640 = vadd.f32 0.0, %v1639
      %v1641 = vpop.f32.mrf.mxu0
      %1642 = vmatprep.mubr.f32.mxu0 0.0
      %1643 = vmatmul.mubr.f32.gmra.mxu0 %v1549
      %v1644 = vpop.f32.mrf.mxu0
      %v1645 = vadd.f32 0.0, %v1644
      %v1646 = vpop.f32.mrf.mxu0
      %1647 = vmatprep.mubr.f32.mxu0 0.0
      %1648 = vmatmul.mubr.f32.gmra.mxu0 %v1550
      %v1649 = vpop.f32.mrf.mxu0
      %v1650 = vadd.f32 0.0, %v1649
      %v1651 = vpop.f32.mrf.mxu0
      %1652 = vmatprep.mubr.f32.mxu0 0.0
      %1653 = vmatmul.mubr.f32.gmra.mxu0 %v1551
      %v1654 = vpop.f32.mrf.mxu0
      %v1655 = vadd.f32 0.0, %v1654
      %v1656 = vpop.f32.mrf.mxu0
      %1657 = vmatprep.mubr.f32.mxu0 0.0
      %1658 = vmatmul.mubr.f32.gmra.mxu0 %v1552
      %v1659 = vpop.f32.mrf.mxu0
      %v1660 = vadd.f32 0.0, %v1659
      %v1661 = vpop.f32.mrf.mxu0
      %1662 = vmatprep.mubr.f32.mxu0 0.0
      %1663 = vmatmul.mubr.f32.gmra.mxu0 %v1553
      %v1664 = vpop.f32.mrf.mxu0
      %v1665 = vadd.f32 0.0, %v1664
      %v1666 = vpop.f32.mrf.mxu0
      %1667 = vmatprep.mubr.f32.mxu0 0.0
      %1668 = vmatmul.mubr.f32.gmra.mxu0 %v1554
      %v1669 = vpop.f32.mrf.mxu0
      %v1670 = vadd.f32 0.0, %v1669
      %v1671 = vpop.f32.mrf.mxu0
      %1672 = vmatprep.mubr.f32.mxu0 0.0
      %1673 = vmatmul.mubr.f32.gmra.mxu0 %v1555
      %v1674 = vpop.f32.mrf.mxu0
      %v1675 = vadd.f32 0.0, %v1674
      %v1676 = vpop.f32.mrf.mxu0
      %1677 = vdwg.mxu0
      %v1678 = vadd.f32 %v1532, %v1640
      %v1679 = vadd.f32 %v1533, %v1645
      %v1680 = vadd.f32 %v1534, %v1650
      %v1681 = vadd.f32 %v1535, %v1655
      %v1682 = vadd.f32 %v1536, %v1660
      %v1683 = vadd.f32 %v1537, %v1665
      %v1684 = vadd.f32 %v1538, %v1670
      %v1685 = vadd.f32 %v1539, %v1675
      %v1686 = vld [vmem:[%s165 + $0x18] sm:$0xff]
      %v1687 = vld [vmem:[%s165 + $0x20] sm:$0xff]
      %v1688 = vld [vmem:[%s165 + $0x28] sm:$0xff]
      %v1689 = vld [vmem:[%s165 + $0x30] sm:$0xff]
      %v1690 = vld [vmem:[%s165 + $0x38] sm:$0xff]
      %v1691 = vld [vmem:[%s165 + $0x40] sm:$0xff]
      %v1692 = vld [vmem:[%s165 + $0x48] sm:$0xff]
      %v1693 = vld [vmem:[%s165 + $0x50] sm:$0xff]
      %s1694 = scalar_lea.vmem %s1, 1280
      %v1695 = vld [vmem:[%s1694] sm:$0xff]
      %v1696 = vld [vmem:[%s1694 + $0x8] sm:$0xff]
      %v1697 = vld [vmem:[%s1694 + $0x10] sm:$0xff]
      %v1698 = vld [vmem:[%s1694 + $0x18] sm:$0xff]
      %v1699 = vld [vmem:[%s1694 + $0x20] sm:$0xff]
      %v1700 = vld [vmem:[%s1694 + $0x28] sm:$0xff]
      %v1701 = vld [vmem:[%s1694 + $0x30] sm:$0xff]
      %v1702 = vld [vmem:[%s1694 + $0x38] sm:$0xff]
      %v1703 = vld [vmem:[%s1694 + $0x40] sm:$0xff]
      %v1704 = vld [vmem:[%s1694 + $0x48] sm:$0xff]
      %v1705 = vld [vmem:[%s1694 + $0x50] sm:$0xff]
      %v1706 = vld [vmem:[%s1694 + $0x58] sm:$0xff]
      %v1707 = vld [vmem:[%s1694 + $0x60] sm:$0xff]
      %v1708 = vld [vmem:[%s1694 + $0x68] sm:$0xff]
      %v1709 = vld [vmem:[%s1694 + $0x70] sm:$0xff]
      %v1710 = vld [vmem:[%s1694 + $0x78] sm:$0xff]
      %1711 = vmatprep.subr.mxu0 0.0
      %1712 = vmatpush1.msra.mxu0 %v1710
      %1713 = vmatprep.subr.mxu0 0.0
      %1714 = vmatpush1.msra.mxu0 %v1709
      %1715 = vmatprep.subr.mxu0 0.0
      %1716 = vmatpush1.msra.mxu0 %v1708
      %1717 = vmatprep.subr.mxu0 0.0
      %1718 = vmatpush1.msra.mxu0 %v1707
      %1719 = vmatprep.subr.mxu0 0.0
      %1720 = vmatpush1.msra.mxu0 %v1706
      %1721 = vmatprep.subr.mxu0 0.0
      %1722 = vmatpush1.msra.mxu0 %v1705
      %1723 = vmatprep.subr.mxu0 0.0
      %1724 = vmatpush1.msra.mxu0 %v1704
      %1725 = vmatprep.subr.mxu0 0.0
      %1726 = vmatpush1.msra.mxu0 %v1703
      %1727 = vmatprep.subr.mxu0 0.0
      %1728 = vmatpush1.msra.mxu0 %v1702
      %1729 = vmatprep.subr.mxu0 0.0
      %1730 = vmatpush1.msra.mxu0 %v1701
      %1731 = vmatprep.subr.mxu0 0.0
      %1732 = vmatpush1.msra.mxu0 %v1700
      %1733 = vmatprep.subr.mxu0 0.0
      %1734 = vmatpush1.msra.mxu0 %v1699
      %1735 = vmatprep.subr.mxu0 0.0
      %1736 = vmatpush1.msra.mxu0 %v1698
      %1737 = vmatprep.subr.mxu0 0.0
      %1738 = vmatpush1.msra.mxu0 %v1697
      %1739 = vmatprep.subr.mxu0 0.0
      %1740 = vmatpush1.msra.mxu0 %v1696
      %1741 = vmatprep.subr.mxu0 0.0
      %1742 = vmatpush1.msra.mxu0 %v1695
      %1743 = vmatprep.subr.mxu0 0.0
      %1744 = vmatpush2.msra.mxu0 0.0
      %1745 = vmatprep.subr.mxu0 0.0
      %1746 = vmatpush2.msra.mxu0 0.0
      %1747 = vmatprep.subr.mxu0 0.0
      %1748 = vmatpush2.msra.mxu0 0.0
      %1749 = vmatprep.subr.mxu0 0.0
      %1750 = vmatpush2.msra.mxu0 0.0
      %1751 = vmatprep.subr.mxu0 0.0
      %1752 = vmatpush2.msra.mxu0 0.0
      %1753 = vmatprep.subr.mxu0 0.0
      %1754 = vmatpush2.msra.mxu0 0.0
      %1755 = vmatprep.subr.mxu0 0.0
      %1756 = vmatpush2.msra.mxu0 0.0
      %1757 = vmatprep.subr.mxu0 0.0
      %1758 = vmatpush2.msra.mxu0 0.0
      %1759 = vmatprep.subr.mxu0 0.0
      %1760 = vmatpush2.msra.mxu0 0.0
      %1761 = vmatprep.subr.mxu0 0.0
      %1762 = vmatpush2.msra.mxu0 0.0
      %1763 = vmatprep.subr.mxu0 0.0
      %1764 = vmatpush2.msra.mxu0 0.0
      %1765 = vmatprep.subr.mxu0 0.0
      %1766 = vmatpush2.msra.mxu0 0.0
      %1767 = vmatprep.subr.mxu0 0.0
      %1768 = vmatpush2.msra.mxu0 0.0
      %1769 = vmatprep.subr.mxu0 0.0
      %1770 = vmatpush2.msra.mxu0 0.0
      %1771 = vmatprep.subr.mxu0 0.0
      %1772 = vmatpush2.msra.mxu0 0.0
      %1773 = vmatprep.subr.mxu0 0.0
      %1774 = vmatpush2.msra.mxu0 0.0
      %1775 = vmatprep.mubr.f32.mxu0 0.0
      %1776 = vmatmul.mubr.f32.gmra.mxu0 %v1686
      %v1777 = vpop.f32.mrf.mxu0
      %v1778 = vadd.f32 0.0, %v1777
      %v1779 = vpop.f32.mrf.mxu0
      %1780 = vmatprep.mubr.f32.mxu0 0.0
      %1781 = vmatmul.mubr.f32.gmra.mxu0 %v1687
      %v1782 = vpop.f32.mrf.mxu0
      %v1783 = vadd.f32 0.0, %v1782
      %v1784 = vpop.f32.mrf.mxu0
      %1785 = vmatprep.mubr.f32.mxu0 0.0
      %1786 = vmatmul.mubr.f32.gmra.mxu0 %v1688
      %v1787 = vpop.f32.mrf.mxu0
      %v1788 = vadd.f32 0.0, %v1787
      %v1789 = vpop.f32.mrf.mxu0
      %1790 = vmatprep.mubr.f32.mxu0 0.0
      %1791 = vmatmul.mubr.f32.gmra.mxu0 %v1689
      %v1792 = vpop.f32.mrf.mxu0
      %v1793 = vadd.f32 0.0, %v1792
      %v1794 = vpop.f32.mrf.mxu0
      %1795 = vmatprep.mubr.f32.mxu0 0.0
      %1796 = vmatmul.mubr.f32.gmra.mxu0 %v1690
      %v1797 = vpop.f32.mrf.mxu0
      %v1798 = vadd.f32 0.0, %v1797
      %v1799 = vpop.f32.mrf.mxu0
      %1800 = vmatprep.mubr.f32.mxu0 0.0
      %1801 = vmatmul.mubr.f32.gmra.mxu0 %v1691
      %v1802 = vpop.f32.mrf.mxu0
      %v1803 = vadd.f32 0.0, %v1802
      %v1804 = vpop.f32.mrf.mxu0
      %1805 = vmatprep.mubr.f32.mxu0 0.0
      %1806 = vmatmul.mubr.f32.gmra.mxu0 %v1692
      %v1807 = vpop.f32.mrf.mxu0
      %v1808 = vadd.f32 0.0, %v1807
      %v1809 = vpop.f32.mrf.mxu0
      %1810 = vmatprep.mubr.f32.mxu0 0.0
      %1811 = vmatmul.mubr.f32.gmra.mxu0 %v1693
      %v1812 = vpop.f32.mrf.mxu0
      %v1813 = vadd.f32 0.0, %v1812
      %v1814 = vpop.f32.mrf.mxu0
      %1815 = vdwg.mxu0
      %v1816 = vadd.f32 %v1678, %v1778
      %v1817 = vadd.f32 %v1679, %v1783
      %v1818 = vadd.f32 %v1680, %v1788
      %v1819 = vadd.f32 %v1681, %v1793
      %v1820 = vadd.f32 %v1682, %v1798
      %v1821 = vadd.f32 %v1683, %v1803
      %v1822 = vadd.f32 %v1684, %v1808
      %v1823 = vadd.f32 %v1685, %v1813
      %v1824 = vld [vmem:[%s165 + $0x19] sm:$0xff]
      %v1825 = vld [vmem:[%s165 + $0x21] sm:$0xff]
      %v1826 = vld [vmem:[%s165 + $0x29] sm:$0xff]
      %v1827 = vld [vmem:[%s165 + $0x31] sm:$0xff]
      %v1828 = vld [vmem:[%s165 + $0x39] sm:$0xff]
      %v1829 = vld [vmem:[%s165 + $0x41] sm:$0xff]
      %v1830 = vld [vmem:[%s165 + $0x49] sm:$0xff]
      %v1831 = vld [vmem:[%s165 + $0x51] sm:$0xff]
      %v1832 = vsel %vm526, %v1824, 0.0
      %v1833 = vsel %vm527, %v1825, 0.0
      %v1834 = vsel %vm528, %v1826, 0.0
      %v1835 = vsel %vm529, %v1827, 0.0
      %v1836 = vsel %vm530, %v1828, 0.0
      %v1837 = vsel %vm531, %v1829, 0.0
      %v1838 = vsel %vm532, %v1830, 0.0
      %v1839 = vsel %vm533, %v1831, 0.0
      %s1840 = scalar_lea.vmem %s1, 1408
      %v1841 = vld [vmem:[%s1840] sm:$0xff]
      %v1842 = vld [vmem:[%s1840 + $0x8] sm:$0xff]
      %v1843 = vld [vmem:[%s1840 + $0x10] sm:$0xff]
      %v1844 = vld [vmem:[%s1840 + $0x18] sm:$0xff]
      %v1845 = vld [vmem:[%s1840 + $0x20] sm:$0xff]
      %v1846 = vld [vmem:[%s1840 + $0x28] sm:$0xff]
      %v1847 = vld [vmem:[%s1840 + $0x30] sm:$0xff]
      %v1848 = vld [vmem:[%s1840 + $0x38] sm:$0xff]
      %v1849 = vld [vmem:[%s1840 + $0x40] sm:$0xff]
      %v1850 = vld [vmem:[%s1840 + $0x48] sm:$0xff]
      %v1851 = vld [vmem:[%s1840 + $0x50] sm:$0xff]
      %v1852 = vld [vmem:[%s1840 + $0x58] sm:$0xff]
      %v1853 = vld [vmem:[%s1840 + $0x60] sm:$0xff]
      %v1854 = vld [vmem:[%s1840 + $0x68] sm:$0xff]
      %v1855 = vld [vmem:[%s1840 + $0x70] sm:$0xff]
      %v1856 = vld [vmem:[%s1840 + $0x78] sm:$0xff]
      %1857 = vmatprep.subr.mxu0 0.0
      %1858 = vmatpush1.msra.mxu0 %v1856
      %1859 = vmatprep.subr.mxu0 0.0
      %1860 = vmatpush1.msra.mxu0 %v1855
      %1861 = vmatprep.subr.mxu0 0.0
      %1862 = vmatpush1.msra.mxu0 %v1854
      %1863 = vmatprep.subr.mxu0 0.0
      %1864 = vmatpush1.msra.mxu0 %v1853
      %1865 = vmatprep.subr.mxu0 0.0
      %1866 = vmatpush1.msra.mxu0 %v1852
      %1867 = vmatprep.subr.mxu0 0.0
      %1868 = vmatpush1.msra.mxu0 %v1851
      %1869 = vmatprep.subr.mxu0 0.0
      %1870 = vmatpush1.msra.mxu0 %v1850
      %1871 = vmatprep.subr.mxu0 0.0
      %1872 = vmatpush1.msra.mxu0 %v1849
      %1873 = vmatprep.subr.mxu0 0.0
      %1874 = vmatpush1.msra.mxu0 %v1848
      %1875 = vmatprep.subr.mxu0 0.0
      %1876 = vmatpush1.msra.mxu0 %v1847
      %1877 = vmatprep.subr.mxu0 0.0
      %1878 = vmatpush1.msra.mxu0 %v1846
      %1879 = vmatprep.subr.mxu0 0.0
      %1880 = vmatpush1.msra.mxu0 %v1845
      %1881 = vmatprep.subr.mxu0 0.0
      %1882 = vmatpush1.msra.mxu0 %v1844
      %1883 = vmatprep.subr.mxu0 0.0
      %1884 = vmatpush1.msra.mxu0 %v1843
      %1885 = vmatprep.subr.mxu0 0.0
      %1886 = vmatpush1.msra.mxu0 %v1842
      %1887 = vmatprep.subr.mxu0 0.0
      %1888 = vmatpush1.msra.mxu0 %v1841
      %1889 = vmatprep.subr.mxu0 0.0
      %1890 = vmatpush2.msra.mxu0 0.0
      %1891 = vmatprep.subr.mxu0 0.0
      %1892 = vmatpush2.msra.mxu0 0.0
      %1893 = vmatprep.subr.mxu0 0.0
      %1894 = vmatpush2.msra.mxu0 0.0
      %1895 = vmatprep.subr.mxu0 0.0
      %1896 = vmatpush2.msra.mxu0 0.0
      %1897 = vmatprep.subr.mxu0 0.0
      %1898 = vmatpush2.msra.mxu0 0.0
      %1899 = vmatprep.subr.mxu0 0.0
      %1900 = vmatpush2.msra.mxu0 0.0
      %1901 = vmatprep.subr.mxu0 0.0
      %1902 = vmatpush2.msra.mxu0 0.0
      %1903 = vmatprep.subr.mxu0 0.0
      %1904 = vmatpush2.msra.mxu0 0.0
      %1905 = vmatprep.subr.mxu0 0.0
      %1906 = vmatpush2.msra.mxu0 0.0
      %1907 = vmatprep.subr.mxu0 0.0
      %1908 = vmatpush2.msra.mxu0 0.0
      %1909 = vmatprep.subr.mxu0 0.0
      %1910 = vmatpush2.msra.mxu0 0.0
      %1911 = vmatprep.subr.mxu0 0.0
      %1912 = vmatpush2.msra.mxu0 0.0
      %1913 = vmatprep.subr.mxu0 0.0
      %1914 = vmatpush2.msra.mxu0 0.0
      %1915 = vmatprep.subr.mxu0 0.0
      %1916 = vmatpush2.msra.mxu0 0.0
      %1917 = vmatprep.subr.mxu0 0.0
      %1918 = vmatpush2.msra.mxu0 0.0
      %1919 = vmatprep.subr.mxu0 0.0
      %1920 = vmatpush2.msra.mxu0 0.0
      %1921 = vmatprep.mubr.f32.mxu0 0.0
      %1922 = vmatmul.mubr.f32.gmra.mxu0 %v1832
      %v1923 = vpop.f32.mrf.mxu0
      %v1924 = vadd.f32 0.0, %v1923
      %v1925 = vpop.f32.mrf.mxu0
      %1926 = vmatprep.mubr.f32.mxu0 0.0
      %1927 = vmatmul.mubr.f32.gmra.mxu0 %v1833
      %v1928 = vpop.f32.mrf.mxu0
      %v1929 = vadd.f32 0.0, %v1928
      %v1930 = vpop.f32.mrf.mxu0
      %1931 = vmatprep.mubr.f32.mxu0 0.0
      %1932 = vmatmul.mubr.f32.gmra.mxu0 %v1834
      %v1933 = vpop.f32.mrf.mxu0
      %v1934 = vadd.f32 0.0, %v1933
      %v1935 = vpop.f32.mrf.mxu0
      %1936 = vmatprep.mubr.f32.mxu0 0.0
      %1937 = vmatmul.mubr.f32.gmra.mxu0 %v1835
      %v1938 = vpop.f32.mrf.mxu0
      %v1939 = vadd.f32 0.0, %v1938
      %v1940 = vpop.f32.mrf.mxu0
      %1941 = vmatprep.mubr.f32.mxu0 0.0
      %1942 = vmatmul.mubr.f32.gmra.mxu0 %v1836
      %v1943 = vpop.f32.mrf.mxu0
      %v1944 = vadd.f32 0.0, %v1943
      %v1945 = vpop.f32.mrf.mxu0
      %1946 = vmatprep.mubr.f32.mxu0 0.0
      %1947 = vmatmul.mubr.f32.gmra.mxu0 %v1837
      %v1948 = vpop.f32.mrf.mxu0
      %v1949 = vadd.f32 0.0, %v1948
      %v1950 = vpop.f32.mrf.mxu0
      %1951 = vmatprep.mubr.f32.mxu0 0.0
      %1952 = vmatmul.mubr.f32.gmra.mxu0 %v1838
      %v1953 = vpop.f32.mrf.mxu0
      %v1954 = vadd.f32 0.0, %v1953
      %v1955 = vpop.f32.mrf.mxu0
      %1956 = vmatprep.mubr.f32.mxu0 0.0
      %1957 = vmatmul.mubr.f32.gmra.mxu0 %v1839
      %v1958 = vpop.f32.mrf.mxu0
      %v1959 = vadd.f32 0.0, %v1958
      %v1960 = vpop.f32.mrf.mxu0
      %1961 = vdwg.mxu0
      %v1962 = vadd.f32 %v1816, %v1924
      %v1963 = vadd.f32 %v1817, %v1929
      %v1964 = vadd.f32 %v1818, %v1934
      %v1965 = vadd.f32 %v1819, %v1939
      %v1966 = vadd.f32 %v1820, %v1944
      %v1967 = vadd.f32 %v1821, %v1949
      %v1968 = vadd.f32 %v1822, %v1954
      %v1969 = vadd.f32 %v1823, %v1959
      %s1970 = scalar_lea.vmem %s170, 64
      %1971 = vst [vmem:[%s1970] sm:$0xff] %v1962
      %1972 = vst [vmem:[%s1970 + $0x8] sm:$0xff] %v1963
      %1973 = vst [vmem:[%s1970 + $0x10] sm:$0xff] %v1964
      %1974 = vst [vmem:[%s1970 + $0x18] sm:$0xff] %v1965
      %1975 = vst [vmem:[%s1970 + $0x20] sm:$0xff] %v1966
      %1976 = vst [vmem:[%s1970 + $0x28] sm:$0xff] %v1967
      %1977 = vst [vmem:[%s1970 + $0x30] sm:$0xff] %v1968
      %1978 = vst [vmem:[%s1970 + $0x38] sm:$0xff] %v1969
      %p1979 = scmp.lt.s32.totalorder %s14, 1
      %s1980 = scalar_select %p1979, %s14, 1
      %s1981 = smul.addr %s1980, 16
      %s1982 = smul.addr %s1981, 8
      %s1983 = scalar_lea.vmem %s3, %s1982
      // Predicated region
      $region33: #{lfm_forward.4} parent=31 // pred_check
        %p1984 = pneg %p100
      $region34: #{lfm_forward.4} parent=31 // pred_check_branch
        %1986 = sbr.rel (%p1984) target = $region36
      $region35: #{lfm_forward.4} parent=31 // pred_region
        _
      $region36: #{lfm_forward.4} parent=31 // pred_fallthru
        _
    $region32: #{lfm_forward.4} parent=5 // pred_fallthru
      _
    %p1987 = scmp.le.s32.totalorder 2, %s9
    // Predicated region
    $region37: #{lfm_forward.4} parent=5 // pred_check
      %p1988 = pneg %p1987
    $region38: #{lfm_forward.4} parent=5 // pred_check_branch
      %1990 = sbr.rel (%p1988) target = $region40
    $region39: #{lfm_forward.4} parent=5 // pred_region
      %s1991 = ssub.s32 %s9, 2
      // Predicated region
      $region41: #{lfm_forward.4} parent=39 // pred_check
        %p1992 = pneg %p106
      $region42: #{lfm_forward.4} parent=39 // pred_check_branch
        %1994 = sbr.rel (%p1992) target = $region44
      $region43: #{lfm_forward.4} parent=39 // pred_region
        %p1995 = scmp.lt.s32.totalorder %s15, 1
        %s1996 = scalar_select %p1995, %s15, 1
        %s1997 = smul.addr %s1996, 16
        %s1998 = smul.addr %s1997, 8
        %s1999 = scalar_lea.vmem %s3, %s1998
      $region44: #{lfm_forward.4} parent=39 // pred_fallthru
        _
    $region40: #{lfm_forward.4} parent=5 // pred_fallthru
      _
  $region6: #{lfm_forward.4} parent=0 // loop_footer
    %s13 = sadd.s32 1, %s9
  $region7: #{lfm_forward.4} parent=0 // loop_footer_branch
    %8 = sbr.rel target = $region3
  $region8: #{lfm_forward.4} parent=0 // loop_exit
    _

// kernel: lfm_forward.5
$region0: #{lfm_forward.5}
  #allocation0 [shape = 'u32[]', space=smem, size = 0x4, offset = 0x4, fixed_abs, tag = 'smem constant byte address 0x4 - core index']
  #allocation1 [shape = 'u32[144,128]{1,0:T(1,128)}', space=vmem, size = 0x12000, scoped, tag = 'internal scratch']
  %s0 = inlined_call_operand.vmem [shape: f32[2,304,128], index: 0, kind: input, shape index: {}]
  %s1 = inlined_call_operand.vmem [shape: f32[12,128,128], index: 1, kind: input, shape index: {}]
  %s2 = inlined_call_operand.vmem [shape: f32[1,128], index: 2, kind: input, shape index: {}]
  %s3 = inlined_call_operand.vmem [shape: f32[2,2,256,128], index: 3, kind: output, shape index: {}]
  %s4 = sld [smem:[#allocation0]]
  $region45: #{lfm_forward.5} parent=0
    _
  %s6 = ssub.s32 1, %s4
  %s7 = scalar_select 0, %s6, %s4
  loop: start=0, step=1, limit=4
  $region2: #{lfm_forward.5} parent=0 // loop_pre_header
    _
  $region3: #{lfm_forward.5} parent=0 // loop_header
    %s9 = sphi 0, %s13
    %p10 = scmp.ge.s32.totalorder %s9, 4
    %s19 = sphi 0, %s21
    %s22 = sphi 0, %s19
    %s23 = sphi 0, %s22
    %s39 = sphi 0, %s23
    %s43 = sphi 0, %s43
    %s45 = sphi 0, %s43
    %s46 = sphi 0, %s45
    %s60 = sphi 0, %s46
    %s64 = sphi 0, %s64
    %s66 = sphi 0, %s64
    %s67 = sphi 0, %s66
    %s81 = sphi 0, %s67
    %s87 = sphi 0, %s89
    %s90 = sphi 0, %s87
    %s91 = sphi 0, %s90
    %s107 = sphi 0, %s91
  $region4: #{lfm_forward.5} parent=0 // loop_header_branch
    %12 = sbr.rel (%p10) target = $region8
  $region5: #{lfm_forward.5} parent=0 // loop_body
    %s14 = ssub.s32 %s9, 1
    %s15 = ssub.s32 %s9, 2
    %s16 = sadd.s32 %s9, 1
    %s17 = ssub.s32 %s9, %s16
    %p18 = scmp.eq.s32.totalorder %s17, 0
    %s20 = sadd.s32 %s19, 1
    %s21 = scalar_select %p18, %s19, %s20
    %p24 = pneg %p18
    %p25 = scmp.eq.s32.totalorder %s9, 1
    %p26 = por %p24, %p25
    %p27 = scmp.ne.s32.totalorder %s19, %s22
    %p28 = scmp.eq.s32.totalorder %s9, 0
    %p29 = por %p27, %p28
    %p30 = scmp.ne.s32.totalorder %s19, %s22
    %p31 = scmp.eq.s32.totalorder %s14, 1
    %p32 = por %p30, %p31
    %p33 = scmp.ne.s32.totalorder %s22, %s23
    %p34 = scmp.eq.s32.totalorder %s14, 0
    %p35 = por %p33, %p34
    %p36 = scmp.ne.s32.totalorder %s22, %s23
    %p37 = scmp.eq.s32.totalorder %s15, 1
    %p38 = por %p36, %p37
    %p40 = scmp.ne.s32.totalorder %s23, %s39
    %p41 = scmp.eq.s32.totalorder %s15, 0
    %p42 = por %p40, %p41
    %s44 = sadd.s32 %s43, 1
    %p47 = scmp.eq.s32.totalorder %s9, 1
    %p48 = scmp.ne.s32.totalorder %s43, %s45
    %p49 = scmp.eq.s32.totalorder %s9, 0
    %p50 = por %p48, %p49
    %p51 = scmp.ne.s32.totalorder %s43, %s45
    %p52 = scmp.eq.s32.totalorder %s14, 1
    %p53 = por %p51, %p52
    %p54 = scmp.ne.s32.totalorder %s45, %s46
    %p55 = scmp.eq.s32.totalorder %s14, 0
    %p56 = por %p54, %p55
    %p57 = scmp.ne.s32.totalorder %s45, %s46
    %p58 = scmp.eq.s32.totalorder %s15, 1
    %p59 = por %p57, %p58
    %p61 = scmp.ne.s32.totalorder %s46, %s60
    %p62 = scmp.eq.s32.totalorder %s15, 0
    %p63 = por %p61, %p62
    %s65 = sadd.s32 %s64, 1
    %p68 = scmp.eq.s32.totalorder %s9, 1
    %p69 = scmp.ne.s32.totalorder %s64, %s66
    %p70 = scmp.eq.s32.totalorder %s9, 0
    %p71 = por %p69, %p70
    %p72 = scmp.ne.s32.totalorder %s64, %s66
    %p73 = scmp.eq.s32.totalorder %s14, 1
    %p74 = por %p72, %p73
    %p75 = scmp.ne.s32.totalorder %s66, %s67
    %p76 = scmp.eq.s32.totalorder %s14, 0
    %p77 = por %p75, %p76
    %p78 = scmp.ne.s32.totalorder %s66, %s67
    %p79 = scmp.eq.s32.totalorder %s15, 1
    %p80 = por %p78, %p79
    %p82 = scmp.ne.s32.totalorder %s67, %s81
    %p83 = scmp.eq.s32.totalorder %s15, 0
    %p84 = por %p82, %p83
    %s85 = ssub.s32 %s9, %s16
    %p86 = scmp.eq.s32.totalorder %s85, 0
    %s88 = sadd.s32 %s87, 1
    %s89 = scalar_select %p86, %s87, %s88
    %p92 = pneg %p86
    %p93 = scmp.eq.s32.totalorder %s9, 1
    %p94 = por %p92, %p93
    %p95 = scmp.ne.s32.totalorder %s87, %s90
    %p96 = scmp.eq.s32.totalorder %s9, 0
    %p97 = por %p95, %p96
    %p98 = scmp.ne.s32.totalorder %s87, %s90
    %p99 = scmp.eq.s32.totalorder %s14, 1
    %p100 = por %p98, %p99
    %p101 = scmp.ne.s32.totalorder %s90, %s91
    %p102 = scmp.eq.s32.totalorder %s14, 0
    %p103 = por %p101, %p102
    %p104 = scmp.ne.s32.totalorder %s90, %s91
    %p105 = scmp.eq.s32.totalorder %s15, 1
    %p106 = por %p104, %p105
    %p108 = scmp.ne.s32.totalorder %s91, %s107
    %p109 = scmp.eq.s32.totalorder %s15, 0
    %p110 = por %p108, %p109
    %p111 = scmp.le.s32.totalorder 1, %s9
    %p112 = scmp.lt.s32.totalorder %s9, 3
    %p113 = pnand %p111, %p112
    %p114 = pneg %p113
    // Predicated region
    $region9: #{lfm_forward.5} parent=5 // pred_check
      _
    $region10: #{lfm_forward.5} parent=5 // pred_check_branch
      %116 = sbr.rel (%p113) target = $region12
    $region11: #{lfm_forward.5} parent=5 // pred_region
      %s117 = ssub.s32 %s9, 1
      // Predicated region
      $region13: #{lfm_forward.5} parent=11 // pred_check
        %p118 = pneg %p56
      $region14: #{lfm_forward.5} parent=11 // pred_check_branch
        %120 = sbr.rel (%p118) target = $region16
      $region15: #{lfm_forward.5} parent=11 // pred_region
        _
      $region16: #{lfm_forward.5} parent=11 // pred_fallthru
        _
      // Predicated region
      $region17: #{lfm_forward.5} parent=11 // pred_check
        %p121 = pneg %p77
      $region18: #{lfm_forward.5} parent=11 // pred_check_branch
        %123 = sbr.rel (%p121) target = $region20
      $region19: #{lfm_forward.5} parent=11 // pred_region
        _
      $region20: #{lfm_forward.5} parent=11 // pred_fallthru
        _
    $region12: #{lfm_forward.5} parent=5 // pred_fallthru
      _
    %p124 = scmp.lt.s32.totalorder %s9, 2
    // Predicated region
    $region21: #{lfm_forward.5} parent=5 // pred_check
      %p125 = pneg %p124
    $region22: #{lfm_forward.5} parent=5 // pred_check_branch
      %127 = sbr.rel (%p125) target = $region24
    $region23: #{lfm_forward.5} parent=5 // pred_region
      // Predicated region
      $region25: #{lfm_forward.5} parent=23 // pred_check
        %p128 = pneg %p29
      $region26: #{lfm_forward.5} parent=23 // pred_check_branch
        %130 = sbr.rel (%p128) target = $region28
      $region27: #{lfm_forward.5} parent=23 // pred_region
        %p131 = scmp.lt.s32.totalorder %s9, 1
        %s132 = scalar_select %p131, %s9, 1
        %s133 = smul.addr %s132, 38
        %s134 = smul.addr %s133, 8
        %s135 = scalar_lea.vmem %s0, %s134
      $region28: #{lfm_forward.5} parent=23 // pred_fallthru
        _
    $region24: #{lfm_forward.5} parent=5 // pred_fallthru
      _
    %p136 = scmp.le.s32.totalorder 1, %s9
    %p137 = scmp.lt.s32.totalorder %s9, 3
    %p138 = pnand %p136, %p137
    %p139 = pneg %p138
    // Predicated region
    $region29: #{lfm_forward.5} parent=5 // pred_check
      _
    $region30: #{lfm_forward.5} parent=5 // pred_check_branch
      %141 = sbr.rel (%p138) target = $region32
    $region31: #{lfm_forward.5} parent=5 // pred_region
      %s142 = ssub.s32 %s9, 1
      %p143 = scmp.lt.s32.totalorder %s14, 1
      %s144 = scalar_select %p143, %s14, 1
      %s145 = smul.addr %s144, 38
      %s146 = smul.addr %s145, 8
      %s147 = scalar_lea.vmem %s0, %s146
      %p148 = pneg %p35
      %p149 = pneg %p32
      %p150 = pneg %p56
      %p151 = pneg %p53
      %p152 = pneg %p77
      %p153 = pneg %p74
      %p154 = pneg %p103
      %p155 = pneg %p100
      %p156 = scmp.lt.s32.totalorder %s14, 1
      %s157 = scalar_select %p156, %s14, 1
      %s158 = smul.addr %s157, 64
      %s159 = smul.addr %s158, 8
      %s160 = scalar_lea.vmem %s3, %s159
      %p161 = scmp.lt.s32.totalorder %s14, 1
      %s162 = scalar_select %p161, %s14, 1
      %s163 = smul.addr %s162, 38
      %s164 = smul.addr %s163, 8
      %s165 = scalar_lea.vmem %s0, %s164
      %p166 = scmp.lt.s32.totalorder %s14, 1
      %s167 = scalar_select %p166, %s14, 1
      %s168 = smul.addr %s167, 64
      %s169 = smul.addr %s168, 8
      %s170 = scalar_lea.vmem %s3, %s169
      %v171 = vlaneseq
      %v172 = vshrl.u32 %v171, 7
      %v173 = vadd.s32 %v172, 8
      %v174 = vadd.s32 %v172, 16
      %v175 = vadd.s32 %v172, 24
      %v176 = vadd.s32 %v172, 32
      %v177 = vadd.s32 %v172, 40
      %v178 = vadd.s32 %v172, 48
      %v179 = vadd.s32 %v172, 56
      %v180 = vadd.s32 %v172, 64
      %v181 = vadd.s32 %v172, 72
      %v182 = vadd.s32 %v172, 80
      %v183 = vadd.s32 %v172, 88
      %v184 = vadd.s32 %v172, 96
      %v185 = vadd.s32 %v172, 104
      %v186 = vadd.s32 %v172, 112
      %v187 = vadd.s32 %v172, 120
      %v188 = vand.u32 %v172, 15
      %v189 = vand.u32 %v173, 15
      %v190 = vand.u32 %v174, 15
      %v191 = vand.u32 %v175, 15
      %v192 = vand.u32 %v176, 15
      %v193 = vand.u32 %v177, 15
      %v194 = vand.u32 %v178, 15
      %v195 = vand.u32 %v179, 15
      %v196 = vand.u32 %v180, 15
      %v197 = vand.u32 %v181, 15
      %v198 = vand.u32 %v182, 15
      %v199 = vand.u32 %v183, 15
      %v200 = vand.u32 %v184, 15
      %v201 = vand.u32 %v185, 15
      %v202 = vand.u32 %v186, 15
      %v203 = vand.u32 %v187, 15
      %vm204 = vcmp.ne.s32.totalorder %v188, 0
      %vm205 = vcmp.ne.s32.totalorder %v189, 0
      %vm206 = vcmp.ne.s32.totalorder %v190, 0
      %vm207 = vcmp.ne.s32.totalorder %v191, 0
      %vm208 = vcmp.ne.s32.totalorder %v192, 0
      %vm209 = vcmp.ne.s32.totalorder %v193, 0
      %vm210 = vcmp.ne.s32.totalorder %v194, 0
      %vm211 = vcmp.ne.s32.totalorder %v195, 0
      %vm212 = vcmp.ne.s32.totalorder %v196, 0
      %vm213 = vcmp.ne.s32.totalorder %v197, 0
      %vm214 = vcmp.ne.s32.totalorder %v198, 0
      %vm215 = vcmp.ne.s32.totalorder %v199, 0
      %vm216 = vcmp.ne.s32.totalorder %v200, 0
      %vm217 = vcmp.ne.s32.totalorder %v201, 0
      %vm218 = vcmp.ne.s32.totalorder %v202, 0
      %vm219 = vcmp.ne.s32.totalorder %v203, 0
      %vm220 = vcmp.ne.s32.totalorder %v188, 15
      %vm221 = vcmp.ne.s32.totalorder %v189, 15
      %vm222 = vcmp.ne.s32.totalorder %v190, 15
      %vm223 = vcmp.ne.s32.totalorder %v191, 15
      %vm224 = vcmp.ne.s32.totalorder %v192, 15
      %vm225 = vcmp.ne.s32.totalorder %v193, 15
      %vm226 = vcmp.ne.s32.totalorder %v194, 15
      %vm227 = vcmp.ne.s32.totalorder %v195, 15
      %vm228 = vcmp.ne.s32.totalorder %v196, 15
      %vm229 = vcmp.ne.s32.totalorder %v197, 15
      %vm230 = vcmp.ne.s32.totalorder %v198, 15
      %vm231 = vcmp.ne.s32.totalorder %v199, 15
      %vm232 = vcmp.ne.s32.totalorder %v200, 15
      %vm233 = vcmp.ne.s32.totalorder %v201, 15
      %vm234 = vcmp.ne.s32.totalorder %v202, 15
      %vm235 = vcmp.ne.s32.totalorder %v203, 15
      %v236 = vld [vmem:[%s2] sm:$0x1]
      %v238 = vlaneseq
      %v239 = vshrl.u32 %v238, 7
      %v240 = vsub.s32 0, %v239
      %v241 = vrot.slane %v236, %v240
      %v243 = vld [vmem:[%s165 + $0x17] sm:$0xff]
      %v244 = vld [vmem:[%s165 + $0x1f] sm:$0xff]
      %v245 = vld [vmem:[%s165 + $0x27] sm:$0xff]
      %v246 = vld [vmem:[%s165 + $0x2f] sm:$0xff]
      %v247 = vld [vmem:[%s165 + $0x37] sm:$0xff]
      %v248 = vld [vmem:[%s165 + $0x3f] sm:$0xff]
      %v249 = vld [vmem:[%s165 + $0x47] sm:$0xff]
      %v250 = vld [vmem:[%s165 + $0x4f] sm:$0xff]
      %v251 = vld [vmem:[%s165 + $0x57] sm:$0xff]
      %v252 = vld [vmem:[%s165 + $0x5f] sm:$0xff]
      %v253 = vld [vmem:[%s165 + $0x67] sm:$0xff]
      %v254 = vld [vmem:[%s165 + $0x6f] sm:$0xff]
      %v255 = vld [vmem:[%s165 + $0x77] sm:$0xff]
      %v256 = vld [vmem:[%s165 + $0x7f] sm:$0xff]
      %v257 = vld [vmem:[%s165 + $0x87] sm:$0xff]
      %v258 = vld [vmem:[%s165 + $0x8f] sm:$0xff]
      %v259 = vsel %vm204, 1, 0
      %v260 = vsel %vm205, 1, 0
      %v261 = vsel %vm206, 1, 0
      %v262 = vsel %vm207, 1, 0
      %v263 = vsel %vm208, 1, 0
      %v264 = vsel %vm209, 1, 0
      %v265 = vsel %vm210, 1, 0
      %v266 = vsel %vm211, 1, 0
      %v267 = vsel %vm212, 1, 0
      %v268 = vsel %vm213, 1, 0
      %v269 = vsel %vm214, 1, 0
      %v270 = vsel %vm215, 1, 0
      %v271 = vsel %vm216, 1, 0
      %v272 = vsel %vm217, 1, 0
      %v273 = vsel %vm218, 1, 0
      %v274 = vsel %vm219, 1, 0
      %vm275 = vcmp.eq.s32.totalorder %v259, 1
      %vm276 = vcmp.eq.s32.totalorder %v260, 1
      %vm277 = vcmp.eq.s32.totalorder %v261, 1
      %vm278 = vcmp.eq.s32.totalorder %v262, 1
      %vm279 = vcmp.eq.s32.totalorder %v263, 1
      %vm280 = vcmp.eq.s32.totalorder %v264, 1
      %vm281 = vcmp.eq.s32.totalorder %v265, 1
      %vm282 = vcmp.eq.s32.totalorder %v266, 1
      %vm283 = vcmp.eq.s32.totalorder %v267, 1
      %vm284 = vcmp.eq.s32.totalorder %v268, 1
      %vm285 = vcmp.eq.s32.totalorder %v269, 1
      %vm286 = vcmp.eq.s32.totalorder %v270, 1
      %vm287 = vcmp.eq.s32.totalorder %v271, 1
      %vm288 = vcmp.eq.s32.totalorder %v272, 1
      %vm289 = vcmp.eq.s32.totalorder %v273, 1
      %vm290 = vcmp.eq.s32.totalorder %v274, 1
      %v291 = vsel %vm275, %v243, 0.0
      %v292 = vsel %vm276, %v244, 0.0
      %v293 = vsel %vm277, %v245, 0.0
      %v294 = vsel %vm278, %v246, 0.0
      %v295 = vsel %vm279, %v247, 0.0
      %v296 = vsel %vm280, %v248, 0.0
      %v297 = vsel %vm281, %v249, 0.0
      %v298 = vsel %vm282, %v250, 0.0
      %v299 = vsel %vm283, %v251, 0.0
      %v300 = vsel %vm284, %v252, 0.0
      %v301 = vsel %vm285, %v253, 0.0
      %v302 = vsel %vm286, %v254, 0.0
      %v303 = vsel %vm287, %v255, 0.0
      %v304 = vsel %vm288, %v256, 0.0
      %v305 = vsel %vm289, %v257, 0.0
      %v306 = vsel %vm290, %v258, 0.0
      %v307 = vld [vmem:[%s1] sm:$0xff]
      %v308 = vld [vmem:[%s1 + $0x8] sm:$0xff]
      %v309 = vld [vmem:[%s1 + $0x10] sm:$0xff]
      %v310 = vld [vmem:[%s1 + $0x18] sm:$0xff]
      %v311 = vld [vmem:[%s1 + $0x20] sm:$0xff]
      %v312 = vld [vmem:[%s1 + $0x28] sm:$0xff]
      %v313 = vld [vmem:[%s1 + $0x30] sm:$0xff]
      %v314 = vld [vmem:[%s1 + $0x38] sm:$0xff]
      %v315 = vld [vmem:[%s1 + $0x40] sm:$0xff]
      %v316 = vld [vmem:[%s1 + $0x48] sm:$0xff]
      %v317 = vld [vmem:[%s1 + $0x50] sm:$0xff]
      %v318 = vld [vmem:[%s1 + $0x58] sm:$0xff]
      %v319 = vld [vmem:[%s1 + $0x60] sm:$0xff]
      %v320 = vld [vmem:[%s1 + $0x68] sm:$0xff]
      %v321 = vld [vmem:[%s1 + $0x70] sm:$0xff]
      %v322 = vld [vmem:[%s1 + $0x78] sm:$0xff]
      %323 = vmatprep.subr.mxu0 0.0
      %324 = vmatpush1.msra.mxu0 %v322
      %325 = vmatprep.subr.mxu0 0.0
      %326 = vmatpush1.msra.mxu0 %v321
      %327 = vmatprep.subr.mxu0 0.0
      %328 = vmatpush1.msra.mxu0 %v320
      %329 = vmatprep.subr.mxu0 0.0
      %330 = vmatpush1.msra.mxu0 %v319
      %331 = vmatprep.subr.mxu0 0.0
      %332 = vmatpush1.msra.mxu0 %v318
      %333 = vmatprep.subr.mxu0 0.0
      %334 = vmatpush1.msra.mxu0 %v317
      %335 = vmatprep.subr.mxu0 0.0
      %336 = vmatpush1.msra.mxu0 %v316
      %337 = vmatprep.subr.mxu0 0.0
      %338 = vmatpush1.msra.mxu0 %v315
      %339 = vmatprep.subr.mxu0 0.0
      %340 = vmatpush1.msra.mxu0 %v314
      %341 = vmatprep.subr.mxu0 0.0
      %342 = vmatpush1.msra.mxu0 %v313
      %343 = vmatprep.subr.mxu0 0.0
      %344 = vmatpush1.msra.mxu0 %v312
      %345 = vmatprep.subr.mxu0 0.0
      %346 = vmatpush1.msra.mxu0 %v311
      %347 = vmatprep.subr.mxu0 0.0
      %348 = vmatpush1.msra.mxu0 %v310
      %349 = vmatprep.subr.mxu0 0.0
      %350 = vmatpush1.msra.mxu0 %v309
      %351 = vmatprep.subr.mxu0 0.0
      %352 = vmatpush1.msra.mxu0 %v308
      %353 = vmatprep.subr.mxu0 0.0
      %354 = vmatpush1.msra.mxu0 %v307
      %355 = vmatprep.subr.mxu0 0.0
      %356 = vmatpush2.msra.mxu0 0.0
      %357 = vmatprep.subr.mxu0 0.0
      %358 = vmatpush2.msra.mxu0 0.0
      %359 = vmatprep.subr.mxu0 0.0
      %360 = vmatpush2.msra.mxu0 0.0
      %361 = vmatprep.subr.mxu0 0.0
      %362 = vmatpush2.msra.mxu0 0.0
      %363 = vmatprep.subr.mxu0 0.0
      %364 = vmatpush2.msra.mxu0 0.0
      %365 = vmatprep.subr.mxu0 0.0
      %366 = vmatpush2.msra.mxu0 0.0
      %367 = vmatprep.subr.mxu0 0.0
      %368 = vmatpush2.msra.mxu0 0.0
      %369 = vmatprep.subr.mxu0 0.0
      %370 = vmatpush2.msra.mxu0 0.0
      %371 = vmatprep.subr.mxu0 0.0
      %372 = vmatpush2.msra.mxu0 0.0
      %373 = vmatprep.subr.mxu0 0.0
      %374 = vmatpush2.msra.mxu0 0.0
      %375 = vmatprep.subr.mxu0 0.0
      %376 = vmatpush2.msra.mxu0 0.0
      %377 = vmatprep.subr.mxu0 0.0
      %378 = vmatpush2.msra.mxu0 0.0
      %379 = vmatprep.subr.mxu0 0.0
      %380 = vmatpush2.msra.mxu0 0.0
      %381 = vmatprep.subr.mxu0 0.0
      %382 = vmatpush2.msra.mxu0 0.0
      %383 = vmatprep.subr.mxu0 0.0
      %384 = vmatpush2.msra.mxu0 0.0
      %385 = vmatprep.subr.mxu0 0.0
      %386 = vmatpush2.msra.mxu0 0.0
      %387 = vmatprep.mubr.f32.mxu0 0.0
      %388 = vmatmul.mubr.f32.gmra.mxu0 %v291
      %v389 = vpop.f32.mrf.mxu0
      %v390 = vadd.f32 0.0, %v389
      %v391 = vpop.f32.mrf.mxu0
      %392 = vmatprep.mubr.f32.mxu0 0.0
      %393 = vmatmul.mubr.f32.gmra.mxu0 %v292
      %v394 = vpop.f32.mrf.mxu0
      %v395 = vadd.f32 0.0, %v394
      %v396 = vpop.f32.mrf.mxu0
      %397 = vmatprep.mubr.f32.mxu0 0.0
      %398 = vmatmul.mubr.f32.gmra.mxu0 %v293
      %v399 = vpop.f32.mrf.mxu0
      %v400 = vadd.f32 0.0, %v399
      %v401 = vpop.f32.mrf.mxu0
      %402 = vmatprep.mubr.f32.mxu0 0.0
      %403 = vmatmul.mubr.f32.gmra.mxu0 %v294
      %v404 = vpop.f32.mrf.mxu0
      %v405 = vadd.f32 0.0, %v404
      %v406 = vpop.f32.mrf.mxu0
      %407 = vmatprep.mubr.f32.mxu0 0.0
      %408 = vmatmul.mubr.f32.gmra.mxu0 %v295
      %v409 = vpop.f32.mrf.mxu0
      %v410 = vadd.f32 0.0, %v409
      %v411 = vpop.f32.mrf.mxu0
      %412 = vmatprep.mubr.f32.mxu0 0.0
      %413 = vmatmul.mubr.f32.gmra.mxu0 %v296
      %v414 = vpop.f32.mrf.mxu0
      %v415 = vadd.f32 0.0, %v414
      %v416 = vpop.f32.mrf.mxu0
      %417 = vmatprep.mubr.f32.mxu0 0.0
      %418 = vmatmul.mubr.f32.gmra.mxu0 %v297
      %v419 = vpop.f32.mrf.mxu0
      %v420 = vadd.f32 0.0, %v419
      %v421 = vpop.f32.mrf.mxu0
      %422 = vmatprep.mubr.f32.mxu0 0.0
      %423 = vmatmul.mubr.f32.gmra.mxu0 %v298
      %v424 = vpop.f32.mrf.mxu0
      %v425 = vadd.f32 0.0, %v424
      %v426 = vpop.f32.mrf.mxu0
      %427 = vmatprep.mubr.f32.mxu0 0.0
      %428 = vmatmul.mubr.f32.gmra.mxu0 %v299
      %v429 = vpop.f32.mrf.mxu0
      %v430 = vadd.f32 0.0, %v429
      %v431 = vpop.f32.mrf.mxu0
      %432 = vmatprep.mubr.f32.mxu0 0.0
      %433 = vmatmul.mubr.f32.gmra.mxu0 %v300
      %v434 = vpop.f32.mrf.mxu0
      %v435 = vadd.f32 0.0, %v434
      %v436 = vpop.f32.mrf.mxu0
      %437 = vmatprep.mubr.f32.mxu0 0.0
      %438 = vmatmul.mubr.f32.gmra.mxu0 %v301
      %v439 = vpop.f32.mrf.mxu0
      %v440 = vadd.f32 0.0, %v439
      %v441 = vpop.f32.mrf.mxu0
      %442 = vmatprep.mubr.f32.mxu0 0.0
      %443 = vmatmul.mubr.f32.gmra.mxu0 %v302
      %v444 = vpop.f32.mrf.mxu0
      %v445 = vadd.f32 0.0, %v444
      %v446 = vpop.f32.mrf.mxu0
      %447 = vmatprep.mubr.f32.mxu0 0.0
      %448 = vmatmul.mubr.f32.gmra.mxu0 %v303
      %v449 = vpop.f32.mrf.mxu0
      %v450 = vadd.f32 0.0, %v449
      %v451 = vpop.f32.mrf.mxu0
      %452 = vmatprep.mubr.f32.mxu0 0.0
      %453 = vmatmul.mubr.f32.gmra.mxu0 %v304
      %v454 = vpop.f32.mrf.mxu0
      %v455 = vadd.f32 0.0, %v454
      %v456 = vpop.f32.mrf.mxu0
      %457 = vmatprep.mubr.f32.mxu0 0.0
      %458 = vmatmul.mubr.f32.gmra.mxu0 %v305
      %v459 = vpop.f32.mrf.mxu0
      %v460 = vadd.f32 0.0, %v459
      %v461 = vpop.f32.mrf.mxu0
      %462 = vmatprep.mubr.f32.mxu0 0.0
      %463 = vmatmul.mubr.f32.gmra.mxu0 %v306
      %v464 = vpop.f32.mrf.mxu0
      %v465 = vadd.f32 0.0, %v464
      %v466 = vpop.f32.mrf.mxu0
      %467 = vdwg.mxu0
      %v468 = vadd.f32 %v241, %v390
      %v469 = vadd.f32 %v241, %v395
      %v470 = vadd.f32 %v241, %v400
      %v471 = vadd.f32 %v241, %v405
      %v472 = vadd.f32 %v241, %v410
      %v473 = vadd.f32 %v241, %v415
      %v474 = vadd.f32 %v241, %v420
      %v475 = vadd.f32 %v241, %v425
      %v476 = vadd.f32 %v241, %v430
      %v477 = vadd.f32 %v241, %v435
      %v478 = vadd.f32 %v241, %v440
      %v479 = vadd.f32 %v241, %v445
      %v480 = vadd.f32 %v241, %v450
      %v481 = vadd.f32 %v241, %v455
      %v482 = vadd.f32 %v241, %v460
      %v483 = vadd.f32 %v241, %v465
      %v484 = vld [vmem:[%s165 + $0x18] sm:$0xff]
      %v485 = vld [vmem:[%s165 + $0x20] sm:$0xff]
      %v486 = vld [vmem:[%s165 + $0x28] sm:$0xff]
      %v487 = vld [vmem:[%s165 + $0x30] sm:$0xff]
      %v488 = vld [vmem:[%s165 + $0x38] sm:$0xff]
      %v489 = vld [vmem:[%s165 + $0x40] sm:$0xff]
      %v490 = vld [vmem:[%s165 + $0x48] sm:$0xff]
      %v491 = vld [vmem:[%s165 + $0x50] sm:$0xff]
      %v492 = vld [vmem:[%s165 + $0x58] sm:$0xff]
      %v493 = vld [vmem:[%s165 + $0x60] sm:$0xff]
      %v494 = vld [vmem:[%s165 + $0x68] sm:$0xff]
      %v495 = vld [vmem:[%s165 + $0x70] sm:$0xff]
      %v496 = vld [vmem:[%s165 + $0x78] sm:$0xff]
      %v497 = vld [vmem:[%s165 + $0x80] sm:$0xff]
      %v498 = vld [vmem:[%s165 + $0x88] sm:$0xff]
      %v499 = vld [vmem:[%s165 + $0x90] sm:$0xff]
      %s500 = scalar_lea.vmem %s1, 128
      %v501 = vld [vmem:[%s500] sm:$0xff]
      %v502 = vld [vmem:[%s500 + $0x8] sm:$0xff]
      %v503 = vld [vmem:[%s500 + $0x10] sm:$0xff]
      %v504 = vld [vmem:[%s500 + $0x18] sm:$0xff]
      %v505 = vld [vmem:[%s500 + $0x20] sm:$0xff]
      %v506 = vld [vmem:[%s500 + $0x28] sm:$0xff]
      %v507 = vld [vmem:[%s500 + $0x30] sm:$0xff]
      %v508 = vld [vmem:[%s500 + $0x38] sm:$0xff]
      %v509 = vld [vmem:[%s500 + $0x40] sm:$0xff]
      %v510 = vld [vmem:[%s500 + $0x48] sm:$0xff]
      %v511 = vld [vmem:[%s500 + $0x50] sm:$0xff]
      %v512 = vld [vmem:[%s500 + $0x58] sm:$0xff]
      %v513 = vld [vmem:[%s500 + $0x60] sm:$0xff]
      %v514 = vld [vmem:[%s500 + $0x68] sm:$0xff]
      %v515 = vld [vmem:[%s500 + $0x70] sm:$0xff]
      %v516 = vld [vmem:[%s500 + $0x78] sm:$0xff]
      %517 = vmatprep.subr.mxu0 0.0
      %518 = vmatpush1.msra.mxu0 %v516
      %519 = vmatprep.subr.mxu0 0.0
      %520 = vmatpush1.msra.mxu0 %v515
      %521 = vmatprep.subr.mxu0 0.0
      %522 = vmatpush1.msra.mxu0 %v514
      %523 = vmatprep.subr.mxu0 0.0
      %524 = vmatpush1.msra.mxu0 %v513
      %525 = vmatprep.subr.mxu0 0.0
      %526 = vmatpush1.msra.mxu0 %v512
      %527 = vmatprep.subr.mxu0 0.0
      %528 = vmatpush1.msra.mxu0 %v511
      %529 = vmatprep.subr.mxu0 0.0
      %530 = vmatpush1.msra.mxu0 %v510
      %531 = vmatprep.subr.mxu0 0.0
      %532 = vmatpush1.msra.mxu0 %v509
      %533 = vmatprep.subr.mxu0 0.0
      %534 = vmatpush1.msra.mxu0 %v508
      %535 = vmatprep.subr.mxu0 0.0
      %536 = vmatpush1.msra.mxu0 %v507
      %537 = vmatprep.subr.mxu0 0.0
      %538 = vmatpush1.msra.mxu0 %v506
      %539 = vmatprep.subr.mxu0 0.0
      %540 = vmatpush1.msra.mxu0 %v505
      %541 = vmatprep.subr.mxu0 0.0
      %542 = vmatpush1.msra.mxu0 %v504
      %543 = vmatprep.subr.mxu0 0.0
      %544 = vmatpush1.msra.mxu0 %v503
      %545 = vmatprep.subr.mxu0 0.0
      %546 = vmatpush1.msra.mxu0 %v502
      %547 = vmatprep.subr.mxu0 0.0
      %548 = vmatpush1.msra.mxu0 %v501
      %549 = vmatprep.subr.mxu0 0.0
      %550 = vmatpush2.msra.mxu0 0.0
      %551 = vmatprep.subr.mxu0 0.0
      %552 = vmatpush2.msra.mxu0 0.0
      %553 = vmatprep.subr.mxu0 0.0
      %554 = vmatpush2.msra.mxu0 0.0
      %555 = vmatprep.subr.mxu0 0.0
      %556 = vmatpush2.msra.mxu0 0.0
      %557 = vmatprep.subr.mxu0 0.0
      %558 = vmatpush2.msra.mxu0 0.0
      %559 = vmatprep.subr.mxu0 0.0
      %560 = vmatpush2.msra.mxu0 0.0
      %561 = vmatprep.subr.mxu0 0.0
      %562 = vmatpush2.msra.mxu0 0.0
      %563 = vmatprep.subr.mxu0 0.0
      %564 = vmatpush2.msra.mxu0 0.0
      %565 = vmatprep.subr.mxu0 0.0
      %566 = vmatpush2.msra.mxu0 0.0
      %567 = vmatprep.subr.mxu0 0.0
      %568 = vmatpush2.msra.mxu0 0.0
      %569 = vmatprep.subr.mxu0 0.0
      %570 = vmatpush2.msra.mxu0 0.0
      %571 = vmatprep.subr.mxu0 0.0
      %572 = vmatpush2.msra.mxu0 0.0
      %573 = vmatprep.subr.mxu0 0.0
      %574 = vmatpush2.msra.mxu0 0.0
      %575 = vmatprep.subr.mxu0 0.0
      %576 = vmatpush2.msra.mxu0 0.0
      %577 = vmatprep.subr.mxu0 0.0
      %578 = vmatpush2.msra.mxu0 0.0
      %579 = vmatprep.subr.mxu0 0.0
      %580 = vmatpush2.msra.mxu0 0.0
      %581 = vmatprep.mubr.f32.mxu0 0.0
      %582 = vmatmul.mubr.f32.gmra.mxu0 %v484
      %v583 = vpop.f32.mrf.mxu0
      %v584 = vadd.f32 0.0, %v583
      %v585 = vpop.f32.mrf.mxu0
      %586 = vmatprep.mubr.f32.mxu0 0.0
      %587 = vmatmul.mubr.f32.gmra.mxu0 %v485
      %v588 = vpop.f32.mrf.mxu0
      %v589 = vadd.f32 0.0, %v588
      %v590 = vpop.f32.mrf.mxu0
      %591 = vmatprep.mubr.f32.mxu0 0.0
      %592 = vmatmul.mubr.f32.gmra.mxu0 %v486
      %v593 = vpop.f32.mrf.mxu0
      %v594 = vadd.f32 0.0, %v593
      %v595 = vpop.f32.mrf.mxu0
      %596 = vmatprep.mubr.f32.mxu0 0.0
      %597 = vmatmul.mubr.f32.gmra.mxu0 %v487
      %v598 = vpop.f32.mrf.mxu0
      %v599 = vadd.f32 0.0, %v598
      %v600 = vpop.f32.mrf.mxu0
      %601 = vmatprep.mubr.f32.mxu0 0.0
      %602 = vmatmul.mubr.f32.gmra.mxu0 %v488
      %v603 = vpop.f32.mrf.mxu0
      %v604 = vadd.f32 0.0, %v603
      %v605 = vpop.f32.mrf.mxu0
      %606 = vmatprep.mubr.f32.mxu0 0.0
      %607 = vmatmul.mubr.f32.gmra.mxu0 %v489
      %v608 = vpop.f32.mrf.mxu0
      %v609 = vadd.f32 0.0, %v608
      %v610 = vpop.f32.mrf.mxu0
      %611 = vmatprep.mubr.f32.mxu0 0.0
      %612 = vmatmul.mubr.f32.gmra.mxu0 %v490
      %v613 = vpop.f32.mrf.mxu0
      %v614 = vadd.f32 0.0, %v613
      %v615 = vpop.f32.mrf.mxu0
      %616 = vmatprep.mubr.f32.mxu0 0.0
      %617 = vmatmul.mubr.f32.gmra.mxu0 %v491
      %v618 = vpop.f32.mrf.mxu0
      %v619 = vadd.f32 0.0, %v618
      %v620 = vpop.f32.mrf.mxu0
      %621 = vmatprep.mubr.f32.mxu0 0.0
      %622 = vmatmul.mubr.f32.gmra.mxu0 %v492
      %v623 = vpop.f32.mrf.mxu0
      %v624 = vadd.f32 0.0, %v623
      %v625 = vpop.f32.mrf.mxu0
      %626 = vmatprep.mubr.f32.mxu0 0.0
      %627 = vmatmul.mubr.f32.gmra.mxu0 %v493
      %v628 = vpop.f32.mrf.mxu0
      %v629 = vadd.f32 0.0, %v628
      %v630 = vpop.f32.mrf.mxu0
      %631 = vmatprep.mubr.f32.mxu0 0.0
      %632 = vmatmul.mubr.f32.gmra.mxu0 %v494
      %v633 = vpop.f32.mrf.mxu0
      %v634 = vadd.f32 0.0, %v633
      %v635 = vpop.f32.mrf.mxu0
      %636 = vmatprep.mubr.f32.mxu0 0.0
      %637 = vmatmul.mubr.f32.gmra.mxu0 %v495
      %v638 = vpop.f32.mrf.mxu0
      %v639 = vadd.f32 0.0, %v638
      %v640 = vpop.f32.mrf.mxu0
      %641 = vmatprep.mubr.f32.mxu0 0.0
      %642 = vmatmul.mubr.f32.gmra.mxu0 %v496
      %v643 = vpop.f32.mrf.mxu0
      %v644 = vadd.f32 0.0, %v643
      %v645 = vpop.f32.mrf.mxu0
      %646 = vmatprep.mubr.f32.mxu0 0.0
      %647 = vmatmul.mubr.f32.gmra.mxu0 %v497
      %v648 = vpop.f32.mrf.mxu0
      %v649 = vadd.f32 0.0, %v648
      %v650 = vpop.f32.mrf.mxu0
      %651 = vmatprep.mubr.f32.mxu0 0.0
      %652 = vmatmul.mubr.f32.gmra.mxu0 %v498
      %v653 = vpop.f32.mrf.mxu0
      %v654 = vadd.f32 0.0, %v653
      %v655 = vpop.f32.mrf.mxu0
      %656 = vmatprep.mubr.f32.mxu0 0.0
      %657 = vmatmul.mubr.f32.gmra.mxu0 %v499
      %v658 = vpop.f32.mrf.mxu0
      %v659 = vadd.f32 0.0, %v658
      %v660 = vpop.f32.mrf.mxu0
      %661 = vdwg.mxu0
      %v662 = vadd.f32 %v468, %v584
      %v663 = vadd.f32 %v469, %v589
      %v664 = vadd.f32 %v470, %v594
      %v665 = vadd.f32 %v471, %v599
      %v666 = vadd.f32 %v472, %v604
      %v667 = vadd.f32 %v473, %v609
      %v668 = vadd.f32 %v474, %v614
      %v669 = vadd.f32 %v475, %v619
      %v670 = vadd.f32 %v476, %v624
      %v671 = vadd.f32 %v477, %v629
      %v672 = vadd.f32 %v478, %v634
      %v673 = vadd.f32 %v479, %v639
      %v674 = vadd.f32 %v480, %v644
      %v675 = vadd.f32 %v481, %v649
      %v676 = vadd.f32 %v482, %v654
      %v677 = vadd.f32 %v483, %v659
      %v678 = vld [vmem:[%s165 + $0x19] sm:$0xff]
      %v679 = vld [vmem:[%s165 + $0x21] sm:$0xff]
      %v680 = vld [vmem:[%s165 + $0x29] sm:$0xff]
      %v681 = vld [vmem:[%s165 + $0x31] sm:$0xff]
      %v682 = vld [vmem:[%s165 + $0x39] sm:$0xff]
      %v683 = vld [vmem:[%s165 + $0x41] sm:$0xff]
      %v684 = vld [vmem:[%s165 + $0x49] sm:$0xff]
      %v685 = vld [vmem:[%s165 + $0x51] sm:$0xff]
      %v686 = vld [vmem:[%s165 + $0x59] sm:$0xff]
      %v687 = vld [vmem:[%s165 + $0x61] sm:$0xff]
      %v688 = vld [vmem:[%s165 + $0x69] sm:$0xff]
      %v689 = vld [vmem:[%s165 + $0x71] sm:$0xff]
      %v690 = vld [vmem:[%s165 + $0x79] sm:$0xff]
      %v691 = vld [vmem:[%s165 + $0x81] sm:$0xff]
      %v692 = vld [vmem:[%s165 + $0x89] sm:$0xff]
      %v693 = vld [vmem:[%s165 + $0x91] sm:$0xff]
      %v694 = vsel %vm220, 1, 0
      %v695 = vsel %vm221, 1, 0
      %v696 = vsel %vm222, 1, 0
      %v697 = vsel %vm223, 1, 0
      %v698 = vsel %vm224, 1, 0
      %v699 = vsel %vm225, 1, 0
      %v700 = vsel %vm226, 1, 0
      %v701 = vsel %vm227, 1, 0
      %v702 = vsel %vm228, 1, 0
      %v703 = vsel %vm229, 1, 0
      %v704 = vsel %vm230, 1, 0
      %v705 = vsel %vm231, 1, 0
      %v706 = vsel %vm232, 1, 0
      %v707 = vsel %vm233, 1, 0
      %v708 = vsel %vm234, 1, 0
      %v709 = vsel %vm235, 1, 0
      %vm710 = vcmp.eq.s32.totalorder %v694, 1
      %vm711 = vcmp.eq.s32.totalorder %v695, 1
      %vm712 = vcmp.eq.s32.totalorder %v696, 1
      %vm713 = vcmp.eq.s32.totalorder %v697, 1
      %vm714 = vcmp.eq.s32.totalorder %v698, 1
      %vm715 = vcmp.eq.s32.totalorder %v699, 1
      %vm716 = vcmp.eq.s32.totalorder %v700, 1
      %vm717 = vcmp.eq.s32.totalorder %v701, 1
      %vm718 = vcmp.eq.s32.totalorder %v702, 1
      %vm719 = vcmp.eq.s32.totalorder %v703, 1
      %vm720 = vcmp.eq.s32.totalorder %v704, 1
      %vm721 = vcmp.eq.s32.totalorder %v705, 1
      %vm722 = vcmp.eq.s32.totalorder %v706, 1
      %vm723 = vcmp.eq.s32.totalorder %v707, 1
      %vm724 = vcmp.eq.s32.totalorder %v708, 1
      %vm725 = vcmp.eq.s32.totalorder %v709, 1
      %v726 = vsel %vm710, %v678, 0.0
      %v727 = vsel %vm711, %v679, 0.0
      %v728 = vsel %vm712, %v680, 0.0
      %v729 = vsel %vm713, %v681, 0.0
      %v730 = vsel %vm714, %v682, 0.0
      %v731 = vsel %vm715, %v683, 0.0
      %v732 = vsel %vm716, %v684, 0.0
      %v733 = vsel %vm717, %v685, 0.0
      %v734 = vsel %vm718, %v686, 0.0
      %v735 = vsel %vm719, %v687, 0.0
      %v736 = vsel %vm720, %v688, 0.0
      %v737 = vsel %vm721, %v689, 0.0
      %v738 = vsel %vm722, %v690, 0.0
      %v739 = vsel %vm723, %v691, 0.0
      %v740 = vsel %vm724, %v692, 0.0
      %v741 = vsel %vm725, %v693, 0.0
      %s742 = scalar_lea.vmem %s1, 256
      %v743 = vld [vmem:[%s742] sm:$0xff]
      %v744 = vld [vmem:[%s742 + $0x8] sm:$0xff]
      %v745 = vld [vmem:[%s742 + $0x10] sm:$0xff]
      %v746 = vld [vmem:[%s742 + $0x18] sm:$0xff]
      %v747 = vld [vmem:[%s742 + $0x20] sm:$0xff]
      %v748 = vld [vmem:[%s742 + $0x28] sm:$0xff]
      %v749 = vld [vmem:[%s742 + $0x30] sm:$0xff]
      %v750 = vld [vmem:[%s742 + $0x38] sm:$0xff]
      %v751 = vld [vmem:[%s742 + $0x40] sm:$0xff]
      %v752 = vld [vmem:[%s742 + $0x48] sm:$0xff]
      %v753 = vld [vmem:[%s742 + $0x50] sm:$0xff]
      %v754 = vld [vmem:[%s742 + $0x58] sm:$0xff]
      %v755 = vld [vmem:[%s742 + $0x60] sm:$0xff]
      %v756 = vld [vmem:[%s742 + $0x68] sm:$0xff]
      %v757 = vld [vmem:[%s742 + $0x70] sm:$0xff]
      %v758 = vld [vmem:[%s742 + $0x78] sm:$0xff]
      %759 = vmatprep.subr.mxu0 0.0
      %760 = vmatpush1.msra.mxu0 %v758
      %761 = vmatprep.subr.mxu0 0.0
      %762 = vmatpush1.msra.mxu0 %v757
      %763 = vmatprep.subr.mxu0 0.0
      %764 = vmatpush1.msra.mxu0 %v756
      %765 = vmatprep.subr.mxu0 0.0
      %766 = vmatpush1.msra.mxu0 %v755
      %767 = vmatprep.subr.mxu0 0.0
      %768 = vmatpush1.msra.mxu0 %v754
      %769 = vmatprep.subr.mxu0 0.0
      %770 = vmatpush1.msra.mxu0 %v753
      %771 = vmatprep.subr.mxu0 0.0
      %772 = vmatpush1.msra.mxu0 %v752
      %773 = vmatprep.subr.mxu0 0.0
      %774 = vmatpush1.msra.mxu0 %v751
      %775 = vmatprep.subr.mxu0 0.0
      %776 = vmatpush1.msra.mxu0 %v750
      %777 = vmatprep.subr.mxu0 0.0
      %778 = vmatpush1.msra.mxu0 %v749
      %779 = vmatprep.subr.mxu0 0.0
      %780 = vmatpush1.msra.mxu0 %v748
      %781 = vmatprep.subr.mxu0 0.0
      %782 = vmatpush1.msra.mxu0 %v747
      %783 = vmatprep.subr.mxu0 0.0
      %784 = vmatpush1.msra.mxu0 %v746
      %785 = vmatprep.subr.mxu0 0.0
      %786 = vmatpush1.msra.mxu0 %v745
      %787 = vmatprep.subr.mxu0 0.0
      %788 = vmatpush1.msra.mxu0 %v744
      %789 = vmatprep.subr.mxu0 0.0
      %790 = vmatpush1.msra.mxu0 %v743
      %791 = vmatprep.subr.mxu0 0.0
      %792 = vmatpush2.msra.mxu0 0.0
      %793 = vmatprep.subr.mxu0 0.0
      %794 = vmatpush2.msra.mxu0 0.0
      %795 = vmatprep.subr.mxu0 0.0
      %796 = vmatpush2.msra.mxu0 0.0
      %797 = vmatprep.subr.mxu0 0.0
      %798 = vmatpush2.msra.mxu0 0.0
      %799 = vmatprep.subr.mxu0 0.0
      %800 = vmatpush2.msra.mxu0 0.0
      %801 = vmatprep.subr.mxu0 0.0
      %802 = vmatpush2.msra.mxu0 0.0
      %803 = vmatprep.subr.mxu0 0.0
      %804 = vmatpush2.msra.mxu0 0.0
      %805 = vmatprep.subr.mxu0 0.0
      %806 = vmatpush2.msra.mxu0 0.0
      %807 = vmatprep.subr.mxu0 0.0
      %808 = vmatpush2.msra.mxu0 0.0
      %809 = vmatprep.subr.mxu0 0.0
      %810 = vmatpush2.msra.mxu0 0.0
      %811 = vmatprep.subr.mxu0 0.0
      %812 = vmatpush2.msra.mxu0 0.0
      %813 = vmatprep.subr.mxu0 0.0
      %814 = vmatpush2.msra.mxu0 0.0
      %815 = vmatprep.subr.mxu0 0.0
      %816 = vmatpush2.msra.mxu0 0.0
      %817 = vmatprep.subr.mxu0 0.0
      %818 = vmatpush2.msra.mxu0 0.0
      %819 = vmatprep.subr.mxu0 0.0
      %820 = vmatpush2.msra.mxu0 0.0
      %821 = vmatprep.subr.mxu0 0.0
      %822 = vmatpush2.msra.mxu0 0.0
      %823 = vmatprep.mubr.f32.mxu0 0.0
      %824 = vmatmul.mubr.f32.gmra.mxu0 %v726
      %v825 = vpop.f32.mrf.mxu0
      %v826 = vadd.f32 0.0, %v825
      %v827 = vpop.f32.mrf.mxu0
      %828 = vmatprep.mubr.f32.mxu0 0.0
      %829 = vmatmul.mubr.f32.gmra.mxu0 %v727
      %v830 = vpop.f32.mrf.mxu0
      %v831 = vadd.f32 0.0, %v830
      %v832 = vpop.f32.mrf.mxu0
      %833 = vmatprep.mubr.f32.mxu0 0.0
      %834 = vmatmul.mubr.f32.gmra.mxu0 %v728
      %v835 = vpop.f32.mrf.mxu0
      %v836 = vadd.f32 0.0, %v835
      %v837 = vpop.f32.mrf.mxu0
      %838 = vmatprep.mubr.f32.mxu0 0.0
      %839 = vmatmul.mubr.f32.gmra.mxu0 %v729
      %v840 = vpop.f32.mrf.mxu0
      %v841 = vadd.f32 0.0, %v840
      %v842 = vpop.f32.mrf.mxu0
      %843 = vmatprep.mubr.f32.mxu0 0.0
      %844 = vmatmul.mubr.f32.gmra.mxu0 %v730
      %v845 = vpop.f32.mrf.mxu0
      %v846 = vadd.f32 0.0, %v845
      %v847 = vpop.f32.mrf.mxu0
      %848 = vmatprep.mubr.f32.mxu0 0.0
      %849 = vmatmul.mubr.f32.gmra.mxu0 %v731
      %v850 = vpop.f32.mrf.mxu0
      %v851 = vadd.f32 0.0, %v850
      %v852 = vpop.f32.mrf.mxu0
      %853 = vmatprep.mubr.f32.mxu0 0.0
      %854 = vmatmul.mubr.f32.gmra.mxu0 %v732
      %v855 = vpop.f32.mrf.mxu0
      %v856 = vadd.f32 0.0, %v855
      %v857 = vpop.f32.mrf.mxu0
      %858 = vmatprep.mubr.f32.mxu0 0.0
      %859 = vmatmul.mubr.f32.gmra.mxu0 %v733
      %v860 = vpop.f32.mrf.mxu0
      %v861 = vadd.f32 0.0, %v860
      %v862 = vpop.f32.mrf.mxu0
      %863 = vmatprep.mubr.f32.mxu0 0.0
      %864 = vmatmul.mubr.f32.gmra.mxu0 %v734
      %v865 = vpop.f32.mrf.mxu0
      %v866 = vadd.f32 0.0, %v865
      %v867 = vpop.f32.mrf.mxu0
      %868 = vmatprep.mubr.f32.mxu0 0.0
      %869 = vmatmul.mubr.f32.gmra.mxu0 %v735
      %v870 = vpop.f32.mrf.mxu0
      %v871 = vadd.f32 0.0, %v870
      %v872 = vpop.f32.mrf.mxu0
      %873 = vmatprep.mubr.f32.mxu0 0.0
      %874 = vmatmul.mubr.f32.gmra.mxu0 %v736
      %v875 = vpop.f32.mrf.mxu0
      %v876 = vadd.f32 0.0, %v875
      %v877 = vpop.f32.mrf.mxu0
      %878 = vmatprep.mubr.f32.mxu0 0.0
      %879 = vmatmul.mubr.f32.gmra.mxu0 %v737
      %v880 = vpop.f32.mrf.mxu0
      %v881 = vadd.f32 0.0, %v880
      %v882 = vpop.f32.mrf.mxu0
      %883 = vmatprep.mubr.f32.mxu0 0.0
      %884 = vmatmul.mubr.f32.gmra.mxu0 %v738
      %v885 = vpop.f32.mrf.mxu0
      %v886 = vadd.f32 0.0, %v885
      %v887 = vpop.f32.mrf.mxu0
      %888 = vmatprep.mubr.f32.mxu0 0.0
      %889 = vmatmul.mubr.f32.gmra.mxu0 %v739
      %v890 = vpop.f32.mrf.mxu0
      %v891 = vadd.f32 0.0, %v890
      %v892 = vpop.f32.mrf.mxu0
      %893 = vmatprep.mubr.f32.mxu0 0.0
      %894 = vmatmul.mubr.f32.gmra.mxu0 %v740
      %v895 = vpop.f32.mrf.mxu0
      %v896 = vadd.f32 0.0, %v895
      %v897 = vpop.f32.mrf.mxu0
      %898 = vmatprep.mubr.f32.mxu0 0.0
      %899 = vmatmul.mubr.f32.gmra.mxu0 %v741
      %v900 = vpop.f32.mrf.mxu0
      %v901 = vadd.f32 0.0, %v900
      %v902 = vpop.f32.mrf.mxu0
      %903 = vdwg.mxu0
      %v904 = vadd.f32 %v662, %v826
      %v905 = vadd.f32 %v663, %v831
      %v906 = vadd.f32 %v664, %v836
      %v907 = vadd.f32 %v665, %v841
      %v908 = vadd.f32 %v666, %v846
      %v909 = vadd.f32 %v667, %v851
      %v910 = vadd.f32 %v668, %v856
      %v911 = vadd.f32 %v669, %v861
      %v912 = vadd.f32 %v670, %v866
      %v913 = vadd.f32 %v671, %v871
      %v914 = vadd.f32 %v672, %v876
      %v915 = vadd.f32 %v673, %v881
      %v916 = vadd.f32 %v674, %v886
      %v917 = vadd.f32 %v675, %v891
      %v918 = vadd.f32 %v676, %v896
      %v919 = vadd.f32 %v677, %v901
      %v920 = vld [vmem:[%s165 + $0x7] sm:$0xff]
      %v921 = vld [vmem:[%s165 + $0xf] sm:$0xff]
      %v922 = vld [vmem:[%s165 + $0x17] sm:$0xff]
      %v923 = vld [vmem:[%s165 + $0x1f] sm:$0xff]
      %v924 = vld [vmem:[%s165 + $0x27] sm:$0xff]
      %v925 = vld [vmem:[%s165 + $0x2f] sm:$0xff]
      %v926 = vld [vmem:[%s165 + $0x37] sm:$0xff]
      %v927 = vld [vmem:[%s165 + $0x3f] sm:$0xff]
      %v928 = vld [vmem:[%s165 + $0x47] sm:$0xff]
      %v929 = vld [vmem:[%s165 + $0x4f] sm:$0xff]
      %v930 = vld [vmem:[%s165 + $0x57] sm:$0xff]
      %v931 = vld [vmem:[%s165 + $0x5f] sm:$0xff]
      %v932 = vld [vmem:[%s165 + $0x67] sm:$0xff]
      %v933 = vld [vmem:[%s165 + $0x6f] sm:$0xff]
      %v934 = vld [vmem:[%s165 + $0x77] sm:$0xff]
      %v935 = vld [vmem:[%s165 + $0x7f] sm:$0xff]
      %v936 = vsel %vm275, %v920, 0.0
      %v937 = vsel %vm276, %v921, 0.0
      %v938 = vsel %vm277, %v922, 0.0
      %v939 = vsel %vm278, %v923, 0.0
      %v940 = vsel %vm279, %v924, 0.0
      %v941 = vsel %vm280, %v925, 0.0
      %v942 = vsel %vm281, %v926, 0.0
      %v943 = vsel %vm282, %v927, 0.0
      %v944 = vsel %vm283, %v928, 0.0
      %v945 = vsel %vm284, %v929, 0.0
      %v946 = vsel %vm285, %v930, 0.0
      %v947 = vsel %vm286, %v931, 0.0
      %v948 = vsel %vm287, %v932, 0.0
      %v949 = vsel %vm288, %v933, 0.0
      %v950 = vsel %vm289, %v934, 0.0
      %v951 = vsel %vm290, %v935, 0.0
      %s952 = scalar_lea.vmem %s1, 384
      %v953 = vld [vmem:[%s952] sm:$0xff]
      %v954 = vld [vmem:[%s952 + $0x8] sm:$0xff]
      %v955 = vld [vmem:[%s952 + $0x10] sm:$0xff]
      %v956 = vld [vmem:[%s952 + $0x18] sm:$0xff]
      %v957 = vld [vmem:[%s952 + $0x20] sm:$0xff]
      %v958 = vld [vmem:[%s952 + $0x28] sm:$0xff]
      %v959 = vld [vmem:[%s952 + $0x30] sm:$0xff]
      %v960 = vld [vmem:[%s952 + $0x38] sm:$0xff]
      %v961 = vld [vmem:[%s952 + $0x40] sm:$0xff]
      %v962 = vld [vmem:[%s952 + $0x48] sm:$0xff]
      %v963 = vld [vmem:[%s952 + $0x50] sm:$0xff]
      %v964 = vld [vmem:[%s952 + $0x58] sm:$0xff]
      %v965 = vld [vmem:[%s952 + $0x60] sm:$0xff]
      %v966 = vld [vmem:[%s952 + $0x68] sm:$0xff]
      %v967 = vld [vmem:[%s952 + $0x70] sm:$0xff]
      %v968 = vld [vmem:[%s952 + $0x78] sm:$0xff]
      %969 = vmatprep.subr.mxu0 0.0
      %970 = vmatpush1.msra.mxu0 %v968
      %971 = vmatprep.subr.mxu0 0.0
      %972 = vmatpush1.msra.mxu0 %v967
      %973 = vmatprep.subr.mxu0 0.0
      %974 = vmatpush1.msra.mxu0 %v966
      %975 = vmatprep.subr.mxu0 0.0
      %976 = vmatpush1.msra.mxu0 %v965
      %977 = vmatprep.subr.mxu0 0.0
      %978 = vmatpush1.msra.mxu0 %v964
      %979 = vmatprep.subr.mxu0 0.0
      %980 = vmatpush1.msra.mxu0 %v963
      %981 = vmatprep.subr.mxu0 0.0
      %982 = vmatpush1.msra.mxu0 %v962
      %983 = vmatprep.subr.mxu0 0.0
      %984 = vmatpush1.msra.mxu0 %v961
      %985 = vmatprep.subr.mxu0 0.0
      %986 = vmatpush1.msra.mxu0 %v960
      %987 = vmatprep.subr.mxu0 0.0
      %988 = vmatpush1.msra.mxu0 %v959
      %989 = vmatprep.subr.mxu0 0.0
      %990 = vmatpush1.msra.mxu0 %v958
      %991 = vmatprep.subr.mxu0 0.0
      %992 = vmatpush1.msra.mxu0 %v957
      %993 = vmatprep.subr.mxu0 0.0
      %994 = vmatpush1.msra.mxu0 %v956
      %995 = vmatprep.subr.mxu0 0.0
      %996 = vmatpush1.msra.mxu0 %v955
      %997 = vmatprep.subr.mxu0 0.0
      %998 = vmatpush1.msra.mxu0 %v954
      %999 = vmatprep.subr.mxu0 0.0
      %1000 = vmatpush1.msra.mxu0 %v953
      %1001 = vmatprep.subr.mxu0 0.0
      %1002 = vmatpush2.msra.mxu0 0.0
      %1003 = vmatprep.subr.mxu0 0.0
      %1004 = vmatpush2.msra.mxu0 0.0
      %1005 = vmatprep.subr.mxu0 0.0
      %1006 = vmatpush2.msra.mxu0 0.0
      %1007 = vmatprep.subr.mxu0 0.0
      %1008 = vmatpush2.msra.mxu0 0.0
      %1009 = vmatprep.subr.mxu0 0.0
      %1010 = vmatpush2.msra.mxu0 0.0
      %1011 = vmatprep.subr.mxu0 0.0
      %1012 = vmatpush2.msra.mxu0 0.0
      %1013 = vmatprep.subr.mxu0 0.0
      %1014 = vmatpush2.msra.mxu0 0.0
      %1015 = vmatprep.subr.mxu0 0.0
      %1016 = vmatpush2.msra.mxu0 0.0
      %1017 = vmatprep.subr.mxu0 0.0
      %1018 = vmatpush2.msra.mxu0 0.0
      %1019 = vmatprep.subr.mxu0 0.0
      %1020 = vmatpush2.msra.mxu0 0.0
      %1021 = vmatprep.subr.mxu0 0.0
      %1022 = vmatpush2.msra.mxu0 0.0
      %1023 = vmatprep.subr.mxu0 0.0
      %1024 = vmatpush2.msra.mxu0 0.0
      %1025 = vmatprep.subr.mxu0 0.0
      %1026 = vmatpush2.msra.mxu0 0.0
      %1027 = vmatprep.subr.mxu0 0.0
      %1028 = vmatpush2.msra.mxu0 0.0
      %1029 = vmatprep.subr.mxu0 0.0
      %1030 = vmatpush2.msra.mxu0 0.0
      %1031 = vmatprep.subr.mxu0 0.0
      %1032 = vmatpush2.msra.mxu0 0.0
      %1033 = vmatprep.mubr.f32.mxu0 0.0
      %1034 = vmatmul.mubr.f32.gmra.mxu0 %v936
      %v1035 = vpop.f32.mrf.mxu0
      %v1036 = vadd.f32 0.0, %v1035
      %v1037 = vpop.f32.mrf.mxu0
      %1038 = vmatprep.mubr.f32.mxu0 0.0
      %1039 = vmatmul.mubr.f32.gmra.mxu0 %v937
      %v1040 = vpop.f32.mrf.mxu0
      %v1041 = vadd.f32 0.0, %v1040
      %v1042 = vpop.f32.mrf.mxu0
      %1043 = vmatprep.mubr.f32.mxu0 0.0
      %1044 = vmatmul.mubr.f32.gmra.mxu0 %v938
      %v1045 = vpop.f32.mrf.mxu0
      %v1046 = vadd.f32 0.0, %v1045
      %v1047 = vpop.f32.mrf.mxu0
      %1048 = vmatprep.mubr.f32.mxu0 0.0
      %1049 = vmatmul.mubr.f32.gmra.mxu0 %v939
      %v1050 = vpop.f32.mrf.mxu0
      %v1051 = vadd.f32 0.0, %v1050
      %v1052 = vpop.f32.mrf.mxu0
      %1053 = vmatprep.mubr.f32.mxu0 0.0
      %1054 = vmatmul.mubr.f32.gmra.mxu0 %v940
      %v1055 = vpop.f32.mrf.mxu0
      %v1056 = vadd.f32 0.0, %v1055
      %v1057 = vpop.f32.mrf.mxu0
      %1058 = vmatprep.mubr.f32.mxu0 0.0
      %1059 = vmatmul.mubr.f32.gmra.mxu0 %v941
      %v1060 = vpop.f32.mrf.mxu0
      %v1061 = vadd.f32 0.0, %v1060
      %v1062 = vpop.f32.mrf.mxu0
      %1063 = vmatprep.mubr.f32.mxu0 0.0
      %1064 = vmatmul.mubr.f32.gmra.mxu0 %v942
      %v1065 = vpop.f32.mrf.mxu0
      %v1066 = vadd.f32 0.0, %v1065
      %v1067 = vpop.f32.mrf.mxu0
      %1068 = vmatprep.mubr.f32.mxu0 0.0
      %1069 = vmatmul.mubr.f32.gmra.mxu0 %v943
      %v1070 = vpop.f32.mrf.mxu0
      %v1071 = vadd.f32 0.0, %v1070
      %v1072 = vpop.f32.mrf.mxu0
      %1073 = vmatprep.mubr.f32.mxu0 0.0
      %1074 = vmatmul.mubr.f32.gmra.mxu0 %v944
      %v1075 = vpop.f32.mrf.mxu0
      %v1076 = vadd.f32 0.0, %v1075
      %v1077 = vpop.f32.mrf.mxu0
      %1078 = vmatprep.mubr.f32.mxu0 0.0
      %1079 = vmatmul.mubr.f32.gmra.mxu0 %v945
      %v1080 = vpop.f32.mrf.mxu0
      %v1081 = vadd.f32 0.0, %v1080
      %v1082 = vpop.f32.mrf.mxu0
      %1083 = vmatprep.mubr.f32.mxu0 0.0
      %1084 = vmatmul.mubr.f32.gmra.mxu0 %v946
      %v1085 = vpop.f32.mrf.mxu0
      %v1086 = vadd.f32 0.0, %v1085
      %v1087 = vpop.f32.mrf.mxu0
      %1088 = vmatprep.mubr.f32.mxu0 0.0
      %1089 = vmatmul.mubr.f32.gmra.mxu0 %v947
      %v1090 = vpop.f32.mrf.mxu0
      %v1091 = vadd.f32 0.0, %v1090
      %v1092 = vpop.f32.mrf.mxu0
      %1093 = vmatprep.mubr.f32.mxu0 0.0
      %1094 = vmatmul.mubr.f32.gmra.mxu0 %v948
      %v1095 = vpop.f32.mrf.mxu0
      %v1096 = vadd.f32 0.0, %v1095
      %v1097 = vpop.f32.mrf.mxu0
      %1098 = vmatprep.mubr.f32.mxu0 0.0
      %1099 = vmatmul.mubr.f32.gmra.mxu0 %v949
      %v1100 = vpop.f32.mrf.mxu0
      %v1101 = vadd.f32 0.0, %v1100
      %v1102 = vpop.f32.mrf.mxu0
      %1103 = vmatprep.mubr.f32.mxu0 0.0
      %1104 = vmatmul.mubr.f32.gmra.mxu0 %v950
      %v1105 = vpop.f32.mrf.mxu0
      %v1106 = vadd.f32 0.0, %v1105
      %v1107 = vpop.f32.mrf.mxu0
      %1108 = vmatprep.mubr.f32.mxu0 0.0
      %1109 = vmatmul.mubr.f32.gmra.mxu0 %v951
      %v1110 = vpop.f32.mrf.mxu0
      %v1111 = vadd.f32 0.0, %v1110
      %v1112 = vpop.f32.mrf.mxu0
      %1113 = vdwg.mxu0
      %v1114 = vadd.f32 %v904, %v1036
      %v1115 = vadd.f32 %v905, %v1041
      %v1116 = vadd.f32 %v906, %v1046
      %v1117 = vadd.f32 %v907, %v1051
      %v1118 = vadd.f32 %v908, %v1056
      %v1119 = vadd.f32 %v909, %v1061
      %v1120 = vadd.f32 %v910, %v1066
      %v1121 = vadd.f32 %v911, %v1071
      %v1122 = vadd.f32 %v912, %v1076
      %v1123 = vadd.f32 %v913, %v1081
      %v1124 = vadd.f32 %v914, %v1086
      %v1125 = vadd.f32 %v915, %v1091
      %v1126 = vadd.f32 %v916, %v1096
      %v1127 = vadd.f32 %v917, %v1101
      %v1128 = vadd.f32 %v918, %v1106
      %v1129 = vadd.f32 %v919, %v1111
      %v1130 = vld [vmem:[%s165 + $0x8] sm:$0xff]
      %v1131 = vld [vmem:[%s165 + $0x10] sm:$0xff]
      %v1132 = vld [vmem:[%s165 + $0x18] sm:$0xff]
      %v1133 = vld [vmem:[%s165 + $0x20] sm:$0xff]
      %v1134 = vld [vmem:[%s165 + $0x28] sm:$0xff]
      %v1135 = vld [vmem:[%s165 + $0x30] sm:$0xff]
      %v1136 = vld [vmem:[%s165 + $0x38] sm:$0xff]
      %v1137 = vld [vmem:[%s165 + $0x40] sm:$0xff]
      %v1138 = vld [vmem:[%s165 + $0x48] sm:$0xff]
      %v1139 = vld [vmem:[%s165 + $0x50] sm:$0xff]
      %v1140 = vld [vmem:[%s165 + $0x58] sm:$0xff]
      %v1141 = vld [vmem:[%s165 + $0x60] sm:$0xff]
      %v1142 = vld [vmem:[%s165 + $0x68] sm:$0xff]
      %v1143 = vld [vmem:[%s165 + $0x70] sm:$0xff]
      %v1144 = vld [vmem:[%s165 + $0x78] sm:$0xff]
      %v1145 = vld [vmem:[%s165 + $0x80] sm:$0xff]
      %s1146 = scalar_lea.vmem %s1, 512
      %v1147 = vld [vmem:[%s1146] sm:$0xff]
      %v1148 = vld [vmem:[%s1146 + $0x8] sm:$0xff]
      %v1149 = vld [vmem:[%s1146 + $0x10] sm:$0xff]
      %v1150 = vld [vmem:[%s1146 + $0x18] sm:$0xff]
      %v1151 = vld [vmem:[%s1146 + $0x20] sm:$0xff]
      %v1152 = vld [vmem:[%s1146 + $0x28] sm:$0xff]
      %v1153 = vld [vmem:[%s1146 + $0x30] sm:$0xff]
      %v1154 = vld [vmem:[%s1146 + $0x38] sm:$0xff]
      %v1155 = vld [vmem:[%s1146 + $0x40] sm:$0xff]
      %v1156 = vld [vmem:[%s1146 + $0x48] sm:$0xff]
      %v1157 = vld [vmem:[%s1146 + $0x50] sm:$0xff]
      %v1158 = vld [vmem:[%s1146 + $0x58] sm:$0xff]
      %v1159 = vld [vmem:[%s1146 + $0x60] sm:$0xff]
      %v1160 = vld [vmem:[%s1146 + $0x68] sm:$0xff]
      %v1161 = vld [vmem:[%s1146 + $0x70] sm:$0xff]
      %v1162 = vld [vmem:[%s1146 + $0x78] sm:$0xff]
      %1163 = vmatprep.subr.mxu0 0.0
      %1164 = vmatpush1.msra.mxu0 %v1162
      %1165 = vmatprep.subr.mxu0 0.0
      %1166 = vmatpush1.msra.mxu0 %v1161
      %1167 = vmatprep.subr.mxu0 0.0
      %1168 = vmatpush1.msra.mxu0 %v1160
      %1169 = vmatprep.subr.mxu0 0.0
      %1170 = vmatpush1.msra.mxu0 %v1159
      %1171 = vmatprep.subr.mxu0 0.0
      %1172 = vmatpush1.msra.mxu0 %v1158
      %1173 = vmatprep.subr.mxu0 0.0
      %1174 = vmatpush1.msra.mxu0 %v1157
      %1175 = vmatprep.subr.mxu0 0.0
      %1176 = vmatpush1.msra.mxu0 %v1156
      %1177 = vmatprep.subr.mxu0 0.0
      %1178 = vmatpush1.msra.mxu0 %v1155
      %1179 = vmatprep.subr.mxu0 0.0
      %1180 = vmatpush1.msra.mxu0 %v1154
      %1181 = vmatprep.subr.mxu0 0.0
      %1182 = vmatpush1.msra.mxu0 %v1153
      %1183 = vmatprep.subr.mxu0 0.0
      %1184 = vmatpush1.msra.mxu0 %v1152
      %1185 = vmatprep.subr.mxu0 0.0
      %1186 = vmatpush1.msra.mxu0 %v1151
      %1187 = vmatprep.subr.mxu0 0.0
      %1188 = vmatpush1.msra.mxu0 %v1150
      %1189 = vmatprep.subr.mxu0 0.0
      %1190 = vmatpush1.msra.mxu0 %v1149
      %1191 = vmatprep.subr.mxu0 0.0
      %1192 = vmatpush1.msra.mxu0 %v1148
      %1193 = vmatprep.subr.mxu0 0.0
      %1194 = vmatpush1.msra.mxu0 %v1147
      %1195 = vmatprep.subr.mxu0 0.0
      %1196 = vmatpush2.msra.mxu0 0.0
      %1197 = vmatprep.subr.mxu0 0.0
      %1198 = vmatpush2.msra.mxu0 0.0
      %1199 = vmatprep.subr.mxu0 0.0
      %1200 = vmatpush2.msra.mxu0 0.0
      %1201 = vmatprep.subr.mxu0 0.0
      %1202 = vmatpush2.msra.mxu0 0.0
      %1203 = vmatprep.subr.mxu0 0.0
      %1204 = vmatpush2.msra.mxu0 0.0
      %1205 = vmatprep.subr.mxu0 0.0
      %1206 = vmatpush2.msra.mxu0 0.0
      %1207 = vmatprep.subr.mxu0 0.0
      %1208 = vmatpush2.msra.mxu0 0.0
      %1209 = vmatprep.subr.mxu0 0.0
      %1210 = vmatpush2.msra.mxu0 0.0
      %1211 = vmatprep.subr.mxu0 0.0
      %1212 = vmatpush2.msra.mxu0 0.0
      %1213 = vmatprep.subr.mxu0 0.0
      %1214 = vmatpush2.msra.mxu0 0.0
      %1215 = vmatprep.subr.mxu0 0.0
      %1216 = vmatpush2.msra.mxu0 0.0
      %1217 = vmatprep.subr.mxu0 0.0
      %1218 = vmatpush2.msra.mxu0 0.0
      %1219 = vmatprep.subr.mxu0 0.0
      %1220 = vmatpush2.msra.mxu0 0.0
      %1221 = vmatprep.subr.mxu0 0.0
      %1222 = vmatpush2.msra.mxu0 0.0
      %1223 = vmatprep.subr.mxu0 0.0
      %1224 = vmatpush2.msra.mxu0 0.0
      %1225 = vmatprep.subr.mxu0 0.0
      %1226 = vmatpush2.msra.mxu0 0.0
      %1227 = vmatprep.mubr.f32.mxu0 0.0
      %1228 = vmatmul.mubr.f32.gmra.mxu0 %v1130
      %v1229 = vpop.f32.mrf.mxu0
      %v1230 = vadd.f32 0.0, %v1229
      %v1231 = vpop.f32.mrf.mxu0
      %1232 = vmatprep.mubr.f32.mxu0 0.0
      %1233 = vmatmul.mubr.f32.gmra.mxu0 %v1131
      %v1234 = vpop.f32.mrf.mxu0
      %v1235 = vadd.f32 0.0, %v1234
      %v1236 = vpop.f32.mrf.mxu0
      %1237 = vmatprep.mubr.f32.mxu0 0.0
      %1238 = vmatmul.mubr.f32.gmra.mxu0 %v1132
      %v1239 = vpop.f32.mrf.mxu0
      %v1240 = vadd.f32 0.0, %v1239
      %v1241 = vpop.f32.mrf.mxu0
      %1242 = vmatprep.mubr.f32.mxu0 0.0
      %1243 = vmatmul.mubr.f32.gmra.mxu0 %v1133
      %v1244 = vpop.f32.mrf.mxu0
      %v1245 = vadd.f32 0.0, %v1244
      %v1246 = vpop.f32.mrf.mxu0
      %1247 = vmatprep.mubr.f32.mxu0 0.0
      %1248 = vmatmul.mubr.f32.gmra.mxu0 %v1134
      %v1249 = vpop.f32.mrf.mxu0
      %v1250 = vadd.f32 0.0, %v1249
      %v1251 = vpop.f32.mrf.mxu0
      %1252 = vmatprep.mubr.f32.mxu0 0.0
      %1253 = vmatmul.mubr.f32.gmra.mxu0 %v1135
      %v1254 = vpop.f32.mrf.mxu0
      %v1255 = vadd.f32 0.0, %v1254
      %v1256 = vpop.f32.mrf.mxu0
      %1257 = vmatprep.mubr.f32.mxu0 0.0
      %1258 = vmatmul.mubr.f32.gmra.mxu0 %v1136
      %v1259 = vpop.f32.mrf.mxu0
      %v1260 = vadd.f32 0.0, %v1259
      %v1261 = vpop.f32.mrf.mxu0
      %1262 = vmatprep.mubr.f32.mxu0 0.0
      %1263 = vmatmul.mubr.f32.gmra.mxu0 %v1137
      %v1264 = vpop.f32.mrf.mxu0
      %v1265 = vadd.f32 0.0, %v1264
      %v1266 = vpop.f32.mrf.mxu0
      %1267 = vmatprep.mubr.f32.mxu0 0.0
      %1268 = vmatmul.mubr.f32.gmra.mxu0 %v1138
      %v1269 = vpop.f32.mrf.mxu0
      %v1270 = vadd.f32 0.0, %v1269
      %v1271 = vpop.f32.mrf.mxu0
      %1272 = vmatprep.mubr.f32.mxu0 0.0
      %1273 = vmatmul.mubr.f32.gmra.mxu0 %v1139
      %v1274 = vpop.f32.mrf.mxu0
      %v1275 = vadd.f32 0.0, %v1274
      %v1276 = vpop.f32.mrf.mxu0
      %1277 = vmatprep.mubr.f32.mxu0 0.0
      %1278 = vmatmul.mubr.f32.gmra.mxu0 %v1140
      %v1279 = vpop.f32.mrf.mxu0
      %v1280 = vadd.f32 0.0, %v1279
      %v1281 = vpop.f32.mrf.mxu0
      %1282 = vmatprep.mubr.f32.mxu0 0.0
      %1283 = vmatmul.mubr.f32.gmra.mxu0 %v1141
      %v1284 = vpop.f32.mrf.mxu0
      %v1285 = vadd.f32 0.0, %v1284
      %v1286 = vpop.f32.mrf.mxu0
      %1287 = vmatprep.mubr.f32.mxu0 0.0
      %1288 = vmatmul.mubr.f32.gmra.mxu0 %v1142
      %v1289 = vpop.f32.mrf.mxu0
      %v1290 = vadd.f32 0.0, %v1289
      %v1291 = vpop.f32.mrf.mxu0
      %1292 = vmatprep.mubr.f32.mxu0 0.0
      %1293 = vmatmul.mubr.f32.gmra.mxu0 %v1143
      %v1294 = vpop.f32.mrf.mxu0
      %v1295 = vadd.f32 0.0, %v1294
      %v1296 = vpop.f32.mrf.mxu0
      %1297 = vmatprep.mubr.f32.mxu0 0.0
      %1298 = vmatmul.mubr.f32.gmra.mxu0 %v1144
      %v1299 = vpop.f32.mrf.mxu0
      %v1300 = vadd.f32 0.0, %v1299
      %v1301 = vpop.f32.mrf.mxu0
      %1302 = vmatprep.mubr.f32.mxu0 0.0
      %1303 = vmatmul.mubr.f32.gmra.mxu0 %v1145
      %v1304 = vpop.f32.mrf.mxu0
      %v1305 = vadd.f32 0.0, %v1304
      %v1306 = vpop.f32.mrf.mxu0
      %1307 = vdwg.mxu0
      %v1308 = vadd.f32 %v1114, %v1230
      %v1309 = vadd.f32 %v1115, %v1235
      %v1310 = vadd.f32 %v1116, %v1240
      %v1311 = vadd.f32 %v1117, %v1245
      %v1312 = vadd.f32 %v1118, %v1250
      %v1313 = vadd.f32 %v1119, %v1255
      %v1314 = vadd.f32 %v1120, %v1260
      %v1315 = vadd.f32 %v1121, %v1265
      %v1316 = vadd.f32 %v1122, %v1270
      %v1317 = vadd.f32 %v1123, %v1275
      %v1318 = vadd.f32 %v1124, %v1280
      %v1319 = vadd.f32 %v1125, %v1285
      %v1320 = vadd.f32 %v1126, %v1290
      %v1321 = vadd.f32 %v1127, %v1295
      %v1322 = vadd.f32 %v1128, %v1300
      %v1323 = vadd.f32 %v1129, %v1305
      %v1324 = vld [vmem:[%s165 + $0x9] sm:$0xff]
      %v1325 = vld [vmem:[%s165 + $0x11] sm:$0xff]
      %v1326 = vld [vmem:[%s165 + $0x19] sm:$0xff]
      %v1327 = vld [vmem:[%s165 + $0x21] sm:$0xff]
      %v1328 = vld [vmem:[%s165 + $0x29] sm:$0xff]
      %v1329 = vld [vmem:[%s165 + $0x31] sm:$0xff]
      %v1330 = vld [vmem:[%s165 + $0x39] sm:$0xff]
      %v1331 = vld [vmem:[%s165 + $0x41] sm:$0xff]
      %v1332 = vld [vmem:[%s165 + $0x49] sm:$0xff]
      %v1333 = vld [vmem:[%s165 + $0x51] sm:$0xff]
      %v1334 = vld [vmem:[%s165 + $0x59] sm:$0xff]
      %v1335 = vld [vmem:[%s165 + $0x61] sm:$0xff]
      %v1336 = vld [vmem:[%s165 + $0x69] sm:$0xff]
      %v1337 = vld [vmem:[%s165 + $0x71] sm:$0xff]
      %v1338 = vld [vmem:[%s165 + $0x79] sm:$0xff]
      %v1339 = vld [vmem:[%s165 + $0x81] sm:$0xff]
      %v1340 = vsel %vm710, %v1324, 0.0
      %v1341 = vsel %vm711, %v1325, 0.0
      %v1342 = vsel %vm712, %v1326, 0.0
      %v1343 = vsel %vm713, %v1327, 0.0
      %v1344 = vsel %vm714, %v1328, 0.0
      %v1345 = vsel %vm715, %v1329, 0.0
      %v1346 = vsel %vm716, %v1330, 0.0
      %v1347 = vsel %vm717, %v1331, 0.0
      %v1348 = vsel %vm718, %v1332, 0.0
      %v1349 = vsel %vm719, %v1333, 0.0
      %v1350 = vsel %vm720, %v1334, 0.0
      %v1351 = vsel %vm721, %v1335, 0.0
      %v1352 = vsel %vm722, %v1336, 0.0
      %v1353 = vsel %vm723, %v1337, 0.0
      %v1354 = vsel %vm724, %v1338, 0.0
      %v1355 = vsel %vm725, %v1339, 0.0
      %s1356 = scalar_lea.vmem %s1, 640
      %v1357 = vld [vmem:[%s1356] sm:$0xff]
      %v1358 = vld [vmem:[%s1356 + $0x8] sm:$0xff]
      %v1359 = vld [vmem:[%s1356 + $0x10] sm:$0xff]
      %v1360 = vld [vmem:[%s1356 + $0x18] sm:$0xff]
      %v1361 = vld [vmem:[%s1356 + $0x20] sm:$0xff]
      %v1362 = vld [vmem:[%s1356 + $0x28] sm:$0xff]
      %v1363 = vld [vmem:[%s1356 + $0x30] sm:$0xff]
      %v1364 = vld [vmem:[%s1356 + $0x38] sm:$0xff]
      %v1365 = vld [vmem:[%s1356 + $0x40] sm:$0xff]
      %v1366 = vld [vmem:[%s1356 + $0x48] sm:$0xff]
      %v1367 = vld [vmem:[%s1356 + $0x50] sm:$0xff]
      %v1368 = vld [vmem:[%s1356 + $0x58] sm:$0xff]
      %v1369 = vld [vmem:[%s1356 + $0x60] sm:$0xff]
      %v1370 = vld [vmem:[%s1356 + $0x68] sm:$0xff]
      %v1371 = vld [vmem:[%s1356 + $0x70] sm:$0xff]
      %v1372 = vld [vmem:[%s1356 + $0x78] sm:$0xff]
      %1373 = vmatprep.subr.mxu0 0.0
      %1374 = vmatpush1.msra.mxu0 %v1372
      %1375 = vmatprep.subr.mxu0 0.0
      %1376 = vmatpush1.msra.mxu0 %v1371
      %1377 = vmatprep.subr.mxu0 0.0
      %1378 = vmatpush1.msra.mxu0 %v1370
      %1379 = vmatprep.subr.mxu0 0.0
      %1380 = vmatpush1.msra.mxu0 %v1369
      %1381 = vmatprep.subr.mxu0 0.0
      %1382 = vmatpush1.msra.mxu0 %v1368
      %1383 = vmatprep.subr.mxu0 0.0
      %1384 = vmatpush1.msra.mxu0 %v1367
      %1385 = vmatprep.subr.mxu0 0.0
      %1386 = vmatpush1.msra.mxu0 %v1366
      %1387 = vmatprep.subr.mxu0 0.0
      %1388 = vmatpush1.msra.mxu0 %v1365
      %1389 = vmatprep.subr.mxu0 0.0
      %1390 = vmatpush1.msra.mxu0 %v1364
      %1391 = vmatprep.subr.mxu0 0.0
      %1392 = vmatpush1.msra.mxu0 %v1363
      %1393 = vmatprep.subr.mxu0 0.0
      %1394 = vmatpush1.msra.mxu0 %v1362
      %1395 = vmatprep.subr.mxu0 0.0
      %1396 = vmatpush1.msra.mxu0 %v1361
      %1397 = vmatprep.subr.mxu0 0.0
      %1398 = vmatpush1.msra.mxu0 %v1360
      %1399 = vmatprep.subr.mxu0 0.0
      %1400 = vmatpush1.msra.mxu0 %v1359
      %1401 = vmatprep.subr.mxu0 0.0
      %1402 = vmatpush1.msra.mxu0 %v1358
      %1403 = vmatprep.subr.mxu0 0.0
      %1404 = vmatpush1.msra.mxu0 %v1357
      %1405 = vmatprep.subr.mxu0 0.0
      %1406 = vmatpush2.msra.mxu0 0.0
      %1407 = vmatprep.subr.mxu0 0.0
      %1408 = vmatpush2.msra.mxu0 0.0
      %1409 = vmatprep.subr.mxu0 0.0
      %1410 = vmatpush2.msra.mxu0 0.0
      %1411 = vmatprep.subr.mxu0 0.0
      %1412 = vmatpush2.msra.mxu0 0.0
      %1413 = vmatprep.subr.mxu0 0.0
      %1414 = vmatpush2.msra.mxu0 0.0
      %1415 = vmatprep.subr.mxu0 0.0
      %1416 = vmatpush2.msra.mxu0 0.0
      %1417 = vmatprep.subr.mxu0 0.0
      %1418 = vmatpush2.msra.mxu0 0.0
      %1419 = vmatprep.subr.mxu0 0.0
      %1420 = vmatpush2.msra.mxu0 0.0
      %1421 = vmatprep.subr.mxu0 0.0
      %1422 = vmatpush2.msra.mxu0 0.0
      %1423 = vmatprep.subr.mxu0 0.0
      %1424 = vmatpush2.msra.mxu0 0.0
      %1425 = vmatprep.subr.mxu0 0.0
      %1426 = vmatpush2.msra.mxu0 0.0
      %1427 = vmatprep.subr.mxu0 0.0
      %1428 = vmatpush2.msra.mxu0 0.0
      %1429 = vmatprep.subr.mxu0 0.0
      %1430 = vmatpush2.msra.mxu0 0.0
      %1431 = vmatprep.subr.mxu0 0.0
      %1432 = vmatpush2.msra.mxu0 0.0
      %1433 = vmatprep.subr.mxu0 0.0
      %1434 = vmatpush2.msra.mxu0 0.0
      %1435 = vmatprep.subr.mxu0 0.0
      %1436 = vmatpush2.msra.mxu0 0.0
      %1437 = vmatprep.mubr.f32.mxu0 0.0
      %1438 = vmatmul.mubr.f32.gmra.mxu0 %v1340
      %v1439 = vpop.f32.mrf.mxu0
      %v1440 = vadd.f32 0.0, %v1439
      %v1441 = vpop.f32.mrf.mxu0
      %1442 = vmatprep.mubr.f32.mxu0 0.0
      %1443 = vmatmul.mubr.f32.gmra.mxu0 %v1341
      %v1444 = vpop.f32.mrf.mxu0
      %v1445 = vadd.f32 0.0, %v1444
      %v1446 = vpop.f32.mrf.mxu0
      %1447 = vmatprep.mubr.f32.mxu0 0.0
      %1448 = vmatmul.mubr.f32.gmra.mxu0 %v1342
      %v1449 = vpop.f32.mrf.mxu0
      %v1450 = vadd.f32 0.0, %v1449
      %v1451 = vpop.f32.mrf.mxu0
      %1452 = vmatprep.mubr.f32.mxu0 0.0
      %1453 = vmatmul.mubr.f32.gmra.mxu0 %v1343
      %v1454 = vpop.f32.mrf.mxu0
      %v1455 = vadd.f32 0.0, %v1454
      %v1456 = vpop.f32.mrf.mxu0
      %1457 = vmatprep.mubr.f32.mxu0 0.0
      %1458 = vmatmul.mubr.f32.gmra.mxu0 %v1344
      %v1459 = vpop.f32.mrf.mxu0
      %v1460 = vadd.f32 0.0, %v1459
      %v1461 = vpop.f32.mrf.mxu0
      %1462 = vmatprep.mubr.f32.mxu0 0.0
      %1463 = vmatmul.mubr.f32.gmra.mxu0 %v1345
      %v1464 = vpop.f32.mrf.mxu0
      %v1465 = vadd.f32 0.0, %v1464
      %v1466 = vpop.f32.mrf.mxu0
      %1467 = vmatprep.mubr.f32.mxu0 0.0
      %1468 = vmatmul.mubr.f32.gmra.mxu0 %v1346
      %v1469 = vpop.f32.mrf.mxu0
      %v1470 = vadd.f32 0.0, %v1469
      %v1471 = vpop.f32.mrf.mxu0
      %1472 = vmatprep.mubr.f32.mxu0 0.0
      %1473 = vmatmul.mubr.f32.gmra.mxu0 %v1347
      %v1474 = vpop.f32.mrf.mxu0
      %v1475 = vadd.f32 0.0, %v1474
      %v1476 = vpop.f32.mrf.mxu0
      %1477 = vmatprep.mubr.f32.mxu0 0.0
      %1478 = vmatmul.mubr.f32.gmra.mxu0 %v1348
      %v1479 = vpop.f32.mrf.mxu0
      %v1480 = vadd.f32 0.0, %v1479
      %v1481 = vpop.f32.mrf.mxu0
      %1482 = vmatprep.mubr.f32.mxu0 0.0
      %1483 = vmatmul.mubr.f32.gmra.mxu0 %v1349
      %v1484 = vpop.f32.mrf.mxu0
      %v1485 = vadd.f32 0.0, %v1484
      %v1486 = vpop.f32.mrf.mxu0
      %1487 = vmatprep.mubr.f32.mxu0 0.0
      %1488 = vmatmul.mubr.f32.gmra.mxu0 %v1350
      %v1489 = vpop.f32.mrf.mxu0
      %v1490 = vadd.f32 0.0, %v1489
      %v1491 = vpop.f32.mrf.mxu0
      %1492 = vmatprep.mubr.f32.mxu0 0.0
      %1493 = vmatmul.mubr.f32.gmra.mxu0 %v1351
      %v1494 = vpop.f32.mrf.mxu0
      %v1495 = vadd.f32 0.0, %v1494
      %v1496 = vpop.f32.mrf.mxu0
      %1497 = vmatprep.mubr.f32.mxu0 0.0
      %1498 = vmatmul.mubr.f32.gmra.mxu0 %v1352
      %v1499 = vpop.f32.mrf.mxu0
      %v1500 = vadd.f32 0.0, %v1499
      %v1501 = vpop.f32.mrf.mxu0
      %1502 = vmatprep.mubr.f32.mxu0 0.0
      %1503 = vmatmul.mubr.f32.gmra.mxu0 %v1353
      %v1504 = vpop.f32.mrf.mxu0
      %v1505 = vadd.f32 0.0, %v1504
      %v1506 = vpop.f32.mrf.mxu0
      %1507 = vmatprep.mubr.f32.mxu0 0.0
      %1508 = vmatmul.mubr.f32.gmra.mxu0 %v1354
      %v1509 = vpop.f32.mrf.mxu0
      %v1510 = vadd.f32 0.0, %v1509
      %v1511 = vpop.f32.mrf.mxu0
      %1512 = vmatprep.mubr.f32.mxu0 0.0
      %1513 = vmatmul.mubr.f32.gmra.mxu0 %v1355
      %v1514 = vpop.f32.mrf.mxu0
      %v1515 = vadd.f32 0.0, %v1514
      %v1516 = vpop.f32.mrf.mxu0
      %1517 = vdwg.mxu0
      %v1518 = vadd.f32 %v1308, %v1440
      %v1519 = vadd.f32 %v1309, %v1445
      %v1520 = vadd.f32 %v1310, %v1450
      %v1521 = vadd.f32 %v1311, %v1455
      %v1522 = vadd.f32 %v1312, %v1460
      %v1523 = vadd.f32 %v1313, %v1465
      %v1524 = vadd.f32 %v1314, %v1470
      %v1525 = vadd.f32 %v1315, %v1475
      %v1526 = vadd.f32 %v1316, %v1480
      %v1527 = vadd.f32 %v1317, %v1485
      %v1528 = vadd.f32 %v1318, %v1490
      %v1529 = vadd.f32 %v1319, %v1495
      %v1530 = vadd.f32 %v1320, %v1500
      %v1531 = vadd.f32 %v1321, %v1505
      %v1532 = vadd.f32 %v1322, %v1510
      %v1533 = vadd.f32 %v1323, %v1515
      %1534 = vst [vmem:[%s170] sm:$0xff] %v1518
      %1535 = vst [vmem:[%s170 + $0x8] sm:$0xff] %v1519
      %1536 = vst [vmem:[%s170 + $0x10] sm:$0xff] %v1520
      %1537 = vst [vmem:[%s170 + $0x18] sm:$0xff] %v1521
      %1538 = vst [vmem:[%s170 + $0x20] sm:$0xff] %v1522
      %1539 = vst [vmem:[%s170 + $0x28] sm:$0xff] %v1523
      %1540 = vst [vmem:[%s170 + $0x30] sm:$0xff] %v1524
      %1541 = vst [vmem:[%s170 + $0x38] sm:$0xff] %v1525
      %1542 = vst [vmem:[%s170 + $0x40] sm:$0xff] %v1526
      %1543 = vst [vmem:[%s170 + $0x48] sm:$0xff] %v1527
      %1544 = vst [vmem:[%s170 + $0x50] sm:$0xff] %v1528
      %1545 = vst [vmem:[%s170 + $0x58] sm:$0xff] %v1529
      %1546 = vst [vmem:[%s170 + $0x60] sm:$0xff] %v1530
      %1547 = vst [vmem:[%s170 + $0x68] sm:$0xff] %v1531
      %1548 = vst [vmem:[%s170 + $0x70] sm:$0xff] %v1532
      %1549 = vst [vmem:[%s170 + $0x78] sm:$0xff] %v1533
      %v1550 = vld [vmem:[%s165 + $0x17] sm:$0xff]
      %v1551 = vld [vmem:[%s165 + $0x1f] sm:$0xff]
      %v1552 = vld [vmem:[%s165 + $0x27] sm:$0xff]
      %v1553 = vld [vmem:[%s165 + $0x2f] sm:$0xff]
      %v1554 = vld [vmem:[%s165 + $0x37] sm:$0xff]
      %v1555 = vld [vmem:[%s165 + $0x3f] sm:$0xff]
      %v1556 = vld [vmem:[%s165 + $0x47] sm:$0xff]
      %v1557 = vld [vmem:[%s165 + $0x4f] sm:$0xff]
      %v1558 = vld [vmem:[%s165 + $0x57] sm:$0xff]
      %v1559 = vld [vmem:[%s165 + $0x5f] sm:$0xff]
      %v1560 = vld [vmem:[%s165 + $0x67] sm:$0xff]
      %v1561 = vld [vmem:[%s165 + $0x6f] sm:$0xff]
      %v1562 = vld [vmem:[%s165 + $0x77] sm:$0xff]
      %v1563 = vld [vmem:[%s165 + $0x7f] sm:$0xff]
      %v1564 = vld [vmem:[%s165 + $0x87] sm:$0xff]
      %v1565 = vld [vmem:[%s165 + $0x8f] sm:$0xff]
      %v1566 = vsel %vm275, %v1550, 0.0
      %v1567 = vsel %vm276, %v1551, 0.0
      %v1568 = vsel %vm277, %v1552, 0.0
      %v1569 = vsel %vm278, %v1553, 0.0
      %v1570 = vsel %vm279, %v1554, 0.0
      %v1571 = vsel %vm280, %v1555, 0.0
      %v1572 = vsel %vm281, %v1556, 0.0
      %v1573 = vsel %vm282, %v1557, 0.0
      %v1574 = vsel %vm283, %v1558, 0.0
      %v1575 = vsel %vm284, %v1559, 0.0
      %v1576 = vsel %vm285, %v1560, 0.0
      %v1577 = vsel %vm286, %v1561, 0.0
      %v1578 = vsel %vm287, %v1562, 0.0
      %v1579 = vsel %vm288, %v1563, 0.0
      %v1580 = vsel %vm289, %v1564, 0.0
      %v1581 = vsel %vm290, %v1565, 0.0
      %s1582 = scalar_lea.vmem %s1, 768
      %v1583 = vld [vmem:[%s1582] sm:$0xff]
      %v1584 = vld [vmem:[%s1582 + $0x8] sm:$0xff]
      %v1585 = vld [vmem:[%s1582 + $0x10] sm:$0xff]
      %v1586 = vld [vmem:[%s1582 + $0x18] sm:$0xff]
      %v1587 = vld [vmem:[%s1582 + $0x20] sm:$0xff]
      %v1588 = vld [vmem:[%s1582 + $0x28] sm:$0xff]
      %v1589 = vld [vmem:[%s1582 + $0x30] sm:$0xff]
      %v1590 = vld [vmem:[%s1582 + $0x38] sm:$0xff]
      %v1591 = vld [vmem:[%s1582 + $0x40] sm:$0xff]
      %v1592 = vld [vmem:[%s1582 + $0x48] sm:$0xff]
      %v1593 = vld [vmem:[%s1582 + $0x50] sm:$0xff]
      %v1594 = vld [vmem:[%s1582 + $0x58] sm:$0xff]
      %v1595 = vld [vmem:[%s1582 + $0x60] sm:$0xff]
      %v1596 = vld [vmem:[%s1582 + $0x68] sm:$0xff]
      %v1597 = vld [vmem:[%s1582 + $0x70] sm:$0xff]
      %v1598 = vld [vmem:[%s1582 + $0x78] sm:$0xff]
      %1599 = vmatprep.subr.mxu0 0.0
      %1600 = vmatpush1.msra.mxu0 %v1598
      %1601 = vmatprep.subr.mxu0 0.0
      %1602 = vmatpush1.msra.mxu0 %v1597
      %1603 = vmatprep.subr.mxu0 0.0
      %1604 = vmatpush1.msra.mxu0 %v1596
      %1605 = vmatprep.subr.mxu0 0.0
      %1606 = vmatpush1.msra.mxu0 %v1595
      %1607 = vmatprep.subr.mxu0 0.0
      %1608 = vmatpush1.msra.mxu0 %v1594
      %1609 = vmatprep.subr.mxu0 0.0
      %1610 = vmatpush1.msra.mxu0 %v1593
      %1611 = vmatprep.subr.mxu0 0.0
      %1612 = vmatpush1.msra.mxu0 %v1592
      %1613 = vmatprep.subr.mxu0 0.0
      %1614 = vmatpush1.msra.mxu0 %v1591
      %1615 = vmatprep.subr.mxu0 0.0
      %1616 = vmatpush1.msra.mxu0 %v1590
      %1617 = vmatprep.subr.mxu0 0.0
      %1618 = vmatpush1.msra.mxu0 %v1589
      %1619 = vmatprep.subr.mxu0 0.0
      %1620 = vmatpush1.msra.mxu0 %v1588
      %1621 = vmatprep.subr.mxu0 0.0
      %1622 = vmatpush1.msra.mxu0 %v1587
      %1623 = vmatprep.subr.mxu0 0.0
      %1624 = vmatpush1.msra.mxu0 %v1586
      %1625 = vmatprep.subr.mxu0 0.0
      %1626 = vmatpush1.msra.mxu0 %v1585
      %1627 = vmatprep.subr.mxu0 0.0
      %1628 = vmatpush1.msra.mxu0 %v1584
      %1629 = vmatprep.subr.mxu0 0.0
      %1630 = vmatpush1.msra.mxu0 %v1583
      %1631 = vmatprep.subr.mxu0 0.0
      %1632 = vmatpush2.msra.mxu0 0.0
      %1633 = vmatprep.subr.mxu0 0.0
      %1634 = vmatpush2.msra.mxu0 0.0
      %1635 = vmatprep.subr.mxu0 0.0
      %1636 = vmatpush2.msra.mxu0 0.0
      %1637 = vmatprep.subr.mxu0 0.0
      %1638 = vmatpush2.msra.mxu0 0.0
      %1639 = vmatprep.subr.mxu0 0.0
      %1640 = vmatpush2.msra.mxu0 0.0
      %1641 = vmatprep.subr.mxu0 0.0
      %1642 = vmatpush2.msra.mxu0 0.0
      %1643 = vmatprep.subr.mxu0 0.0
      %1644 = vmatpush2.msra.mxu0 0.0
      %1645 = vmatprep.subr.mxu0 0.0
      %1646 = vmatpush2.msra.mxu0 0.0
      %1647 = vmatprep.subr.mxu0 0.0
      %1648 = vmatpush2.msra.mxu0 0.0
      %1649 = vmatprep.subr.mxu0 0.0
      %1650 = vmatpush2.msra.mxu0 0.0
      %1651 = vmatprep.subr.mxu0 0.0
      %1652 = vmatpush2.msra.mxu0 0.0
      %1653 = vmatprep.subr.mxu0 0.0
      %1654 = vmatpush2.msra.mxu0 0.0
      %1655 = vmatprep.subr.mxu0 0.0
      %1656 = vmatpush2.msra.mxu0 0.0
      %1657 = vmatprep.subr.mxu0 0.0
      %1658 = vmatpush2.msra.mxu0 0.0
      %1659 = vmatprep.subr.mxu0 0.0
      %1660 = vmatpush2.msra.mxu0 0.0
      %1661 = vmatprep.subr.mxu0 0.0
      %1662 = vmatpush2.msra.mxu0 0.0
      %1663 = vmatprep.mubr.f32.mxu0 0.0
      %1664 = vmatmul.mubr.f32.gmra.mxu0 %v1566
      %v1665 = vpop.f32.mrf.mxu0
      %v1666 = vadd.f32 0.0, %v1665
      %v1667 = vpop.f32.mrf.mxu0
      %1668 = vmatprep.mubr.f32.mxu0 0.0
      %1669 = vmatmul.mubr.f32.gmra.mxu0 %v1567
      %v1670 = vpop.f32.mrf.mxu0
      %v1671 = vadd.f32 0.0, %v1670
      %v1672 = vpop.f32.mrf.mxu0
      %1673 = vmatprep.mubr.f32.mxu0 0.0
      %1674 = vmatmul.mubr.f32.gmra.mxu0 %v1568
      %v1675 = vpop.f32.mrf.mxu0
      %v1676 = vadd.f32 0.0, %v1675
      %v1677 = vpop.f32.mrf.mxu0
      %1678 = vmatprep.mubr.f32.mxu0 0.0
      %1679 = vmatmul.mubr.f32.gmra.mxu0 %v1569
      %v1680 = vpop.f32.mrf.mxu0
      %v1681 = vadd.f32 0.0, %v1680
      %v1682 = vpop.f32.mrf.mxu0
      %1683 = vmatprep.mubr.f32.mxu0 0.0
      %1684 = vmatmul.mubr.f32.gmra.mxu0 %v1570
      %v1685 = vpop.f32.mrf.mxu0
      %v1686 = vadd.f32 0.0, %v1685
      %v1687 = vpop.f32.mrf.mxu0
      %1688 = vmatprep.mubr.f32.mxu0 0.0
      %1689 = vmatmul.mubr.f32.gmra.mxu0 %v1571
      %v1690 = vpop.f32.mrf.mxu0
      %v1691 = vadd.f32 0.0, %v1690
      %v1692 = vpop.f32.mrf.mxu0
      %1693 = vmatprep.mubr.f32.mxu0 0.0
      %1694 = vmatmul.mubr.f32.gmra.mxu0 %v1572
      %v1695 = vpop.f32.mrf.mxu0
      %v1696 = vadd.f32 0.0, %v1695
      %v1697 = vpop.f32.mrf.mxu0
      %1698 = vmatprep.mubr.f32.mxu0 0.0
      %1699 = vmatmul.mubr.f32.gmra.mxu0 %v1573
      %v1700 = vpop.f32.mrf.mxu0
      %v1701 = vadd.f32 0.0, %v1700
      %v1702 = vpop.f32.mrf.mxu0
      %1703 = vmatprep.mubr.f32.mxu0 0.0
      %1704 = vmatmul.mubr.f32.gmra.mxu0 %v1574
      %v1705 = vpop.f32.mrf.mxu0
      %v1706 = vadd.f32 0.0, %v1705
      %v1707 = vpop.f32.mrf.mxu0
      %1708 = vmatprep.mubr.f32.mxu0 0.0
      %1709 = vmatmul.mubr.f32.gmra.mxu0 %v1575
      %v1710 = vpop.f32.mrf.mxu0
      %v1711 = vadd.f32 0.0, %v1710
      %v1712 = vpop.f32.mrf.mxu0
      %1713 = vmatprep.mubr.f32.mxu0 0.0
      %1714 = vmatmul.mubr.f32.gmra.mxu0 %v1576
      %v1715 = vpop.f32.mrf.mxu0
      %v1716 = vadd.f32 0.0, %v1715
      %v1717 = vpop.f32.mrf.mxu0
      %1718 = vmatprep.mubr.f32.mxu0 0.0
      %1719 = vmatmul.mubr.f32.gmra.mxu0 %v1577
      %v1720 = vpop.f32.mrf.mxu0
      %v1721 = vadd.f32 0.0, %v1720
      %v1722 = vpop.f32.mrf.mxu0
      %1723 = vmatprep.mubr.f32.mxu0 0.0
      %1724 = vmatmul.mubr.f32.gmra.mxu0 %v1578
      %v1725 = vpop.f32.mrf.mxu0
      %v1726 = vadd.f32 0.0, %v1725
      %v1727 = vpop.f32.mrf.mxu0
      %1728 = vmatprep.mubr.f32.mxu0 0.0
      %1729 = vmatmul.mubr.f32.gmra.mxu0 %v1579
      %v1730 = vpop.f32.mrf.mxu0
      %v1731 = vadd.f32 0.0, %v1730
      %v1732 = vpop.f32.mrf.mxu0
      %1733 = vmatprep.mubr.f32.mxu0 0.0
      %1734 = vmatmul.mubr.f32.gmra.mxu0 %v1580
      %v1735 = vpop.f32.mrf.mxu0
      %v1736 = vadd.f32 0.0, %v1735
      %v1737 = vpop.f32.mrf.mxu0
      %1738 = vmatprep.mubr.f32.mxu0 0.0
      %1739 = vmatmul.mubr.f32.gmra.mxu0 %v1581
      %v1740 = vpop.f32.mrf.mxu0
      %v1741 = vadd.f32 0.0, %v1740
      %v1742 = vpop.f32.mrf.mxu0
      %1743 = vdwg.mxu0
      %v1744 = vadd.f32 %v241, %v1666
      %v1745 = vadd.f32 %v241, %v1671
      %v1746 = vadd.f32 %v241, %v1676
      %v1747 = vadd.f32 %v241, %v1681
      %v1748 = vadd.f32 %v241, %v1686
      %v1749 = vadd.f32 %v241, %v1691
      %v1750 = vadd.f32 %v241, %v1696
      %v1751 = vadd.f32 %v241, %v1701
      %v1752 = vadd.f32 %v241, %v1706
      %v1753 = vadd.f32 %v241, %v1711
      %v1754 = vadd.f32 %v241, %v1716
      %v1755 = vadd.f32 %v241, %v1721
      %v1756 = vadd.f32 %v241, %v1726
      %v1757 = vadd.f32 %v241, %v1731
      %v1758 = vadd.f32 %v241, %v1736
      %v1759 = vadd.f32 %v241, %v1741
      %v1760 = vld [vmem:[%s165 + $0x18] sm:$0xff]
      %v1761 = vld [vmem:[%s165 + $0x20] sm:$0xff]
      %v1762 = vld [vmem:[%s165 + $0x28] sm:$0xff]
      %v1763 = vld [vmem:[%s165 + $0x30] sm:$0xff]
      %v1764 = vld [vmem:[%s165 + $0x38] sm:$0xff]
      %v1765 = vld [vmem:[%s165 + $0x40] sm:$0xff]
      %v1766 = vld [vmem:[%s165 + $0x48] sm:$0xff]
      %v1767 = vld [vmem:[%s165 + $0x50] sm:$0xff]
      %v1768 = vld [vmem:[%s165 + $0x58] sm:$0xff]
      %v1769 = vld [vmem:[%s165 + $0x60] sm:$0xff]
      %v1770 = vld [vmem:[%s165 + $0x68] sm:$0xff]
      %v1771 = vld [vmem:[%s165 + $0x70] sm:$0xff]
      %v1772 = vld [vmem:[%s165 + $0x78] sm:$0xff]
      %v1773 = vld [vmem:[%s165 + $0x80] sm:$0xff]
      %v1774 = vld [vmem:[%s165 + $0x88] sm:$0xff]
      %v1775 = vld [vmem:[%s165 + $0x90] sm:$0xff]
      %s1776 = scalar_lea.vmem %s1, 896
      %v1777 = vld [vmem:[%s1776] sm:$0xff]
      %v1778 = vld [vmem:[%s1776 + $0x8] sm:$0xff]
      %v1779 = vld [vmem:[%s1776 + $0x10] sm:$0xff]
      %v1780 = vld [vmem:[%s1776 + $0x18] sm:$0xff]
      %v1781 = vld [vmem:[%s1776 + $0x20] sm:$0xff]
      %v1782 = vld [vmem:[%s1776 + $0x28] sm:$0xff]
      %v1783 = vld [vmem:[%s1776 + $0x30] sm:$0xff]
      %v1784 = vld [vmem:[%s1776 + $0x38] sm:$0xff]
      %v1785 = vld [vmem:[%s1776 + $0x40] sm:$0xff]
      %v1786 = vld [vmem:[%s1776 + $0x48] sm:$0xff]
      %v1787 = vld [vmem:[%s1776 + $0x50] sm:$0xff]
      %v1788 = vld [vmem:[%s1776 + $0x58] sm:$0xff]
      %v1789 = vld [vmem:[%s1776 + $0x60] sm:$0xff]
      %v1790 = vld [vmem:[%s1776 + $0x68] sm:$0xff]
      %v1791 = vld [vmem:[%s1776 + $0x70] sm:$0xff]
      %v1792 = vld [vmem:[%s1776 + $0x78] sm:$0xff]
      %1793 = vmatprep.subr.mxu0 0.0
      %1794 = vmatpush1.msra.mxu0 %v1792
      %1795 = vmatprep.subr.mxu0 0.0
      %1796 = vmatpush1.msra.mxu0 %v1791
      %1797 = vmatprep.subr.mxu0 0.0
      %1798 = vmatpush1.msra.mxu0 %v1790
      %1799 = vmatprep.subr.mxu0 0.0
      %1800 = vmatpush1.msra.mxu0 %v1789
      %1801 = vmatprep.subr.mxu0 0.0
      %1802 = vmatpush1.msra.mxu0 %v1788
      %1803 = vmatprep.subr.mxu0 0.0
      %1804 = vmatpush1.msra.mxu0 %v1787
      %1805 = vmatprep.subr.mxu0 0.0
      %1806 = vmatpush1.msra.mxu0 %v1786
      %1807 = vmatprep.subr.mxu0 0.0
      %1808 = vmatpush1.msra.mxu0 %v1785
      %1809 = vmatprep.subr.mxu0 0.0
      %1810 = vmatpush1.msra.mxu0 %v1784
      %1811 = vmatprep.subr.mxu0 0.0
      %1812 = vmatpush1.msra.mxu0 %v1783
      %1813 = vmatprep.subr.mxu0 0.0
      %1814 = vmatpush1.msra.mxu0 %v1782
      %1815 = vmatprep.subr.mxu0 0.0
      %1816 = vmatpush1.msra.mxu0 %v1781
      %1817 = vmatprep.subr.mxu0 0.0
      %1818 = vmatpush1.msra.mxu0 %v1780
      %1819 = vmatprep.subr.mxu0 0.0
      %1820 = vmatpush1.msra.mxu0 %v1779
      %1821 = vmatprep.subr.mxu0 0.0
      %1822 = vmatpush1.msra.mxu0 %v1778
      %1823 = vmatprep.subr.mxu0 0.0
      %1824 = vmatpush1.msra.mxu0 %v1777
      %1825 = vmatprep.subr.mxu0 0.0
      %1826 = vmatpush2.msra.mxu0 0.0
      %1827 = vmatprep.subr.mxu0 0.0
      %1828 = vmatpush2.msra.mxu0 0.0
      %1829 = vmatprep.subr.mxu0 0.0
      %1830 = vmatpush2.msra.mxu0 0.0
      %1831 = vmatprep.subr.mxu0 0.0
      %1832 = vmatpush2.msra.mxu0 0.0
      %1833 = vmatprep.subr.mxu0 0.0
      %1834 = vmatpush2.msra.mxu0 0.0
      %1835 = vmatprep.subr.mxu0 0.0
      %1836 = vmatpush2.msra.mxu0 0.0
      %1837 = vmatprep.subr.mxu0 0.0
      %1838 = vmatpush2.msra.mxu0 0.0
      %1839 = vmatprep.subr.mxu0 0.0
      %1840 = vmatpush2.msra.mxu0 0.0
      %1841 = vmatprep.subr.mxu0 0.0
      %1842 = vmatpush2.msra.mxu0 0.0
      %1843 = vmatprep.subr.mxu0 0.0
      %1844 = vmatpush2.msra.mxu0 0.0
      %1845 = vmatprep.subr.mxu0 0.0
      %1846 = vmatpush2.msra.mxu0 0.0
      %1847 = vmatprep.subr.mxu0 0.0
      %1848 = vmatpush2.msra.mxu0 0.0
      %1849 = vmatprep.subr.mxu0 0.0
      %1850 = vmatpush2.msra.mxu0 0.0
      %1851 = vmatprep.subr.mxu0 0.0
      %1852 = vmatpush2.msra.mxu0 0.0
      %1853 = vmatprep.subr.mxu0 0.0
      %1854 = vmatpush2.msra.mxu0 0.0
      %1855 = vmatprep.subr.mxu0 0.0
      %1856 = vmatpush2.msra.mxu0 0.0
      %1857 = vmatprep.mubr.f32.mxu0 0.0
      %1858 = vmatmul.mubr.f32.gmra.mxu0 %v1760
      %v1859 = vpop.f32.mrf.mxu0
      %v1860 = vadd.f32 0.0, %v1859
      %v1861 = vpop.f32.mrf.mxu0
      %1862 = vmatprep.mubr.f32.mxu0 0.0
      %1863 = vmatmul.mubr.f32.gmra.mxu0 %v1761
      %v1864 = vpop.f32.mrf.mxu0
      %v1865 = vadd.f32 0.0, %v1864
      %v1866 = vpop.f32.mrf.mxu0
      %1867 = vmatprep.mubr.f32.mxu0 0.0
      %1868 = vmatmul.mubr.f32.gmra.mxu0 %v1762
      %v1869 = vpop.f32.mrf.mxu0
      %v1870 = vadd.f32 0.0, %v1869
      %v1871 = vpop.f32.mrf.mxu0
      %1872 = vmatprep.mubr.f32.mxu0 0.0
      %1873 = vmatmul.mubr.f32.gmra.mxu0 %v1763
      %v1874 = vpop.f32.mrf.mxu0
      %v1875 = vadd.f32 0.0, %v1874
      %v1876 = vpop.f32.mrf.mxu0
      %1877 = vmatprep.mubr.f32.mxu0 0.0
      %1878 = vmatmul.mubr.f32.gmra.mxu0 %v1764
      %v1879 = vpop.f32.mrf.mxu0
      %v1880 = vadd.f32 0.0, %v1879
      %v1881 = vpop.f32.mrf.mxu0
      %1882 = vmatprep.mubr.f32.mxu0 0.0
      %1883 = vmatmul.mubr.f32.gmra.mxu0 %v1765
      %v1884 = vpop.f32.mrf.mxu0
      %v1885 = vadd.f32 0.0, %v1884
      %v1886 = vpop.f32.mrf.mxu0
      %1887 = vmatprep.mubr.f32.mxu0 0.0
      %1888 = vmatmul.mubr.f32.gmra.mxu0 %v1766
      %v1889 = vpop.f32.mrf.mxu0
      %v1890 = vadd.f32 0.0, %v1889
      %v1891 = vpop.f32.mrf.mxu0
      %1892 = vmatprep.mubr.f32.mxu0 0.0
      %1893 = vmatmul.mubr.f32.gmra.mxu0 %v1767
      %v1894 = vpop.f32.mrf.mxu0
      %v1895 = vadd.f32 0.0, %v1894
      %v1896 = vpop.f32.mrf.mxu0
      %1897 = vmatprep.mubr.f32.mxu0 0.0
      %1898 = vmatmul.mubr.f32.gmra.mxu0 %v1768
      %v1899 = vpop.f32.mrf.mxu0
      %v1900 = vadd.f32 0.0, %v1899
      %v1901 = vpop.f32.mrf.mxu0
      %1902 = vmatprep.mubr.f32.mxu0 0.0
      %1903 = vmatmul.mubr.f32.gmra.mxu0 %v1769
      %v1904 = vpop.f32.mrf.mxu0
      %v1905 = vadd.f32 0.0, %v1904
      %v1906 = vpop.f32.mrf.mxu0
      %1907 = vmatprep.mubr.f32.mxu0 0.0
      %1908 = vmatmul.mubr.f32.gmra.mxu0 %v1770
      %v1909 = vpop.f32.mrf.mxu0
      %v1910 = vadd.f32 0.0, %v1909
      %v1911 = vpop.f32.mrf.mxu0
      %1912 = vmatprep.mubr.f32.mxu0 0.0
      %1913 = vmatmul.mubr.f32.gmra.mxu0 %v1771
      %v1914 = vpop.f32.mrf.mxu0
      %v1915 = vadd.f32 0.0, %v1914
      %v1916 = vpop.f32.mrf.mxu0
      %1917 = vmatprep.mubr.f32.mxu0 0.0
      %1918 = vmatmul.mubr.f32.gmra.mxu0 %v1772
      %v1919 = vpop.f32.mrf.mxu0
      %v1920 = vadd.f32 0.0, %v1919
      %v1921 = vpop.f32.mrf.mxu0
      %1922 = vmatprep.mubr.f32.mxu0 0.0
      %1923 = vmatmul.mubr.f32.gmra.mxu0 %v1773
      %v1924 = vpop.f32.mrf.mxu0
      %v1925 = vadd.f32 0.0, %v1924
      %v1926 = vpop.f32.mrf.mxu0
      %1927 = vmatprep.mubr.f32.mxu0 0.0
      %1928 = vmatmul.mubr.f32.gmra.mxu0 %v1774
      %v1929 = vpop.f32.mrf.mxu0
      %v1930 = vadd.f32 0.0, %v1929
      %v1931 = vpop.f32.mrf.mxu0
      %1932 = vmatprep.mubr.f32.mxu0 0.0
      %1933 = vmatmul.mubr.f32.gmra.mxu0 %v1775
      %v1934 = vpop.f32.mrf.mxu0
      %v1935 = vadd.f32 0.0, %v1934
      %v1936 = vpop.f32.mrf.mxu0
      %1937 = vdwg.mxu0
      %v1938 = vadd.f32 %v1744, %v1860
      %v1939 = vadd.f32 %v1745, %v1865
      %v1940 = vadd.f32 %v1746, %v1870
      %v1941 = vadd.f32 %v1747, %v1875
      %v1942 = vadd.f32 %v1748, %v1880
      %v1943 = vadd.f32 %v1749, %v1885
      %v1944 = vadd.f32 %v1750, %v1890
      %v1945 = vadd.f32 %v1751, %v1895
      %v1946 = vadd.f32 %v1752, %v1900
      %v1947 = vadd.f32 %v1753, %v1905
      %v1948 = vadd.f32 %v1754, %v1910
      %v1949 = vadd.f32 %v1755, %v1915
      %v1950 = vadd.f32 %v1756, %v1920
      %v1951 = vadd.f32 %v1757, %v1925
      %v1952 = vadd.f32 %v1758, %v1930
      %v1953 = vadd.f32 %v1759, %v1935
      %v1954 = vld [vmem:[%s165 + $0x19] sm:$0xff]
      %v1955 = vld [vmem:[%s165 + $0x21] sm:$0xff]
      %v1956 = vld [vmem:[%s165 + $0x29] sm:$0xff]
      %v1957 = vld [vmem:[%s165 + $0x31] sm:$0xff]
      %v1958 = vld [vmem:[%s165 + $0x39] sm:$0xff]
      %v1959 = vld [vmem:[%s165 + $0x41] sm:$0xff]
      %v1960 = vld [vmem:[%s165 + $0x49] sm:$0xff]
      %v1961 = vld [vmem:[%s165 + $0x51] sm:$0xff]
      %v1962 = vld [vmem:[%s165 + $0x59] sm:$0xff]
      %v1963 = vld [vmem:[%s165 + $0x61] sm:$0xff]
      %v1964 = vld [vmem:[%s165 + $0x69] sm:$0xff]
      %v1965 = vld [vmem:[%s165 + $0x71] sm:$0xff]
      %v1966 = vld [vmem:[%s165 + $0x79] sm:$0xff]
      %v1967 = vld [vmem:[%s165 + $0x81] sm:$0xff]
      %v1968 = vld [vmem:[%s165 + $0x89] sm:$0xff]
      %v1969 = vld [vmem:[%s165 + $0x91] sm:$0xff]
      %v1970 = vsel %vm710, %v1954, 0.0
      %v1971 = vsel %vm711, %v1955, 0.0
      %v1972 = vsel %vm712, %v1956, 0.0
      %v1973 = vsel %vm713, %v1957, 0.0
      %v1974 = vsel %vm714, %v1958, 0.0
      %v1975 = vsel %vm715, %v1959, 0.0
      %v1976 = vsel %vm716, %v1960, 0.0
      %v1977 = vsel %vm717, %v1961, 0.0
      %v1978 = vsel %vm718, %v1962, 0.0
      %v1979 = vsel %vm719, %v1963, 0.0
      %v1980 = vsel %vm720, %v1964, 0.0
      %v1981 = vsel %vm721, %v1965, 0.0
      %v1982 = vsel %vm722, %v1966, 0.0
      %v1983 = vsel %vm723, %v1967, 0.0
      %v1984 = vsel %vm724, %v1968, 0.0
      %v1985 = vsel %vm725, %v1969, 0.0
      %s1986 = scalar_lea.vmem %s1, 1024
      %v1987 = vld [vmem:[%s1986] sm:$0xff]
      %v1988 = vld [vmem:[%s1986 + $0x8] sm:$0xff]
      %v1989 = vld [vmem:[%s1986 + $0x10] sm:$0xff]
      %v1990 = vld [vmem:[%s1986 + $0x18] sm:$0xff]
      %v1991 = vld [vmem:[%s1986 + $0x20] sm:$0xff]
      %v1992 = vld [vmem:[%s1986 + $0x28] sm:$0xff]
      %v1993 = vld [vmem:[%s1986 + $0x30] sm:$0xff]
      %v1994 = vld [vmem:[%s1986 + $0x38] sm:$0xff]
      %v1995 = vld [vmem:[%s1986 + $0x40] sm:$0xff]
      %v1996 = vld [vmem:[%s1986 + $0x48] sm:$0xff]
      %v1997 = vld [vmem:[%s1986 + $0x50] sm:$0xff]
      %v1998 = vld [vmem:[%s1986 + $0x58] sm:$0xff]
      %v1999 = vld [vmem:[%s1986 + $0x60] sm:$0xff]
      %v2000 = vld [vmem:[%s1986 + $0x68] sm:$0xff]
      %v2001 = vld [vmem:[%s1986 + $0x70] sm:$0xff]
      %v2002 = vld [vmem:[%s1986 + $0x78] sm:$0xff]
      %2003 = vmatprep.subr.mxu0 0.0
      %2004 = vmatpush1.msra.mxu0 %v2002
      %2005 = vmatprep.subr.mxu0 0.0
      %2006 = vmatpush1.msra.mxu0 %v2001
      %2007 = vmatprep.subr.mxu0 0.0
      %2008 = vmatpush1.msra.mxu0 %v2000
      %2009 = vmatprep.subr.mxu0 0.0
      %2010 = vmatpush1.msra.mxu0 %v1999
      %2011 = vmatprep.subr.mxu0 0.0
      %2012 = vmatpush1.msra.mxu0 %v1998
      %2013 = vmatprep.subr.mxu0 0.0
      %2014 = vmatpush1.msra.mxu0 %v1997
      %2015 = vmatprep.subr.mxu0 0.0
      %2016 = vmatpush1.msra.mxu0 %v1996
      %2017 = vmatprep.subr.mxu0 0.0
      %2018 = vmatpush1.msra.mxu0 %v1995
      %2019 = vmatprep.subr.mxu0 0.0
      %2020 = vmatpush1.msra.mxu0 %v1994
      %2021 = vmatprep.subr.mxu0 0.0
      %2022 = vmatpush1.msra.mxu0 %v1993
      %2023 = vmatprep.subr.mxu0 0.0
      %2024 = vmatpush1.msra.mxu0 %v1992
      %2025 = vmatprep.subr.mxu0 0.0
      %2026 = vmatpush1.msra.mxu0 %v1991
      %2027 = vmatprep.subr.mxu0 0.0
      %2028 = vmatpush1.msra.mxu0 %v1990
      %2029 = vmatprep.subr.mxu0 0.0
      %2030 = vmatpush1.msra.mxu0 %v1989
      %2031 = vmatprep.subr.mxu0 0.0
      %2032 = vmatpush1.msra.mxu0 %v1988
      %2033 = vmatprep.subr.mxu0 0.0
      %2034 = vmatpush1.msra.mxu0 %v1987
      %2035 = vmatprep.subr.mxu0 0.0
      %2036 = vmatpush2.msra.mxu0 0.0
      %2037 = vmatprep.subr.mxu0 0.0
      %2038 = vmatpush2.msra.mxu0 0.0
      %2039 = vmatprep.subr.mxu0 0.0
      %2040 = vmatpush2.msra.mxu0 0.0
      %2041 = vmatprep.subr.mxu0 0.0
      %2042 = vmatpush2.msra.mxu0 0.0
      %2043 = vmatprep.subr.mxu0 0.0
      %2044 = vmatpush2.msra.mxu0 0.0
      %2045 = vmatprep.subr.mxu0 0.0
      %2046 = vmatpush2.msra.mxu0 0.0
      %2047 = vmatprep.subr.mxu0 0.0
      %2048 = vmatpush2.msra.mxu0 0.0
      %2049 = vmatprep.subr.mxu0 0.0
      %2050 = vmatpush2.msra.mxu0 0.0
      %2051 = vmatprep.subr.mxu0 0.0
      %2052 = vmatpush2.msra.mxu0 0.0
      %2053 = vmatprep.subr.mxu0 0.0
      %2054 = vmatpush2.msra.mxu0 0.0
      %2055 = vmatprep.subr.mxu0 0.0
      %2056 = vmatpush2.msra.mxu0 0.0
      %2057 = vmatprep.subr.mxu0 0.0
      %2058 = vmatpush2.msra.mxu0 0.0
      %2059 = vmatprep.subr.mxu0 0.0
      %2060 = vmatpush2.msra.mxu0 0.0
      %2061 = vmatprep.subr.mxu0 0.0
      %2062 = vmatpush2.msra.mxu0 0.0
      %2063 = vmatprep.subr.mxu0 0.0
      %2064 = vmatpush2.msra.mxu0 0.0
      %2065 = vmatprep.subr.mxu0 0.0
      %2066 = vmatpush2.msra.mxu0 0.0
      %2067 = vmatprep.mubr.f32.mxu0 0.0
      %2068 = vmatmul.mubr.f32.gmra.mxu0 %v1970
      %v2069 = vpop.f32.mrf.mxu0
      %v2070 = vadd.f32 0.0, %v2069
      %v2071 = vpop.f32.mrf.mxu0
      %2072 = vmatprep.mubr.f32.mxu0 0.0
      %2073 = vmatmul.mubr.f32.gmra.mxu0 %v1971
      %v2074 = vpop.f32.mrf.mxu0
      %v2075 = vadd.f32 0.0, %v2074
      %v2076 = vpop.f32.mrf.mxu0
      %2077 = vmatprep.mubr.f32.mxu0 0.0
      %2078 = vmatmul.mubr.f32.gmra.mxu0 %v1972
      %v2079 = vpop.f32.mrf.mxu0
      %v2080 = vadd.f32 0.0, %v2079
      %v2081 = vpop.f32.mrf.mxu0
      %2082 = vmatprep.mubr.f32.mxu0 0.0
      %2083 = vmatmul.mubr.f32.gmra.mxu0 %v1973
      %v2084 = vpop.f32.mrf.mxu0
      %v2085 = vadd.f32 0.0, %v2084
      %v2086 = vpop.f32.mrf.mxu0
      %2087 = vmatprep.mubr.f32.mxu0 0.0
      %2088 = vmatmul.mubr.f32.gmra.mxu0 %v1974
      %v2089 = vpop.f32.mrf.mxu0
      %v2090 = vadd.f32 0.0, %v2089
      %v2091 = vpop.f32.mrf.mxu0
      %2092 = vmatprep.mubr.f32.mxu0 0.0
      %2093 = vmatmul.mubr.f32.gmra.mxu0 %v1975
      %v2094 = vpop.f32.mrf.mxu0
      %v2095 = vadd.f32 0.0, %v2094
      %v2096 = vpop.f32.mrf.mxu0
      %2097 = vmatprep.mubr.f32.mxu0 0.0
      %2098 = vmatmul.mubr.f32.gmra.mxu0 %v1976
      %v2099 = vpop.f32.mrf.mxu0
      %v2100 = vadd.f32 0.0, %v2099
      %v2101 = vpop.f32.mrf.mxu0
      %2102 = vmatprep.mubr.f32.mxu0 0.0
      %2103 = vmatmul.mubr.f32.gmra.mxu0 %v1977
      %v2104 = vpop.f32.mrf.mxu0
      %v2105 = vadd.f32 0.0, %v2104
      %v2106 = vpop.f32.mrf.mxu0
      %2107 = vmatprep.mubr.f32.mxu0 0.0
      %2108 = vmatmul.mubr.f32.gmra.mxu0 %v1978
      %v2109 = vpop.f32.mrf.mxu0
      %v2110 = vadd.f32 0.0, %v2109
      %v2111 = vpop.f32.mrf.mxu0
      %2112 = vmatprep.mubr.f32.mxu0 0.0
      %2113 = vmatmul.mubr.f32.gmra.mxu0 %v1979
      %v2114 = vpop.f32.mrf.mxu0
      %v2115 = vadd.f32 0.0, %v2114
      %v2116 = vpop.f32.mrf.mxu0
      %2117 = vmatprep.mubr.f32.mxu0 0.0
      %2118 = vmatmul.mubr.f32.gmra.mxu0 %v1980
      %v2119 = vpop.f32.mrf.mxu0
      %v2120 = vadd.f32 0.0, %v2119
      %v2121 = vpop.f32.mrf.mxu0
      %2122 = vmatprep.mubr.f32.mxu0 0.0
      %2123 = vmatmul.mubr.f32.gmra.mxu0 %v1981
      %v2124 = vpop.f32.mrf.mxu0
      %v2125 = vadd.f32 0.0, %v2124
      %v2126 = vpop.f32.mrf.mxu0
      %2127 = vmatprep.mubr.f32.mxu0 0.0
      %2128 = vmatmul.mubr.f32.gmra.mxu0 %v1982
      %v2129 = vpop.f32.mrf.mxu0
      %v2130 = vadd.f32 0.0, %v2129
      %v2131 = vpop.f32.mrf.mxu0
      %2132 = vmatprep.mubr.f32.mxu0 0.0
      %2133 = vmatmul.mubr.f32.gmra.mxu0 %v1983
      %v2134 = vpop.f32.mrf.mxu0
      %v2135 = vadd.f32 0.0, %v2134
      %v2136 = vpop.f32.mrf.mxu0
      %2137 = vmatprep.mubr.f32.mxu0 0.0
      %2138 = vmatmul.mubr.f32.gmra.mxu0 %v1984
      %v2139 = vpop.f32.mrf.mxu0
      %v2140 = vadd.f32 0.0, %v2139
      %v2141 = vpop.f32.mrf.mxu0
      %2142 = vmatprep.mubr.f32.mxu0 0.0
      %2143 = vmatmul.mubr.f32.gmra.mxu0 %v1985
      %v2144 = vpop.f32.mrf.mxu0
      %v2145 = vadd.f32 0.0, %v2144
      %v2146 = vpop.f32.mrf.mxu0
      %2147 = vdwg.mxu0
      %v2148 = vadd.f32 %v1938, %v2070
      %v2149 = vadd.f32 %v1939, %v2075
      %v2150 = vadd.f32 %v1940, %v2080
      %v2151 = vadd.f32 %v1941, %v2085
      %v2152 = vadd.f32 %v1942, %v2090
      %v2153 = vadd.f32 %v1943, %v2095
      %v2154 = vadd.f32 %v1944, %v2100
      %v2155 = vadd.f32 %v1945, %v2105
      %v2156 = vadd.f32 %v1946, %v2110
      %v2157 = vadd.f32 %v1947, %v2115
      %v2158 = vadd.f32 %v1948, %v2120
      %v2159 = vadd.f32 %v1949, %v2125
      %v2160 = vadd.f32 %v1950, %v2130
      %v2161 = vadd.f32 %v1951, %v2135
      %v2162 = vadd.f32 %v1952, %v2140
      %v2163 = vadd.f32 %v1953, %v2145
      %v2164 = vld [vmem:[%s165 + $0x27] sm:$0xff]
      %v2165 = vld [vmem:[%s165 + $0x2f] sm:$0xff]
      %v2166 = vld [vmem:[%s165 + $0x37] sm:$0xff]
      %v2167 = vld [vmem:[%s165 + $0x3f] sm:$0xff]
      %v2168 = vld [vmem:[%s165 + $0x47] sm:$0xff]
      %v2169 = vld [vmem:[%s165 + $0x4f] sm:$0xff]
      %v2170 = vld [vmem:[%s165 + $0x57] sm:$0xff]
      %v2171 = vld [vmem:[%s165 + $0x5f] sm:$0xff]
      %v2172 = vld [vmem:[%s165 + $0x67] sm:$0xff]
      %v2173 = vld [vmem:[%s165 + $0x6f] sm:$0xff]
      %v2174 = vld [vmem:[%s165 + $0x77] sm:$0xff]
      %v2175 = vld [vmem:[%s165 + $0x7f] sm:$0xff]
      %v2176 = vld [vmem:[%s165 + $0x87] sm:$0xff]
      %v2177 = vld [vmem:[%s165 + $0x8f] sm:$0xff]
      %v2178 = vld [vmem:[%s165 + $0x97] sm:$0xff]
      %v2179 = vld [vmem:[%s165 + $0x9f] sm:$0xff]
      %v2180 = vsel %vm275, %v2164, 0.0
      %v2181 = vsel %vm276, %v2165, 0.0
      %v2182 = vsel %vm277, %v2166, 0.0
      %v2183 = vsel %vm278, %v2167, 0.0
      %v2184 = vsel %vm279, %v2168, 0.0
      %v2185 = vsel %vm280, %v2169, 0.0
      %v2186 = vsel %vm281, %v2170, 0.0
      %v2187 = vsel %vm282, %v2171, 0.0
      %v2188 = vsel %vm283, %v2172, 0.0
      %v2189 = vsel %vm284, %v2173, 0.0
      %v2190 = vsel %vm285, %v2174, 0.0
      %v2191 = vsel %vm286, %v2175, 0.0
      %v2192 = vsel %vm287, %v2176, 0.0
      %v2193 = vsel %vm288, %v2177, 0.0
      %v2194 = vsel %vm289, %v2178, 0.0
      %v2195 = vsel %vm290, %v2179, 0.0
      %s2196 = scalar_lea.vmem %s1, 1152
      %v2197 = vld [vmem:[%s2196] sm:$0xff]
      %v2198 = vld [vmem:[%s2196 + $0x8] sm:$0xff]
      %v2199 = vld [vmem:[%s2196 + $0x10] sm:$0xff]
      %v2200 = vld [vmem:[%s2196 + $0x18] sm:$0xff]
      %v2201 = vld [vmem:[%s2196 + $0x20] sm:$0xff]
      %v2202 = vld [vmem:[%s2196 + $0x28] sm:$0xff]
      %v2203 = vld [vmem:[%s2196 + $0x30] sm:$0xff]
      %v2204 = vld [vmem:[%s2196 + $0x38] sm:$0xff]
      %v2205 = vld [vmem:[%s2196 + $0x40] sm:$0xff]
      %v2206 = vld [vmem:[%s2196 + $0x48] sm:$0xff]
      %v2207 = vld [vmem:[%s2196 + $0x50] sm:$0xff]
      %v2208 = vld [vmem:[%s2196 + $0x58] sm:$0xff]
      %v2209 = vld [vmem:[%s2196 + $0x60] sm:$0xff]
      %v2210 = vld [vmem:[%s2196 + $0x68] sm:$0xff]
      %v2211 = vld [vmem:[%s2196 + $0x70] sm:$0xff]
      %v2212 = vld [vmem:[%s2196 + $0x78] sm:$0xff]
      %2213 = vmatprep.subr.mxu0 0.0
      %2214 = vmatpush1.msra.mxu0 %v2212
      %2215 = vmatprep.subr.mxu0 0.0
      %2216 = vmatpush1.msra.mxu0 %v2211
      %2217 = vmatprep.subr.mxu0 0.0
      %2218 = vmatpush1.msra.mxu0 %v2210
      %2219 = vmatprep.subr.mxu0 0.0
      %2220 = vmatpush1.msra.mxu0 %v2209
      %2221 = vmatprep.subr.mxu0 0.0
      %2222 = vmatpush1.msra.mxu0 %v2208
      %2223 = vmatprep.subr.mxu0 0.0
      %2224 = vmatpush1.msra.mxu0 %v2207
      %2225 = vmatprep.subr.mxu0 0.0
      %2226 = vmatpush1.msra.mxu0 %v2206
      %2227 = vmatprep.subr.mxu0 0.0
      %2228 = vmatpush1.msra.mxu0 %v2205
      %2229 = vmatprep.subr.mxu0 0.0
      %2230 = vmatpush1.msra.mxu0 %v2204
      %2231 = vmatprep.subr.mxu0 0.0
      %2232 = vmatpush1.msra.mxu0 %v2203
      %2233 = vmatprep.subr.mxu0 0.0
      %2234 = vmatpush1.msra.mxu0 %v2202
      %2235 = vmatprep.subr.mxu0 0.0
      %2236 = vmatpush1.msra.mxu0 %v2201
      %2237 = vmatprep.subr.mxu0 0.0
      %2238 = vmatpush1.msra.mxu0 %v2200
      %2239 = vmatprep.subr.mxu0 0.0
      %2240 = vmatpush1.msra.mxu0 %v2199
      %2241 = vmatprep.subr.mxu0 0.0
      %2242 = vmatpush1.msra.mxu0 %v2198
      %2243 = vmatprep.subr.mxu0 0.0
      %2244 = vmatpush1.msra.mxu0 %v2197
      %2245 = vmatprep.subr.mxu0 0.0
      %2246 = vmatpush2.msra.mxu0 0.0
      %2247 = vmatprep.subr.mxu0 0.0
      %2248 = vmatpush2.msra.mxu0 0.0
      %2249 = vmatprep.subr.mxu0 0.0
      %2250 = vmatpush2.msra.mxu0 0.0
      %2251 = vmatprep.subr.mxu0 0.0
      %2252 = vmatpush2.msra.mxu0 0.0
      %2253 = vmatprep.subr.mxu0 0.0
      %2254 = vmatpush2.msra.mxu0 0.0
      %2255 = vmatprep.subr.mxu0 0.0
      %2256 = vmatpush2.msra.mxu0 0.0
      %2257 = vmatprep.subr.mxu0 0.0
      %2258 = vmatpush2.msra.mxu0 0.0
      %2259 = vmatprep.subr.mxu0 0.0
      %2260 = vmatpush2.msra.mxu0 0.0
      %2261 = vmatprep.subr.mxu0 0.0
      %2262 = vmatpush2.msra.mxu0 0.0
      %2263 = vmatprep.subr.mxu0 0.0
      %2264 = vmatpush2.msra.mxu0 0.0
      %2265 = vmatprep.subr.mxu0 0.0
      %2266 = vmatpush2.msra.mxu0 0.0
      %2267 = vmatprep.subr.mxu0 0.0
      %2268 = vmatpush2.msra.mxu0 0.0
      %2269 = vmatprep.subr.mxu0 0.0
      %2270 = vmatpush2.msra.mxu0 0.0
      %2271 = vmatprep.subr.mxu0 0.0
      %2272 = vmatpush2.msra.mxu0 0.0
      %2273 = vmatprep.subr.mxu0 0.0
      %2274 = vmatpush2.msra.mxu0 0.0
      %2275 = vmatprep.subr.mxu0 0.0
      %2276 = vmatpush2.msra.mxu0 0.0
      %2277 = vmatprep.mubr.f32.mxu0 0.0
      %2278 = vmatmul.mubr.f32.gmra.mxu0 %v2180
      %v2279 = vpop.f32.mrf.mxu0
      %v2280 = vadd.f32 0.0, %v2279
      %v2281 = vpop.f32.mrf.mxu0
      %2282 = vmatprep.mubr.f32.mxu0 0.0
      %2283 = vmatmul.mubr.f32.gmra.mxu0 %v2181
      %v2284 = vpop.f32.mrf.mxu0
      %v2285 = vadd.f32 0.0, %v2284
      %v2286 = vpop.f32.mrf.mxu0
      %2287 = vmatprep.mubr.f32.mxu0 0.0
      %2288 = vmatmul.mubr.f32.gmra.mxu0 %v2182
      %v2289 = vpop.f32.mrf.mxu0
      %v2290 = vadd.f32 0.0, %v2289
      %v2291 = vpop.f32.mrf.mxu0
      %2292 = vmatprep.mubr.f32.mxu0 0.0
      %2293 = vmatmul.mubr.f32.gmra.mxu0 %v2183
      %v2294 = vpop.f32.mrf.mxu0
      %v2295 = vadd.f32 0.0, %v2294
      %v2296 = vpop.f32.mrf.mxu0
      %2297 = vmatprep.mubr.f32.mxu0 0.0
      %2298 = vmatmul.mubr.f32.gmra.mxu0 %v2184
      %v2299 = vpop.f32.mrf.mxu0
      %v2300 = vadd.f32 0.0, %v2299
      %v2301 = vpop.f32.mrf.mxu0
      %2302 = vmatprep.mubr.f32.mxu0 0.0
      %2303 = vmatmul.mubr.f32.gmra.mxu0 %v2185
      %v2304 = vpop.f32.mrf.mxu0
      %v2305 = vadd.f32 0.0, %v2304
      %v2306 = vpop.f32.mrf.mxu0
      %2307 = vmatprep.mubr.f32.mxu0 0.0
      %2308 = vmatmul.mubr.f32.gmra.mxu0 %v2186
      %v2309 = vpop.f32.mrf.mxu0
      %v2310 = vadd.f32 0.0, %v2309
      %v2311 = vpop.f32.mrf.mxu0
      %2312 = vmatprep.mubr.f32.mxu0 0.0
      %2313 = vmatmul.mubr.f32.gmra.mxu0 %v2187
      %v2314 = vpop.f32.mrf.mxu0
      %v2315 = vadd.f32 0.0, %v2314
      %v2316 = vpop.f32.mrf.mxu0
      %2317 = vmatprep.mubr.f32.mxu0 0.0
      %2318 = vmatmul.mubr.f32.gmra.mxu0 %v2188
      %v2319 = vpop.f32.mrf.mxu0
      %v2320 = vadd.f32 0.0, %v2319
      %v2321 = vpop.f32.mrf.mxu0
      %2322 = vmatprep.mubr.f32.mxu0 0.0
      %2323 = vmatmul.mubr.f32.gmra.mxu0 %v2189
      %v2324 = vpop.f32.mrf.mxu0
      %v2325 = vadd.f32 0.0, %v2324
      %v2326 = vpop.f32.mrf.mxu0
      %2327 = vmatprep.mubr.f32.mxu0 0.0
      %2328 = vmatmul.mubr.f32.gmra.mxu0 %v2190
      %v2329 = vpop.f32.mrf.mxu0
      %v2330 = vadd.f32 0.0, %v2329
      %v2331 = vpop.f32.mrf.mxu0
      %2332 = vmatprep.mubr.f32.mxu0 0.0
      %2333 = vmatmul.mubr.f32.gmra.mxu0 %v2191
      %v2334 = vpop.f32.mrf.mxu0
      %v2335 = vadd.f32 0.0, %v2334
      %v2336 = vpop.f32.mrf.mxu0
      %2337 = vmatprep.mubr.f32.mxu0 0.0
      %2338 = vmatmul.mubr.f32.gmra.mxu0 %v2192
      %v2339 = vpop.f32.mrf.mxu0
      %v2340 = vadd.f32 0.0, %v2339
      %v2341 = vpop.f32.mrf.mxu0
      %2342 = vmatprep.mubr.f32.mxu0 0.0
      %2343 = vmatmul.mubr.f32.gmra.mxu0 %v2193
      %v2344 = vpop.f32.mrf.mxu0
      %v2345 = vadd.f32 0.0, %v2344
      %v2346 = vpop.f32.mrf.mxu0
      %2347 = vmatprep.mubr.f32.mxu0 0.0
      %2348 = vmatmul.mubr.f32.gmra.mxu0 %v2194
      %v2349 = vpop.f32.mrf.mxu0
      %v2350 = vadd.f32 0.0, %v2349
      %v2351 = vpop.f32.mrf.mxu0
      %2352 = vmatprep.mubr.f32.mxu0 0.0
      %2353 = vmatmul.mubr.f32.gmra.mxu0 %v2195
      %v2354 = vpop.f32.mrf.mxu0
      %v2355 = vadd.f32 0.0, %v2354
      %v2356 = vpop.f32.mrf.mxu0
      %2357 = vdwg.mxu0
      %v2358 = vadd.f32 %v2148, %v2280
      %v2359 = vadd.f32 %v2149, %v2285
      %v2360 = vadd.f32 %v2150, %v2290
      %v2361 = vadd.f32 %v2151, %v2295
      %v2362 = vadd.f32 %v2152, %v2300
      %v2363 = vadd.f32 %v2153, %v2305
      %v2364 = vadd.f32 %v2154, %v2310
      %v2365 = vadd.f32 %v2155, %v2315
      %v2366 = vadd.f32 %v2156, %v2320
      %v2367 = vadd.f32 %v2157, %v2325
      %v2368 = vadd.f32 %v2158, %v2330
      %v2369 = vadd.f32 %v2159, %v2335
      %v2370 = vadd.f32 %v2160, %v2340
      %v2371 = vadd.f32 %v2161, %v2345
      %v2372 = vadd.f32 %v2162, %v2350
      %v2373 = vadd.f32 %v2163, %v2355
      %v2374 = vld [vmem:[%s165 + $0x28] sm:$0xff]
      %v2375 = vld [vmem:[%s165 + $0x30] sm:$0xff]
      %v2376 = vld [vmem:[%s165 + $0x38] sm:$0xff]
      %v2377 = vld [vmem:[%s165 + $0x40] sm:$0xff]
      %v2378 = vld [vmem:[%s165 + $0x48] sm:$0xff]
      %v2379 = vld [vmem:[%s165 + $0x50] sm:$0xff]
      %v2380 = vld [vmem:[%s165 + $0x58] sm:$0xff]
      %v2381 = vld [vmem:[%s165 + $0x60] sm:$0xff]
      %v2382 = vld [vmem:[%s165 + $0x68] sm:$0xff]
      %v2383 = vld [vmem:[%s165 + $0x70] sm:$0xff]
      %v2384 = vld [vmem:[%s165 + $0x78] sm:$0xff]
      %v2385 = vld [vmem:[%s165 + $0x80] sm:$0xff]
      %v2386 = vld [vmem:[%s165 + $0x88] sm:$0xff]
      %v2387 = vld [vmem:[%s165 + $0x90] sm:$0xff]
      %v2388 = vld [vmem:[%s165 + $0x98] sm:$0xff]
      %v2389 = vld [vmem:[%s165 + $0xa0] sm:$0xff]
      %s2390 = scalar_lea.vmem %s1, 1280
      %v2391 = vld [vmem:[%s2390] sm:$0xff]
      %v2392 = vld [vmem:[%s2390 + $0x8] sm:$0xff]
      %v2393 = vld [vmem:[%s2390 + $0x10] sm:$0xff]
      %v2394 = vld [vmem:[%s2390 + $0x18] sm:$0xff]
      %v2395 = vld [vmem:[%s2390 + $0x20] sm:$0xff]
      %v2396 = vld [vmem:[%s2390 + $0x28] sm:$0xff]
      %v2397 = vld [vmem:[%s2390 + $0x30] sm:$0xff]
      %v2398 = vld [vmem:[%s2390 + $0x38] sm:$0xff]
      %v2399 = vld [vmem:[%s2390 + $0x40] sm:$0xff]
      %v2400 = vld [vmem:[%s2390 + $0x48] sm:$0xff]
      %v2401 = vld [vmem:[%s2390 + $0x50] sm:$0xff]
      %v2402 = vld [vmem:[%s2390 + $0x58] sm:$0xff]
      %v2403 = vld [vmem:[%s2390 + $0x60] sm:$0xff]
      %v2404 = vld [vmem:[%s2390 + $0x68] sm:$0xff]
      %v2405 = vld [vmem:[%s2390 + $0x70] sm:$0xff]
      %v2406 = vld [vmem:[%s2390 + $0x78] sm:$0xff]
      %2407 = vmatprep.subr.mxu0 0.0
      %2408 = vmatpush1.msra.mxu0 %v2406
      %2409 = vmatprep.subr.mxu0 0.0
      %2410 = vmatpush1.msra.mxu0 %v2405
      %2411 = vmatprep.subr.mxu0 0.0
      %2412 = vmatpush1.msra.mxu0 %v2404
      %2413 = vmatprep.subr.mxu0 0.0
      %2414 = vmatpush1.msra.mxu0 %v2403
      %2415 = vmatprep.subr.mxu0 0.0
      %2416 = vmatpush1.msra.mxu0 %v2402
      %2417 = vmatprep.subr.mxu0 0.0
      %2418 = vmatpush1.msra.mxu0 %v2401
      %2419 = vmatprep.subr.mxu0 0.0
      %2420 = vmatpush1.msra.mxu0 %v2400
      %2421 = vmatprep.subr.mxu0 0.0
      %2422 = vmatpush1.msra.mxu0 %v2399
      %2423 = vmatprep.subr.mxu0 0.0
      %2424 = vmatpush1.msra.mxu0 %v2398
      %2425 = vmatprep.subr.mxu0 0.0
      %2426 = vmatpush1.msra.mxu0 %v2397
      %2427 = vmatprep.subr.mxu0 0.0
      %2428 = vmatpush1.msra.mxu0 %v2396
      %2429 = vmatprep.subr.mxu0 0.0
      %2430 = vmatpush1.msra.mxu0 %v2395
      %2431 = vmatprep.subr.mxu0 0.0
      %2432 = vmatpush1.msra.mxu0 %v2394
      %2433 = vmatprep.subr.mxu0 0.0
      %2434 = vmatpush1.msra.mxu0 %v2393
      %2435 = vmatprep.subr.mxu0 0.0
      %2436 = vmatpush1.msra.mxu0 %v2392
      %2437 = vmatprep.subr.mxu0 0.0
      %2438 = vmatpush1.msra.mxu0 %v2391
      %2439 = vmatprep.subr.mxu0 0.0
      %2440 = vmatpush2.msra.mxu0 0.0
      %2441 = vmatprep.subr.mxu0 0.0
      %2442 = vmatpush2.msra.mxu0 0.0
      %2443 = vmatprep.subr.mxu0 0.0
      %2444 = vmatpush2.msra.mxu0 0.0
      %2445 = vmatprep.subr.mxu0 0.0
      %2446 = vmatpush2.msra.mxu0 0.0
      %2447 = vmatprep.subr.mxu0 0.0
      %2448 = vmatpush2.msra.mxu0 0.0
      %2449 = vmatprep.subr.mxu0 0.0
      %2450 = vmatpush2.msra.mxu0 0.0
      %2451 = vmatprep.subr.mxu0 0.0
      %2452 = vmatpush2.msra.mxu0 0.0
      %2453 = vmatprep.subr.mxu0 0.0
      %2454 = vmatpush2.msra.mxu0 0.0
      %2455 = vmatprep.subr.mxu0 0.0
      %2456 = vmatpush2.msra.mxu0 0.0
      %2457 = vmatprep.subr.mxu0 0.0
      %2458 = vmatpush2.msra.mxu0 0.0
      %2459 = vmatprep.subr.mxu0 0.0
      %2460 = vmatpush2.msra.mxu0 0.0
      %2461 = vmatprep.subr.mxu0 0.0
      %2462 = vmatpush2.msra.mxu0 0.0
      %2463 = vmatprep.subr.mxu0 0.0
      %2464 = vmatpush2.msra.mxu0 0.0
      %2465 = vmatprep.subr.mxu0 0.0
      %2466 = vmatpush2.msra.mxu0 0.0
      %2467 = vmatprep.subr.mxu0 0.0
      %2468 = vmatpush2.msra.mxu0 0.0
      %2469 = vmatprep.subr.mxu0 0.0
      %2470 = vmatpush2.msra.mxu0 0.0
      %2471 = vmatprep.mubr.f32.mxu0 0.0
      %2472 = vmatmul.mubr.f32.gmra.mxu0 %v2374
      %v2473 = vpop.f32.mrf.mxu0
      %v2474 = vadd.f32 0.0, %v2473
      %v2475 = vpop.f32.mrf.mxu0
      %2476 = vmatprep.mubr.f32.mxu0 0.0
      %2477 = vmatmul.mubr.f32.gmra.mxu0 %v2375
      %v2478 = vpop.f32.mrf.mxu0
      %v2479 = vadd.f32 0.0, %v2478
      %v2480 = vpop.f32.mrf.mxu0
      %2481 = vmatprep.mubr.f32.mxu0 0.0
      %2482 = vmatmul.mubr.f32.gmra.mxu0 %v2376
      %v2483 = vpop.f32.mrf.mxu0
      %v2484 = vadd.f32 0.0, %v2483
      %v2485 = vpop.f32.mrf.mxu0
      %2486 = vmatprep.mubr.f32.mxu0 0.0
      %2487 = vmatmul.mubr.f32.gmra.mxu0 %v2377
      %v2488 = vpop.f32.mrf.mxu0
      %v2489 = vadd.f32 0.0, %v2488
      %v2490 = vpop.f32.mrf.mxu0
      %2491 = vmatprep.mubr.f32.mxu0 0.0
      %2492 = vmatmul.mubr.f32.gmra.mxu0 %v2378
      %v2493 = vpop.f32.mrf.mxu0
      %v2494 = vadd.f32 0.0, %v2493
      %v2495 = vpop.f32.mrf.mxu0
      %2496 = vmatprep.mubr.f32.mxu0 0.0
      %2497 = vmatmul.mubr.f32.gmra.mxu0 %v2379
      %v2498 = vpop.f32.mrf.mxu0
      %v2499 = vadd.f32 0.0, %v2498
      %v2500 = vpop.f32.mrf.mxu0
      %2501 = vmatprep.mubr.f32.mxu0 0.0
      %2502 = vmatmul.mubr.f32.gmra.mxu0 %v2380
      %v2503 = vpop.f32.mrf.mxu0
      %v2504 = vadd.f32 0.0, %v2503
      %v2505 = vpop.f32.mrf.mxu0
      %2506 = vmatprep.mubr.f32.mxu0 0.0
      %2507 = vmatmul.mubr.f32.gmra.mxu0 %v2381
      %v2508 = vpop.f32.mrf.mxu0
      %v2509 = vadd.f32 0.0, %v2508
      %v2510 = vpop.f32.mrf.mxu0
      %2511 = vmatprep.mubr.f32.mxu0 0.0
      %2512 = vmatmul.mubr.f32.gmra.mxu0 %v2382
      %v2513 = vpop.f32.mrf.mxu0
      %v2514 = vadd.f32 0.0, %v2513
      %v2515 = vpop.f32.mrf.mxu0
      %2516 = vmatprep.mubr.f32.mxu0 0.0
      %2517 = vmatmul.mubr.f32.gmra.mxu0 %v2383
      %v2518 = vpop.f32.mrf.mxu0
      %v2519 = vadd.f32 0.0, %v2518
      %v2520 = vpop.f32.mrf.mxu0
      %2521 = vmatprep.mubr.f32.mxu0 0.0
      %2522 = vmatmul.mubr.f32.gmra.mxu0 %v2384
      %v2523 = vpop.f32.mrf.mxu0
      %v2524 = vadd.f32 0.0, %v2523
      %v2525 = vpop.f32.mrf.mxu0
      %2526 = vmatprep.mubr.f32.mxu0 0.0
      %2527 = vmatmul.mubr.f32.gmra.mxu0 %v2385
      %v2528 = vpop.f32.mrf.mxu0
      %v2529 = vadd.f32 0.0, %v2528
      %v2530 = vpop.f32.mrf.mxu0
      %2531 = vmatprep.mubr.f32.mxu0 0.0
      %2532 = vmatmul.mubr.f32.gmra.mxu0 %v2386
      %v2533 = vpop.f32.mrf.mxu0
      %v2534 = vadd.f32 0.0, %v2533
      %v2535 = vpop.f32.mrf.mxu0
      %2536 = vmatprep.mubr.f32.mxu0 0.0
      %2537 = vmatmul.mubr.f32.gmra.mxu0 %v2387
      %v2538 = vpop.f32.mrf.mxu0
      %v2539 = vadd.f32 0.0, %v2538
      %v2540 = vpop.f32.mrf.mxu0
      %2541 = vmatprep.mubr.f32.mxu0 0.0
      %2542 = vmatmul.mubr.f32.gmra.mxu0 %v2388
      %v2543 = vpop.f32.mrf.mxu0
      %v2544 = vadd.f32 0.0, %v2543
      %v2545 = vpop.f32.mrf.mxu0
      %2546 = vmatprep.mubr.f32.mxu0 0.0
      %2547 = vmatmul.mubr.f32.gmra.mxu0 %v2389
      %v2548 = vpop.f32.mrf.mxu0
      %v2549 = vadd.f32 0.0, %v2548
      %v2550 = vpop.f32.mrf.mxu0
      %2551 = vdwg.mxu0
      %v2552 = vadd.f32 %v2358, %v2474
      %v2553 = vadd.f32 %v2359, %v2479
      %v2554 = vadd.f32 %v2360, %v2484
      %v2555 = vadd.f32 %v2361, %v2489
      %v2556 = vadd.f32 %v2362, %v2494
      %v2557 = vadd.f32 %v2363, %v2499
      %v2558 = vadd.f32 %v2364, %v2504
      %v2559 = vadd.f32 %v2365, %v2509
      %v2560 = vadd.f32 %v2366, %v2514
      %v2561 = vadd.f32 %v2367, %v2519
      %v2562 = vadd.f32 %v2368, %v2524
      %v2563 = vadd.f32 %v2369, %v2529
      %v2564 = vadd.f32 %v2370, %v2534
      %v2565 = vadd.f32 %v2371, %v2539
      %v2566 = vadd.f32 %v2372, %v2544
      %v2567 = vadd.f32 %v2373, %v2549
      %v2568 = vld [vmem:[%s165 + $0x29] sm:$0xff]
      %v2569 = vld [vmem:[%s165 + $0x31] sm:$0xff]
      %v2570 = vld [vmem:[%s165 + $0x39] sm:$0xff]
      %v2571 = vld [vmem:[%s165 + $0x41] sm:$0xff]
      %v2572 = vld [vmem:[%s165 + $0x49] sm:$0xff]
      %v2573 = vld [vmem:[%s165 + $0x51] sm:$0xff]
      %v2574 = vld [vmem:[%s165 + $0x59] sm:$0xff]
      %v2575 = vld [vmem:[%s165 + $0x61] sm:$0xff]
      %v2576 = vld [vmem:[%s165 + $0x69] sm:$0xff]
      %v2577 = vld [vmem:[%s165 + $0x71] sm:$0xff]
      %v2578 = vld [vmem:[%s165 + $0x79] sm:$0xff]
      %v2579 = vld [vmem:[%s165 + $0x81] sm:$0xff]
      %v2580 = vld [vmem:[%s165 + $0x89] sm:$0xff]
      %v2581 = vld [vmem:[%s165 + $0x91] sm:$0xff]
      %v2582 = vld [vmem:[%s165 + $0x99] sm:$0xff]
      %v2583 = vld [vmem:[%s165 + $0xa1] sm:$0xff]
      %v2584 = vsel %vm710, %v2568, 0.0
      %v2585 = vsel %vm711, %v2569, 0.0
      %v2586 = vsel %vm712, %v2570, 0.0
      %v2587 = vsel %vm713, %v2571, 0.0
      %v2588 = vsel %vm714, %v2572, 0.0
      %v2589 = vsel %vm715, %v2573, 0.0
      %v2590 = vsel %vm716, %v2574, 0.0
      %v2591 = vsel %vm717, %v2575, 0.0
      %v2592 = vsel %vm718, %v2576, 0.0
      %v2593 = vsel %vm719, %v2577, 0.0
      %v2594 = vsel %vm720, %v2578, 0.0
      %v2595 = vsel %vm721, %v2579, 0.0
      %v2596 = vsel %vm722, %v2580, 0.0
      %v2597 = vsel %vm723, %v2581, 0.0
      %v2598 = vsel %vm724, %v2582, 0.0
      %v2599 = vsel %vm725, %v2583, 0.0
      %s2600 = scalar_lea.vmem %s1, 1408
      %v2601 = vld [vmem:[%s2600] sm:$0xff]
      %v2602 = vld [vmem:[%s2600 + $0x8] sm:$0xff]
      %v2603 = vld [vmem:[%s2600 + $0x10] sm:$0xff]
      %v2604 = vld [vmem:[%s2600 + $0x18] sm:$0xff]
      %v2605 = vld [vmem:[%s2600 + $0x20] sm:$0xff]
      %v2606 = vld [vmem:[%s2600 + $0x28] sm:$0xff]
      %v2607 = vld [vmem:[%s2600 + $0x30] sm:$0xff]
      %v2608 = vld [vmem:[%s2600 + $0x38] sm:$0xff]
      %v2609 = vld [vmem:[%s2600 + $0x40] sm:$0xff]
      %v2610 = vld [vmem:[%s2600 + $0x48] sm:$0xff]
      %v2611 = vld [vmem:[%s2600 + $0x50] sm:$0xff]
      %v2612 = vld [vmem:[%s2600 + $0x58] sm:$0xff]
      %v2613 = vld [vmem:[%s2600 + $0x60] sm:$0xff]
      %v2614 = vld [vmem:[%s2600 + $0x68] sm:$0xff]
      %v2615 = vld [vmem:[%s2600 + $0x70] sm:$0xff]
      %v2616 = vld [vmem:[%s2600 + $0x78] sm:$0xff]
      %2617 = vmatprep.subr.mxu0 0.0
      %2618 = vmatpush1.msra.mxu0 %v2616
      %2619 = vmatprep.subr.mxu0 0.0
      %2620 = vmatpush1.msra.mxu0 %v2615
      %2621 = vmatprep.subr.mxu0 0.0
      %2622 = vmatpush1.msra.mxu0 %v2614
      %2623 = vmatprep.subr.mxu0 0.0
      %2624 = vmatpush1.msra.mxu0 %v2613
      %2625 = vmatprep.subr.mxu0 0.0
      %2626 = vmatpush1.msra.mxu0 %v2612
      %2627 = vmatprep.subr.mxu0 0.0
      %2628 = vmatpush1.msra.mxu0 %v2611
      %2629 = vmatprep.subr.mxu0 0.0
      %2630 = vmatpush1.msra.mxu0 %v2610
      %2631 = vmatprep.subr.mxu0 0.0
      %2632 = vmatpush1.msra.mxu0 %v2609
      %2633 = vmatprep.subr.mxu0 0.0
      %2634 = vmatpush1.msra.mxu0 %v2608
      %2635 = vmatprep.subr.mxu0 0.0
      %2636 = vmatpush1.msra.mxu0 %v2607
      %2637 = vmatprep.subr.mxu0 0.0
      %2638 = vmatpush1.msra.mxu0 %v2606
      %2639 = vmatprep.subr.mxu0 0.0
      %2640 = vmatpush1.msra.mxu0 %v2605
      %2641 = vmatprep.subr.mxu0 0.0
      %2642 = vmatpush1.msra.mxu0 %v2604
      %2643 = vmatprep.subr.mxu0 0.0
      %2644 = vmatpush1.msra.mxu0 %v2603
      %2645 = vmatprep.subr.mxu0 0.0
      %2646 = vmatpush1.msra.mxu0 %v2602
      %2647 = vmatprep.subr.mxu0 0.0
      %2648 = vmatpush1.msra.mxu0 %v2601
      %2649 = vmatprep.subr.mxu0 0.0
      %2650 = vmatpush2.msra.mxu0 0.0
      %2651 = vmatprep.subr.mxu0 0.0
      %2652 = vmatpush2.msra.mxu0 0.0
      %2653 = vmatprep.subr.mxu0 0.0
      %2654 = vmatpush2.msra.mxu0 0.0
      %2655 = vmatprep.subr.mxu0 0.0
      %2656 = vmatpush2.msra.mxu0 0.0
      %2657 = vmatprep.subr.mxu0 0.0
      %2658 = vmatpush2.msra.mxu0 0.0
      %2659 = vmatprep.subr.mxu0 0.0
      %2660 = vmatpush2.msra.mxu0 0.0
      %2661 = vmatprep.subr.mxu0 0.0
      %2662 = vmatpush2.msra.mxu0 0.0
      %2663 = vmatprep.subr.mxu0 0.0
      %2664 = vmatpush2.msra.mxu0 0.0
      %2665 = vmatprep.subr.mxu0 0.0
      %2666 = vmatpush2.msra.mxu0 0.0
      %2667 = vmatprep.subr.mxu0 0.0
      %2668 = vmatpush2.msra.mxu0 0.0
      %2669 = vmatprep.subr.mxu0 0.0
      %2670 = vmatpush2.msra.mxu0 0.0
      %2671 = vmatprep.subr.mxu0 0.0
      %2672 = vmatpush2.msra.mxu0 0.0
      %2673 = vmatprep.subr.mxu0 0.0
      %2674 = vmatpush2.msra.mxu0 0.0
      %2675 = vmatprep.subr.mxu0 0.0
      %2676 = vmatpush2.msra.mxu0 0.0
      %2677 = vmatprep.subr.mxu0 0.0
      %2678 = vmatpush2.msra.mxu0 0.0
      %2679 = vmatprep.subr.mxu0 0.0
      %2680 = vmatpush2.msra.mxu0 0.0
      %2681 = vmatprep.mubr.f32.mxu0 0.0
      %2682 = vmatmul.mubr.f32.gmra.mxu0 %v2584
      %v2683 = vpop.f32.mrf.mxu0
      %v2684 = vadd.f32 0.0, %v2683
      %v2685 = vpop.f32.mrf.mxu0
      %2686 = vmatprep.mubr.f32.mxu0 0.0
      %2687 = vmatmul.mubr.f32.gmra.mxu0 %v2585
      %v2688 = vpop.f32.mrf.mxu0
      %v2689 = vadd.f32 0.0, %v2688
      %v2690 = vpop.f32.mrf.mxu0
      %2691 = vmatprep.mubr.f32.mxu0 0.0
      %2692 = vmatmul.mubr.f32.gmra.mxu0 %v2586
      %v2693 = vpop.f32.mrf.mxu0
      %v2694 = vadd.f32 0.0, %v2693
      %v2695 = vpop.f32.mrf.mxu0
      %2696 = vmatprep.mubr.f32.mxu0 0.0
      %2697 = vmatmul.mubr.f32.gmra.mxu0 %v2587
      %v2698 = vpop.f32.mrf.mxu0
      %v2699 = vadd.f32 0.0, %v2698
      %v2700 = vpop.f32.mrf.mxu0
      %2701 = vmatprep.mubr.f32.mxu0 0.0
      %2702 = vmatmul.mubr.f32.gmra.mxu0 %v2588
      %v2703 = vpop.f32.mrf.mxu0
      %v2704 = vadd.f32 0.0, %v2703
      %v2705 = vpop.f32.mrf.mxu0
      %2706 = vmatprep.mubr.f32.mxu0 0.0
      %2707 = vmatmul.mubr.f32.gmra.mxu0 %v2589
      %v2708 = vpop.f32.mrf.mxu0
      %v2709 = vadd.f32 0.0, %v2708
      %v2710 = vpop.f32.mrf.mxu0
      %2711 = vmatprep.mubr.f32.mxu0 0.0
      %2712 = vmatmul.mubr.f32.gmra.mxu0 %v2590
      %v2713 = vpop.f32.mrf.mxu0
      %v2714 = vadd.f32 0.0, %v2713
      %v2715 = vpop.f32.mrf.mxu0
      %2716 = vmatprep.mubr.f32.mxu0 0.0
      %2717 = vmatmul.mubr.f32.gmra.mxu0 %v2591
      %v2718 = vpop.f32.mrf.mxu0
      %v2719 = vadd.f32 0.0, %v2718
      %v2720 = vpop.f32.mrf.mxu0
      %2721 = vmatprep.mubr.f32.mxu0 0.0
      %2722 = vmatmul.mubr.f32.gmra.mxu0 %v2592
      %v2723 = vpop.f32.mrf.mxu0
      %v2724 = vadd.f32 0.0, %v2723
      %v2725 = vpop.f32.mrf.mxu0
      %2726 = vmatprep.mubr.f32.mxu0 0.0
      %2727 = vmatmul.mubr.f32.gmra.mxu0 %v2593
      %v2728 = vpop.f32.mrf.mxu0
      %v2729 = vadd.f32 0.0, %v2728
      %v2730 = vpop.f32.mrf.mxu0
      %2731 = vmatprep.mubr.f32.mxu0 0.0
      %2732 = vmatmul.mubr.f32.gmra.mxu0 %v2594
      %v2733 = vpop.f32.mrf.mxu0
      %v2734 = vadd.f32 0.0, %v2733
      %v2735 = vpop.f32.mrf.mxu0
      %2736 = vmatprep.mubr.f32.mxu0 0.0
      %2737 = vmatmul.mubr.f32.gmra.mxu0 %v2595
      %v2738 = vpop.f32.mrf.mxu0
      %v2739 = vadd.f32 0.0, %v2738
      %v2740 = vpop.f32.mrf.mxu0
      %2741 = vmatprep.mubr.f32.mxu0 0.0
      %2742 = vmatmul.mubr.f32.gmra.mxu0 %v2596
      %v2743 = vpop.f32.mrf.mxu0
      %v2744 = vadd.f32 0.0, %v2743
      %v2745 = vpop.f32.mrf.mxu0
      %2746 = vmatprep.mubr.f32.mxu0 0.0
      %2747 = vmatmul.mubr.f32.gmra.mxu0 %v2597
      %v2748 = vpop.f32.mrf.mxu0
      %v2749 = vadd.f32 0.0, %v2748
      %v2750 = vpop.f32.mrf.mxu0
      %2751 = vmatprep.mubr.f32.mxu0 0.0
      %2752 = vmatmul.mubr.f32.gmra.mxu0 %v2598
      %v2753 = vpop.f32.mrf.mxu0
      %v2754 = vadd.f32 0.0, %v2753
      %v2755 = vpop.f32.mrf.mxu0
      %2756 = vmatprep.mubr.f32.mxu0 0.0
      %2757 = vmatmul.mubr.f32.gmra.mxu0 %v2599
      %v2758 = vpop.f32.mrf.mxu0
      %v2759 = vadd.f32 0.0, %v2758
      %v2760 = vpop.f32.mrf.mxu0
      %2761 = vdwg.mxu0
      %v2762 = vadd.f32 %v2552, %v2684
      %v2763 = vadd.f32 %v2553, %v2689
      %v2764 = vadd.f32 %v2554, %v2694
      %v2765 = vadd.f32 %v2555, %v2699
      %v2766 = vadd.f32 %v2556, %v2704
      %v2767 = vadd.f32 %v2557, %v2709
      %v2768 = vadd.f32 %v2558, %v2714
      %v2769 = vadd.f32 %v2559, %v2719
      %v2770 = vadd.f32 %v2560, %v2724
      %v2771 = vadd.f32 %v2561, %v2729
      %v2772 = vadd.f32 %v2562, %v2734
      %v2773 = vadd.f32 %v2563, %v2739
      %v2774 = vadd.f32 %v2564, %v2744
      %v2775 = vadd.f32 %v2565, %v2749
      %v2776 = vadd.f32 %v2566, %v2754
      %v2777 = vadd.f32 %v2567, %v2759
      %s2778 = scalar_lea.vmem %s170, 256
      %2779 = vst [vmem:[%s2778] sm:$0xff] %v2762
      %2780 = vst [vmem:[%s2778 + $0x8] sm:$0xff] %v2763
      %2781 = vst [vmem:[%s2778 + $0x10] sm:$0xff] %v2764
      %2782 = vst [vmem:[%s2778 + $0x18] sm:$0xff] %v2765
      %2783 = vst [vmem:[%s2778 + $0x20] sm:$0xff] %v2766
      %2784 = vst [vmem:[%s2778 + $0x28] sm:$0xff] %v2767
      %2785 = vst [vmem:[%s2778 + $0x30] sm:$0xff] %v2768
      %2786 = vst [vmem:[%s2778 + $0x38] sm:$0xff] %v2769
      %2787 = vst [vmem:[%s2778 + $0x40] sm:$0xff] %v2770
      %2788 = vst [vmem:[%s2778 + $0x48] sm:$0xff] %v2771
      %2789 = vst [vmem:[%s2778 + $0x50] sm:$0xff] %v2772
      %2790 = vst [vmem:[%s2778 + $0x58] sm:$0xff] %v2773
      %2791 = vst [vmem:[%s2778 + $0x60] sm:$0xff] %v2774
      %2792 = vst [vmem:[%s2778 + $0x68] sm:$0xff] %v2775
      %2793 = vst [vmem:[%s2778 + $0x70] sm:$0xff] %v2776
      %2794 = vst [vmem:[%s2778 + $0x78] sm:$0xff] %v2777
      %v2795 = vld [vmem:[%s165 + $0x97] sm:$0xff]
      %v2796 = vld [vmem:[%s165 + $0x9f] sm:$0xff]
      %v2797 = vld [vmem:[%s165 + $0xa7] sm:$0xff]
      %v2798 = vld [vmem:[%s165 + $0xaf] sm:$0xff]
      %v2799 = vld [vmem:[%s165 + $0xb7] sm:$0xff]
      %v2800 = vld [vmem:[%s165 + $0xbf] sm:$0xff]
      %v2801 = vld [vmem:[%s165 + $0xc7] sm:$0xff]
      %v2802 = vld [vmem:[%s165 + $0xcf] sm:$0xff]
      %v2803 = vld [vmem:[%s165 + $0xd7] sm:$0xff]
      %v2804 = vld [vmem:[%s165 + $0xdf] sm:$0xff]
      %v2805 = vld [vmem:[%s165 + $0xe7] sm:$0xff]
      %v2806 = vld [vmem:[%s165 + $0xef] sm:$0xff]
      %v2807 = vld [vmem:[%s165 + $0xf7] sm:$0xff]
      %v2808 = vld [vmem:[%s165 + $0xff] sm:$0xff]
      %v2809 = vld [vmem:[%s165 + $0x107] sm:$0xff]
      %v2810 = vld [vmem:[%s165 + $0x10f] sm:$0xff]
      %v2811 = vsel %vm275, %v2795, 0.0
      %v2812 = vsel %vm276, %v2796, 0.0
      %v2813 = vsel %vm277, %v2797, 0.0
      %v2814 = vsel %vm278, %v2798, 0.0
      %v2815 = vsel %vm279, %v2799, 0.0
      %v2816 = vsel %vm280, %v2800, 0.0
      %v2817 = vsel %vm281, %v2801, 0.0
      %v2818 = vsel %vm282, %v2802, 0.0
      %v2819 = vsel %vm283, %v2803, 0.0
      %v2820 = vsel %vm284, %v2804, 0.0
      %v2821 = vsel %vm285, %v2805, 0.0
      %v2822 = vsel %vm286, %v2806, 0.0
      %v2823 = vsel %vm287, %v2807, 0.0
      %v2824 = vsel %vm288, %v2808, 0.0
      %v2825 = vsel %vm289, %v2809, 0.0
      %v2826 = vsel %vm290, %v2810, 0.0
      %v2827 = vld [vmem:[%s1] sm:$0xff]
      %v2828 = vld [vmem:[%s1 + $0x8] sm:$0xff]
      %v2829 = vld [vmem:[%s1 + $0x10] sm:$0xff]
      %v2830 = vld [vmem:[%s1 + $0x18] sm:$0xff]
      %v2831 = vld [vmem:[%s1 + $0x20] sm:$0xff]
      %v2832 = vld [vmem:[%s1 + $0x28] sm:$0xff]
      %v2833 = vld [vmem:[%s1 + $0x30] sm:$0xff]
      %v2834 = vld [vmem:[%s1 + $0x38] sm:$0xff]
      %v2835 = vld [vmem:[%s1 + $0x40] sm:$0xff]
      %v2836 = vld [vmem:[%s1 + $0x48] sm:$0xff]
      %v2837 = vld [vmem:[%s1 + $0x50] sm:$0xff]
      %v2838 = vld [vmem:[%s1 + $0x58] sm:$0xff]
      %v2839 = vld [vmem:[%s1 + $0x60] sm:$0xff]
      %v2840 = vld [vmem:[%s1 + $0x68] sm:$0xff]
      %v2841 = vld [vmem:[%s1 + $0x70] sm:$0xff]
      %v2842 = vld [vmem:[%s1 + $0x78] sm:$0xff]
      %2843 = vmatprep.subr.mxu0 0.0
      %2844 = vmatpush1.msra.mxu0 %v2842
      %2845 = vmatprep.subr.mxu0 0.0
      %2846 = vmatpush1.msra.mxu0 %v2841
      %2847 = vmatprep.subr.mxu0 0.0
      %2848 = vmatpush1.msra.mxu0 %v2840
      %2849 = vmatprep.subr.mxu0 0.0
      %2850 = vmatpush1.msra.mxu0 %v2839
      %2851 = vmatprep.subr.mxu0 0.0
      %2852 = vmatpush1.msra.mxu0 %v2838
      %2853 = vmatprep.subr.mxu0 0.0
      %2854 = vmatpush1.msra.mxu0 %v2837
      %2855 = vmatprep.subr.mxu0 0.0
      %2856 = vmatpush1.msra.mxu0 %v2836
      %2857 = vmatprep.subr.mxu0 0.0
      %2858 = vmatpush1.msra.mxu0 %v2835
      %2859 = vmatprep.subr.mxu0 0.0
      %2860 = vmatpush1.msra.mxu0 %v2834
      %2861 = vmatprep.subr.mxu0 0.0
      %2862 = vmatpush1.msra.mxu0 %v2833
      %2863 = vmatprep.subr.mxu0 0.0
      %2864 = vmatpush1.msra.mxu0 %v2832
      %2865 = vmatprep.subr.mxu0 0.0
      %2866 = vmatpush1.msra.mxu0 %v2831
      %2867 = vmatprep.subr.mxu0 0.0
      %2868 = vmatpush1.msra.mxu0 %v2830
      %2869 = vmatprep.subr.mxu0 0.0
      %2870 = vmatpush1.msra.mxu0 %v2829
      %2871 = vmatprep.subr.mxu0 0.0
      %2872 = vmatpush1.msra.mxu0 %v2828
      %2873 = vmatprep.subr.mxu0 0.0
      %2874 = vmatpush1.msra.mxu0 %v2827
      %2875 = vmatprep.subr.mxu0 0.0
      %2876 = vmatpush2.msra.mxu0 0.0
      %2877 = vmatprep.subr.mxu0 0.0
      %2878 = vmatpush2.msra.mxu0 0.0
      %2879 = vmatprep.subr.mxu0 0.0
      %2880 = vmatpush2.msra.mxu0 0.0
      %2881 = vmatprep.subr.mxu0 0.0
      %2882 = vmatpush2.msra.mxu0 0.0
      %2883 = vmatprep.subr.mxu0 0.0
      %2884 = vmatpush2.msra.mxu0 0.0
      %2885 = vmatprep.subr.mxu0 0.0
      %2886 = vmatpush2.msra.mxu0 0.0
      %2887 = vmatprep.subr.mxu0 0.0
      %2888 = vmatpush2.msra.mxu0 0.0
      %2889 = vmatprep.subr.mxu0 0.0
      %2890 = vmatpush2.msra.mxu0 0.0
      %2891 = vmatprep.subr.mxu0 0.0
      %2892 = vmatpush2.msra.mxu0 0.0
      %2893 = vmatprep.subr.mxu0 0.0
      %2894 = vmatpush2.msra.mxu0 0.0
      %2895 = vmatprep.subr.mxu0 0.0
      %2896 = vmatpush2.msra.mxu0 0.0
      %2897 = vmatprep.subr.mxu0 0.0
      %2898 = vmatpush2.msra.mxu0 0.0
      %2899 = vmatprep.subr.mxu0 0.0
      %2900 = vmatpush2.msra.mxu0 0.0
      %2901 = vmatprep.subr.mxu0 0.0
      %2902 = vmatpush2.msra.mxu0 0.0
      %2903 = vmatprep.subr.mxu0 0.0
      %2904 = vmatpush2.msra.mxu0 0.0
      %2905 = vmatprep.subr.mxu0 0.0
      %2906 = vmatpush2.msra.mxu0 0.0
      %2907 = vmatprep.mubr.f32.mxu0 0.0
      %2908 = vmatmul.mubr.f32.gmra.mxu0 %v2811
      %v2909 = vpop.f32.mrf.mxu0
      %v2910 = vadd.f32 0.0, %v2909
      %v2911 = vpop.f32.mrf.mxu0
      %2912 = vmatprep.mubr.f32.mxu0 0.0
      %2913 = vmatmul.mubr.f32.gmra.mxu0 %v2812
      %v2914 = vpop.f32.mrf.mxu0
      %v2915 = vadd.f32 0.0, %v2914
      %v2916 = vpop.f32.mrf.mxu0
      %2917 = vmatprep.mubr.f32.mxu0 0.0
      %2918 = vmatmul.mubr.f32.gmra.mxu0 %v2813
      %v2919 = vpop.f32.mrf.mxu0
      %v2920 = vadd.f32 0.0, %v2919
      %v2921 = vpop.f32.mrf.mxu0
      %2922 = vmatprep.mubr.f32.mxu0 0.0
      %2923 = vmatmul.mubr.f32.gmra.mxu0 %v2814
      %v2924 = vpop.f32.mrf.mxu0
      %v2925 = vadd.f32 0.0, %v2924
      %v2926 = vpop.f32.mrf.mxu0
      %2927 = vmatprep.mubr.f32.mxu0 0.0
      %2928 = vmatmul.mubr.f32.gmra.mxu0 %v2815
      %v2929 = vpop.f32.mrf.mxu0
      %v2930 = vadd.f32 0.0, %v2929
      %v2931 = vpop.f32.mrf.mxu0
      %2932 = vmatprep.mubr.f32.mxu0 0.0
      %2933 = vmatmul.mubr.f32.gmra.mxu0 %v2816
      %v2934 = vpop.f32.mrf.mxu0
      %v2935 = vadd.f32 0.0, %v2934
      %v2936 = vpop.f32.mrf.mxu0
      %2937 = vmatprep.mubr.f32.mxu0 0.0
      %2938 = vmatmul.mubr.f32.gmra.mxu0 %v2817
      %v2939 = vpop.f32.mrf.mxu0
      %v2940 = vadd.f32 0.0, %v2939
      %v2941 = vpop.f32.mrf.mxu0
      %2942 = vmatprep.mubr.f32.mxu0 0.0
      %2943 = vmatmul.mubr.f32.gmra.mxu0 %v2818
      %v2944 = vpop.f32.mrf.mxu0
      %v2945 = vadd.f32 0.0, %v2944
      %v2946 = vpop.f32.mrf.mxu0
      %2947 = vmatprep.mubr.f32.mxu0 0.0
      %2948 = vmatmul.mubr.f32.gmra.mxu0 %v2819
      %v2949 = vpop.f32.mrf.mxu0
      %v2950 = vadd.f32 0.0, %v2949
      %v2951 = vpop.f32.mrf.mxu0
      %2952 = vmatprep.mubr.f32.mxu0 0.0
      %2953 = vmatmul.mubr.f32.gmra.mxu0 %v2820
      %v2954 = vpop.f32.mrf.mxu0
      %v2955 = vadd.f32 0.0, %v2954
      %v2956 = vpop.f32.mrf.mxu0
      %2957 = vmatprep.mubr.f32.mxu0 0.0
      %2958 = vmatmul.mubr.f32.gmra.mxu0 %v2821
      %v2959 = vpop.f32.mrf.mxu0
      %v2960 = vadd.f32 0.0, %v2959
      %v2961 = vpop.f32.mrf.mxu0
      %2962 = vmatprep.mubr.f32.mxu0 0.0
      %2963 = vmatmul.mubr.f32.gmra.mxu0 %v2822
      %v2964 = vpop.f32.mrf.mxu0
      %v2965 = vadd.f32 0.0, %v2964
      %v2966 = vpop.f32.mrf.mxu0
      %2967 = vmatprep.mubr.f32.mxu0 0.0
      %2968 = vmatmul.mubr.f32.gmra.mxu0 %v2823
      %v2969 = vpop.f32.mrf.mxu0
      %v2970 = vadd.f32 0.0, %v2969
      %v2971 = vpop.f32.mrf.mxu0
      %2972 = vmatprep.mubr.f32.mxu0 0.0
      %2973 = vmatmul.mubr.f32.gmra.mxu0 %v2824
      %v2974 = vpop.f32.mrf.mxu0
      %v2975 = vadd.f32 0.0, %v2974
      %v2976 = vpop.f32.mrf.mxu0
      %2977 = vmatprep.mubr.f32.mxu0 0.0
      %2978 = vmatmul.mubr.f32.gmra.mxu0 %v2825
      %v2979 = vpop.f32.mrf.mxu0
      %v2980 = vadd.f32 0.0, %v2979
      %v2981 = vpop.f32.mrf.mxu0
      %2982 = vmatprep.mubr.f32.mxu0 0.0
      %2983 = vmatmul.mubr.f32.gmra.mxu0 %v2826
      %v2984 = vpop.f32.mrf.mxu0
      %v2985 = vadd.f32 0.0, %v2984
      %v2986 = vpop.f32.mrf.mxu0
      %2987 = vdwg.mxu0
      %v2988 = vadd.f32 %v241, %v2910
      %v2989 = vadd.f32 %v241, %v2915
      %v2990 = vadd.f32 %v241, %v2920
      %v2991 = vadd.f32 %v241, %v2925
      %v2992 = vadd.f32 %v241, %v2930
      %v2993 = vadd.f32 %v241, %v2935
      %v2994 = vadd.f32 %v241, %v2940
      %v2995 = vadd.f32 %v241, %v2945
      %v2996 = vadd.f32 %v241, %v2950
      %v2997 = vadd.f32 %v241, %v2955
      %v2998 = vadd.f32 %v241, %v2960
      %v2999 = vadd.f32 %v241, %v2965
      %v3000 = vadd.f32 %v241, %v2970
      %v3001 = vadd.f32 %v241, %v2975
      %v3002 = vadd.f32 %v241, %v2980
      %v3003 = vadd.f32 %v241, %v2985
      %v3004 = vld [vmem:[%s165 + $0x98] sm:$0xff]
      %v3005 = vld [vmem:[%s165 + $0xa0] sm:$0xff]
      %v3006 = vld [vmem:[%s165 + $0xa8] sm:$0xff]
      %v3007 = vld [vmem:[%s165 + $0xb0] sm:$0xff]
      %v3008 = vld [vmem:[%s165 + $0xb8] sm:$0xff]
      %v3009 = vld [vmem:[%s165 + $0xc0] sm:$0xff]
      %v3010 = vld [vmem:[%s165 + $0xc8] sm:$0xff]
      %v3011 = vld [vmem:[%s165 + $0xd0] sm:$0xff]
      %v3012 = vld [vmem:[%s165 + $0xd8] sm:$0xff]
      %v3013 = vld [vmem:[%s165 + $0xe0] sm:$0xff]
      %v3014 = vld [vmem:[%s165 + $0xe8] sm:$0xff]
      %v3015 = vld [vmem:[%s165 + $0xf0] sm:$0xff]
      %v3016 = vld [vmem:[%s165 + $0xf8] sm:$0xff]
      %v3017 = vld [vmem:[%s165 + $0x100] sm:$0xff]
      %v3018 = vld [vmem:[%s165 + $0x108] sm:$0xff]
      %v3019 = vld [vmem:[%s165 + $0x110] sm:$0xff]
      %v3020 = vld [vmem:[%s500] sm:$0xff]
      %v3021 = vld [vmem:[%s500 + $0x8] sm:$0xff]
      %v3022 = vld [vmem:[%s500 + $0x10] sm:$0xff]
      %v3023 = vld [vmem:[%s500 + $0x18] sm:$0xff]
      %v3024 = vld [vmem:[%s500 + $0x20] sm:$0xff]
      %v3025 = vld [vmem:[%s500 + $0x28] sm:$0xff]
      %v3026 = vld [vmem:[%s500 + $0x30] sm:$0xff]
      %v3027 = vld [vmem:[%s500 + $0x38] sm:$0xff]
      %v3028 = vld [vmem:[%s500 + $0x40] sm:$0xff]
      %v3029 = vld [vmem:[%s500 + $0x48] sm:$0xff]
      %v3030 = vld [vmem:[%s500 + $0x50] sm:$0xff]
      %v3031 = vld [vmem:[%s500 + $0x58] sm:$0xff]
      %v3032 = vld [vmem:[%s500 + $0x60] sm:$0xff]
      %v3033 = vld [vmem:[%s500 + $0x68] sm:$0xff]
      %v3034 = vld [vmem:[%s500 + $0x70] sm:$0xff]
      %v3035 = vld [vmem:[%s500 + $0x78] sm:$0xff]
      %3036 = vmatprep.subr.mxu0 0.0
      %3037 = vmatpush1.msra.mxu0 %v3035
      %3038 = vmatprep.subr.mxu0 0.0
      %3039 = vmatpush1.msra.mxu0 %v3034
      %3040 = vmatprep.subr.mxu0 0.0
      %3041 = vmatpush1.msra.mxu0 %v3033
      %3042 = vmatprep.subr.mxu0 0.0
      %3043 = vmatpush1.msra.mxu0 %v3032
      %3044 = vmatprep.subr.mxu0 0.0
      %3045 = vmatpush1.msra.mxu0 %v3031
      %3046 = vmatprep.subr.mxu0 0.0
      %3047 = vmatpush1.msra.mxu0 %v3030
      %3048 = vmatprep.subr.mxu0 0.0
      %3049 = vmatpush1.msra.mxu0 %v3029
      %3050 = vmatprep.subr.mxu0 0.0
      %3051 = vmatpush1.msra.mxu0 %v3028
      %3052 = vmatprep.subr.mxu0 0.0
      %3053 = vmatpush1.msra.mxu0 %v3027
      %3054 = vmatprep.subr.mxu0 0.0
      %3055 = vmatpush1.msra.mxu0 %v3026
      %3056 = vmatprep.subr.mxu0 0.0
      %3057 = vmatpush1.msra.mxu0 %v3025
      %3058 = vmatprep.subr.mxu0 0.0
      %3059 = vmatpush1.msra.mxu0 %v3024
      %3060 = vmatprep.subr.mxu0 0.0
      %3061 = vmatpush1.msra.mxu0 %v3023
      %3062 = vmatprep.subr.mxu0 0.0
      %3063 = vmatpush1.msra.mxu0 %v3022
      %3064 = vmatprep.subr.mxu0 0.0
      %3065 = vmatpush1.msra.mxu0 %v3021
      %3066 = vmatprep.subr.mxu0 0.0
      %3067 = vmatpush1.msra.mxu0 %v3020
      %3068 = vmatprep.subr.mxu0 0.0
      %3069 = vmatpush2.msra.mxu0 0.0
      %3070 = vmatprep.subr.mxu0 0.0
      %3071 = vmatpush2.msra.mxu0 0.0
      %3072 = vmatprep.subr.mxu0 0.0
      %3073 = vmatpush2.msra.mxu0 0.0
      %3074 = vmatprep.subr.mxu0 0.0
      %3075 = vmatpush2.msra.mxu0 0.0
      %3076 = vmatprep.subr.mxu0 0.0
      %3077 = vmatpush2.msra.mxu0 0.0
      %3078 = vmatprep.subr.mxu0 0.0
      %3079 = vmatpush2.msra.mxu0 0.0
      %3080 = vmatprep.subr.mxu0 0.0
      %3081 = vmatpush2.msra.mxu0 0.0
      %3082 = vmatprep.subr.mxu0 0.0
      %3083 = vmatpush2.msra.mxu0 0.0
      %3084 = vmatprep.subr.mxu0 0.0
      %3085 = vmatpush2.msra.mxu0 0.0
      %3086 = vmatprep.subr.mxu0 0.0
      %3087 = vmatpush2.msra.mxu0 0.0
      %3088 = vmatprep.subr.mxu0 0.0
      %3089 = vmatpush2.msra.mxu0 0.0
      %3090 = vmatprep.subr.mxu0 0.0
      %3091 = vmatpush2.msra.mxu0 0.0
      %3092 = vmatprep.subr.mxu0 0.0
      %3093 = vmatpush2.msra.mxu0 0.0
      %3094 = vmatprep.subr.mxu0 0.0
      %3095 = vmatpush2.msra.mxu0 0.0
      %3096 = vmatprep.subr.mxu0 0.0
      %3097 = vmatpush2.msra.mxu0 0.0
      %3098 = vmatprep.subr.mxu0 0.0
      %3099 = vmatpush2.msra.mxu0 0.0
      %3100 = vmatprep.mubr.f32.mxu0 0.0
      %3101 = vmatmul.mubr.f32.gmra.mxu0 %v3004
      %v3102 = vpop.f32.mrf.mxu0
      %v3103 = vadd.f32 0.0, %v3102
      %v3104 = vpop.f32.mrf.mxu0
      %3105 = vmatprep.mubr.f32.mxu0 0.0
      %3106 = vmatmul.mubr.f32.gmra.mxu0 %v3005
      %v3107 = vpop.f32.mrf.mxu0
      %v3108 = vadd.f32 0.0, %v3107
      %v3109 = vpop.f32.mrf.mxu0
      %3110 = vmatprep.mubr.f32.mxu0 0.0
      %3111 = vmatmul.mubr.f32.gmra.mxu0 %v3006
      %v3112 = vpop.f32.mrf.mxu0
      %v3113 = vadd.f32 0.0, %v3112
      %v3114 = vpop.f32.mrf.mxu0
      %3115 = vmatprep.mubr.f32.mxu0 0.0
      %3116 = vmatmul.mubr.f32.gmra.mxu0 %v3007
      %v3117 = vpop.f32.mrf.mxu0
      %v3118 = vadd.f32 0.0, %v3117
      %v3119 = vpop.f32.mrf.mxu0
      %3120 = vmatprep.mubr.f32.mxu0 0.0
      %3121 = vmatmul.mubr.f32.gmra.mxu0 %v3008
      %v3122 = vpop.f32.mrf.mxu0
      %v3123 = vadd.f32 0.0, %v3122
      %v3124 = vpop.f32.mrf.mxu0
      %3125 = vmatprep.mubr.f32.mxu0 0.0
      %3126 = vmatmul.mubr.f32.gmra.mxu0 %v3009
      %v3127 = vpop.f32.mrf.mxu0
      %v3128 = vadd.f32 0.0, %v3127
      %v3129 = vpop.f32.mrf.mxu0
      %3130 = vmatprep.mubr.f32.mxu0 0.0
      %3131 = vmatmul.mubr.f32.gmra.mxu0 %v3010
      %v3132 = vpop.f32.mrf.mxu0
      %v3133 = vadd.f32 0.0, %v3132
      %v3134 = vpop.f32.mrf.mxu0
      %3135 = vmatprep.mubr.f32.mxu0 0.0
      %3136 = vmatmul.mubr.f32.gmra.mxu0 %v3011
      %v3137 = vpop.f32.mrf.mxu0
      %v3138 = vadd.f32 0.0, %v3137
      %v3139 = vpop.f32.mrf.mxu0
      %3140 = vmatprep.mubr.f32.mxu0 0.0
      %3141 = vmatmul.mubr.f32.gmra.mxu0 %v3012
      %v3142 = vpop.f32.mrf.mxu0
      %v3143 = vadd.f32 0.0, %v3142
      %v3144 = vpop.f32.mrf.mxu0
      %3145 = vmatprep.mubr.f32.mxu0 0.0
      %3146 = vmatmul.mubr.f32.gmra.mxu0 %v3013
      %v3147 = vpop.f32.mrf.mxu0
      %v3148 = vadd.f32 0.0, %v3147
      %v3149 = vpop.f32.mrf.mxu0
      %3150 = vmatprep.mubr.f32.mxu0 0.0
      %3151 = vmatmul.mubr.f32.gmra.mxu0 %v3014
      %v3152 = vpop.f32.mrf.mxu0
      %v3153 = vadd.f32 0.0, %v3152
      %v3154 = vpop.f32.mrf.mxu0
      %3155 = vmatprep.mubr.f32.mxu0 0.0
      %3156 = vmatmul.mubr.f32.gmra.mxu0 %v3015
      %v3157 = vpop.f32.mrf.mxu0
      %v3158 = vadd.f32 0.0, %v3157
      %v3159 = vpop.f32.mrf.mxu0
      %3160 = vmatprep.mubr.f32.mxu0 0.0
      %3161 = vmatmul.mubr.f32.gmra.mxu0 %v3016
      %v3162 = vpop.f32.mrf.mxu0
      %v3163 = vadd.f32 0.0, %v3162
      %v3164 = vpop.f32.mrf.mxu0
      %3165 = vmatprep.mubr.f32.mxu0 0.0
      %3166 = vmatmul.mubr.f32.gmra.mxu0 %v3017
      %v3167 = vpop.f32.mrf.mxu0
      %v3168 = vadd.f32 0.0, %v3167
      %v3169 = vpop.f32.mrf.mxu0
      %3170 = vmatprep.mubr.f32.mxu0 0.0
      %3171 = vmatmul.mubr.f32.gmra.mxu0 %v3018
      %v3172 = vpop.f32.mrf.mxu0
      %v3173 = vadd.f32 0.0, %v3172
      %v3174 = vpop.f32.mrf.mxu0
      %3175 = vmatprep.mubr.f32.mxu0 0.0
      %3176 = vmatmul.mubr.f32.gmra.mxu0 %v3019
      %v3177 = vpop.f32.mrf.mxu0
      %v3178 = vadd.f32 0.0, %v3177
      %v3179 = vpop.f32.mrf.mxu0
      %3180 = vdwg.mxu0
      %v3181 = vadd.f32 %v2988, %v3103
      %v3182 = vadd.f32 %v2989, %v3108
      %v3183 = vadd.f32 %v2990, %v3113
      %v3184 = vadd.f32 %v2991, %v3118
      %v3185 = vadd.f32 %v2992, %v3123
      %v3186 = vadd.f32 %v2993, %v3128
      %v3187 = vadd.f32 %v2994, %v3133
      %v3188 = vadd.f32 %v2995, %v3138
      %v3189 = vadd.f32 %v2996, %v3143
      %v3190 = vadd.f32 %v2997, %v3148
      %v3191 = vadd.f32 %v2998, %v3153
      %v3192 = vadd.f32 %v2999, %v3158
      %v3193 = vadd.f32 %v3000, %v3163
      %v3194 = vadd.f32 %v3001, %v3168
      %v3195 = vadd.f32 %v3002, %v3173
      %v3196 = vadd.f32 %v3003, %v3178
      %v3197 = vld [vmem:[%s165 + $0x99] sm:$0xff]
      %v3198 = vld [vmem:[%s165 + $0xa1] sm:$0xff]
      %v3199 = vld [vmem:[%s165 + $0xa9] sm:$0xff]
      %v3200 = vld [vmem:[%s165 + $0xb1] sm:$0xff]
      %v3201 = vld [vmem:[%s165 + $0xb9] sm:$0xff]
      %v3202 = vld [vmem:[%s165 + $0xc1] sm:$0xff]
      %v3203 = vld [vmem:[%s165 + $0xc9] sm:$0xff]
      %v3204 = vld [vmem:[%s165 + $0xd1] sm:$0xff]
      %v3205 = vld [vmem:[%s165 + $0xd9] sm:$0xff]
      %v3206 = vld [vmem:[%s165 + $0xe1] sm:$0xff]
      %v3207 = vld [vmem:[%s165 + $0xe9] sm:$0xff]
      %v3208 = vld [vmem:[%s165 + $0xf1] sm:$0xff]
      %v3209 = vld [vmem:[%s165 + $0xf9] sm:$0xff]
      %v3210 = vld [vmem:[%s165 + $0x101] sm:$0xff]
      %v3211 = vld [vmem:[%s165 + $0x109] sm:$0xff]
      %v3212 = vld [vmem:[%s165 + $0x111] sm:$0xff]
      %v3213 = vsel %vm710, %v3197, 0.0
      %v3214 = vsel %vm711, %v3198, 0.0
      %v3215 = vsel %vm712, %v3199, 0.0
      %v3216 = vsel %vm713, %v3200, 0.0
      %v3217 = vsel %vm714, %v3201, 0.0
      %v3218 = vsel %vm715, %v3202, 0.0
      %v3219 = vsel %vm716, %v3203, 0.0
      %v3220 = vsel %vm717, %v3204, 0.0
      %v3221 = vsel %vm718, %v3205, 0.0
      %v3222 = vsel %vm719, %v3206, 0.0
      %v3223 = vsel %vm720, %v3207, 0.0
      %v3224 = vsel %vm721, %v3208, 0.0
      %v3225 = vsel %vm722, %v3209, 0.0
      %v3226 = vsel %vm723, %v3210, 0.0
      %v3227 = vsel %vm724, %v3211, 0.0
      %v3228 = vsel %vm725, %v3212, 0.0
      %v3229 = vld [vmem:[%s742] sm:$0xff]
      %v3230 = vld [vmem:[%s742 + $0x8] sm:$0xff]
      %v3231 = vld [vmem:[%s742 + $0x10] sm:$0xff]
      %v3232 = vld [vmem:[%s742 + $0x18] sm:$0xff]
      %v3233 = vld [vmem:[%s742 + $0x20] sm:$0xff]
      %v3234 = vld [vmem:[%s742 + $0x28] sm:$0xff]
      %v3235 = vld [vmem:[%s742 + $0x30] sm:$0xff]
      %v3236 = vld [vmem:[%s742 + $0x38] sm:$0xff]
      %v3237 = vld [vmem:[%s742 + $0x40] sm:$0xff]
      %v3238 = vld [vmem:[%s742 + $0x48] sm:$0xff]
      %v3239 = vld [vmem:[%s742 + $0x50] sm:$0xff]
      %v3240 = vld [vmem:[%s742 + $0x58] sm:$0xff]
      %v3241 = vld [vmem:[%s742 + $0x60] sm:$0xff]
      %v3242 = vld [vmem:[%s742 + $0x68] sm:$0xff]
      %v3243 = vld [vmem:[%s742 + $0x70] sm:$0xff]
      %v3244 = vld [vmem:[%s742 + $0x78] sm:$0xff]
      %3245 = vmatprep.subr.mxu0 0.0
      %3246 = vmatpush1.msra.mxu0 %v3244
      %3247 = vmatprep.subr.mxu0 0.0
      %3248 = vmatpush1.msra.mxu0 %v3243
      %3249 = vmatprep.subr.mxu0 0.0
      %3250 = vmatpush1.msra.mxu0 %v3242
      %3251 = vmatprep.subr.mxu0 0.0
      %3252 = vmatpush1.msra.mxu0 %v3241
      %3253 = vmatprep.subr.mxu0 0.0
      %3254 = vmatpush1.msra.mxu0 %v3240
      %3255 = vmatprep.subr.mxu0 0.0
      %3256 = vmatpush1.msra.mxu0 %v3239
      %3257 = vmatprep.subr.mxu0 0.0
      %3258 = vmatpush1.msra.mxu0 %v3238
      %3259 = vmatprep.subr.mxu0 0.0
      %3260 = vmatpush1.msra.mxu0 %v3237
      %3261 = vmatprep.subr.mxu0 0.0
      %3262 = vmatpush1.msra.mxu0 %v3236
      %3263 = vmatprep.subr.mxu0 0.0
      %3264 = vmatpush1.msra.mxu0 %v3235
      %3265 = vmatprep.subr.mxu0 0.0
      %3266 = vmatpush1.msra.mxu0 %v3234
      %3267 = vmatprep.subr.mxu0 0.0
      %3268 = vmatpush1.msra.mxu0 %v3233
      %3269 = vmatprep.subr.mxu0 0.0
      %3270 = vmatpush1.msra.mxu0 %v3232
      %3271 = vmatprep.subr.mxu0 0.0
      %3272 = vmatpush1.msra.mxu0 %v3231
      %3273 = vmatprep.subr.mxu0 0.0
      %3274 = vmatpush1.msra.mxu0 %v3230
      %3275 = vmatprep.subr.mxu0 0.0
      %3276 = vmatpush1.msra.mxu0 %v3229
      %3277 = vmatprep.subr.mxu0 0.0
      %3278 = vmatpush2.msra.mxu0 0.0
      %3279 = vmatprep.subr.mxu0 0.0
      %3280 = vmatpush2.msra.mxu0 0.0
      %3281 = vmatprep.subr.mxu0 0.0
      %3282 = vmatpush2.msra.mxu0 0.0
      %3283 = vmatprep.subr.mxu0 0.0
      %3284 = vmatpush2.msra.mxu0 0.0
      %3285 = vmatprep.subr.mxu0 0.0
      %3286 = vmatpush2.msra.mxu0 0.0
      %3287 = vmatprep.subr.mxu0 0.0
      %3288 = vmatpush2.msra.mxu0 0.0
      %3289 = vmatprep.subr.mxu0 0.0
      %3290 = vmatpush2.msra.mxu0 0.0
      %3291 = vmatprep.subr.mxu0 0.0
      %3292 = vmatpush2.msra.mxu0 0.0
      %3293 = vmatprep.subr.mxu0 0.0
      %3294 = vmatpush2.msra.mxu0 0.0
      %3295 = vmatprep.subr.mxu0 0.0
      %3296 = vmatpush2.msra.mxu0 0.0
      %3297 = vmatprep.subr.mxu0 0.0
      %3298 = vmatpush2.msra.mxu0 0.0
      %3299 = vmatprep.subr.mxu0 0.0
      %3300 = vmatpush2.msra.mxu0 0.0
      %3301 = vmatprep.subr.mxu0 0.0
      %3302 = vmatpush2.msra.mxu0 0.0
      %3303 = vmatprep.subr.mxu0 0.0
      %3304 = vmatpush2.msra.mxu0 0.0
      %3305 = vmatprep.subr.mxu0 0.0
      %3306 = vmatpush2.msra.mxu0 0.0
      %3307 = vmatprep.subr.mxu0 0.0
      %3308 = vmatpush2.msra.mxu0 0.0
      %3309 = vmatprep.mubr.f32.mxu0 0.0
      %3310 = vmatmul.mubr.f32.gmra.mxu0 %v3213
      %v3311 = vpop.f32.mrf.mxu0
      %v3312 = vadd.f32 0.0, %v3311
      %v3313 = vpop.f32.mrf.mxu0
      %3314 = vmatprep.mubr.f32.mxu0 0.0
      %3315 = vmatmul.mubr.f32.gmra.mxu0 %v3214
      %v3316 = vpop.f32.mrf.mxu0
      %v3317 = vadd.f32 0.0, %v3316
      %v3318 = vpop.f32.mrf.mxu0
      %3319 = vmatprep.mubr.f32.mxu0 0.0
      %3320 = vmatmul.mubr.f32.gmra.mxu0 %v3215
      %v3321 = vpop.f32.mrf.mxu0
      %v3322 = vadd.f32 0.0, %v3321
      %v3323 = vpop.f32.mrf.mxu0
      %3324 = vmatprep.mubr.f32.mxu0 0.0
      %3325 = vmatmul.mubr.f32.gmra.mxu0 %v3216
      %v3326 = vpop.f32.mrf.mxu0
      %v3327 = vadd.f32 0.0, %v3326
      %v3328 = vpop.f32.mrf.mxu0
      %3329 = vmatprep.mubr.f32.mxu0 0.0
      %3330 = vmatmul.mubr.f32.gmra.mxu0 %v3217
      %v3331 = vpop.f32.mrf.mxu0
      %v3332 = vadd.f32 0.0, %v3331
      %v3333 = vpop.f32.mrf.mxu0
      %3334 = vmatprep.mubr.f32.mxu0 0.0
      %3335 = vmatmul.mubr.f32.gmra.mxu0 %v3218
      %v3336 = vpop.f32.mrf.mxu0
      %v3337 = vadd.f32 0.0, %v3336
      %v3338 = vpop.f32.mrf.mxu0
      %3339 = vmatprep.mubr.f32.mxu0 0.0
      %3340 = vmatmul.mubr.f32.gmra.mxu0 %v3219
      %v3341 = vpop.f32.mrf.mxu0
      %v3342 = vadd.f32 0.0, %v3341
      %v3343 = vpop.f32.mrf.mxu0
      %3344 = vmatprep.mubr.f32.mxu0 0.0
      %3345 = vmatmul.mubr.f32.gmra.mxu0 %v3220
      %v3346 = vpop.f32.mrf.mxu0
      %v3347 = vadd.f32 0.0, %v3346
      %v3348 = vpop.f32.mrf.mxu0
      %3349 = vmatprep.mubr.f32.mxu0 0.0
      %3350 = vmatmul.mubr.f32.gmra.mxu0 %v3221
      %v3351 = vpop.f32.mrf.mxu0
      %v3352 = vadd.f32 0.0, %v3351
      %v3353 = vpop.f32.mrf.mxu0
      %3354 = vmatprep.mubr.f32.mxu0 0.0
      %3355 = vmatmul.mubr.f32.gmra.mxu0 %v3222
      %v3356 = vpop.f32.mrf.mxu0
      %v3357 = vadd.f32 0.0, %v3356
      %v3358 = vpop.f32.mrf.mxu0
      %3359 = vmatprep.mubr.f32.mxu0 0.0
      %3360 = vmatmul.mubr.f32.gmra.mxu0 %v3223
      %v3361 = vpop.f32.mrf.mxu0
      %v3362 = vadd.f32 0.0, %v3361
      %v3363 = vpop.f32.mrf.mxu0
      %3364 = vmatprep.mubr.f32.mxu0 0.0
      %3365 = vmatmul.mubr.f32.gmra.mxu0 %v3224
      %v3366 = vpop.f32.mrf.mxu0
      %v3367 = vadd.f32 0.0, %v3366
      %v3368 = vpop.f32.mrf.mxu0
      %3369 = vmatprep.mubr.f32.mxu0 0.0
      %3370 = vmatmul.mubr.f32.gmra.mxu0 %v3225
      %v3371 = vpop.f32.mrf.mxu0
      %v3372 = vadd.f32 0.0, %v3371
      %v3373 = vpop.f32.mrf.mxu0
      %3374 = vmatprep.mubr.f32.mxu0 0.0
      %3375 = vmatmul.mubr.f32.gmra.mxu0 %v3226
      %v3376 = vpop.f32.mrf.mxu0
      %v3377 = vadd.f32 0.0, %v3376
      %v3378 = vpop.f32.mrf.mxu0
      %3379 = vmatprep.mubr.f32.mxu0 0.0
      %3380 = vmatmul.mubr.f32.gmra.mxu0 %v3227
      %v3381 = vpop.f32.mrf.mxu0
      %v3382 = vadd.f32 0.0, %v3381
      %v3383 = vpop.f32.mrf.mxu0
      %3384 = vmatprep.mubr.f32.mxu0 0.0
      %3385 = vmatmul.mubr.f32.gmra.mxu0 %v3228
      %v3386 = vpop.f32.mrf.mxu0
      %v3387 = vadd.f32 0.0, %v3386
      %v3388 = vpop.f32.mrf.mxu0
      %3389 = vdwg.mxu0
      %v3390 = vadd.f32 %v3181, %v3312
      %v3391 = vadd.f32 %v3182, %v3317
      %v3392 = vadd.f32 %v3183, %v3322
      %v3393 = vadd.f32 %v3184, %v3327
      %v3394 = vadd.f32 %v3185, %v3332
      %v3395 = vadd.f32 %v3186, %v3337
      %v3396 = vadd.f32 %v3187, %v3342
      %v3397 = vadd.f32 %v3188, %v3347
      %v3398 = vadd.f32 %v3189, %v3352
      %v3399 = vadd.f32 %v3190, %v3357
      %v3400 = vadd.f32 %v3191, %v3362
      %v3401 = vadd.f32 %v3192, %v3367
      %v3402 = vadd.f32 %v3193, %v3372
      %v3403 = vadd.f32 %v3194, %v3377
      %v3404 = vadd.f32 %v3195, %v3382
      %v3405 = vadd.f32 %v3196, %v3387
      %v3406 = vld [vmem:[%s165 + $0x87] sm:$0xff]
      %v3407 = vld [vmem:[%s165 + $0x8f] sm:$0xff]
      %v3408 = vld [vmem:[%s165 + $0x97] sm:$0xff]
      %v3409 = vld [vmem:[%s165 + $0x9f] sm:$0xff]
      %v3410 = vld [vmem:[%s165 + $0xa7] sm:$0xff]
      %v3411 = vld [vmem:[%s165 + $0xaf] sm:$0xff]
      %v3412 = vld [vmem:[%s165 + $0xb7] sm:$0xff]
      %v3413 = vld [vmem:[%s165 + $0xbf] sm:$0xff]
      %v3414 = vld [vmem:[%s165 + $0xc7] sm:$0xff]
      %v3415 = vld [vmem:[%s165 + $0xcf] sm:$0xff]
      %v3416 = vld [vmem:[%s165 + $0xd7] sm:$0xff]
      %v3417 = vld [vmem:[%s165 + $0xdf] sm:$0xff]
      %v3418 = vld [vmem:[%s165 + $0xe7] sm:$0xff]
      %v3419 = vld [vmem:[%s165 + $0xef] sm:$0xff]
      %v3420 = vld [vmem:[%s165 + $0xf7] sm:$0xff]
      %v3421 = vld [vmem:[%s165 + $0xff] sm:$0xff]
      %v3422 = vsel %vm275, %v3406, 0.0
      %v3423 = vsel %vm276, %v3407, 0.0
      %v3424 = vsel %vm277, %v3408, 0.0
      %v3425 = vsel %vm278, %v3409, 0.0
      %v3426 = vsel %vm279, %v3410, 0.0
      %v3427 = vsel %vm280, %v3411, 0.0
      %v3428 = vsel %vm281, %v3412, 0.0
      %v3429 = vsel %vm282, %v3413, 0.0
      %v3430 = vsel %vm283, %v3414, 0.0
      %v3431 = vsel %vm284, %v3415, 0.0
      %v3432 = vsel %vm285, %v3416, 0.0
      %v3433 = vsel %vm286, %v3417, 0.0
      %v3434 = vsel %vm287, %v3418, 0.0
      %v3435 = vsel %vm288, %v3419, 0.0
      %v3436 = vsel %vm289, %v3420, 0.0
      %v3437 = vsel %vm290, %v3421, 0.0
      %v3438 = vld [vmem:[%s952] sm:$0xff]
      %v3439 = vld [vmem:[%s952 + $0x8] sm:$0xff]
      %v3440 = vld [vmem:[%s952 + $0x10] sm:$0xff]
      %v3441 = vld [vmem:[%s952 + $0x18] sm:$0xff]
      %v3442 = vld [vmem:[%s952 + $0x20] sm:$0xff]
      %v3443 = vld [vmem:[%s952 + $0x28] sm:$0xff]
      %v3444 = vld [vmem:[%s952 + $0x30] sm:$0xff]
      %v3445 = vld [vmem:[%s952 + $0x38] sm:$0xff]
      %v3446 = vld [vmem:[%s952 + $0x40] sm:$0xff]
      %v3447 = vld [vmem:[%s952 + $0x48] sm:$0xff]
      %v3448 = vld [vmem:[%s952 + $0x50] sm:$0xff]
      %v3449 = vld [vmem:[%s952 + $0x58] sm:$0xff]
      %v3450 = vld [vmem:[%s952 + $0x60] sm:$0xff]
      %v3451 = vld [vmem:[%s952 + $0x68] sm:$0xff]
      %v3452 = vld [vmem:[%s952 + $0x70] sm:$0xff]
      %v3453 = vld [vmem:[%s952 + $0x78] sm:$0xff]
      %3454 = vmatprep.subr.mxu0 0.0
      %3455 = vmatpush1.msra.mxu0 %v3453
      %3456 = vmatprep.subr.mxu0 0.0
      %3457 = vmatpush1.msra.mxu0 %v3452
      %3458 = vmatprep.subr.mxu0 0.0
      %3459 = vmatpush1.msra.mxu0 %v3451
      %3460 = vmatprep.subr.mxu0 0.0
      %3461 = vmatpush1.msra.mxu0 %v3450
      %3462 = vmatprep.subr.mxu0 0.0
      %3463 = vmatpush1.msra.mxu0 %v3449
      %3464 = vmatprep.subr.mxu0 0.0
      %3465 = vmatpush1.msra.mxu0 %v3448
      %3466 = vmatprep.subr.mxu0 0.0
      %3467 = vmatpush1.msra.mxu0 %v3447
      %3468 = vmatprep.subr.mxu0 0.0
      %3469 = vmatpush1.msra.mxu0 %v3446
      %3470 = vmatprep.subr.mxu0 0.0
      %3471 = vmatpush1.msra.mxu0 %v3445
      %3472 = vmatprep.subr.mxu0 0.0
      %3473 = vmatpush1.msra.mxu0 %v3444
      %3474 = vmatprep.subr.mxu0 0.0
      %3475 = vmatpush1.msra.mxu0 %v3443
      %3476 = vmatprep.subr.mxu0 0.0
      %3477 = vmatpush1.msra.mxu0 %v3442
      %3478 = vmatprep.subr.mxu0 0.0
      %3479 = vmatpush1.msra.mxu0 %v3441
      %3480 = vmatprep.subr.mxu0 0.0
      %3481 = vmatpush1.msra.mxu0 %v3440
      %3482 = vmatprep.subr.mxu0 0.0
      %3483 = vmatpush1.msra.mxu0 %v3439
      %3484 = vmatprep.subr.mxu0 0.0
      %3485 = vmatpush1.msra.mxu0 %v3438
      %3486 = vmatprep.subr.mxu0 0.0
      %3487 = vmatpush2.msra.mxu0 0.0
      %3488 = vmatprep.subr.mxu0 0.0
      %3489 = vmatpush2.msra.mxu0 0.0
      %3490 = vmatprep.subr.mxu0 0.0
      %3491 = vmatpush2.msra.mxu0 0.0
      %3492 = vmatprep.subr.mxu0 0.0
      %3493 = vmatpush2.msra.mxu0 0.0
      %3494 = vmatprep.subr.mxu0 0.0
      %3495 = vmatpush2.msra.mxu0 0.0
      %3496 = vmatprep.subr.mxu0 0.0
      %3497 = vmatpush2.msra.mxu0 0.0
      %3498 = vmatprep.subr.mxu0 0.0
      %3499 = vmatpush2.msra.mxu0 0.0
      %3500 = vmatprep.subr.mxu0 0.0
      %3501 = vmatpush2.msra.mxu0 0.0
      %3502 = vmatprep.subr.mxu0 0.0
      %3503 = vmatpush2.msra.mxu0 0.0
      %3504 = vmatprep.subr.mxu0 0.0
      %3505 = vmatpush2.msra.mxu0 0.0
      %3506 = vmatprep.subr.mxu0 0.0
      %3507 = vmatpush2.msra.mxu0 0.0
      %3508 = vmatprep.subr.mxu0 0.0
      %3509 = vmatpush2.msra.mxu0 0.0
      %3510 = vmatprep.subr.mxu0 0.0
      %3511 = vmatpush2.msra.mxu0 0.0
      %3512 = vmatprep.subr.mxu0 0.0
      %3513 = vmatpush2.msra.mxu0 0.0
      %3514 = vmatprep.subr.mxu0 0.0
      %3515 = vmatpush2.msra.mxu0 0.0
      %3516 = vmatprep.subr.mxu0 0.0
      %3517 = vmatpush2.msra.mxu0 0.0
      %3518 = vmatprep.mubr.f32.mxu0 0.0
      %3519 = vmatmul.mubr.f32.gmra.mxu0 %v3422
      %v3520 = vpop.f32.mrf.mxu0
      %v3521 = vadd.f32 0.0, %v3520
      %v3522 = vpop.f32.mrf.mxu0
      %3523 = vmatprep.mubr.f32.mxu0 0.0
      %3524 = vmatmul.mubr.f32.gmra.mxu0 %v3423
      %v3525 = vpop.f32.mrf.mxu0
      %v3526 = vadd.f32 0.0, %v3525
      %v3527 = vpop.f32.mrf.mxu0
      %3528 = vmatprep.mubr.f32.mxu0 0.0
      %3529 = vmatmul.mubr.f32.gmra.mxu0 %v3424
      %v3530 = vpop.f32.mrf.mxu0
      %v3531 = vadd.f32 0.0, %v3530
      %v3532 = vpop.f32.mrf.mxu0
      %3533 = vmatprep.mubr.f32.mxu0 0.0
      %3534 = vmatmul.mubr.f32.gmra.mxu0 %v3425
      %v3535 = vpop.f32.mrf.mxu0
      %v3536 = vadd.f32 0.0, %v3535
      %v3537 = vpop.f32.mrf.mxu0
      %3538 = vmatprep.mubr.f32.mxu0 0.0
      %3539 = vmatmul.mubr.f32.gmra.mxu0 %v3426
      %v3540 = vpop.f32.mrf.mxu0
      %v3541 = vadd.f32 0.0, %v3540
      %v3542 = vpop.f32.mrf.mxu0
      %3543 = vmatprep.mubr.f32.mxu0 0.0
      %3544 = vmatmul.mubr.f32.gmra.mxu0 %v3427
      %v3545 = vpop.f32.mrf.mxu0
      %v3546 = vadd.f32 0.0, %v3545
      %v3547 = vpop.f32.mrf.mxu0
      %3548 = vmatprep.mubr.f32.mxu0 0.0
      %3549 = vmatmul.mubr.f32.gmra.mxu0 %v3428
      %v3550 = vpop.f32.mrf.mxu0
      %v3551 = vadd.f32 0.0, %v3550
      %v3552 = vpop.f32.mrf.mxu0
      %3553 = vmatprep.mubr.f32.mxu0 0.0
      %3554 = vmatmul.mubr.f32.gmra.mxu0 %v3429
      %v3555 = vpop.f32.mrf.mxu0
      %v3556 = vadd.f32 0.0, %v3555
      %v3557 = vpop.f32.mrf.mxu0
      %3558 = vmatprep.mubr.f32.mxu0 0.0
      %3559 = vmatmul.mubr.f32.gmra.mxu0 %v3430
      %v3560 = vpop.f32.mrf.mxu0
      %v3561 = vadd.f32 0.0, %v3560
      %v3562 = vpop.f32.mrf.mxu0
      %3563 = vmatprep.mubr.f32.mxu0 0.0
      %3564 = vmatmul.mubr.f32.gmra.mxu0 %v3431
      %v3565 = vpop.f32.mrf.mxu0
      %v3566 = vadd.f32 0.0, %v3565
      %v3567 = vpop.f32.mrf.mxu0
      %3568 = vmatprep.mubr.f32.mxu0 0.0
      %3569 = vmatmul.mubr.f32.gmra.mxu0 %v3432
      %v3570 = vpop.f32.mrf.mxu0
      %v3571 = vadd.f32 0.0, %v3570
      %v3572 = vpop.f32.mrf.mxu0
      %3573 = vmatprep.mubr.f32.mxu0 0.0
      %3574 = vmatmul.mubr.f32.gmra.mxu0 %v3433
      %v3575 = vpop.f32.mrf.mxu0
      %v3576 = vadd.f32 0.0, %v3575
      %v3577 = vpop.f32.mrf.mxu0
      %3578 = vmatprep.mubr.f32.mxu0 0.0
      %3579 = vmatmul.mubr.f32.gmra.mxu0 %v3434
      %v3580 = vpop.f32.mrf.mxu0
      %v3581 = vadd.f32 0.0, %v3580
      %v3582 = vpop.f32.mrf.mxu0
      %3583 = vmatprep.mubr.f32.mxu0 0.0
      %3584 = vmatmul.mubr.f32.gmra.mxu0 %v3435
      %v3585 = vpop.f32.mrf.mxu0
      %v3586 = vadd.f32 0.0, %v3585
      %v3587 = vpop.f32.mrf.mxu0
      %3588 = vmatprep.mubr.f32.mxu0 0.0
      %3589 = vmatmul.mubr.f32.gmra.mxu0 %v3436
      %v3590 = vpop.f32.mrf.mxu0
      %v3591 = vadd.f32 0.0, %v3590
      %v3592 = vpop.f32.mrf.mxu0
      %3593 = vmatprep.mubr.f32.mxu0 0.0
      %3594 = vmatmul.mubr.f32.gmra.mxu0 %v3437
      %v3595 = vpop.f32.mrf.mxu0
      %v3596 = vadd.f32 0.0, %v3595
      %v3597 = vpop.f32.mrf.mxu0
      %3598 = vdwg.mxu0
      %v3599 = vadd.f32 %v3390, %v3521
      %v3600 = vadd.f32 %v3391, %v3526
      %v3601 = vadd.f32 %v3392, %v3531
      %v3602 = vadd.f32 %v3393, %v3536
      %v3603 = vadd.f32 %v3394, %v3541
      %v3604 = vadd.f32 %v3395, %v3546
      %v3605 = vadd.f32 %v3396, %v3551
      %v3606 = vadd.f32 %v3397, %v3556
      %v3607 = vadd.f32 %v3398, %v3561
      %v3608 = vadd.f32 %v3399, %v3566
      %v3609 = vadd.f32 %v3400, %v3571
      %v3610 = vadd.f32 %v3401, %v3576
      %v3611 = vadd.f32 %v3402, %v3581
      %v3612 = vadd.f32 %v3403, %v3586
      %v3613 = vadd.f32 %v3404, %v3591
      %v3614 = vadd.f32 %v3405, %v3596
      %v3615 = vld [vmem:[%s165 + $0x88] sm:$0xff]
      %v3616 = vld [vmem:[%s165 + $0x90] sm:$0xff]
      %v3617 = vld [vmem:[%s165 + $0x98] sm:$0xff]
      %v3618 = vld [vmem:[%s165 + $0xa0] sm:$0xff]
      %v3619 = vld [vmem:[%s165 + $0xa8] sm:$0xff]
      %v3620 = vld [vmem:[%s165 + $0xb0] sm:$0xff]
      %v3621 = vld [vmem:[%s165 + $0xb8] sm:$0xff]
      %v3622 = vld [vmem:[%s165 + $0xc0] sm:$0xff]
      %v3623 = vld [vmem:[%s165 + $0xc8] sm:$0xff]
      %v3624 = vld [vmem:[%s165 + $0xd0] sm:$0xff]
      %v3625 = vld [vmem:[%s165 + $0xd8] sm:$0xff]
      %v3626 = vld [vmem:[%s165 + $0xe0] sm:$0xff]
      %v3627 = vld [vmem:[%s165 + $0xe8] sm:$0xff]
      %v3628 = vld [vmem:[%s165 + $0xf0] sm:$0xff]
      %v3629 = vld [vmem:[%s165 + $0xf8] sm:$0xff]
      %v3630 = vld [vmem:[%s165 + $0x100] sm:$0xff]
      %v3631 = vld [vmem:[%s1146] sm:$0xff]
      %v3632 = vld [vmem:[%s1146 + $0x8] sm:$0xff]
      %v3633 = vld [vmem:[%s1146 + $0x10] sm:$0xff]
      %v3634 = vld [vmem:[%s1146 + $0x18] sm:$0xff]
      %v3635 = vld [vmem:[%s1146 + $0x20] sm:$0xff]
      %v3636 = vld [vmem:[%s1146 + $0x28] sm:$0xff]
      %v3637 = vld [vmem:[%s1146 + $0x30] sm:$0xff]
      %v3638 = vld [vmem:[%s1146 + $0x38] sm:$0xff]
      %v3639 = vld [vmem:[%s1146 + $0x40] sm:$0xff]
      %v3640 = vld [vmem:[%s1146 + $0x48] sm:$0xff]
      %v3641 = vld [vmem:[%s1146 + $0x50] sm:$0xff]
      %v3642 = vld [vmem:[%s1146 + $0x58] sm:$0xff]
      %v3643 = vld [vmem:[%s1146 + $0x60] sm:$0xff]
      %v3644 = vld [vmem:[%s1146 + $0x68] sm:$0xff]
      %v3645 = vld [vmem:[%s1146 + $0x70] sm:$0xff]
      %v3646 = vld [vmem:[%s1146 + $0x78] sm:$0xff]
      %3647 = vmatprep.subr.mxu0 0.0
      %3648 = vmatpush1.msra.mxu0 %v3646
      %3649 = vmatprep.subr.mxu0 0.0
      %3650 = vmatpush1.msra.mxu0 %v3645
      %3651 = vmatprep.subr.mxu0 0.0
      %3652 = vmatpush1.msra.mxu0 %v3644
      %3653 = vmatprep.subr.mxu0 0.0
      %3654 = vmatpush1.msra.mxu0 %v3643
      %3655 = vmatprep.subr.mxu0 0.0
      %3656 = vmatpush1.msra.mxu0 %v3642
      %3657 = vmatprep.subr.mxu0 0.0
      %3658 = vmatpush1.msra.mxu0 %v3641
      %3659 = vmatprep.subr.mxu0 0.0
      %3660 = vmatpush1.msra.mxu0 %v3640
      %3661 = vmatprep.subr.mxu0 0.0
      %3662 = vmatpush1.msra.mxu0 %v3639
      %3663 = vmatprep.subr.mxu0 0.0
      %3664 = vmatpush1.msra.mxu0 %v3638
      %3665 = vmatprep.subr.mxu0 0.0
      %3666 = vmatpush1.msra.mxu0 %v3637
      %3667 = vmatprep.subr.mxu0 0.0
      %3668 = vmatpush1.msra.mxu0 %v3636
      %3669 = vmatprep.subr.mxu0 0.0
      %3670 = vmatpush1.msra.mxu0 %v3635
      %3671 = vmatprep.subr.mxu0 0.0
      %3672 = vmatpush1.msra.mxu0 %v3634
      %3673 = vmatprep.subr.mxu0 0.0
      %3674 = vmatpush1.msra.mxu0 %v3633
      %3675 = vmatprep.subr.mxu0 0.0
      %3676 = vmatpush1.msra.mxu0 %v3632
      %3677 = vmatprep.subr.mxu0 0.0
      %3678 = vmatpush1.msra.mxu0 %v3631
      %3679 = vmatprep.subr.mxu0 0.0
      %3680 = vmatpush2.msra.mxu0 0.0
      %3681 = vmatprep.subr.mxu0 0.0
      %3682 = vmatpush2.msra.mxu0 0.0
      %3683 = vmatprep.subr.mxu0 0.0
      %3684 = vmatpush2.msra.mxu0 0.0
      %3685 = vmatprep.subr.mxu0 0.0
      %3686 = vmatpush2.msra.mxu0 0.0
      %3687 = vmatprep.subr.mxu0 0.0
      %3688 = vmatpush2.msra.mxu0 0.0
      %3689 = vmatprep.subr.mxu0 0.0
      %3690 = vmatpush2.msra.mxu0 0.0
      %3691 = vmatprep.subr.mxu0 0.0
      %3692 = vmatpush2.msra.mxu0 0.0
      %3693 = vmatprep.subr.mxu0 0.0
      %3694 = vmatpush2.msra.mxu0 0.0
      %3695 = vmatprep.subr.mxu0 0.0
      %3696 = vmatpush2.msra.mxu0 0.0
      %3697 = vmatprep.subr.mxu0 0.0
      %3698 = vmatpush2.msra.mxu0 0.0
      %3699 = vmatprep.subr.mxu0 0.0
      %3700 = vmatpush2.msra.mxu0 0.0
      %3701 = vmatprep.subr.mxu0 0.0
      %3702 = vmatpush2.msra.mxu0 0.0
      %3703 = vmatprep.subr.mxu0 0.0
      %3704 = vmatpush2.msra.mxu0 0.0
      %3705 = vmatprep.subr.mxu0 0.0
      %3706 = vmatpush2.msra.mxu0 0.0
      %3707 = vmatprep.subr.mxu0 0.0
      %3708 = vmatpush2.msra.mxu0 0.0
      %3709 = vmatprep.subr.mxu0 0.0
      %3710 = vmatpush2.msra.mxu0 0.0
      %3711 = vmatprep.mubr.f32.mxu0 0.0
      %3712 = vmatmul.mubr.f32.gmra.mxu0 %v3615
      %v3713 = vpop.f32.mrf.mxu0
      %v3714 = vadd.f32 0.0, %v3713
      %v3715 = vpop.f32.mrf.mxu0
      %3716 = vmatprep.mubr.f32.mxu0 0.0
      %3717 = vmatmul.mubr.f32.gmra.mxu0 %v3616
      %v3718 = vpop.f32.mrf.mxu0
      %v3719 = vadd.f32 0.0, %v3718
      %v3720 = vpop.f32.mrf.mxu0
      %3721 = vmatprep.mubr.f32.mxu0 0.0
      %3722 = vmatmul.mubr.f32.gmra.mxu0 %v3617
      %v3723 = vpop.f32.mrf.mxu0
      %v3724 = vadd.f32 0.0, %v3723
      %v3725 = vpop.f32.mrf.mxu0
      %3726 = vmatprep.mubr.f32.mxu0 0.0
      %3727 = vmatmul.mubr.f32.gmra.mxu0 %v3618
      %v3728 = vpop.f32.mrf.mxu0
      %v3729 = vadd.f32 0.0, %v3728
      %v3730 = vpop.f32.mrf.mxu0
      %3731 = vmatprep.mubr.f32.mxu0 0.0
      %3732 = vmatmul.mubr.f32.gmra.mxu0 %v3619
      %v3733 = vpop.f32.mrf.mxu0
      %v3734 = vadd.f32 0.0, %v3733
      %v3735 = vpop.f32.mrf.mxu0
      %3736 = vmatprep.mubr.f32.mxu0 0.0
      %3737 = vmatmul.mubr.f32.gmra.mxu0 %v3620
      %v3738 = vpop.f32.mrf.mxu0
      %v3739 = vadd.f32 0.0, %v3738
      %v3740 = vpop.f32.mrf.mxu0
      %3741 = vmatprep.mubr.f32.mxu0 0.0
      %3742 = vmatmul.mubr.f32.gmra.mxu0 %v3621
      %v3743 = vpop.f32.mrf.mxu0
      %v3744 = vadd.f32 0.0, %v3743
      %v3745 = vpop.f32.mrf.mxu0
      %3746 = vmatprep.mubr.f32.mxu0 0.0
      %3747 = vmatmul.mubr.f32.gmra.mxu0 %v3622
      %v3748 = vpop.f32.mrf.mxu0
      %v3749 = vadd.f32 0.0, %v3748
      %v3750 = vpop.f32.mrf.mxu0
      %3751 = vmatprep.mubr.f32.mxu0 0.0
      %3752 = vmatmul.mubr.f32.gmra.mxu0 %v3623
      %v3753 = vpop.f32.mrf.mxu0
      %v3754 = vadd.f32 0.0, %v3753
      %v3755 = vpop.f32.mrf.mxu0
      %3756 = vmatprep.mubr.f32.mxu0 0.0
      %3757 = vmatmul.mubr.f32.gmra.mxu0 %v3624
      %v3758 = vpop.f32.mrf.mxu0
      %v3759 = vadd.f32 0.0, %v3758
      %v3760 = vpop.f32.mrf.mxu0
      %3761 = vmatprep.mubr.f32.mxu0 0.0
      %3762 = vmatmul.mubr.f32.gmra.mxu0 %v3625
      %v3763 = vpop.f32.mrf.mxu0
      %v3764 = vadd.f32 0.0, %v3763
      %v3765 = vpop.f32.mrf.mxu0
      %3766 = vmatprep.mubr.f32.mxu0 0.0
      %3767 = vmatmul.mubr.f32.gmra.mxu0 %v3626
      %v3768 = vpop.f32.mrf.mxu0
      %v3769 = vadd.f32 0.0, %v3768
      %v3770 = vpop.f32.mrf.mxu0
      %3771 = vmatprep.mubr.f32.mxu0 0.0
      %3772 = vmatmul.mubr.f32.gmra.mxu0 %v3627
      %v3773 = vpop.f32.mrf.mxu0
      %v3774 = vadd.f32 0.0, %v3773
      %v3775 = vpop.f32.mrf.mxu0
      %3776 = vmatprep.mubr.f32.mxu0 0.0
      %3777 = vmatmul.mubr.f32.gmra.mxu0 %v3628
      %v3778 = vpop.f32.mrf.mxu0
      %v3779 = vadd.f32 0.0, %v3778
      %v3780 = vpop.f32.mrf.mxu0
      %3781 = vmatprep.mubr.f32.mxu0 0.0
      %3782 = vmatmul.mubr.f32.gmra.mxu0 %v3629
      %v3783 = vpop.f32.mrf.mxu0
      %v3784 = vadd.f32 0.0, %v3783
      %v3785 = vpop.f32.mrf.mxu0
      %3786 = vmatprep.mubr.f32.mxu0 0.0
      %3787 = vmatmul.mubr.f32.gmra.mxu0 %v3630
      %v3788 = vpop.f32.mrf.mxu0
      %v3789 = vadd.f32 0.0, %v3788
      %v3790 = vpop.f32.mrf.mxu0
      %3791 = vdwg.mxu0
      %v3792 = vadd.f32 %v3599, %v3714
      %v3793 = vadd.f32 %v3600, %v3719
      %v3794 = vadd.f32 %v3601, %v3724
      %v3795 = vadd.f32 %v3602, %v3729
      %v3796 = vadd.f32 %v3603, %v3734
      %v3797 = vadd.f32 %v3604, %v3739
      %v3798 = vadd.f32 %v3605, %v3744
      %v3799 = vadd.f32 %v3606, %v3749
      %v3800 = vadd.f32 %v3607, %v3754
      %v3801 = vadd.f32 %v3608, %v3759
      %v3802 = vadd.f32 %v3609, %v3764
      %v3803 = vadd.f32 %v3610, %v3769
      %v3804 = vadd.f32 %v3611, %v3774
      %v3805 = vadd.f32 %v3612, %v3779
      %v3806 = vadd.f32 %v3613, %v3784
      %v3807 = vadd.f32 %v3614, %v3789
      %v3808 = vld [vmem:[%s165 + $0x89] sm:$0xff]
      %v3809 = vld [vmem:[%s165 + $0x91] sm:$0xff]
      %v3810 = vld [vmem:[%s165 + $0x99] sm:$0xff]
      %v3811 = vld [vmem:[%s165 + $0xa1] sm:$0xff]
      %v3812 = vld [vmem:[%s165 + $0xa9] sm:$0xff]
      %v3813 = vld [vmem:[%s165 + $0xb1] sm:$0xff]
      %v3814 = vld [vmem:[%s165 + $0xb9] sm:$0xff]
      %v3815 = vld [vmem:[%s165 + $0xc1] sm:$0xff]
      %v3816 = vld [vmem:[%s165 + $0xc9] sm:$0xff]
      %v3817 = vld [vmem:[%s165 + $0xd1] sm:$0xff]
      %v3818 = vld [vmem:[%s165 + $0xd9] sm:$0xff]
      %v3819 = vld [vmem:[%s165 + $0xe1] sm:$0xff]
      %v3820 = vld [vmem:[%s165 + $0xe9] sm:$0xff]
      %v3821 = vld [vmem:[%s165 + $0xf1] sm:$0xff]
      %v3822 = vld [vmem:[%s165 + $0xf9] sm:$0xff]
      %v3823 = vld [vmem:[%s165 + $0x101] sm:$0xff]
      %v3824 = vsel %vm710, %v3808, 0.0
      %v3825 = vsel %vm711, %v3809, 0.0
      %v3826 = vsel %vm712, %v3810, 0.0
      %v3827 = vsel %vm713, %v3811, 0.0
      %v3828 = vsel %vm714, %v3812, 0.0
      %v3829 = vsel %vm715, %v3813, 0.0
      %v3830 = vsel %vm716, %v3814, 0.0
      %v3831 = vsel %vm717, %v3815, 0.0
      %v3832 = vsel %vm718, %v3816, 0.0
      %v3833 = vsel %vm719, %v3817, 0.0
      %v3834 = vsel %vm720, %v3818, 0.0
      %v3835 = vsel %vm721, %v3819, 0.0
      %v3836 = vsel %vm722, %v3820, 0.0
      %v3837 = vsel %vm723, %v3821, 0.0
      %v3838 = vsel %vm724, %v3822, 0.0
      %v3839 = vsel %vm725, %v3823, 0.0
      %v3840 = vld [vmem:[%s1356] sm:$0xff]
      %v3841 = vld [vmem:[%s1356 + $0x8] sm:$0xff]
      %v3842 = vld [vmem:[%s1356 + $0x10] sm:$0xff]
      %v3843 = vld [vmem:[%s1356 + $0x18] sm:$0xff]
      %v3844 = vld [vmem:[%s1356 + $0x20] sm:$0xff]
      %v3845 = vld [vmem:[%s1356 + $0x28] sm:$0xff]
      %v3846 = vld [vmem:[%s1356 + $0x30] sm:$0xff]
      %v3847 = vld [vmem:[%s1356 + $0x38] sm:$0xff]
      %v3848 = vld [vmem:[%s1356 + $0x40] sm:$0xff]
      %v3849 = vld [vmem:[%s1356 + $0x48] sm:$0xff]
      %v3850 = vld [vmem:[%s1356 + $0x50] sm:$0xff]
      %v3851 = vld [vmem:[%s1356 + $0x58] sm:$0xff]
      %v3852 = vld [vmem:[%s1356 + $0x60] sm:$0xff]
      %v3853 = vld [vmem:[%s1356 + $0x68] sm:$0xff]
      %v3854 = vld [vmem:[%s1356 + $0x70] sm:$0xff]
      %v3855 = vld [vmem:[%s1356 + $0x78] sm:$0xff]
      %3856 = vmatprep.subr.mxu0 0.0
      %3857 = vmatpush1.msra.mxu0 %v3855
      %3858 = vmatprep.subr.mxu0 0.0
      %3859 = vmatpush1.msra.mxu0 %v3854
      %3860 = vmatprep.subr.mxu0 0.0
      %3861 = vmatpush1.msra.mxu0 %v3853
      %3862 = vmatprep.subr.mxu0 0.0
      %3863 = vmatpush1.msra.mxu0 %v3852
      %3864 = vmatprep.subr.mxu0 0.0
      %3865 = vmatpush1.msra.mxu0 %v3851
      %3866 = vmatprep.subr.mxu0 0.0
      %3867 = vmatpush1.msra.mxu0 %v3850
      %3868 = vmatprep.subr.mxu0 0.0
      %3869 = vmatpush1.msra.mxu0 %v3849
      %3870 = vmatprep.subr.mxu0 0.0
      %3871 = vmatpush1.msra.mxu0 %v3848
      %3872 = vmatprep.subr.mxu0 0.0
      %3873 = vmatpush1.msra.mxu0 %v3847
      %3874 = vmatprep.subr.mxu0 0.0
      %3875 = vmatpush1.msra.mxu0 %v3846
      %3876 = vmatprep.subr.mxu0 0.0
      %3877 = vmatpush1.msra.mxu0 %v3845
      %3878 = vmatprep.subr.mxu0 0.0
      %3879 = vmatpush1.msra.mxu0 %v3844
      %3880 = vmatprep.subr.mxu0 0.0
      %3881 = vmatpush1.msra.mxu0 %v3843
      %3882 = vmatprep.subr.mxu0 0.0
      %3883 = vmatpush1.msra.mxu0 %v3842
      %3884 = vmatprep.subr.mxu0 0.0
      %3885 = vmatpush1.msra.mxu0 %v3841
      %3886 = vmatprep.subr.mxu0 0.0
      %3887 = vmatpush1.msra.mxu0 %v3840
      %3888 = vmatprep.subr.mxu0 0.0
      %3889 = vmatpush2.msra.mxu0 0.0
      %3890 = vmatprep.subr.mxu0 0.0
      %3891 = vmatpush2.msra.mxu0 0.0
      %3892 = vmatprep.subr.mxu0 0.0
      %3893 = vmatpush2.msra.mxu0 0.0
      %3894 = vmatprep.subr.mxu0 0.0
      %3895 = vmatpush2.msra.mxu0 0.0
      %3896 = vmatprep.subr.mxu0 0.0
      %3897 = vmatpush2.msra.mxu0 0.0
      %3898 = vmatprep.subr.mxu0 0.0
      %3899 = vmatpush2.msra.mxu0 0.0
      %3900 = vmatprep.subr.mxu0 0.0
      %3901 = vmatpush2.msra.mxu0 0.0
      %3902 = vmatprep.subr.mxu0 0.0
      %3903 = vmatpush2.msra.mxu0 0.0
      %3904 = vmatprep.subr.mxu0 0.0
      %3905 = vmatpush2.msra.mxu0 0.0
      %3906 = vmatprep.subr.mxu0 0.0
      %3907 = vmatpush2.msra.mxu0 0.0
      %3908 = vmatprep.subr.mxu0 0.0
      %3909 = vmatpush2.msra.mxu0 0.0
      %3910 = vmatprep.subr.mxu0 0.0
      %3911 = vmatpush2.msra.mxu0 0.0
      %3912 = vmatprep.subr.mxu0 0.0
      %3913 = vmatpush2.msra.mxu0 0.0
      %3914 = vmatprep.subr.mxu0 0.0
      %3915 = vmatpush2.msra.mxu0 0.0
      %3916 = vmatprep.subr.mxu0 0.0
      %3917 = vmatpush2.msra.mxu0 0.0
      %3918 = vmatprep.subr.mxu0 0.0
      %3919 = vmatpush2.msra.mxu0 0.0
      %3920 = vmatprep.mubr.f32.mxu0 0.0
      %3921 = vmatmul.mubr.f32.gmra.mxu0 %v3824
      %v3922 = vpop.f32.mrf.mxu0
      %v3923 = vadd.f32 0.0, %v3922
      %v3924 = vpop.f32.mrf.mxu0
      %3925 = vmatprep.mubr.f32.mxu0 0.0
      %3926 = vmatmul.mubr.f32.gmra.mxu0 %v3825
      %v3927 = vpop.f32.mrf.mxu0
      %v3928 = vadd.f32 0.0, %v3927
      %v3929 = vpop.f32.mrf.mxu0
      %3930 = vmatprep.mubr.f32.mxu0 0.0
      %3931 = vmatmul.mubr.f32.gmra.mxu0 %v3826
      %v3932 = vpop.f32.mrf.mxu0
      %v3933 = vadd.f32 0.0, %v3932
      %v3934 = vpop.f32.mrf.mxu0
      %3935 = vmatprep.mubr.f32.mxu0 0.0
      %3936 = vmatmul.mubr.f32.gmra.mxu0 %v3827
      %v3937 = vpop.f32.mrf.mxu0
      %v3938 = vadd.f32 0.0, %v3937
      %v3939 = vpop.f32.mrf.mxu0
      %3940 = vmatprep.mubr.f32.mxu0 0.0
      %3941 = vmatmul.mubr.f32.gmra.mxu0 %v3828
      %v3942 = vpop.f32.mrf.mxu0
      %v3943 = vadd.f32 0.0, %v3942
      %v3944 = vpop.f32.mrf.mxu0
      %3945 = vmatprep.mubr.f32.mxu0 0.0
      %3946 = vmatmul.mubr.f32.gmra.mxu0 %v3829
      %v3947 = vpop.f32.mrf.mxu0
      %v3948 = vadd.f32 0.0, %v3947
      %v3949 = vpop.f32.mrf.mxu0
      %3950 = vmatprep.mubr.f32.mxu0 0.0
      %3951 = vmatmul.mubr.f32.gmra.mxu0 %v3830
      %v3952 = vpop.f32.mrf.mxu0
      %v3953 = vadd.f32 0.0, %v3952
      %v3954 = vpop.f32.mrf.mxu0
      %3955 = vmatprep.mubr.f32.mxu0 0.0
      %3956 = vmatmul.mubr.f32.gmra.mxu0 %v3831
      %v3957 = vpop.f32.mrf.mxu0
      %v3958 = vadd.f32 0.0, %v3957
      %v3959 = vpop.f32.mrf.mxu0
      %3960 = vmatprep.mubr.f32.mxu0 0.0
      %3961 = vmatmul.mubr.f32.gmra.mxu0 %v3832
      %v3962 = vpop.f32.mrf.mxu0
      %v3963 = vadd.f32 0.0, %v3962
      %v3964 = vpop.f32.mrf.mxu0
      %3965 = vmatprep.mubr.f32.mxu0 0.0
      %3966 = vmatmul.mubr.f32.gmra.mxu0 %v3833
      %v3967 = vpop.f32.mrf.mxu0
      %v3968 = vadd.f32 0.0, %v3967
      %v3969 = vpop.f32.mrf.mxu0
      %3970 = vmatprep.mubr.f32.mxu0 0.0
      %3971 = vmatmul.mubr.f32.gmra.mxu0 %v3834
      %v3972 = vpop.f32.mrf.mxu0
      %v3973 = vadd.f32 0.0, %v3972
      %v3974 = vpop.f32.mrf.mxu0
      %3975 = vmatprep.mubr.f32.mxu0 0.0
      %3976 = vmatmul.mubr.f32.gmra.mxu0 %v3835
      %v3977 = vpop.f32.mrf.mxu0
      %v3978 = vadd.f32 0.0, %v3977
      %v3979 = vpop.f32.mrf.mxu0
      %3980 = vmatprep.mubr.f32.mxu0 0.0
      %3981 = vmatmul.mubr.f32.gmra.mxu0 %v3836
      %v3982 = vpop.f32.mrf.mxu0
      %v3983 = vadd.f32 0.0, %v3982
      %v3984 = vpop.f32.mrf.mxu0
      %3985 = vmatprep.mubr.f32.mxu0 0.0
      %3986 = vmatmul.mubr.f32.gmra.mxu0 %v3837
      %v3987 = vpop.f32.mrf.mxu0
      %v3988 = vadd.f32 0.0, %v3987
      %v3989 = vpop.f32.mrf.mxu0
      %3990 = vmatprep.mubr.f32.mxu0 0.0
      %3991 = vmatmul.mubr.f32.gmra.mxu0 %v3838
      %v3992 = vpop.f32.mrf.mxu0
      %v3993 = vadd.f32 0.0, %v3992
      %v3994 = vpop.f32.mrf.mxu0
      %3995 = vmatprep.mubr.f32.mxu0 0.0
      %3996 = vmatmul.mubr.f32.gmra.mxu0 %v3839
      %v3997 = vpop.f32.mrf.mxu0
      %v3998 = vadd.f32 0.0, %v3997
      %v3999 = vpop.f32.mrf.mxu0
      %4000 = vdwg.mxu0
      %v4001 = vadd.f32 %v3792, %v3923
      %v4002 = vadd.f32 %v3793, %v3928
      %v4003 = vadd.f32 %v3794, %v3933
      %v4004 = vadd.f32 %v3795, %v3938
      %v4005 = vadd.f32 %v3796, %v3943
      %v4006 = vadd.f32 %v3797, %v3948
      %v4007 = vadd.f32 %v3798, %v3953
      %v4008 = vadd.f32 %v3799, %v3958
      %v4009 = vadd.f32 %v3800, %v3963
      %v4010 = vadd.f32 %v3801, %v3968
      %v4011 = vadd.f32 %v3802, %v3973
      %v4012 = vadd.f32 %v3803, %v3978
      %v4013 = vadd.f32 %v3804, %v3983
      %v4014 = vadd.f32 %v3805, %v3988
      %v4015 = vadd.f32 %v3806, %v3993
      %v4016 = vadd.f32 %v3807, %v3998
      %4017 = vst [vmem:[%s170 + $0x80] sm:$0xff] %v4001
      %4018 = vst [vmem:[%s170 + $0x88] sm:$0xff] %v4002
      %4019 = vst [vmem:[%s170 + $0x90] sm:$0xff] %v4003
      %4020 = vst [vmem:[%s170 + $0x98] sm:$0xff] %v4004
      %4021 = vst [vmem:[%s170 + $0xa0] sm:$0xff] %v4005
      %4022 = vst [vmem:[%s170 + $0xa8] sm:$0xff] %v4006
      %4023 = vst [vmem:[%s170 + $0xb0] sm:$0xff] %v4007
      %4024 = vst [vmem:[%s170 + $0xb8] sm:$0xff] %v4008
      %4025 = vst [vmem:[%s170 + $0xc0] sm:$0xff] %v4009
      %4026 = vst [vmem:[%s170 + $0xc8] sm:$0xff] %v4010
      %4027 = vst [vmem:[%s170 + $0xd0] sm:$0xff] %v4011
      %4028 = vst [vmem:[%s170 + $0xd8] sm:$0xff] %v4012
      %4029 = vst [vmem:[%s170 + $0xe0] sm:$0xff] %v4013
      %4030 = vst [vmem:[%s170 + $0xe8] sm:$0xff] %v4014
      %4031 = vst [vmem:[%s170 + $0xf0] sm:$0xff] %v4015
      %4032 = vst [vmem:[%s170 + $0xf8] sm:$0xff] %v4016
      %v4033 = vld [vmem:[%s165 + $0x97] sm:$0xff]
      %v4034 = vld [vmem:[%s165 + $0x9f] sm:$0xff]
      %v4035 = vld [vmem:[%s165 + $0xa7] sm:$0xff]
      %v4036 = vld [vmem:[%s165 + $0xaf] sm:$0xff]
      %v4037 = vld [vmem:[%s165 + $0xb7] sm:$0xff]
      %v4038 = vld [vmem:[%s165 + $0xbf] sm:$0xff]
      %v4039 = vld [vmem:[%s165 + $0xc7] sm:$0xff]
      %v4040 = vld [vmem:[%s165 + $0xcf] sm:$0xff]
      %v4041 = vld [vmem:[%s165 + $0xd7] sm:$0xff]
      %v4042 = vld [vmem:[%s165 + $0xdf] sm:$0xff]
      %v4043 = vld [vmem:[%s165 + $0xe7] sm:$0xff]
      %v4044 = vld [vmem:[%s165 + $0xef] sm:$0xff]
      %v4045 = vld [vmem:[%s165 + $0xf7] sm:$0xff]
      %v4046 = vld [vmem:[%s165 + $0xff] sm:$0xff]
      %v4047 = vld [vmem:[%s165 + $0x107] sm:$0xff]
      %v4048 = vld [vmem:[%s165 + $0x10f] sm:$0xff]
      %v4049 = vsel %vm275, %v4033, 0.0
      %v4050 = vsel %vm276, %v4034, 0.0
      %v4051 = vsel %vm277, %v4035, 0.0
      %v4052 = vsel %vm278, %v4036, 0.0
      %v4053 = vsel %vm279, %v4037, 0.0
      %v4054 = vsel %vm280, %v4038, 0.0
      %v4055 = vsel %vm281, %v4039, 0.0
      %v4056 = vsel %vm282, %v4040, 0.0
      %v4057 = vsel %vm283, %v4041, 0.0
      %v4058 = vsel %vm284, %v4042, 0.0
      %v4059 = vsel %vm285, %v4043, 0.0
      %v4060 = vsel %vm286, %v4044, 0.0
      %v4061 = vsel %vm287, %v4045, 0.0
      %v4062 = vsel %vm288, %v4046, 0.0
      %v4063 = vsel %vm289, %v4047, 0.0
      %v4064 = vsel %vm290, %v4048, 0.0
      %v4065 = vld [vmem:[%s1582] sm:$0xff]
      %v4066 = vld [vmem:[%s1582 + $0x8] sm:$0xff]
      %v4067 = vld [vmem:[%s1582 + $0x10] sm:$0xff]
      %v4068 = vld [vmem:[%s1582 + $0x18] sm:$0xff]
      %v4069 = vld [vmem:[%s1582 + $0x20] sm:$0xff]
      %v4070 = vld [vmem:[%s1582 + $0x28] sm:$0xff]
      %v4071 = vld [vmem:[%s1582 + $0x30] sm:$0xff]
      %v4072 = vld [vmem:[%s1582 + $0x38] sm:$0xff]
      %v4073 = vld [vmem:[%s1582 + $0x40] sm:$0xff]
      %v4074 = vld [vmem:[%s1582 + $0x48] sm:$0xff]
      %v4075 = vld [vmem:[%s1582 + $0x50] sm:$0xff]
      %v4076 = vld [vmem:[%s1582 + $0x58] sm:$0xff]
      %v4077 = vld [vmem:[%s1582 + $0x60] sm:$0xff]
      %v4078 = vld [vmem:[%s1582 + $0x68] sm:$0xff]
      %v4079 = vld [vmem:[%s1582 + $0x70] sm:$0xff]
      %v4080 = vld [vmem:[%s1582 + $0x78] sm:$0xff]
      %4081 = vmatprep.subr.mxu0 0.0
      %4082 = vmatpush1.msra.mxu0 %v4080
      %4083 = vmatprep.subr.mxu0 0.0
      %4084 = vmatpush1.msra.mxu0 %v4079
      %4085 = vmatprep.subr.mxu0 0.0
      %4086 = vmatpush1.msra.mxu0 %v4078
      %4087 = vmatprep.subr.mxu0 0.0
      %4088 = vmatpush1.msra.mxu0 %v4077
      %4089 = vmatprep.subr.mxu0 0.0
      %4090 = vmatpush1.msra.mxu0 %v4076
      %4091 = vmatprep.subr.mxu0 0.0
      %4092 = vmatpush1.msra.mxu0 %v4075
      %4093 = vmatprep.subr.mxu0 0.0
      %4094 = vmatpush1.msra.mxu0 %v4074
      %4095 = vmatprep.subr.mxu0 0.0
      %4096 = vmatpush1.msra.mxu0 %v4073
      %4097 = vmatprep.subr.mxu0 0.0
      %4098 = vmatpush1.msra.mxu0 %v4072
      %4099 = vmatprep.subr.mxu0 0.0
      %4100 = vmatpush1.msra.mxu0 %v4071
      %4101 = vmatprep.subr.mxu0 0.0
      %4102 = vmatpush1.msra.mxu0 %v4070
      %4103 = vmatprep.subr.mxu0 0.0
      %4104 = vmatpush1.msra.mxu0 %v4069
      %4105 = vmatprep.subr.mxu0 0.0
      %4106 = vmatpush1.msra.mxu0 %v4068
      %4107 = vmatprep.subr.mxu0 0.0
      %4108 = vmatpush1.msra.mxu0 %v4067
      %4109 = vmatprep.subr.mxu0 0.0
      %4110 = vmatpush1.msra.mxu0 %v4066
      %4111 = vmatprep.subr.mxu0 0.0
      %4112 = vmatpush1.msra.mxu0 %v4065
      %4113 = vmatprep.subr.mxu0 0.0
      %4114 = vmatpush2.msra.mxu0 0.0
      %4115 = vmatprep.subr.mxu0 0.0
      %4116 = vmatpush2.msra.mxu0 0.0
      %4117 = vmatprep.subr.mxu0 0.0
      %4118 = vmatpush2.msra.mxu0 0.0
      %4119 = vmatprep.subr.mxu0 0.0
      %4120 = vmatpush2.msra.mxu0 0.0
      %4121 = vmatprep.subr.mxu0 0.0
      %4122 = vmatpush2.msra.mxu0 0.0
      %4123 = vmatprep.subr.mxu0 0.0
      %4124 = vmatpush2.msra.mxu0 0.0
      %4125 = vmatprep.subr.mxu0 0.0
      %4126 = vmatpush2.msra.mxu0 0.0
      %4127 = vmatprep.subr.mxu0 0.0
      %4128 = vmatpush2.msra.mxu0 0.0
      %4129 = vmatprep.subr.mxu0 0.0
      %4130 = vmatpush2.msra.mxu0 0.0
      %4131 = vmatprep.subr.mxu0 0.0
      %4132 = vmatpush2.msra.mxu0 0.0
      %4133 = vmatprep.subr.mxu0 0.0
      %4134 = vmatpush2.msra.mxu0 0.0
      %4135 = vmatprep.subr.mxu0 0.0
      %4136 = vmatpush2.msra.mxu0 0.0
      %4137 = vmatprep.subr.mxu0 0.0
      %4138 = vmatpush2.msra.mxu0 0.0
      %4139 = vmatprep.subr.mxu0 0.0
      %4140 = vmatpush2.msra.mxu0 0.0
      %4141 = vmatprep.subr.mxu0 0.0
      %4142 = vmatpush2.msra.mxu0 0.0
      %4143 = vmatprep.subr.mxu0 0.0
      %4144 = vmatpush2.msra.mxu0 0.0
      %4145 = vmatprep.mubr.f32.mxu0 0.0
      %4146 = vmatmul.mubr.f32.gmra.mxu0 %v4049
      %v4147 = vpop.f32.mrf.mxu0
      %v4148 = vadd.f32 0.0, %v4147
      %v4149 = vpop.f32.mrf.mxu0
      %4150 = vmatprep.mubr.f32.mxu0 0.0
      %4151 = vmatmul.mubr.f32.gmra.mxu0 %v4050
      %v4152 = vpop.f32.mrf.mxu0
      %v4153 = vadd.f32 0.0, %v4152
      %v4154 = vpop.f32.mrf.mxu0
      %4155 = vmatprep.mubr.f32.mxu0 0.0
      %4156 = vmatmul.mubr.f32.gmra.mxu0 %v4051
      %v4157 = vpop.f32.mrf.mxu0
      %v4158 = vadd.f32 0.0, %v4157
      %v4159 = vpop.f32.mrf.mxu0
      %4160 = vmatprep.mubr.f32.mxu0 0.0
      %4161 = vmatmul.mubr.f32.gmra.mxu0 %v4052
      %v4162 = vpop.f32.mrf.mxu0
      %v4163 = vadd.f32 0.0, %v4162
      %v4164 = vpop.f32.mrf.mxu0
      %4165 = vmatprep.mubr.f32.mxu0 0.0
      %4166 = vmatmul.mubr.f32.gmra.mxu0 %v4053
      %v4167 = vpop.f32.mrf.mxu0
      %v4168 = vadd.f32 0.0, %v4167
      %v4169 = vpop.f32.mrf.mxu0
      %4170 = vmatprep.mubr.f32.mxu0 0.0
      %4171 = vmatmul.mubr.f32.gmra.mxu0 %v4054
      %v4172 = vpop.f32.mrf.mxu0
      %v4173 = vadd.f32 0.0, %v4172
      %v4174 = vpop.f32.mrf.mxu0
      %4175 = vmatprep.mubr.f32.mxu0 0.0
      %4176 = vmatmul.mubr.f32.gmra.mxu0 %v4055
      %v4177 = vpop.f32.mrf.mxu0
      %v4178 = vadd.f32 0.0, %v4177
      %v4179 = vpop.f32.mrf.mxu0
      %4180 = vmatprep.mubr.f32.mxu0 0.0
      %4181 = vmatmul.mubr.f32.gmra.mxu0 %v4056
      %v4182 = vpop.f32.mrf.mxu0
      %v4183 = vadd.f32 0.0, %v4182
      %v4184 = vpop.f32.mrf.mxu0
      %4185 = vmatprep.mubr.f32.mxu0 0.0
      %4186 = vmatmul.mubr.f32.gmra.mxu0 %v4057
      %v4187 = vpop.f32.mrf.mxu0
      %v4188 = vadd.f32 0.0, %v4187
      %v4189 = vpop.f32.mrf.mxu0
      %4190 = vmatprep.mubr.f32.mxu0 0.0
      %4191 = vmatmul.mubr.f32.gmra.mxu0 %v4058
      %v4192 = vpop.f32.mrf.mxu0
      %v4193 = vadd.f32 0.0, %v4192
      %v4194 = vpop.f32.mrf.mxu0
      %4195 = vmatprep.mubr.f32.mxu0 0.0
      %4196 = vmatmul.mubr.f32.gmra.mxu0 %v4059
      %v4197 = vpop.f32.mrf.mxu0
      %v4198 = vadd.f32 0.0, %v4197
      %v4199 = vpop.f32.mrf.mxu0
      %4200 = vmatprep.mubr.f32.mxu0 0.0
      %4201 = vmatmul.mubr.f32.gmra.mxu0 %v4060
      %v4202 = vpop.f32.mrf.mxu0
      %v4203 = vadd.f32 0.0, %v4202
      %v4204 = vpop.f32.mrf.mxu0
      %4205 = vmatprep.mubr.f32.mxu0 0.0
      %4206 = vmatmul.mubr.f32.gmra.mxu0 %v4061
      %v4207 = vpop.f32.mrf.mxu0
      %v4208 = vadd.f32 0.0, %v4207
      %v4209 = vpop.f32.mrf.mxu0
      %4210 = vmatprep.mubr.f32.mxu0 0.0
      %4211 = vmatmul.mubr.f32.gmra.mxu0 %v4062
      %v4212 = vpop.f32.mrf.mxu0
      %v4213 = vadd.f32 0.0, %v4212
      %v4214 = vpop.f32.mrf.mxu0
      %4215 = vmatprep.mubr.f32.mxu0 0.0
      %4216 = vmatmul.mubr.f32.gmra.mxu0 %v4063
      %v4217 = vpop.f32.mrf.mxu0
      %v4218 = vadd.f32 0.0, %v4217
      %v4219 = vpop.f32.mrf.mxu0
      %4220 = vmatprep.mubr.f32.mxu0 0.0
      %4221 = vmatmul.mubr.f32.gmra.mxu0 %v4064
      %v4222 = vpop.f32.mrf.mxu0
      %v4223 = vadd.f32 0.0, %v4222
      %v4224 = vpop.f32.mrf.mxu0
      %4225 = vdwg.mxu0
      %v4226 = vadd.f32 %v241, %v4148
      %v4227 = vadd.f32 %v241, %v4153
      %v4228 = vadd.f32 %v241, %v4158
      %v4229 = vadd.f32 %v241, %v4163
      %v4230 = vadd.f32 %v241, %v4168
      %v4231 = vadd.f32 %v241, %v4173
      %v4232 = vadd.f32 %v241, %v4178
      %v4233 = vadd.f32 %v241, %v4183
      %v4234 = vadd.f32 %v241, %v4188
      %v4235 = vadd.f32 %v241, %v4193
      %v4236 = vadd.f32 %v241, %v4198
      %v4237 = vadd.f32 %v241, %v4203
      %v4238 = vadd.f32 %v241, %v4208
      %v4239 = vadd.f32 %v241, %v4213
      %v4240 = vadd.f32 %v241, %v4218
      %v4241 = vadd.f32 %v241, %v4223
      %v4242 = vld [vmem:[%s165 + $0x98] sm:$0xff]
      %v4243 = vld [vmem:[%s165 + $0xa0] sm:$0xff]
      %v4244 = vld [vmem:[%s165 + $0xa8] sm:$0xff]
      %v4245 = vld [vmem:[%s165 + $0xb0] sm:$0xff]
      %v4246 = vld [vmem:[%s165 + $0xb8] sm:$0xff]
      %v4247 = vld [vmem:[%s165 + $0xc0] sm:$0xff]
      %v4248 = vld [vmem:[%s165 + $0xc8] sm:$0xff]
      %v4249 = vld [vmem:[%s165 + $0xd0] sm:$0xff]
      %v4250 = vld [vmem:[%s165 + $0xd8] sm:$0xff]
      %v4251 = vld [vmem:[%s165 + $0xe0] sm:$0xff]
      %v4252 = vld [vmem:[%s165 + $0xe8] sm:$0xff]
      %v4253 = vld [vmem:[%s165 + $0xf0] sm:$0xff]
      %v4254 = vld [vmem:[%s165 + $0xf8] sm:$0xff]
      %v4255 = vld [vmem:[%s165 + $0x100] sm:$0xff]
      %v4256 = vld [vmem:[%s165 + $0x108] sm:$0xff]
      %v4257 = vld [vmem:[%s165 + $0x110] sm:$0xff]
      %v4258 = vld [vmem:[%s1776] sm:$0xff]
      %v4259 = vld [vmem:[%s1776 + $0x8] sm:$0xff]
      %v4260 = vld [vmem:[%s1776 + $0x10] sm:$0xff]
      %v4261 = vld [vmem:[%s1776 + $0x18] sm:$0xff]
      %v4262 = vld [vmem:[%s1776 + $0x20] sm:$0xff]
      %v4263 = vld [vmem:[%s1776 + $0x28] sm:$0xff]
      %v4264 = vld [vmem:[%s1776 + $0x30] sm:$0xff]
      %v4265 = vld [vmem:[%s1776 + $0x38] sm:$0xff]
      %v4266 = vld [vmem:[%s1776 + $0x40] sm:$0xff]
      %v4267 = vld [vmem:[%s1776 + $0x48] sm:$0xff]
      %v4268 = vld [vmem:[%s1776 + $0x50] sm:$0xff]
      %v4269 = vld [vmem:[%s1776 + $0x58] sm:$0xff]
      %v4270 = vld [vmem:[%s1776 + $0x60] sm:$0xff]
      %v4271 = vld [vmem:[%s1776 + $0x68] sm:$0xff]
      %v4272 = vld [vmem:[%s1776 + $0x70] sm:$0xff]
      %v4273 = vld [vmem:[%s1776 + $0x78] sm:$0xff]
      %4274 = vmatprep.subr.mxu0 0.0
      %4275 = vmatpush1.msra.mxu0 %v4273
      %4276 = vmatprep.subr.mxu0 0.0
      %4277 = vmatpush1.msra.mxu0 %v4272
      %4278 = vmatprep.subr.mxu0 0.0
      %4279 = vmatpush1.msra.mxu0 %v4271
      %4280 = vmatprep.subr.mxu0 0.0
      %4281 = vmatpush1.msra.mxu0 %v4270
      %4282 = vmatprep.subr.mxu0 0.0
      %4283 = vmatpush1.msra.mxu0 %v4269
      %4284 = vmatprep.subr.mxu0 0.0
      %4285 = vmatpush1.msra.mxu0 %v4268
      %4286 = vmatprep.subr.mxu0 0.0
      %4287 = vmatpush1.msra.mxu0 %v4267
      %4288 = vmatprep.subr.mxu0 0.0
      %4289 = vmatpush1.msra.mxu0 %v4266
      %4290 = vmatprep.subr.mxu0 0.0
      %4291 = vmatpush1.msra.mxu0 %v4265
      %4292 = vmatprep.subr.mxu0 0.0
      %4293 = vmatpush1.msra.mxu0 %v4264
      %4294 = vmatprep.subr.mxu0 0.0
      %4295 = vmatpush1.msra.mxu0 %v4263
      %4296 = vmatprep.subr.mxu0 0.0
      %4297 = vmatpush1.msra.mxu0 %v4262
      %4298 = vmatprep.subr.mxu0 0.0
      %4299 = vmatpush1.msra.mxu0 %v4261
      %4300 = vmatprep.subr.mxu0 0.0
      %4301 = vmatpush1.msra.mxu0 %v4260
      %4302 = vmatprep.subr.mxu0 0.0
      %4303 = vmatpush1.msra.mxu0 %v4259
      %4304 = vmatprep.subr.mxu0 0.0
      %4305 = vmatpush1.msra.mxu0 %v4258
      %4306 = vmatprep.subr.mxu0 0.0
      %4307 = vmatpush2.msra.mxu0 0.0
      %4308 = vmatprep.subr.mxu0 0.0
      %4309 = vmatpush2.msra.mxu0 0.0
      %4310 = vmatprep.subr.mxu0 0.0
      %4311 = vmatpush2.msra.mxu0 0.0
      %4312 = vmatprep.subr.mxu0 0.0
      %4313 = vmatpush2.msra.mxu0 0.0
      %4314 = vmatprep.subr.mxu0 0.0
      %4315 = vmatpush2.msra.mxu0 0.0
      %4316 = vmatprep.subr.mxu0 0.0
      %4317 = vmatpush2.msra.mxu0 0.0
      %4318 = vmatprep.subr.mxu0 0.0
      %4319 = vmatpush2.msra.mxu0 0.0
      %4320 = vmatprep.subr.mxu0 0.0
      %4321 = vmatpush2.msra.mxu0 0.0
      %4322 = vmatprep.subr.mxu0 0.0
      %4323 = vmatpush2.msra.mxu0 0.0
      %4324 = vmatprep.subr.mxu0 0.0
      %4325 = vmatpush2.msra.mxu0 0.0
      %4326 = vmatprep.subr.mxu0 0.0
      %4327 = vmatpush2.msra.mxu0 0.0
      %4328 = vmatprep.subr.mxu0 0.0
      %4329 = vmatpush2.msra.mxu0 0.0
      %4330 = vmatprep.subr.mxu0 0.0
      %4331 = vmatpush2.msra.mxu0 0.0
      %4332 = vmatprep.subr.mxu0 0.0
      %4333 = vmatpush2.msra.mxu0 0.0
      %4334 = vmatprep.subr.mxu0 0.0
      %4335 = vmatpush2.msra.mxu0 0.0
      %4336 = vmatprep.subr.mxu0 0.0
      %4337 = vmatpush2.msra.mxu0 0.0
      %4338 = vmatprep.mubr.f32.mxu0 0.0
      %4339 = vmatmul.mubr.f32.gmra.mxu0 %v4242
      %v4340 = vpop.f32.mrf.mxu0
      %v4341 = vadd.f32 0.0, %v4340
      %v4342 = vpop.f32.mrf.mxu0
      %4343 = vmatprep.mubr.f32.mxu0 0.0
      %4344 = vmatmul.mubr.f32.gmra.mxu0 %v4243
      %v4345 = vpop.f32.mrf.mxu0
      %v4346 = vadd.f32 0.0, %v4345
      %v4347 = vpop.f32.mrf.mxu0
      %4348 = vmatprep.mubr.f32.mxu0 0.0
      %4349 = vmatmul.mubr.f32.gmra.mxu0 %v4244
      %v4350 = vpop.f32.mrf.mxu0
      %v4351 = vadd.f32 0.0, %v4350
      %v4352 = vpop.f32.mrf.mxu0
      %4353 = vmatprep.mubr.f32.mxu0 0.0
      %4354 = vmatmul.mubr.f32.gmra.mxu0 %v4245
      %v4355 = vpop.f32.mrf.mxu0
      %v4356 = vadd.f32 0.0, %v4355
      %v4357 = vpop.f32.mrf.mxu0
      %4358 = vmatprep.mubr.f32.mxu0 0.0
      %4359 = vmatmul.mubr.f32.gmra.mxu0 %v4246
      %v4360 = vpop.f32.mrf.mxu0
      %v4361 = vadd.f32 0.0, %v4360
      %v4362 = vpop.f32.mrf.mxu0
      %4363 = vmatprep.mubr.f32.mxu0 0.0
      %4364 = vmatmul.mubr.f32.gmra.mxu0 %v4247
      %v4365 = vpop.f32.mrf.mxu0
      %v4366 = vadd.f32 0.0, %v4365
      %v4367 = vpop.f32.mrf.mxu0
      %4368 = vmatprep.mubr.f32.mxu0 0.0
      %4369 = vmatmul.mubr.f32.gmra.mxu0 %v4248
      %v4370 = vpop.f32.mrf.mxu0
      %v4371 = vadd.f32 0.0, %v4370
      %v4372 = vpop.f32.mrf.mxu0
      %4373 = vmatprep.mubr.f32.mxu0 0.0
      %4374 = vmatmul.mubr.f32.gmra.mxu0 %v4249
      %v4375 = vpop.f32.mrf.mxu0
      %v4376 = vadd.f32 0.0, %v4375
      %v4377 = vpop.f32.mrf.mxu0
      %4378 = vmatprep.mubr.f32.mxu0 0.0
      %4379 = vmatmul.mubr.f32.gmra.mxu0 %v4250
      %v4380 = vpop.f32.mrf.mxu0
      %v4381 = vadd.f32 0.0, %v4380
      %v4382 = vpop.f32.mrf.mxu0
      %4383 = vmatprep.mubr.f32.mxu0 0.0
      %4384 = vmatmul.mubr.f32.gmra.mxu0 %v4251
      %v4385 = vpop.f32.mrf.mxu0
      %v4386 = vadd.f32 0.0, %v4385
      %v4387 = vpop.f32.mrf.mxu0
      %4388 = vmatprep.mubr.f32.mxu0 0.0
      %4389 = vmatmul.mubr.f32.gmra.mxu0 %v4252
      %v4390 = vpop.f32.mrf.mxu0
      %v4391 = vadd.f32 0.0, %v4390
      %v4392 = vpop.f32.mrf.mxu0
      %4393 = vmatprep.mubr.f32.mxu0 0.0
      %4394 = vmatmul.mubr.f32.gmra.mxu0 %v4253
      %v4395 = vpop.f32.mrf.mxu0
      %v4396 = vadd.f32 0.0, %v4395
      %v4397 = vpop.f32.mrf.mxu0
      %4398 = vmatprep.mubr.f32.mxu0 0.0
      %4399 = vmatmul.mubr.f32.gmra.mxu0 %v4254
      %v4400 = vpop.f32.mrf.mxu0
      %v4401 = vadd.f32 0.0, %v4400
      %v4402 = vpop.f32.mrf.mxu0
      %4403 = vmatprep.mubr.f32.mxu0 0.0
      %4404 = vmatmul.mubr.f32.gmra.mxu0 %v4255
      %v4405 = vpop.f32.mrf.mxu0
      %v4406 = vadd.f32 0.0, %v4405
      %v4407 = vpop.f32.mrf.mxu0
      %4408 = vmatprep.mubr.f32.mxu0 0.0
      %4409 = vmatmul.mubr.f32.gmra.mxu0 %v4256
      %v4410 = vpop.f32.mrf.mxu0
      %v4411 = vadd.f32 0.0, %v4410
      %v4412 = vpop.f32.mrf.mxu0
      %4413 = vmatprep.mubr.f32.mxu0 0.0
      %4414 = vmatmul.mubr.f32.gmra.mxu0 %v4257
      %v4415 = vpop.f32.mrf.mxu0
      %v4416 = vadd.f32 0.0, %v4415
      %v4417 = vpop.f32.mrf.mxu0
      %4418 = vdwg.mxu0
      %v4419 = vadd.f32 %v4226, %v4341
      %v4420 = vadd.f32 %v4227, %v4346
      %v4421 = vadd.f32 %v4228, %v4351
      %v4422 = vadd.f32 %v4229, %v4356
      %v4423 = vadd.f32 %v4230, %v4361
      %v4424 = vadd.f32 %v4231, %v4366
      %v4425 = vadd.f32 %v4232, %v4371
      %v4426 = vadd.f32 %v4233, %v4376
      %v4427 = vadd.f32 %v4234, %v4381
      %v4428 = vadd.f32 %v4235, %v4386
      %v4429 = vadd.f32 %v4236, %v4391
      %v4430 = vadd.f32 %v4237, %v4396
      %v4431 = vadd.f32 %v4238, %v4401
      %v4432 = vadd.f32 %v4239, %v4406
      %v4433 = vadd.f32 %v4240, %v4411
      %v4434 = vadd.f32 %v4241, %v4416
      %v4435 = vld [vmem:[%s165 + $0x99] sm:$0xff]
      %v4436 = vld [vmem:[%s165 + $0xa1] sm:$0xff]
      %v4437 = vld [vmem:[%s165 + $0xa9] sm:$0xff]
      %v4438 = vld [vmem:[%s165 + $0xb1] sm:$0xff]
      %v4439 = vld [vmem:[%s165 + $0xb9] sm:$0xff]
      %v4440 = vld [vmem:[%s165 + $0xc1] sm:$0xff]
      %v4441 = vld [vmem:[%s165 + $0xc9] sm:$0xff]
      %v4442 = vld [vmem:[%s165 + $0xd1] sm:$0xff]
      %v4443 = vld [vmem:[%s165 + $0xd9] sm:$0xff]
      %v4444 = vld [vmem:[%s165 + $0xe1] sm:$0xff]
      %v4445 = vld [vmem:[%s165 + $0xe9] sm:$0xff]
      %v4446 = vld [vmem:[%s165 + $0xf1] sm:$0xff]
      %v4447 = vld [vmem:[%s165 + $0xf9] sm:$0xff]
      %v4448 = vld [vmem:[%s165 + $0x101] sm:$0xff]
      %v4449 = vld [vmem:[%s165 + $0x109] sm:$0xff]
      %v4450 = vld [vmem:[%s165 + $0x111] sm:$0xff]
      %v4451 = vsel %vm710, %v4435, 0.0
      %v4452 = vsel %vm711, %v4436, 0.0
      %v4453 = vsel %vm712, %v4437, 0.0
      %v4454 = vsel %vm713, %v4438, 0.0
      %v4455 = vsel %vm714, %v4439, 0.0
      %v4456 = vsel %vm715, %v4440, 0.0
      %v4457 = vsel %vm716, %v4441, 0.0
      %v4458 = vsel %vm717, %v4442, 0.0
      %v4459 = vsel %vm718, %v4443, 0.0
      %v4460 = vsel %vm719, %v4444, 0.0
      %v4461 = vsel %vm720, %v4445, 0.0
      %v4462 = vsel %vm721, %v4446, 0.0
      %v4463 = vsel %vm722, %v4447, 0.0
      %v4464 = vsel %vm723, %v4448, 0.0
      %v4465 = vsel %vm724, %v4449, 0.0
      %v4466 = vsel %vm725, %v4450, 0.0
      %v4467 = vld [vmem:[%s1986] sm:$0xff]
      %v4468 = vld [vmem:[%s1986 + $0x8] sm:$0xff]
      %v4469 = vld [vmem:[%s1986 + $0x10] sm:$0xff]
      %v4470 = vld [vmem:[%s1986 + $0x18] sm:$0xff]
      %v4471 = vld [vmem:[%s1986 + $0x20] sm:$0xff]
      %v4472 = vld [vmem:[%s1986 + $0x28] sm:$0xff]
      %v4473 = vld [vmem:[%s1986 + $0x30] sm:$0xff]
      %v4474 = vld [vmem:[%s1986 + $0x38] sm:$0xff]
      %v4475 = vld [vmem:[%s1986 + $0x40] sm:$0xff]
      %v4476 = vld [vmem:[%s1986 + $0x48] sm:$0xff]
      %v4477 = vld [vmem:[%s1986 + $0x50] sm:$0xff]
      %v4478 = vld [vmem:[%s1986 + $0x58] sm:$0xff]
      %v4479 = vld [vmem:[%s1986 + $0x60] sm:$0xff]
      %v4480 = vld [vmem:[%s1986 + $0x68] sm:$0xff]
      %v4481 = vld [vmem:[%s1986 + $0x70] sm:$0xff]
      %v4482 = vld [vmem:[%s1986 + $0x78] sm:$0xff]
      %4483 = vmatprep.subr.mxu0 0.0
      %4484 = vmatpush1.msra.mxu0 %v4482
      %4485 = vmatprep.subr.mxu0 0.0
      %4486 = vmatpush1.msra.mxu0 %v4481
      %4487 = vmatprep.subr.mxu0 0.0
      %4488 = vmatpush1.msra.mxu0 %v4480
      %4489 = vmatprep.subr.mxu0 0.0
      %4490 = vmatpush1.msra.mxu0 %v4479
      %4491 = vmatprep.subr.mxu0 0.0
      %4492 = vmatpush1.msra.mxu0 %v4478
      %4493 = vmatprep.subr.mxu0 0.0
      %4494 = vmatpush1.msra.mxu0 %v4477
      %4495 = vmatprep.subr.mxu0 0.0
      %4496 = vmatpush1.msra.mxu0 %v4476
      %4497 = vmatprep.subr.mxu0 0.0
      %4498 = vmatpush1.msra.mxu0 %v4475
      %4499 = vmatprep.subr.mxu0 0.0
      %4500 = vmatpush1.msra.mxu0 %v4474
      %4501 = vmatprep.subr.mxu0 0.0
      %4502 = vmatpush1.msra.mxu0 %v4473
      %4503 = vmatprep.subr.mxu0 0.0
      %4504 = vmatpush1.msra.mxu0 %v4472
      %4505 = vmatprep.subr.mxu0 0.0
      %4506 = vmatpush1.msra.mxu0 %v4471
      %4507 = vmatprep.subr.mxu0 0.0
      %4508 = vmatpush1.msra.mxu0 %v4470
      %4509 = vmatprep.subr.mxu0 0.0
      %4510 = vmatpush1.msra.mxu0 %v4469
      %4511 = vmatprep.subr.mxu0 0.0
      %4512 = vmatpush1.msra.mxu0 %v4468
      %4513 = vmatprep.subr.mxu0 0.0
      %4514 = vmatpush1.msra.mxu0 %v4467
      %4515 = vmatprep.subr.mxu0 0.0
      %4516 = vmatpush2.msra.mxu0 0.0
      %4517 = vmatprep.subr.mxu0 0.0
      %4518 = vmatpush2.msra.mxu0 0.0
      %4519 = vmatprep.subr.mxu0 0.0
      %4520 = vmatpush2.msra.mxu0 0.0
      %4521 = vmatprep.subr.mxu0 0.0
      %4522 = vmatpush2.msra.mxu0 0.0
      %4523 = vmatprep.subr.mxu0 0.0
      %4524 = vmatpush2.msra.mxu0 0.0
      %4525 = vmatprep.subr.mxu0 0.0
      %4526 = vmatpush2.msra.mxu0 0.0
      %4527 = vmatprep.subr.mxu0 0.0
      %4528 = vmatpush2.msra.mxu0 0.0
      %4529 = vmatprep.subr.mxu0 0.0
      %4530 = vmatpush2.msra.mxu0 0.0
      %4531 = vmatprep.subr.mxu0 0.0
      %4532 = vmatpush2.msra.mxu0 0.0
      %4533 = vmatprep.subr.mxu0 0.0
      %4534 = vmatpush2.msra.mxu0 0.0
      %4535 = vmatprep.subr.mxu0 0.0
      %4536 = vmatpush2.msra.mxu0 0.0
      %4537 = vmatprep.subr.mxu0 0.0
      %4538 = vmatpush2.msra.mxu0 0.0
      %4539 = vmatprep.subr.mxu0 0.0
      %4540 = vmatpush2.msra.mxu0 0.0
      %4541 = vmatprep.subr.mxu0 0.0
      %4542 = vmatpush2.msra.mxu0 0.0
      %4543 = vmatprep.subr.mxu0 0.0
      %4544 = vmatpush2.msra.mxu0 0.0
      %4545 = vmatprep.subr.mxu0 0.0
      %4546 = vmatpush2.msra.mxu0 0.0
      %4547 = vmatprep.mubr.f32.mxu0 0.0
      %4548 = vmatmul.mubr.f32.gmra.mxu0 %v4451
      %v4549 = vpop.f32.mrf.mxu0
      %v4550 = vadd.f32 0.0, %v4549
      %v4551 = vpop.f32.mrf.mxu0
      %4552 = vmatprep.mubr.f32.mxu0 0.0
      %4553 = vmatmul.mubr.f32.gmra.mxu0 %v4452
      %v4554 = vpop.f32.mrf.mxu0
      %v4555 = vadd.f32 0.0, %v4554
      %v4556 = vpop.f32.mrf.mxu0
      %4557 = vmatprep.mubr.f32.mxu0 0.0
      %4558 = vmatmul.mubr.f32.gmra.mxu0 %v4453
      %v4559 = vpop.f32.mrf.mxu0
      %v4560 = vadd.f32 0.0, %v4559
      %v4561 = vpop.f32.mrf.mxu0
      %4562 = vmatprep.mubr.f32.mxu0 0.0
      %4563 = vmatmul.mubr.f32.gmra.mxu0 %v4454
      %v4564 = vpop.f32.mrf.mxu0
      %v4565 = vadd.f32 0.0, %v4564
      %v4566 = vpop.f32.mrf.mxu0
      %4567 = vmatprep.mubr.f32.mxu0 0.0
      %4568 = vmatmul.mubr.f32.gmra.mxu0 %v4455
      %v4569 = vpop.f32.mrf.mxu0
      %v4570 = vadd.f32 0.0, %v4569
      %v4571 = vpop.f32.mrf.mxu0
      %4572 = vmatprep.mubr.f32.mxu0 0.0
      %4573 = vmatmul.mubr.f32.gmra.mxu0 %v4456
      %v4574 = vpop.f32.mrf.mxu0
      %v4575 = vadd.f32 0.0, %v4574
      %v4576 = vpop.f32.mrf.mxu0
      %4577 = vmatprep.mubr.f32.mxu0 0.0
      %4578 = vmatmul.mubr.f32.gmra.mxu0 %v4457
      %v4579 = vpop.f32.mrf.mxu0
      %v4580 = vadd.f32 0.0, %v4579
      %v4581 = vpop.f32.mrf.mxu0
      %4582 = vmatprep.mubr.f32.mxu0 0.0
      %4583 = vmatmul.mubr.f32.gmra.mxu0 %v4458
      %v4584 = vpop.f32.mrf.mxu0
      %v4585 = vadd.f32 0.0, %v4584
      %v4586 = vpop.f32.mrf.mxu0
      %4587 = vmatprep.mubr.f32.mxu0 0.0
      %4588 = vmatmul.mubr.f32.gmra.mxu0 %v4459
      %v4589 = vpop.f32.mrf.mxu0
      %v4590 = vadd.f32 0.0, %v4589
      %v4591 = vpop.f32.mrf.mxu0
      %4592 = vmatprep.mubr.f32.mxu0 0.0
      %4593 = vmatmul.mubr.f32.gmra.mxu0 %v4460
      %v4594 = vpop.f32.mrf.mxu0
      %v4595 = vadd.f32 0.0, %v4594
      %v4596 = vpop.f32.mrf.mxu0
      %4597 = vmatprep.mubr.f32.mxu0 0.0
      %4598 = vmatmul.mubr.f32.gmra.mxu0 %v4461
      %v4599 = vpop.f32.mrf.mxu0
      %v4600 = vadd.f32 0.0, %v4599
      %v4601 = vpop.f32.mrf.mxu0
      %4602 = vmatprep.mubr.f32.mxu0 0.0
      %4603 = vmatmul.mubr.f32.gmra.mxu0 %v4462
      %v4604 = vpop.f32.mrf.mxu0
      %v4605 = vadd.f32 0.0, %v4604
      %v4606 = vpop.f32.mrf.mxu0
      %4607 = vmatprep.mubr.f32.mxu0 0.0
      %4608 = vmatmul.mubr.f32.gmra.mxu0 %v4463
      %v4609 = vpop.f32.mrf.mxu0
      %v4610 = vadd.f32 0.0, %v4609
      %v4611 = vpop.f32.mrf.mxu0
      %4612 = vmatprep.mubr.f32.mxu0 0.0
      %4613 = vmatmul.mubr.f32.gmra.mxu0 %v4464
      %v4614 = vpop.f32.mrf.mxu0
      %v4615 = vadd.f32 0.0, %v4614
      %v4616 = vpop.f32.mrf.mxu0
      %4617 = vmatprep.mubr.f32.mxu0 0.0
      %4618 = vmatmul.mubr.f32.gmra.mxu0 %v4465
      %v4619 = vpop.f32.mrf.mxu0
      %v4620 = vadd.f32 0.0, %v4619
      %v4621 = vpop.f32.mrf.mxu0
      %4622 = vmatprep.mubr.f32.mxu0 0.0
      %4623 = vmatmul.mubr.f32.gmra.mxu0 %v4466
      %v4624 = vpop.f32.mrf.mxu0
      %v4625 = vadd.f32 0.0, %v4624
      %v4626 = vpop.f32.mrf.mxu0
      %4627 = vdwg.mxu0
      %v4628 = vadd.f32 %v4419, %v4550
      %v4629 = vadd.f32 %v4420, %v4555
      %v4630 = vadd.f32 %v4421, %v4560
      %v4631 = vadd.f32 %v4422, %v4565
      %v4632 = vadd.f32 %v4423, %v4570
      %v4633 = vadd.f32 %v4424, %v4575
      %v4634 = vadd.f32 %v4425, %v4580
      %v4635 = vadd.f32 %v4426, %v4585
      %v4636 = vadd.f32 %v4427, %v4590
      %v4637 = vadd.f32 %v4428, %v4595
      %v4638 = vadd.f32 %v4429, %v4600
      %v4639 = vadd.f32 %v4430, %v4605
      %v4640 = vadd.f32 %v4431, %v4610
      %v4641 = vadd.f32 %v4432, %v4615
      %v4642 = vadd.f32 %v4433, %v4620
      %v4643 = vadd.f32 %v4434, %v4625
      %v4644 = vld [vmem:[%s165 + $0xa7] sm:$0xff]
      %v4645 = vld [vmem:[%s165 + $0xaf] sm:$0xff]
      %v4646 = vld [vmem:[%s165 + $0xb7] sm:$0xff]
      %v4647 = vld [vmem:[%s165 + $0xbf] sm:$0xff]
      %v4648 = vld [vmem:[%s165 + $0xc7] sm:$0xff]
      %v4649 = vld [vmem:[%s165 + $0xcf] sm:$0xff]
      %v4650 = vld [vmem:[%s165 + $0xd7] sm:$0xff]
      %v4651 = vld [vmem:[%s165 + $0xdf] sm:$0xff]
      %v4652 = vld [vmem:[%s165 + $0xe7] sm:$0xff]
      %v4653 = vld [vmem:[%s165 + $0xef] sm:$0xff]
      %v4654 = vld [vmem:[%s165 + $0xf7] sm:$0xff]
      %v4655 = vld [vmem:[%s165 + $0xff] sm:$0xff]
      %v4656 = vld [vmem:[%s165 + $0x107] sm:$0xff]
      %v4657 = vld [vmem:[%s165 + $0x10f] sm:$0xff]
      %v4658 = vld [vmem:[%s165 + $0x117] sm:$0xff]
      %v4659 = vld [vmem:[%s165 + $0x11f] sm:$0xff]
      %v4660 = vsel %vm275, %v4644, 0.0
      %v4661 = vsel %vm276, %v4645, 0.0
      %v4662 = vsel %vm277, %v4646, 0.0
      %v4663 = vsel %vm278, %v4647, 0.0
      %v4664 = vsel %vm279, %v4648, 0.0
      %v4665 = vsel %vm280, %v4649, 0.0
      %v4666 = vsel %vm281, %v4650, 0.0
      %v4667 = vsel %vm282, %v4651, 0.0
      %v4668 = vsel %vm283, %v4652, 0.0
      %v4669 = vsel %vm284, %v4653, 0.0
      %v4670 = vsel %vm285, %v4654, 0.0
      %v4671 = vsel %vm286, %v4655, 0.0
      %v4672 = vsel %vm287, %v4656, 0.0
      %v4673 = vsel %vm288, %v4657, 0.0
      %v4674 = vsel %vm289, %v4658, 0.0
      %v4675 = vsel %vm290, %v4659, 0.0
      %v4676 = vld [vmem:[%s2196] sm:$0xff]
      %v4677 = vld [vmem:[%s2196 + $0x8] sm:$0xff]
      %v4678 = vld [vmem:[%s2196 + $0x10] sm:$0xff]
      %v4679 = vld [vmem:[%s2196 + $0x18] sm:$0xff]
      %v4680 = vld [vmem:[%s2196 + $0x20] sm:$0xff]
      %v4681 = vld [vmem:[%s2196 + $0x28] sm:$0xff]
      %v4682 = vld [vmem:[%s2196 + $0x30] sm:$0xff]
      %v4683 = vld [vmem:[%s2196 + $0x38] sm:$0xff]
      %v4684 = vld [vmem:[%s2196 + $0x40] sm:$0xff]
      %v4685 = vld [vmem:[%s2196 + $0x48] sm:$0xff]
      %v4686 = vld [vmem:[%s2196 + $0x50] sm:$0xff]
      %v4687 = vld [vmem:[%s2196 + $0x58] sm:$0xff]
      %v4688 = vld [vmem:[%s2196 + $0x60] sm:$0xff]
      %v4689 = vld [vmem:[%s2196 + $0x68] sm:$0xff]
      %v4690 = vld [vmem:[%s2196 + $0x70] sm:$0xff]
      %v4691 = vld [vmem:[%s2196 + $0x78] sm:$0xff]
      %4692 = vmatprep.subr.mxu0 0.0
      %4693 = vmatpush1.msra.mxu0 %v4691
      %4694 = vmatprep.subr.mxu0 0.0
      %4695 = vmatpush1.msra.mxu0 %v4690
      %4696 = vmatprep.subr.mxu0 0.0
      %4697 = vmatpush1.msra.mxu0 %v4689
      %4698 = vmatprep.subr.mxu0 0.0
      %4699 = vmatpush1.msra.mxu0 %v4688
      %4700 = vmatprep.subr.mxu0 0.0
      %4701 = vmatpush1.msra.mxu0 %v4687
      %4702 = vmatprep.subr.mxu0 0.0
      %4703 = vmatpush1.msra.mxu0 %v4686
      %4704 = vmatprep.subr.mxu0 0.0
      %4705 = vmatpush1.msra.mxu0 %v4685
      %4706 = vmatprep.subr.mxu0 0.0
      %4707 = vmatpush1.msra.mxu0 %v4684
      %4708 = vmatprep.subr.mxu0 0.0
      %4709 = vmatpush1.msra.mxu0 %v4683
      %4710 = vmatprep.subr.mxu0 0.0
      %4711 = vmatpush1.msra.mxu0 %v4682
      %4712 = vmatprep.subr.mxu0 0.0
      %4713 = vmatpush1.msra.mxu0 %v4681
      %4714 = vmatprep.subr.mxu0 0.0
      %4715 = vmatpush1.msra.mxu0 %v4680
      %4716 = vmatprep.subr.mxu0 0.0
      %4717 = vmatpush1.msra.mxu0 %v4679
      %4718 = vmatprep.subr.mxu0 0.0
      %4719 = vmatpush1.msra.mxu0 %v4678
      %4720 = vmatprep.subr.mxu0 0.0
      %4721 = vmatpush1.msra.mxu0 %v4677
      %4722 = vmatprep.subr.mxu0 0.0
      %4723 = vmatpush1.msra.mxu0 %v4676
      %4724 = vmatprep.subr.mxu0 0.0
      %4725 = vmatpush2.msra.mxu0 0.0
      %4726 = vmatprep.subr.mxu0 0.0
      %4727 = vmatpush2.msra.mxu0 0.0
      %4728 = vmatprep.subr.mxu0 0.0
      %4729 = vmatpush2.msra.mxu0 0.0
      %4730 = vmatprep.subr.mxu0 0.0
      %4731 = vmatpush2.msra.mxu0 0.0
      %4732 = vmatprep.subr.mxu0 0.0
      %4733 = vmatpush2.msra.mxu0 0.0
      %4734 = vmatprep.subr.mxu0 0.0
      %4735 = vmatpush2.msra.mxu0 0.0
      %4736 = vmatprep.subr.mxu0 0.0
      %4737 = vmatpush2.msra.mxu0 0.0
      %4738 = vmatprep.subr.mxu0 0.0
      %4739 = vmatpush2.msra.mxu0 0.0
      %4740 = vmatprep.subr.mxu0 0.0
      %4741 = vmatpush2.msra.mxu0 0.0
      %4742 = vmatprep.subr.mxu0 0.0
      %4743 = vmatpush2.msra.mxu0 0.0
      %4744 = vmatprep.subr.mxu0 0.0
      %4745 = vmatpush2.msra.mxu0 0.0
      %4746 = vmatprep.subr.mxu0 0.0
      %4747 = vmatpush2.msra.mxu0 0.0
      %4748 = vmatprep.subr.mxu0 0.0
      %4749 = vmatpush2.msra.mxu0 0.0
      %4750 = vmatprep.subr.mxu0 0.0
      %4751 = vmatpush2.msra.mxu0 0.0
      %4752 = vmatprep.subr.mxu0 0.0
      %4753 = vmatpush2.msra.mxu0 0.0
      %4754 = vmatprep.subr.mxu0 0.0
      %4755 = vmatpush2.msra.mxu0 0.0
      %4756 = vmatprep.mubr.f32.mxu0 0.0
      %4757 = vmatmul.mubr.f32.gmra.mxu0 %v4660
      %v4758 = vpop.f32.mrf.mxu0
      %v4759 = vadd.f32 0.0, %v4758
      %v4760 = vpop.f32.mrf.mxu0
      %4761 = vmatprep.mubr.f32.mxu0 0.0
      %4762 = vmatmul.mubr.f32.gmra.mxu0 %v4661
      %v4763 = vpop.f32.mrf.mxu0
      %v4764 = vadd.f32 0.0, %v4763
      %v4765 = vpop.f32.mrf.mxu0
      %4766 = vmatprep.mubr.f32.mxu0 0.0
      %4767 = vmatmul.mubr.f32.gmra.mxu0 %v4662
      %v4768 = vpop.f32.mrf.mxu0
      %v4769 = vadd.f32 0.0, %v4768
      %v4770 = vpop.f32.mrf.mxu0
      %4771 = vmatprep.mubr.f32.mxu0 0.0
      %4772 = vmatmul.mubr.f32.gmra.mxu0 %v4663
      %v4773 = vpop.f32.mrf.mxu0
      %v4774 = vadd.f32 0.0, %v4773
      %v4775 = vpop.f32.mrf.mxu0
      %4776 = vmatprep.mubr.f32.mxu0 0.0
      %4777 = vmatmul.mubr.f32.gmra.mxu0 %v4664
      %v4778 = vpop.f32.mrf.mxu0
      %v4779 = vadd.f32 0.0, %v4778
      %v4780 = vpop.f32.mrf.mxu0
      %4781 = vmatprep.mubr.f32.mxu0 0.0
      %4782 = vmatmul.mubr.f32.gmra.mxu0 %v4665
      %v4783 = vpop.f32.mrf.mxu0
      %v4784 = vadd.f32 0.0, %v4783
      %v4785 = vpop.f32.mrf.mxu0
      %4786 = vmatprep.mubr.f32.mxu0 0.0
      %4787 = vmatmul.mubr.f32.gmra.mxu0 %v4666
      %v4788 = vpop.f32.mrf.mxu0
      %v4789 = vadd.f32 0.0, %v4788
      %v4790 = vpop.f32.mrf.mxu0
      %4791 = vmatprep.mubr.f32.mxu0 0.0
      %4792 = vmatmul.mubr.f32.gmra.mxu0 %v4667
      %v4793 = vpop.f32.mrf.mxu0
      %v4794 = vadd.f32 0.0, %v4793
      %v4795 = vpop.f32.mrf.mxu0
      %4796 = vmatprep.mubr.f32.mxu0 0.0
      %4797 = vmatmul.mubr.f32.gmra.mxu0 %v4668
      %v4798 = vpop.f32.mrf.mxu0
      %v4799 = vadd.f32 0.0, %v4798
      %v4800 = vpop.f32.mrf.mxu0
      %4801 = vmatprep.mubr.f32.mxu0 0.0
      %4802 = vmatmul.mubr.f32.gmra.mxu0 %v4669
      %v4803 = vpop.f32.mrf.mxu0
      %v4804 = vadd.f32 0.0, %v4803
      %v4805 = vpop.f32.mrf.mxu0
      %4806 = vmatprep.mubr.f32.mxu0 0.0
      %4807 = vmatmul.mubr.f32.gmra.mxu0 %v4670
      %v4808 = vpop.f32.mrf.mxu0
      %v4809 = vadd.f32 0.0, %v4808
      %v4810 = vpop.f32.mrf.mxu0
      %4811 = vmatprep.mubr.f32.mxu0 0.0
      %4812 = vmatmul.mubr.f32.gmra.mxu0 %v4671
      %v4813 = vpop.f32.mrf.mxu0
      %v4814 = vadd.f32 0.0, %v4813
      %v4815 = vpop.f32.mrf.mxu0
      %4816 = vmatprep.mubr.f32.mxu0 0.0
      %4817 = vmatmul.mubr.f32.gmra.mxu0 %v4672
      %v4818 = vpop.f32.mrf.mxu0
      %v4819 = vadd.f32 0.0, %v4818
      %v4820 = vpop.f32.mrf.mxu0
      %4821 = vmatprep.mubr.f32.mxu0 0.0
      %4822 = vmatmul.mubr.f32.gmra.mxu0 %v4673
      %v4823 = vpop.f32.mrf.mxu0
      %v4824 = vadd.f32 0.0, %v4823
      %v4825 = vpop.f32.mrf.mxu0
      %4826 = vmatprep.mubr.f32.mxu0 0.0
      %4827 = vmatmul.mubr.f32.gmra.mxu0 %v4674
      %v4828 = vpop.f32.mrf.mxu0
      %v4829 = vadd.f32 0.0, %v4828
      %v4830 = vpop.f32.mrf.mxu0
      %4831 = vmatprep.mubr.f32.mxu0 0.0
      %4832 = vmatmul.mubr.f32.gmra.mxu0 %v4675
      %v4833 = vpop.f32.mrf.mxu0
      %v4834 = vadd.f32 0.0, %v4833
      %v4835 = vpop.f32.mrf.mxu0
      %4836 = vdwg.mxu0
      %v4837 = vadd.f32 %v4628, %v4759
      %v4838 = vadd.f32 %v4629, %v4764
      %v4839 = vadd.f32 %v4630, %v4769
      %v4840 = vadd.f32 %v4631, %v4774
      %v4841 = vadd.f32 %v4632, %v4779
      %v4842 = vadd.f32 %v4633, %v4784
      %v4843 = vadd.f32 %v4634, %v4789
      %v4844 = vadd.f32 %v4635, %v4794
      %v4845 = vadd.f32 %v4636, %v4799
      %v4846 = vadd.f32 %v4637, %v4804
      %v4847 = vadd.f32 %v4638, %v4809
      %v4848 = vadd.f32 %v4639, %v4814
      %v4849 = vadd.f32 %v4640, %v4819
      %v4850 = vadd.f32 %v4641, %v4824
      %v4851 = vadd.f32 %v4642, %v4829
      %v4852 = vadd.f32 %v4643, %v4834
      %v4853 = vld [vmem:[%s165 + $0xa8] sm:$0xff]
      %v4854 = vld [vmem:[%s165 + $0xb0] sm:$0xff]
      %v4855 = vld [vmem:[%s165 + $0xb8] sm:$0xff]
      %v4856 = vld [vmem:[%s165 + $0xc0] sm:$0xff]
      %v4857 = vld [vmem:[%s165 + $0xc8] sm:$0xff]
      %v4858 = vld [vmem:[%s165 + $0xd0] sm:$0xff]
      %v4859 = vld [vmem:[%s165 + $0xd8] sm:$0xff]
      %v4860 = vld [vmem:[%s165 + $0xe0] sm:$0xff]
      %v4861 = vld [vmem:[%s165 + $0xe8] sm:$0xff]
      %v4862 = vld [vmem:[%s165 + $0xf0] sm:$0xff]
      %v4863 = vld [vmem:[%s165 + $0xf8] sm:$0xff]
      %v4864 = vld [vmem:[%s165 + $0x100] sm:$0xff]
      %v4865 = vld [vmem:[%s165 + $0x108] sm:$0xff]
      %v4866 = vld [vmem:[%s165 + $0x110] sm:$0xff]
      %v4867 = vld [vmem:[%s165 + $0x118] sm:$0xff]
      %v4868 = vld [vmem:[%s165 + $0x120] sm:$0xff]
      %v4869 = vld [vmem:[%s2390] sm:$0xff]
      %v4870 = vld [vmem:[%s2390 + $0x8] sm:$0xff]
      %v4871 = vld [vmem:[%s2390 + $0x10] sm:$0xff]
      %v4872 = vld [vmem:[%s2390 + $0x18] sm:$0xff]
      %v4873 = vld [vmem:[%s2390 + $0x20] sm:$0xff]
      %v4874 = vld [vmem:[%s2390 + $0x28] sm:$0xff]
      %v4875 = vld [vmem:[%s2390 + $0x30] sm:$0xff]
      %v4876 = vld [vmem:[%s2390 + $0x38] sm:$0xff]
      %v4877 = vld [vmem:[%s2390 + $0x40] sm:$0xff]
      %v4878 = vld [vmem:[%s2390 + $0x48] sm:$0xff]
      %v4879 = vld [vmem:[%s2390 + $0x50] sm:$0xff]
      %v4880 = vld [vmem:[%s2390 + $0x58] sm:$0xff]
      %v4881 = vld [vmem:[%s2390 + $0x60] sm:$0xff]
      %v4882 = vld [vmem:[%s2390 + $0x68] sm:$0xff]
      %v4883 = vld [vmem:[%s2390 + $0x70] sm:$0xff]
      %v4884 = vld [vmem:[%s2390 + $0x78] sm:$0xff]
      %4885 = vmatprep.subr.mxu0 0.0
      %4886 = vmatpush1.msra.mxu0 %v4884
      %4887 = vmatprep.subr.mxu0 0.0
      %4888 = vmatpush1.msra.mxu0 %v4883
      %4889 = vmatprep.subr.mxu0 0.0
      %4890 = vmatpush1.msra.mxu0 %v4882
      %4891 = vmatprep.subr.mxu0 0.0
      %4892 = vmatpush1.msra.mxu0 %v4881
      %4893 = vmatprep.subr.mxu0 0.0
      %4894 = vmatpush1.msra.mxu0 %v4880
      %4895 = vmatprep.subr.mxu0 0.0
      %4896 = vmatpush1.msra.mxu0 %v4879
      %4897 = vmatprep.subr.mxu0 0.0
      %4898 = vmatpush1.msra.mxu0 %v4878
      %4899 = vmatprep.subr.mxu0 0.0
      %4900 = vmatpush1.msra.mxu0 %v4877
      %4901 = vmatprep.subr.mxu0 0.0
      %4902 = vmatpush1.msra.mxu0 %v4876
      %4903 = vmatprep.subr.mxu0 0.0
      %4904 = vmatpush1.msra.mxu0 %v4875
      %4905 = vmatprep.subr.mxu0 0.0
      %4906 = vmatpush1.msra.mxu0 %v4874
      %4907 = vmatprep.subr.mxu0 0.0
      %4908 = vmatpush1.msra.mxu0 %v4873
      %4909 = vmatprep.subr.mxu0 0.0
      %4910 = vmatpush1.msra.mxu0 %v4872
      %4911 = vmatprep.subr.mxu0 0.0
      %4912 = vmatpush1.msra.mxu0 %v4871
      %4913 = vmatprep.subr.mxu0 0.0
      %4914 = vmatpush1.msra.mxu0 %v4870
      %4915 = vmatprep.subr.mxu0 0.0
      %4916 = vmatpush1.msra.mxu0 %v4869
      %4917 = vmatprep.subr.mxu0 0.0
      %4918 = vmatpush2.msra.mxu0 0.0
      %4919 = vmatprep.subr.mxu0 0.0
      %4920 = vmatpush2.msra.mxu0 0.0
      %4921 = vmatprep.subr.mxu0 0.0
      %4922 = vmatpush2.msra.mxu0 0.0
      %4923 = vmatprep.subr.mxu0 0.0
      %4924 = vmatpush2.msra.mxu0 0.0
      %4925 = vmatprep.subr.mxu0 0.0
      %4926 = vmatpush2.msra.mxu0 0.0
      %4927 = vmatprep.subr.mxu0 0.0
      %4928 = vmatpush2.msra.mxu0 0.0
      %4929 = vmatprep.subr.mxu0 0.0
      %4930 = vmatpush2.msra.mxu0 0.0
      %4931 = vmatprep.subr.mxu0 0.0
      %4932 = vmatpush2.msra.mxu0 0.0
      %4933 = vmatprep.subr.mxu0 0.0
      %4934 = vmatpush2.msra.mxu0 0.0
      %4935 = vmatprep.subr.mxu0 0.0
      %4936 = vmatpush2.msra.mxu0 0.0
      %4937 = vmatprep.subr.mxu0 0.0
      %4938 = vmatpush2.msra.mxu0 0.0
      %4939 = vmatprep.subr.mxu0 0.0
      %4940 = vmatpush2.msra.mxu0 0.0
      %4941 = vmatprep.subr.mxu0 0.0
      %4942 = vmatpush2.msra.mxu0 0.0
      %4943 = vmatprep.subr.mxu0 0.0
      %4944 = vmatpush2.msra.mxu0 0.0
      %4945 = vmatprep.subr.mxu0 0.0
      %4946 = vmatpush2.msra.mxu0 0.0
      %4947 = vmatprep.subr.mxu0 0.0
      %4948 = vmatpush2.msra.mxu0 0.0
      %4949 = vmatprep.mubr.f32.mxu0 0.0
      %4950 = vmatmul.mubr.f32.gmra.mxu0 %v4853
      %v4951 = vpop.f32.mrf.mxu0
      %v4952 = vadd.f32 0.0, %v4951
      %v4953 = vpop.f32.mrf.mxu0
      %4954 = vmatprep.mubr.f32.mxu0 0.0
      %4955 = vmatmul.mubr.f32.gmra.mxu0 %v4854
      %v4956 = vpop.f32.mrf.mxu0
      %v4957 = vadd.f32 0.0, %v4956
      %v4958 = vpop.f32.mrf.mxu0
      %4959 = vmatprep.mubr.f32.mxu0 0.0
      %4960 = vmatmul.mubr.f32.gmra.mxu0 %v4855
      %v4961 = vpop.f32.mrf.mxu0
      %v4962 = vadd.f32 0.0, %v4961
      %v4963 = vpop.f32.mrf.mxu0
      %4964 = vmatprep.mubr.f32.mxu0 0.0
      %4965 = vmatmul.mubr.f32.gmra.mxu0 %v4856
      %v4966 = vpop.f32.mrf.mxu0
      %v4967 = vadd.f32 0.0, %v4966
      %v4968 = vpop.f32.mrf.mxu0
      %4969 = vmatprep.mubr.f32.mxu0 0.0
      %4970 = vmatmul.mubr.f32.gmra.mxu0 %v4857
      %v4971 = vpop.f32.mrf.mxu0
      %v4972 = vadd.f32 0.0, %v4971
      %v4973 = vpop.f32.mrf.mxu0
      %4974 = vmatprep.mubr.f32.mxu0 0.0
      %4975 = vmatmul.mubr.f32.gmra.mxu0 %v4858
      %v4976 = vpop.f32.mrf.mxu0
      %v4977 = vadd.f32 0.0, %v4976
      %v4978 = vpop.f32.mrf.mxu0
      %4979 = vmatprep.mubr.f32.mxu0 0.0
      %4980 = vmatmul.mubr.f32.gmra.mxu0 %v4859
      %v4981 = vpop.f32.mrf.mxu0
      %v4982 = vadd.f32 0.0, %v4981
      %v4983 = vpop.f32.mrf.mxu0
      %4984 = vmatprep.mubr.f32.mxu0 0.0
      %4985 = vmatmul.mubr.f32.gmra.mxu0 %v4860
      %v4986 = vpop.f32.mrf.mxu0
      %v4987 = vadd.f32 0.0, %v4986
      %v4988 = vpop.f32.mrf.mxu0
      %4989 = vmatprep.mubr.f32.mxu0 0.0
      %4990 = vmatmul.mubr.f32.gmra.mxu0 %v4861
      %v4991 = vpop.f32.mrf.mxu0
      %v4992 = vadd.f32 0.0, %v4991
      %v4993 = vpop.f32.mrf.mxu0
      %4994 = vmatprep.mubr.f32.mxu0 0.0
      %4995 = vmatmul.mubr.f32.gmra.mxu0 %v4862
      %v4996 = vpop.f32.mrf.mxu0
      %v4997 = vadd.f32 0.0, %v4996
      %v4998 = vpop.f32.mrf.mxu0
      %4999 = vmatprep.mubr.f32.mxu0 0.0
      %5000 = vmatmul.mubr.f32.gmra.mxu0 %v4863
      %v5001 = vpop.f32.mrf.mxu0
      %v5002 = vadd.f32 0.0, %v5001
      %v5003 = vpop.f32.mrf.mxu0
      %5004 = vmatprep.mubr.f32.mxu0 0.0
      %5005 = vmatmul.mubr.f32.gmra.mxu0 %v4864
      %v5006 = vpop.f32.mrf.mxu0
      %v5007 = vadd.f32 0.0, %v5006
      %v5008 = vpop.f32.mrf.mxu0
      %5009 = vmatprep.mubr.f32.mxu0 0.0
      %5010 = vmatmul.mubr.f32.gmra.mxu0 %v4865
      %v5011 = vpop.f32.mrf.mxu0
      %v5012 = vadd.f32 0.0, %v5011
      %v5013 = vpop.f32.mrf.mxu0
      %5014 = vmatprep.mubr.f32.mxu0 0.0
      %5015 = vmatmul.mubr.f32.gmra.mxu0 %v4866
      %v5016 = vpop.f32.mrf.mxu0
      %v5017 = vadd.f32 0.0, %v5016
      %v5018 = vpop.f32.mrf.mxu0
      %5019 = vmatprep.mubr.f32.mxu0 0.0
      %5020 = vmatmul.mubr.f32.gmra.mxu0 %v4867
      %v5021 = vpop.f32.mrf.mxu0
      %v5022 = vadd.f32 0.0, %v5021
      %v5023 = vpop.f32.mrf.mxu0
      %5024 = vmatprep.mubr.f32.mxu0 0.0
      %5025 = vmatmul.mubr.f32.gmra.mxu0 %v4868
      %v5026 = vpop.f32.mrf.mxu0
      %v5027 = vadd.f32 0.0, %v5026
      %v5028 = vpop.f32.mrf.mxu0
      %5029 = vdwg.mxu0
      %v5030 = vadd.f32 %v4837, %v4952
      %v5031 = vadd.f32 %v4838, %v4957
      %v5032 = vadd.f32 %v4839, %v4962
      %v5033 = vadd.f32 %v4840, %v4967
      %v5034 = vadd.f32 %v4841, %v4972
      %v5035 = vadd.f32 %v4842, %v4977
      %v5036 = vadd.f32 %v4843, %v4982
      %v5037 = vadd.f32 %v4844, %v4987
      %v5038 = vadd.f32 %v4845, %v4992
      %v5039 = vadd.f32 %v4846, %v4997
      %v5040 = vadd.f32 %v4847, %v5002
      %v5041 = vadd.f32 %v4848, %v5007
      %v5042 = vadd.f32 %v4849, %v5012
      %v5043 = vadd.f32 %v4850, %v5017
      %v5044 = vadd.f32 %v4851, %v5022
      %v5045 = vadd.f32 %v4852, %v5027
      %v5046 = vld [vmem:[%s165 + $0xa9] sm:$0xff]
      %v5047 = vld [vmem:[%s165 + $0xb1] sm:$0xff]
      %v5048 = vld [vmem:[%s165 + $0xb9] sm:$0xff]
      %v5049 = vld [vmem:[%s165 + $0xc1] sm:$0xff]
      %v5050 = vld [vmem:[%s165 + $0xc9] sm:$0xff]
      %v5051 = vld [vmem:[%s165 + $0xd1] sm:$0xff]
      %v5052 = vld [vmem:[%s165 + $0xd9] sm:$0xff]
      %v5053 = vld [vmem:[%s165 + $0xe1] sm:$0xff]
      %v5054 = vld [vmem:[%s165 + $0xe9] sm:$0xff]
      %v5055 = vld [vmem:[%s165 + $0xf1] sm:$0xff]
      %v5056 = vld [vmem:[%s165 + $0xf9] sm:$0xff]
      %v5057 = vld [vmem:[%s165 + $0x101] sm:$0xff]
      %v5058 = vld [vmem:[%s165 + $0x109] sm:$0xff]
      %v5059 = vld [vmem:[%s165 + $0x111] sm:$0xff]
      %v5060 = vld [vmem:[%s165 + $0x119] sm:$0xff]
      %v5061 = vld [vmem:[%s165 + $0x121] sm:$0xff]
      %v5062 = vsel %vm710, %v5046, 0.0
      %v5063 = vsel %vm711, %v5047, 0.0
      %v5064 = vsel %vm712, %v5048, 0.0
      %v5065 = vsel %vm713, %v5049, 0.0
      %v5066 = vsel %vm714, %v5050, 0.0
      %v5067 = vsel %vm715, %v5051, 0.0
      %v5068 = vsel %vm716, %v5052, 0.0
      %v5069 = vsel %vm717, %v5053, 0.0
      %v5070 = vsel %vm718, %v5054, 0.0
      %v5071 = vsel %vm719, %v5055, 0.0
      %v5072 = vsel %vm720, %v5056, 0.0
      %v5073 = vsel %vm721, %v5057, 0.0
      %v5074 = vsel %vm722, %v5058, 0.0
      %v5075 = vsel %vm723, %v5059, 0.0
      %v5076 = vsel %vm724, %v5060, 0.0
      %v5077 = vsel %vm725, %v5061, 0.0
      %v5078 = vld [vmem:[%s2600] sm:$0xff]
      %v5079 = vld [vmem:[%s2600 + $0x8] sm:$0xff]
      %v5080 = vld [vmem:[%s2600 + $0x10] sm:$0xff]
      %v5081 = vld [vmem:[%s2600 + $0x18] sm:$0xff]
      %v5082 = vld [vmem:[%s2600 + $0x20] sm:$0xff]
      %v5083 = vld [vmem:[%s2600 + $0x28] sm:$0xff]
      %v5084 = vld [vmem:[%s2600 + $0x30] sm:$0xff]
      %v5085 = vld [vmem:[%s2600 + $0x38] sm:$0xff]
      %v5086 = vld [vmem:[%s2600 + $0x40] sm:$0xff]
      %v5087 = vld [vmem:[%s2600 + $0x48] sm:$0xff]
      %v5088 = vld [vmem:[%s2600 + $0x50] sm:$0xff]
      %v5089 = vld [vmem:[%s2600 + $0x58] sm:$0xff]
      %v5090 = vld [vmem:[%s2600 + $0x60] sm:$0xff]
      %v5091 = vld [vmem:[%s2600 + $0x68] sm:$0xff]
      %v5092 = vld [vmem:[%s2600 + $0x70] sm:$0xff]
      %v5093 = vld [vmem:[%s2600 + $0x78] sm:$0xff]
      %5094 = vmatprep.subr.mxu0 0.0
      %5095 = vmatpush1.msra.mxu0 %v5093
      %5096 = vmatprep.subr.mxu0 0.0
      %5097 = vmatpush1.msra.mxu0 %v5092
      %5098 = vmatprep.subr.mxu0 0.0
      %5099 = vmatpush1.msra.mxu0 %v5091
      %5100 = vmatprep.subr.mxu0 0.0
      %5101 = vmatpush1.msra.mxu0 %v5090
      %5102 = vmatprep.subr.mxu0 0.0
      %5103 = vmatpush1.msra.mxu0 %v5089
      %5104 = vmatprep.subr.mxu0 0.0
      %5105 = vmatpush1.msra.mxu0 %v5088
      %5106 = vmatprep.subr.mxu0 0.0
      %5107 = vmatpush1.msra.mxu0 %v5087
      %5108 = vmatprep.subr.mxu0 0.0
      %5109 = vmatpush1.msra.mxu0 %v5086
      %5110 = vmatprep.subr.mxu0 0.0
      %5111 = vmatpush1.msra.mxu0 %v5085
      %5112 = vmatprep.subr.mxu0 0.0
      %5113 = vmatpush1.msra.mxu0 %v5084
      %5114 = vmatprep.subr.mxu0 0.0
      %5115 = vmatpush1.msra.mxu0 %v5083
      %5116 = vmatprep.subr.mxu0 0.0
      %5117 = vmatpush1.msra.mxu0 %v5082
      %5118 = vmatprep.subr.mxu0 0.0
      %5119 = vmatpush1.msra.mxu0 %v5081
      %5120 = vmatprep.subr.mxu0 0.0
      %5121 = vmatpush1.msra.mxu0 %v5080
      %5122 = vmatprep.subr.mxu0 0.0
      %5123 = vmatpush1.msra.mxu0 %v5079
      %5124 = vmatprep.subr.mxu0 0.0
      %5125 = vmatpush1.msra.mxu0 %v5078
      %5126 = vmatprep.subr.mxu0 0.0
      %5127 = vmatpush2.msra.mxu0 0.0
      %5128 = vmatprep.subr.mxu0 0.0
      %5129 = vmatpush2.msra.mxu0 0.0
      %5130 = vmatprep.subr.mxu0 0.0
      %5131 = vmatpush2.msra.mxu0 0.0
      %5132 = vmatprep.subr.mxu0 0.0
      %5133 = vmatpush2.msra.mxu0 0.0
      %5134 = vmatprep.subr.mxu0 0.0
      %5135 = vmatpush2.msra.mxu0 0.0
      %5136 = vmatprep.subr.mxu0 0.0
      %5137 = vmatpush2.msra.mxu0 0.0
      %5138 = vmatprep.subr.mxu0 0.0
      %5139 = vmatpush2.msra.mxu0 0.0
      %5140 = vmatprep.subr.mxu0 0.0
      %5141 = vmatpush2.msra.mxu0 0.0
      %5142 = vmatprep.subr.mxu0 0.0
      %5143 = vmatpush2.msra.mxu0 0.0
      %5144 = vmatprep.subr.mxu0 0.0
      %5145 = vmatpush2.msra.mxu0 0.0
      %5146 = vmatprep.subr.mxu0 0.0
      %5147 = vmatpush2.msra.mxu0 0.0
      %5148 = vmatprep.subr.mxu0 0.0
      %5149 = vmatpush2.msra.mxu0 0.0
      %5150 = vmatprep.subr.mxu0 0.0
      %5151 = vmatpush2.msra.mxu0 0.0
      %5152 = vmatprep.subr.mxu0 0.0
      %5153 = vmatpush2.msra.mxu0 0.0
      %5154 = vmatprep.subr.mxu0 0.0
      %5155 = vmatpush2.msra.mxu0 0.0
      %5156 = vmatprep.subr.mxu0 0.0
      %5157 = vmatpush2.msra.mxu0 0.0
      %5158 = vmatprep.mubr.f32.mxu0 0.0
      %5159 = vmatmul.mubr.f32.gmra.mxu0 %v5062
      %v5160 = vpop.f32.mrf.mxu0
      %v5161 = vadd.f32 0.0, %v5160
      %v5162 = vpop.f32.mrf.mxu0
      %5163 = vmatprep.mubr.f32.mxu0 0.0
      %5164 = vmatmul.mubr.f32.gmra.mxu0 %v5063
      %v5165 = vpop.f32.mrf.mxu0
      %v5166 = vadd.f32 0.0, %v5165
      %v5167 = vpop.f32.mrf.mxu0
      %5168 = vmatprep.mubr.f32.mxu0 0.0
      %5169 = vmatmul.mubr.f32.gmra.mxu0 %v5064
      %v5170 = vpop.f32.mrf.mxu0
      %v5171 = vadd.f32 0.0, %v5170
      %v5172 = vpop.f32.mrf.mxu0
      %5173 = vmatprep.mubr.f32.mxu0 0.0
      %5174 = vmatmul.mubr.f32.gmra.mxu0 %v5065
      %v5175 = vpop.f32.mrf.mxu0
      %v5176 = vadd.f32 0.0, %v5175
      %v5177 = vpop.f32.mrf.mxu0
      %5178 = vmatprep.mubr.f32.mxu0 0.0
      %5179 = vmatmul.mubr.f32.gmra.mxu0 %v5066
      %v5180 = vpop.f32.mrf.mxu0
      %v5181 = vadd.f32 0.0, %v5180
      %v5182 = vpop.f32.mrf.mxu0
      %5183 = vmatprep.mubr.f32.mxu0 0.0
      %5184 = vmatmul.mubr.f32.gmra.mxu0 %v5067
      %v5185 = vpop.f32.mrf.mxu0
      %v5186 = vadd.f32 0.0, %v5185
      %v5187 = vpop.f32.mrf.mxu0
      %5188 = vmatprep.mubr.f32.mxu0 0.0
      %5189 = vmatmul.mubr.f32.gmra.mxu0 %v5068
      %v5190 = vpop.f32.mrf.mxu0
      %v5191 = vadd.f32 0.0, %v5190
      %v5192 = vpop.f32.mrf.mxu0
      %5193 = vmatprep.mubr.f32.mxu0 0.0
      %5194 = vmatmul.mubr.f32.gmra.mxu0 %v5069
      %v5195 = vpop.f32.mrf.mxu0
      %v5196 = vadd.f32 0.0, %v5195
      %v5197 = vpop.f32.mrf.mxu0
      %5198 = vmatprep.mubr.f32.mxu0 0.0
      %5199 = vmatmul.mubr.f32.gmra.mxu0 %v5070
      %v5200 = vpop.f32.mrf.mxu0
      %v5201 = vadd.f32 0.0, %v5200
      %v5202 = vpop.f32.mrf.mxu0
      %5203 = vmatprep.mubr.f32.mxu0 0.0
      %5204 = vmatmul.mubr.f32.gmra.mxu0 %v5071
      %v5205 = vpop.f32.mrf.mxu0
      %v5206 = vadd.f32 0.0, %v5205
      %v5207 = vpop.f32.mrf.mxu0
      %5208 = vmatprep.mubr.f32.mxu0 0.0
      %5209 = vmatmul.mubr.f32.gmra.mxu0 %v5072
      %v5210 = vpop.f32.mrf.mxu0
      %v5211 = vadd.f32 0.0, %v5210
      %v5212 = vpop.f32.mrf.mxu0
      %5213 = vmatprep.mubr.f32.mxu0 0.0
      %5214 = vmatmul.mubr.f32.gmra.mxu0 %v5073
      %v5215 = vpop.f32.mrf.mxu0
      %v5216 = vadd.f32 0.0, %v5215
      %v5217 = vpop.f32.mrf.mxu0
      %5218 = vmatprep.mubr.f32.mxu0 0.0
      %5219 = vmatmul.mubr.f32.gmra.mxu0 %v5074
      %v5220 = vpop.f32.mrf.mxu0
      %v5221 = vadd.f32 0.0, %v5220
      %v5222 = vpop.f32.mrf.mxu0
      %5223 = vmatprep.mubr.f32.mxu0 0.0
      %5224 = vmatmul.mubr.f32.gmra.mxu0 %v5075
      %v5225 = vpop.f32.mrf.mxu0
      %v5226 = vadd.f32 0.0, %v5225
      %v5227 = vpop.f32.mrf.mxu0
      %5228 = vmatprep.mubr.f32.mxu0 0.0
      %5229 = vmatmul.mubr.f32.gmra.mxu0 %v5076
      %v5230 = vpop.f32.mrf.mxu0
      %v5231 = vadd.f32 0.0, %v5230
      %v5232 = vpop.f32.mrf.mxu0
      %5233 = vmatprep.mubr.f32.mxu0 0.0
      %5234 = vmatmul.mubr.f32.gmra.mxu0 %v5077
      %v5235 = vpop.f32.mrf.mxu0
      %v5236 = vadd.f32 0.0, %v5235
      %v5237 = vpop.f32.mrf.mxu0
      %5238 = vdwg.mxu0
      %v5239 = vadd.f32 %v5030, %v5161
      %v5240 = vadd.f32 %v5031, %v5166
      %v5241 = vadd.f32 %v5032, %v5171
      %v5242 = vadd.f32 %v5033, %v5176
      %v5243 = vadd.f32 %v5034, %v5181
      %v5244 = vadd.f32 %v5035, %v5186
      %v5245 = vadd.f32 %v5036, %v5191
      %v5246 = vadd.f32 %v5037, %v5196
      %v5247 = vadd.f32 %v5038, %v5201
      %v5248 = vadd.f32 %v5039, %v5206
      %v5249 = vadd.f32 %v5040, %v5211
      %v5250 = vadd.f32 %v5041, %v5216
      %v5251 = vadd.f32 %v5042, %v5221
      %v5252 = vadd.f32 %v5043, %v5226
      %v5253 = vadd.f32 %v5044, %v5231
      %v5254 = vadd.f32 %v5045, %v5236
      %5255 = vst [vmem:[%s2778 + $0x80] sm:$0xff] %v5239
      %5256 = vst [vmem:[%s2778 + $0x88] sm:$0xff] %v5240
      %5257 = vst [vmem:[%s2778 + $0x90] sm:$0xff] %v5241
      %5258 = vst [vmem:[%s2778 + $0x98] sm:$0xff] %v5242
      %5259 = vst [vmem:[%s2778 + $0xa0] sm:$0xff] %v5243
      %5260 = vst [vmem:[%s2778 + $0xa8] sm:$0xff] %v5244
      %5261 = vst [vmem:[%s2778 + $0xb0] sm:$0xff] %v5245
      %5262 = vst [vmem:[%s2778 + $0xb8] sm:$0xff] %v5246
      %5263 = vst [vmem:[%s2778 + $0xc0] sm:$0xff] %v5247
      %5264 = vst [vmem:[%s2778 + $0xc8] sm:$0xff] %v5248
      %5265 = vst [vmem:[%s2778 + $0xd0] sm:$0xff] %v5249
      %5266 = vst [vmem:[%s2778 + $0xd8] sm:$0xff] %v5250
      %5267 = vst [vmem:[%s2778 + $0xe0] sm:$0xff] %v5251
      %5268 = vst [vmem:[%s2778 + $0xe8] sm:$0xff] %v5252
      %5269 = vst [vmem:[%s2778 + $0xf0] sm:$0xff] %v5253
      %5270 = vst [vmem:[%s2778 + $0xf8] sm:$0xff] %v5254
      %p5271 = scmp.lt.s32.totalorder %s14, 1
      %s5272 = scalar_select %p5271, %s14, 1
      %s5273 = smul.addr %s5272, 64
      %s5274 = smul.addr %s5273, 8
      %s5275 = scalar_lea.vmem %s3, %s5274
      // Predicated region
      $region33: #{lfm_forward.5} parent=31 // pred_check
        %p5276 = pneg %p100
      $region34: #{lfm_forward.5} parent=31 // pred_check_branch
        %5278 = sbr.rel (%p5276) target = $region36
      $region35: #{lfm_forward.5} parent=31 // pred_region
        _
      $region36: #{lfm_forward.5} parent=31 // pred_fallthru
        _
    $region32: #{lfm_forward.5} parent=5 // pred_fallthru
      _
    %p5279 = scmp.le.s32.totalorder 2, %s9
    // Predicated region
    $region37: #{lfm_forward.5} parent=5 // pred_check
      %p5280 = pneg %p5279
    $region38: #{lfm_forward.5} parent=5 // pred_check_branch
      %5282 = sbr.rel (%p5280) target = $region40
    $region39: #{lfm_forward.5} parent=5 // pred_region
      %s5283 = ssub.s32 %s9, 2
      // Predicated region
      $region41: #{lfm_forward.5} parent=39 // pred_check
        %p5284 = pneg %p106
      $region42: #{lfm_forward.5} parent=39 // pred_check_branch
        %5286 = sbr.rel (%p5284) target = $region44
      $region43: #{lfm_forward.5} parent=39 // pred_region
        %p5287 = scmp.lt.s32.totalorder %s15, 1
        %s5288 = scalar_select %p5287, %s15, 1
        %s5289 = smul.addr %s5288, 64
        %s5290 = smul.addr %s5289, 8
        %s5291 = scalar_lea.vmem %s3, %s5290
      $region44: #{lfm_forward.5} parent=39 // pred_fallthru
        _
    $region40: #{lfm_forward.5} parent=5 // pred_fallthru
      _
  $region6: #{lfm_forward.5} parent=0 // loop_footer
    %s13 = sadd.s32 1, %s9
  $region7: #{lfm_forward.5} parent=0 // loop_footer_branch
    %8 = sbr.rel target = $region3
  $region8: #{lfm_forward.5} parent=0 // loop_exit
    _

</llo_original>
